<compile_context>
chip_gen: v7x
topology: tpu7x:2x2x1
jax: 0.10.0
libtpu: 0.0.40
codegen_flags: <defaults>
</compile_context>

<pallas_src>
import functools

import jax
import jax.numpy as jnp
from jax.experimental import pallas as pl
from jax.experimental.pallas import tpu as pltpu

_LN_EPS = 1e-6


def _layer_norm(v, g, b):
    """LayerNorm over the channel (last/lane) axis, fp32 math."""
    v = v.astype(jnp.float32)
    mu = jnp.mean(v, axis=-1, keepdims=True)
    d = v - mu
    var = jnp.mean(d * d, axis=-1, keepdims=True)
    return d * jax.lax.rsqrt(var + _LN_EPS) * g + b


def _gelu_tanh(v):
    # TODO(synk): torch nn.GELU defaults to the erf form; the tanh approximation
    # (~1e-3 diff) is used because erf lowering support in Mosaic is not assured.
    c = 0.7978845608028654  # sqrt(2/pi)
    return 0.5 * v * (1.0 + jnp.tanh(c * (v + 0.044715 * v * v * v)))


def _intern_layer_kernel(xt_ref, xc_ref, xb_ref,
                         g1_ref, b1_ref, wd_ref, bd_ref,
                         g2_ref, b2_ref, w1_ref, bb1_ref, w2_ref, bb2_ref,
                         out_ref, ln_ref, *, chunk_rows, lane_dense_out):
    # xt_ref/xb_ref: (1, 1, W, C) halo rows;  xc_ref: (1, TH, W, C) centre rows.
    i = pl.program_id(1)
    n_tiles = pl.num_programs(1)
    _, th, w, c = xc_ref.shape
    c3 = 3 * c
    rc = chunk_rows
    n_chunks = th // rc
    f32 = jnp.float32
    cdt = ln_ref.dtype  # bf16: MXU-operand dtype

    # --- LN1 of centre + halo rows into the (TH+2, W, C) scratch -------------
    g1 = g1_ref[...]
    b1 = b1_ref[...]
    ln_ref[1:th + 1] = _layer_norm(xc_ref[0], g1, b1).astype(cdt)
    # Halo rows are zero-masked at the image border so the 3x3 conv sees zero
    # padding along H (padding applied AFTER norm1, as in the reference module).
    top_ok = jnp.where(i > 0, 1.0, 0.0)
    bot_ok = jnp.where(i < n_tiles - 1, 1.0, 0.0)
    ln_ref[0:1] = (_layer_norm(xt_ref[0], g1, b1) * top_ok).astype(cdt)
    ln_ref[th + 1:th + 2] = (_layer_norm(xb_ref[0], g1, b1) * bot_ok).astype(cdt)

    # Column masks for the dx=0 / dx=2 taps: zero padding along W without a
    # padded scratch and without unaligned sublane slices.
    col = jax.lax.broadcasted_iota(jnp.int32, (rc + 2, w, c), 1)
    not_first_col = col > 0
    not_last_col = col < (w - 1)

    g2 = g2_ref[...]
    b2 = b2_ref[...]
    bd = bd_ref[...]
    bb1 = bb1_ref[...]
    bb2 = bb2_ref[...]

    def chunk_body(r0):
        # --- DCN stand-in: 3x3 conv; dx taps folded into K via lane concat ----
        slab = ln_ref[pl.ds(r0, rc + 2)].astype(f32)            # (rc+2, W, C)
        left = jnp.where(not_first_col, pltpu.roll(slab, 1, axis=1), 0.0)
        right = jnp.where(not_last_col, pltpu.roll(slab, w - 1, axis=1), 0.0)
        cat = jnp.concatenate(
            [left.astype(cdt), slab.astype(cdt), right.astype(cdt)],
            axis=-1)                                            # (rc+2, W, 3C)

        acc = jnp.zeros((rc * w, c), f32) + bd                  # conv bias
        for dy in range(3):                                     # K = 3C per dy
            acc = acc + jnp.dot(cat[dy:dy + rc].reshape(rc * w, c3),
                                wd_ref[dy],
                                preferred_element_type=f32)

        # residual 1: x + dcn(norm1(x))
        h = xc_ref[0, pl.ds(r0, rc)].astype(f32).reshape(rc * w, c) + acc

        # --- LN2 + MLP (C -> 4C -> C) + residual 2 ----------------------------
        z = _layer_norm(h, g2, b2).astype(cdt)
        u = jnp.dot(z, w1_ref[...], preferred_element_type=f32) + bb1
        u = _gelu_tanh(u).astype(cdt)
        m = jnp.dot(u, w2_ref[...], preferred_element_type=f32) + bb2
        y = h + m

        if lane_dense_out:
            # last dim = W*C (full, >=128-multiple) -> unmasked lane-dense stores
            out_ref[0, pl.ds(r0, rc), :] = y.reshape(rc, w * c).astype(out_ref.dtype)
        else:
            out_ref[0, pl.ds(r0, rc)] = y.reshape(rc, w, c).astype(out_ref.dtype)

    if n_chunks == 1:
        chunk_body(0)
    else:
        # Bound vreg / VMEM pressure of fp32 MLP intermediates at large tiles.
        def loop_body(s, carry):
            chunk_body(pl.multiple_of(s * rc, rc))
            return carry
        jax.lax.fori_loop(0, n_chunks, loop_body, 0, unroll=True)


# --------------------------------------------------------------------------- #
# Tiling / VMEM budgeting helpers
# --------------------------------------------------------------------------- #
def _vmem_budget_bytes():
    """Scoped-VMEM request, generation-aware: ~96 MiB on 128-MiB v5e/v6e,
    <=48 MiB on 64-MiB v7x; conservative fallback if the query is unavailable."""
    try:
        cap = int(pltpu.get_tpu_info().vmem_capacity_bytes)
    except Exception:
        cap = 64 * 1024 * 1024
    return int(min(96 * 1024 * 1024, cap * 3 // 4))


def _pick_chunk_rows(th, W, C, hid):
    """Rows per inner chunk: keep the fp32 (rows*W, hid) MLP intermediate small."""
    limit = 4 * 1024 * 1024
    best = 1
    for rc in range(1, th + 1):
        if th % rc == 0 and rc * W * max(hid, 3 * C) * 4 <= limit:
            best = rc
    return best


def _estimate_vmem_bytes(th, rc, W, C, hid, in_b, out_b, wbufs):
    blocks = 2 * (th * W * C * (in_b + out_b) + 2 * W * C * in_b)  # dbl-buffered I/O
    ln = (th + 2) * W * C * 2                                      # bf16 scratch
    weights = wbufs * ((9 * C * C + 2 * C * hid) * 2 + (5 * C + hid) * 4)
    live = (rc + 2) * W * C * 16 + rc * W * (6 * hid + 16 * C)     # chunk temporaries
    return blocks + ln + weights + live


def _pick_tile_h(H, W, C, hid, in_b, out_b, budget, wbufs):
    """Largest divisor of H (multiple of 8, or H itself) within the VMEM budget."""
    cands = sorted({d for d in range(1, H + 1)
                    if H % d == 0 and (d % 8 == 0 or d == H)}, reverse=True)
    for th in cands:
        rc = _pick_chunk_rows(th, W, C, hid)
        if _estimate_vmem_bytes(th, rc, W, C, hid, in_b, out_b, wbufs) <= budget:
            return th, rc
    th = cands[-1]
    return th, _pick_chunk_rows(th, W, C, hid)


# --------------------------------------------------------------------------- #
# Wrapper
# --------------------------------------------------------------------------- #
def _run(x, params, *, tile_h, lane_dense_out, weight_buffer_count):
    N, H, W, C = x.shape
    hid = params["fc1_w"].shape[1]
    f32, bf16 = jnp.float32, jnp.bfloat16
    io_dt = x.dtype                      # pass bf16 x to halve HBM traffic
    in_b = out_b = jnp.dtype(io_dt).itemsize

    vmem_limit = _vmem_budget_bytes()
    wbufs = 2 if weight_buffer_count is None else weight_buffer_count
    if (tile_h is not None and H % tile_h == 0
            and (tile_h % 8 == 0 or tile_h == H)):
        th = tile_h
        rc = _pick_chunk_rows(th, W, C, hid)
    else:
        th, rc = _pick_tile_h(H, W, C, hid, in_b, out_b,
                              int(vmem_limit * 0.7), wbufs)
    n_tiles = H // th

    # matmul weights in bf16 (MXU-native); the three dx taps of each ky row are
    # folded into a single K=3C contraction:  (3, 3, C, C) -> (3, 3C, C).
    wd = params["dcn_w"].astype(bf16).reshape(3, 3 * C, C)
    w1 = params["fc1_w"].astype(bf16)
    w2 = params["fc2_w"].astype(bf16)
    g1 = params["ln1_g"].reshape(1, C).astype(f32)
    b1 = params["ln1_b"].reshape(1, C).astype(f32)
    bd = params["dcn_b"].reshape(1, C).astype(f32)
    g2 = params["ln2_g"].reshape(1, C).astype(f32)
    b2 = params["ln2_b"].reshape(1, C).astype(f32)
    bb1 = params["fc1_b"].reshape(1, hid).astype(f32)
    bb2 = params["fc2_b"].reshape(1, C).astype(f32)

    def const_spec(shape):
        nd = len(shape)

        def imap(n, i):
            return (0,) * nd

        if weight_buffer_count is None:
            return pl.BlockSpec(shape, imap)
        # constant-index weights: no double buffering (saves VMEM, esp. on v7x)
        return pl.BlockSpec(shape, imap,
                            pipeline_mode=pl.Buffered(weight_buffer_count))

    in_specs = [
        # x: top halo row / centre rows / bottom halo row (clamped at borders;
        # border halo rows are zero-masked inside the kernel).
        pl.BlockSpec((1, 1, W, C),
                     lambda n, i: (n, jnp.maximum(i * th - 1, 0), 0, 0)),
        pl.BlockSpec((1, th, W, C), lambda n, i: (n, i, 0, 0)),
        pl.BlockSpec((1, 1, W, C),
                     lambda n, i: (n, jnp.minimum((i + 1) * th, H - 1), 0, 0)),
        const_spec((1, C)), const_spec((1, C)),          # LN1 gamma/beta
        const_spec((3, 3 * C, C)), const_spec((1, C)),   # conv weight (K-folded)/bias
        const_spec((1, C)), const_spec((1, C)),          # LN2 gamma/beta
        const_spec((C, hid)), const_spec((1, hid)),      # fc1
        const_spec((hid, C)), const_spec((1, C)),        # fc2
    ]

    if lane_dense_out:
        out_shape = jax.ShapeDtypeStruct((N, H, W * C), io_dt)
        out_spec = pl.BlockSpec((1, th, W * C), lambda n, i: (n, i, 0))
    else:
        out_shape = jax.ShapeDtypeStruct((N, H, W, C), io_dt)
        out_spec = pl.BlockSpec((1, th, W, C), lambda n, i: (n, i, 0, 0))

    call_kwargs = {}
    if hasattr(pl, "CostEstimate"):
        flops = 2 * N * H * W * (9 * C * C + 2 * C * hid)
        transcendentals = N * H * W * hid               # tanh in GELU
        wbytes = (9 * C * C + 2 * C * hid) * 2 + (5 * C + hid) * 4
        bytes_accessed = (N * H * W * C * (in_b + out_b)
                          + 2 * N * n_tiles * W * C * in_b
                          + N * n_tiles * wbytes)
        call_kwargs["cost_estimate"] = pl.CostEstimate(
            flops=flops, transcendentals=transcendentals,
            bytes_accessed=bytes_accessed)

    kernel = functools.partial(_intern_layer_kernel,
                               chunk_rows=rc, lane_dense_out=lane_dense_out)
    out = pl.pallas_call(
        kernel,
        out_shape=out_shape,
        grid=(N, n_tiles),
        in_specs=in_specs,
        out_specs=out_spec,
        scratch_shapes=[pltpu.VMEM((th + 2, W, C), bf16)],
        compiler_params=pltpu.CompilerParams(
            dimension_semantics=("parallel", "parallel"),
            vmem_limit_bytes=vmem_limit),
        **call_kwargs,
    )(x, x, x, g1, b1, wd, bd, g2, b2, w1, bb1, w2, bb2)

    if lane_dense_out:
        out = out.reshape(N, H, W, C)
    return out


_CONFIG_LADDER = (
    dict(lane_dense_out=True, weight_buffer_count=1),
    dict(lane_dense_out=True, weight_buffer_count=None),
    dict(lane_dense_out=False, weight_buffer_count=1),
    dict(lane_dense_out=False, weight_buffer_count=None),
)
_WORKING_CONFIG = None


def intern_image_layer_forward(x, params, *, tile_h=None):
    """InternImageLayer forward (default config) on channels_last x: (N,H,W,C).

    Tries the most optimized configuration first (lane-dense output layout,
    single-buffered constant weights) and falls back if the installed
    JAX/Mosaic build does not support a feature (pl.Buffered / minor-dim
    reshape).  Call eagerly so fallbacks can be applied.
    """
    global _WORKING_CONFIG
    if _WORKING_CONFIG is not None:
        return _run(x, params, tile_h=tile_h, **_WORKING_CONFIG)
    err = None
    for cfg in _CONFIG_LADDER:
        try:
            out = _run(x, params, tile_h=tile_h, **cfg)
            _WORKING_CONFIG = cfg
            return out
        except Exception as e:  # unsupported feature on this JAX/Mosaic version
            err = e
    raise err


# --------------------------------------------------------------------------- #
# Pure-JAX reference (same dense-conv DCNv3 stand-in), params, demo
# --------------------------------------------------------------------------- #
def _reference_forward(x, params):
    f32 = jnp.float32
    x = x.astype(f32)

    def ln(v, g, b):
        mu = jnp.mean(v, axis=-1, keepdims=True)
        var = jnp.mean((v - mu) ** 2, axis=-1, keepdims=True)
        return (v - mu) * jax.lax.rsqrt(var + _LN_EPS) * g.reshape(-1) + b.reshape(-1)

    y = ln(x, params["ln1_g"], params["ln1_b"])
    conv = jax.lax.conv_general_dilated(
        y, params["dcn_w"].astype(f32), window_strides=(1, 1), padding="SAME",
        dimension_numbers=("NHWC", "HWIO", "NHWC")) + params["dcn_b"].reshape(-1)
    x = x + conv
    z = ln(x, params["ln2_g"], params["ln2_b"])
    u = _gelu_tanh(z @ params["fc1_w"] + params["fc1_b"].reshape(-1))
    return x + (u @ params["fc2_w"] + params["fc2_b"].reshape(-1))


def init_params(key, c, mlp_ratio=4.0):
    hid = int(c * mlp_ratio)
    ks = jax.random.split(key, 10)
    s = 0.05
    n = jax.random.normal
    f = jnp.float32
    return {
        "ln1_g": 1.0 + s * n(ks[0], (1, c), f), "ln1_b": s * n(ks[1], (1, c), f),
        "dcn_w": s * n(ks[2], (3, 3, c, c), f), "dcn_b": s * n(ks[3], (1, c), f),
        "ln2_g": 1.0 + s * n(ks[4], (1, c), f), "ln2_b": s * n(ks[5], (1, c), f),
        "fc1_w": s * n(ks[6], (c, hid), f), "fc1_b": s * n(ks[7], (1, hid), f),
        "fc2_w": s * n(ks[8], (hid, c), f), "fc2_b": s * n(ks[9], (1, c), f),
    }


if __name__ == "__main__":
    key = jax.random.PRNGKey(0)
    kx, kp = jax.random.split(key)

    # channels_last, InternImage-style: batch=2, 16x16 spatial, 64 channels
    N, H, W, C = 2, 16, 16, 64
    GROUPS = 4  # TODO(synk): unused by the dense-conv DCNv3 stand-in
    x = jax.random.normal(kx, (N, H, W, C), jnp.float32)
    params = init_params(kp, C, mlp_ratio=4.0)

    out = jax.block_until_ready(intern_image_layer_forward(x, params))
    assert out.shape == (N, H, W, C), out.shape
    assert bool(jnp.all(jnp.isfinite(out)))

    # numerical check against a pure-JAX fp32 reference (bf16-matmul tolerance)
    ref = _reference_forward(x, params)
    max_err = float(jnp.max(jnp.abs(out.astype(jnp.float32) - ref)))
    assert max_err < 0.3, f"max abs error vs reference: {max_err}"
    print("KERNEL_OK")
</pallas_src>

<mosaic_0001>
module attributes {stable_mosaic.version = 11 : i64} {
  func.func @_intern_layer_kernel(%arg0: i32, %arg1: i32, %arg2: memref<1x1x16x64xf32, #tpu.memory_space<vmem>>, %arg3: memref<1x16x16x64xf32, #tpu.memory_space<vmem>>, %arg4: memref<1x1x16x64xf32, #tpu.memory_space<vmem>>, %arg5: memref<1x64xf32, #tpu.memory_space<vmem>>, %arg6: memref<1x64xf32, #tpu.memory_space<vmem>>, %arg7: memref<3x192x64xbf16, #tpu.memory_space<vmem>>, %arg8: memref<1x64xf32, #tpu.memory_space<vmem>>, %arg9: memref<1x64xf32, #tpu.memory_space<vmem>>, %arg10: memref<1x64xf32, #tpu.memory_space<vmem>>, %arg11: memref<64x256xbf16, #tpu.memory_space<vmem>>, %arg12: memref<1x256xf32, #tpu.memory_space<vmem>>, %arg13: memref<256x64xbf16, #tpu.memory_space<vmem>>, %arg14: memref<1x64xf32, #tpu.memory_space<vmem>>, %arg15: memref<1x16x1024xf32, #tpu.memory_space<vmem>>, %arg16: memref<18x16x64xbf16, #tpu.memory_space<vmem>>) attributes {dimension_semantics = [#tpu.dimension_semantics<parallel>, #tpu.dimension_semantics<parallel>], iteration_bounds = array<i64: 2, 1>, scalar_prefetch = 0 : i64, scratch_operands = 1 : i64, tpu.core_type = #tpu.core_type<tc>, window_params = [{transform_indices = @transform_0, window_bounds = array<i64: 1, 1, 16, 64>}, {transform_indices = @transform_1, window_bounds = array<i64: 1, 16, 16, 64>}, {transform_indices = @transform_2, window_bounds = array<i64: 1, 1, 16, 64>}, {pipeline_mode = #tpu.pipeline_mode<synchronous>, transform_indices = @transform_3, window_bounds = array<i64: 1, 64>}, {pipeline_mode = #tpu.pipeline_mode<synchronous>, transform_indices = @transform_4, window_bounds = array<i64: 1, 64>}, {pipeline_mode = #tpu.pipeline_mode<synchronous>, transform_indices = @transform_5, window_bounds = array<i64: 3, 192, 64>}, {pipeline_mode = #tpu.pipeline_mode<synchronous>, transform_indices = @transform_6, window_bounds = array<i64: 1, 64>}, {pipeline_mode = #tpu.pipeline_mode<synchronous>, transform_indices = @transform_7, window_bounds = array<i64: 1, 64>}, {pipeline_mode = #tpu.pipeline_mode<synchronous>, transform_indices = @transform_8, window_bounds = array<i64: 1, 64>}, {pipeline_mode = #tpu.pipeline_mode<synchronous>, transform_indices = @transform_9, window_bounds = array<i64: 64, 256>}, {pipeline_mode = #tpu.pipeline_mode<synchronous>, transform_indices = @transform_10, window_bounds = array<i64: 1, 256>}, {pipeline_mode = #tpu.pipeline_mode<synchronous>, transform_indices = @transform_11, window_bounds = array<i64: 256, 64>}, {pipeline_mode = #tpu.pipeline_mode<synchronous>, transform_indices = @transform_12, window_bounds = array<i64: 1, 64>}, {transform_indices = @transform_13, window_bounds = array<i64: 1, 16, 1024>}]} {
    %c0 = arith.constant 0 : index
    %c0_0 = arith.constant 0 : index
    %0 = vector.load %arg5[%c0, %c0_0] : memref<1x64xf32, #tpu.memory_space<vmem>>, vector<1x64xf32>
    %c0_1 = arith.constant 0 : index
    %c0_2 = arith.constant 0 : index
    %1 = vector.load %arg6[%c0_1, %c0_2] : memref<1x64xf32, #tpu.memory_space<vmem>>, vector<1x64xf32>
    %c0_3 = arith.constant 0 : index
    %c0_4 = arith.constant 0 : index
    %c0_5 = arith.constant 0 : index
    %c0_6 = arith.constant 0 : index
    %2 = vector.load %arg3[%c0_3, %c0_4, %c0_5, %c0_6] : memref<1x16x16x64xf32, #tpu.memory_space<vmem>>, vector<1x16x16x64xf32>
    %3 = vector.shape_cast %2 : vector<1x16x16x64xf32> to vector<16x16x64xf32>
    %cst = arith.constant dense<0.000000e+00> : vector<16x16xf32>
    %4 = vector.multi_reduction <add>, %3, %cst [2] : vector<16x16x64xf32> to vector<16x16xf32>
    %5 = vector.shape_cast %4 : vector<16x16xf32> to vector<16x16x1xf32>
    %cst_7 = arith.constant 6.400000e+01 : f32
    %6 = vector.broadcast %cst_7 : f32 to vector<16x16x1xf32>
    %7 = arith.divf %5, %6 : vector<16x16x1xf32>
    %8 = vector.broadcast %7 : vector<16x16x1xf32> to vector<16x16x64xf32>
    %9 = arith.subf %3, %8 : vector<16x16x64xf32>
    %10 = arith.mulf %9, %9 : vector<16x16x64xf32>
    %cst_8 = arith.constant dense<0.000000e+00> : vector<16x16xf32>
    %11 = vector.multi_reduction <add>, %10, %cst_8 [2] : vector<16x16x64xf32> to vector<16x16xf32>
    %12 = vector.shape_cast %11 : vector<16x16xf32> to vector<16x16x1xf32>
    %cst_9 = arith.constant 6.400000e+01 : f32
    %13 = vector.broadcast %cst_9 : f32 to vector<16x16x1xf32>
    %14 = arith.divf %12, %13 : vector<16x16x1xf32>
    %cst_10 = arith.constant 9.99999997E-7 : f32
    %15 = vector.broadcast %cst_10 : f32 to vector<16x16x1xf32>
    %16 = arith.addf %14, %15 : vector<16x16x1xf32>
    %17 = math.rsqrt %16 : vector<16x16x1xf32>
    %18 = vector.broadcast %17 : vector<16x16x1xf32> to vector<16x16x64xf32>
    %19 = arith.mulf %9, %18 : vector<16x16x64xf32>
    %20 = vector.shape_cast %0 : vector<1x64xf32> to vector<1x1x64xf32>
    %21 = vector.broadcast %20 : vector<1x1x64xf32> to vector<16x16x64xf32>
    %22 = arith.mulf %19, %21 : vector<16x16x64xf32>
    %23 = vector.shape_cast %1 : vector<1x64xf32> to vector<1x1x64xf32>
    %24 = vector.broadcast %23 : vector<1x1x64xf32> to vector<16x16x64xf32>
    %25 = arith.addf %22, %24 : vector<16x16x64xf32>
    %26 = arith.truncf %25 : vector<16x16x64xf32> to vector<16x16x64xbf16>
    %c1 = arith.constant 1 : index
    %c0_11 = arith.constant 0 : index
    %c0_12 = arith.constant 0 : index
    %27 = vector.load %arg16[%c1, %c0_11, %c0_12] : memref<18x16x64xbf16, #tpu.memory_space<vmem>>, vector<16x16x64xbf16>
    tpu.vector_store %arg16[%c1, %c0_11, %c0_12], %26 {strides = array<i32>} : memref<18x16x64xbf16, #tpu.memory_space<vmem>>, vector<16x16x64xbf16>,
    %c0_i32 = arith.constant 0 : i32
    %28 = arith.cmpi sgt, %arg1, %c0_i32 : i32
    %cst_13 = arith.constant 1.000000e+00 : f32
    %cst_14 = arith.constant 0.000000e+00 : f32
    %29 = arith.select %28, %cst_13, %cst_14 : f32
    %c0_i32_15 = arith.constant 0 : i32
    %30 = arith.cmpi slt, %arg1, %c0_i32_15 : i32
    %cst_16 = arith.constant 1.000000e+00 : f32
    %cst_17 = arith.constant 0.000000e+00 : f32
    %31 = arith.select %30, %cst_16, %cst_17 : f32
    %c0_18 = arith.constant 0 : index
    %c0_19 = arith.constant 0 : index
    %c0_20 = arith.constant 0 : index
    %c0_21 = arith.constant 0 : index
    %32 = vector.load %arg2[%c0_18, %c0_19, %c0_20, %c0_21] : memref<1x1x16x64xf32, #tpu.memory_space<vmem>>, vector<1x1x16x64xf32>
    %33 = vector.shape_cast %32 : vector<1x1x16x64xf32> to vector<1x16x64xf32>
    %cst_22 = arith.constant dense<0.000000e+00> : vector<1x16xf32>
    %34 = vector.multi_reduction <add>, %33, %cst_22 [2] : vector<1x16x64xf32> to vector<1x16xf32>
    %35 = vector.shape_cast %34 : vector<1x16xf32> to vector<1x16x1xf32>
    %cst_23 = arith.constant 6.400000e+01 : f32
    %36 = vector.broadcast %cst_23 : f32 to vector<1x16x1xf32>
    %37 = arith.divf %35, %36 : vector<1x16x1xf32>
    %38 = vector.broadcast %37 : vector<1x16x1xf32> to vector<1x16x64xf32>
    %39 = arith.subf %33, %38 : vector<1x16x64xf32>
    %40 = arith.mulf %39, %39 : vector<1x16x64xf32>
    %cst_24 = arith.constant dense<0.000000e+00> : vector<1x16xf32>
    %41 = vector.multi_reduction <add>, %40, %cst_24 [2] : vector<1x16x64xf32> to vector<1x16xf32>
    %42 = vector.shape_cast %41 : vector<1x16xf32> to vector<1x16x1xf32>
    %cst_25 = arith.constant 6.400000e+01 : f32
    %43 = vector.broadcast %cst_25 : f32 to vector<1x16x1xf32>
    %44 = arith.divf %42, %43 : vector<1x16x1xf32>
    %cst_26 = arith.constant 9.99999997E-7 : f32
    %45 = vector.broadcast %cst_26 : f32 to vector<1x16x1xf32>
    %46 = arith.addf %44, %45 : vector<1x16x1xf32>
    %47 = math.rsqrt %46 : vector<1x16x1xf32>
    %48 = vector.broadcast %47 : vector<1x16x1xf32> to vector<1x16x64xf32>
    %49 = arith.mulf %39, %48 : vector<1x16x64xf32>
    %50 = vector.shape_cast %0 : vector<1x64xf32> to vector<1x1x64xf32>
    %51 = vector.broadcast %50 : vector<1x1x64xf32> to vector<1x16x64xf32>
    %52 = arith.mulf %49, %51 : vector<1x16x64xf32>
    %53 = vector.shape_cast %1 : vector<1x64xf32> to vector<1x1x64xf32>
    %54 = vector.broadcast %53 : vector<1x1x64xf32> to vector<1x16x64xf32>
    %55 = arith.addf %52, %54 : vector<1x16x64xf32>
    %56 = vector.broadcast %29 : f32 to vector<1x16x64xf32>
    %57 = arith.mulf %55, %56 : vector<1x16x64xf32>
    %58 = arith.truncf %57 : vector<1x16x64xf32> to vector<1x16x64xbf16>
    %c0_27 = arith.constant 0 : index
    %c0_28 = arith.constant 0 : index
    %c0_29 = arith.constant 0 : index
    %59 = vector.load %arg16[%c0_27, %c0_28, %c0_29] : memref<18x16x64xbf16, #tpu.memory_space<vmem>>, vector<1x16x64xbf16>
    tpu.vector_store %arg16[%c0_27, %c0_28, %c0_29], %58 {strides = array<i32>} : memref<18x16x64xbf16, #tpu.memory_space<vmem>>, vector<1x16x64xbf16>,
    %c0_30 = arith.constant 0 : index
    %c0_31 = arith.constant 0 : index
    %c0_32 = arith.constant 0 : index
    %c0_33 = arith.constant 0 : index
    %60 = vector.load %arg4[%c0_30, %c0_31, %c0_32, %c0_33] : memref<1x1x16x64xf32, #tpu.memory_space<vmem>>, vector<1x1x16x64xf32>
    %61 = vector.shape_cast %60 : vector<1x1x16x64xf32> to vector<1x16x64xf32>
    %cst_34 = arith.constant dense<0.000000e+00> : vector<1x16xf32>
    %62 = vector.multi_reduction <add>, %61, %cst_34 [2] : vector<1x16x64xf32> to vector<1x16xf32>
    %63 = vector.shape_cast %62 : vector<1x16xf32> to vector<1x16x1xf32>
    %cst_35 = arith.constant 6.400000e+01 : f32
    %64 = vector.broadcast %cst_35 : f32 to vector<1x16x1xf32>
    %65 = arith.divf %63, %64 : vector<1x16x1xf32>
    %66 = vector.broadcast %65 : vector<1x16x1xf32> to vector<1x16x64xf32>
    %67 = arith.subf %61, %66 : vector<1x16x64xf32>
    %68 = arith.mulf %67, %67 : vector<1x16x64xf32>
    %cst_36 = arith.constant dense<0.000000e+00> : vector<1x16xf32>
    %69 = vector.multi_reduction <add>, %68, %cst_36 [2] : vector<1x16x64xf32> to vector<1x16xf32>
    %70 = vector.shape_cast %69 : vector<1x16xf32> to vector<1x16x1xf32>
    %cst_37 = arith.constant 6.400000e+01 : f32
    %71 = vector.broadcast %cst_37 : f32 to vector<1x16x1xf32>
    %72 = arith.divf %70, %71 : vector<1x16x1xf32>
    %cst_38 = arith.constant 9.99999997E-7 : f32
    %73 = vector.broadcast %cst_38 : f32 to vector<1x16x1xf32>
    %74 = arith.addf %72, %73 : vector<1x16x1xf32>
    %75 = math.rsqrt %74 : vector<1x16x1xf32>
    %76 = vector.broadcast %75 : vector<1x16x1xf32> to vector<1x16x64xf32>
    %77 = arith.mulf %67, %76 : vector<1x16x64xf32>
    %78 = vector.shape_cast %0 : vector<1x64xf32> to vector<1x1x64xf32>
    %79 = vector.broadcast %78 : vector<1x1x64xf32> to vector<1x16x64xf32>
    %80 = arith.mulf %77, %79 : vector<1x16x64xf32>
    %81 = vector.shape_cast %1 : vector<1x64xf32> to vector<1x1x64xf32>
    %82 = vector.broadcast %81 : vector<1x1x64xf32> to vector<1x16x64xf32>
    %83 = arith.addf %80, %82 : vector<1x16x64xf32>
    %84 = vector.broadcast %31 : f32 to vector<1x16x64xf32>
    %85 = arith.mulf %83, %84 : vector<1x16x64xf32>
    %86 = arith.truncf %85 : vector<1x16x64xf32> to vector<1x16x64xbf16>
    %c17 = arith.constant 17 : index
    %c0_39 = arith.constant 0 : index
    %c0_40 = arith.constant 0 : index
    %87 = vector.load %arg16[%c17, %c0_39, %c0_40] : memref<18x16x64xbf16, #tpu.memory_space<vmem>>, vector<1x16x64xbf16>
    tpu.vector_store %arg16[%c17, %c0_39, %c0_40], %86 {strides = array<i32>} : memref<18x16x64xbf16, #tpu.memory_space<vmem>>, vector<1x16x64xbf16>,
    %88 = tpu.iota {dimensions = array<i32: 1>} : vector<18x16x64xi32>
    %c0_i32_41 = arith.constant 0 : i32
    %89 = vector.broadcast %c0_i32_41 : i32 to vector<18x16x64xi32>
    %90 = arith.cmpi sgt, %88, %89 : vector<18x16x64xi32>
    %c15_i32 = arith.constant 15 : i32
    %91 = vector.broadcast %c15_i32 : i32 to vector<18x16x64xi32>
    %92 = arith.cmpi slt, %88, %91 : vector<18x16x64xi32>
    %c0_42 = arith.constant 0 : index
    %c0_43 = arith.constant 0 : index
    %93 = vector.load %arg9[%c0_42, %c0_43] : memref<1x64xf32, #tpu.memory_space<vmem>>, vector<1x64xf32>
    %c0_44 = arith.constant 0 : index
    %c0_45 = arith.constant 0 : index
    %94 = vector.load %arg10[%c0_44, %c0_45] : memref<1x64xf32, #tpu.memory_space<vmem>>, vector<1x64xf32>
    %c0_46 = arith.constant 0 : index
    %c0_47 = arith.constant 0 : index
    %95 = vector.load %arg8[%c0_46, %c0_47] : memref<1x64xf32, #tpu.memory_space<vmem>>, vector<1x64xf32>
    %c0_48 = arith.constant 0 : index
    %c0_49 = arith.constant 0 : index
    %96 = vector.load %arg12[%c0_48, %c0_49] : memref<1x256xf32, #tpu.memory_space<vmem>>, vector<1x256xf32>
    %c0_50 = arith.constant 0 : index
    %c0_51 = arith.constant 0 : index
    %97 = vector.load %arg14[%c0_50, %c0_51] : memref<1x64xf32, #tpu.memory_space<vmem>>, vector<1x64xf32>
    %c0_52 = arith.constant 0 : index
    %c0_53 = arith.constant 0 : index
    %c0_54 = arith.constant 0 : index
    %98 = vector.load %arg16[%c0_52, %c0_53, %c0_54] : memref<18x16x64xbf16, #tpu.memory_space<vmem>>, vector<18x16x64xbf16>
    %99 = arith.extf %98 : vector<18x16x64xbf16> to vector<18x16x64xf32>
    %c1_i32 = arith.constant 1 : i32
    %100 = tpu.dynamic_rotate %99 by %c1_i32 dim 1 : vector<18x16x64xf32>, i32 -> vector<18x16x64xf32>
    %cst_55 = arith.constant 0.000000e+00 : f32
    %101 = vector.broadcast %cst_55 : f32 to vector<18x16x64xf32>
    %102 = arith.select %90, %100, %101 : vector<18x16x64xi1>, vector<18x16x64xf32>
    %c15_i32_56 = arith.constant 15 : i32
    %103 = tpu.dynamic_rotate %99 by %c15_i32_56 dim 1 : vector<18x16x64xf32>, i32 -> vector<18x16x64xf32>
    %cst_57 = arith.constant 0.000000e+00 : f32
    %104 = vector.broadcast %cst_57 : f32 to vector<18x16x64xf32>
    %105 = arith.select %92, %103, %104 : vector<18x16x64xi1>, vector<18x16x64xf32>
    %106 = arith.truncf %102 : vector<18x16x64xf32> to vector<18x16x64xbf16>
    %107 = arith.truncf %99 : vector<18x16x64xf32> to vector<18x16x64xbf16>
    %108 = arith.truncf %105 : vector<18x16x64xf32> to vector<18x16x64xbf16>
    %109 = tpu.concatenate %106, %107, %108 in 2 : vector<18x16x64xbf16>, vector<18x16x64xbf16>, vector<18x16x64xbf16> -> vector<18x16x192xbf16>
    %cst_58 = arith.constant 0.000000e+00 : f32
    %110 = vector.broadcast %cst_58 : f32 to vector<256x64xf32>
    %111 = vector.broadcast %95 : vector<1x64xf32> to vector<256x64xf32>
    %112 = arith.addf %110, %111 : vector<256x64xf32>
    %113 = vector.extract_strided_slice %109 {offsets = [0, 0, 0], sizes = [16, 16, 192], strides = [1, 1, 1]} : vector<18x16x192xbf16> to vector<16x16x192xbf16>
    %114 = vector.shape_cast %113 : vector<16x16x192xbf16> to vector<256x192xbf16>
    %c0_59 = arith.constant 0 : index
    %c0_60 = arith.constant 0 : index
    %c0_61 = arith.constant 0 : index
    %115 = vector.load %arg7[%c0_59, %c0_60, %c0_61] : memref<3x192x64xbf16, #tpu.memory_space<vmem>>, vector<1x192x64xbf16>
    %116 = vector.shape_cast %115 : vector<1x192x64xbf16> to vector<192x64xbf16>
    %cst_62 = arith.constant dense<0.000000e+00> : vector<256x64xf32>
    %117 = tpu.matmul %114, %116, %cst_62 {dimension_numbers = #tpu.dot_dimension_numbers<[1], [0], [0], [1], [0, 0, 1, 1], [], []>} : vector<256x192xbf16>, vector<192x64xbf16>, vector<256x64xf32> -> vector<256x64xf32>
    %118 = arith.addf %112, %117 : vector<256x64xf32>
    %119 = vector.extract_strided_slice %109 {offsets = [1, 0, 0], sizes = [16, 16, 192], strides = [1, 1, 1]} : vector<18x16x192xbf16> to vector<16x16x192xbf16>
    %120 = vector.shape_cast %119 : vector<16x16x192xbf16> to vector<256x192xbf16>
    %c1_63 = arith.constant 1 : index
    %c0_64 = arith.constant 0 : index
    %c0_65 = arith.constant 0 : index
    %121 = vector.load %arg7[%c1_63, %c0_64, %c0_65] : memref<3x192x64xbf16, #tpu.memory_space<vmem>>, vector<1x192x64xbf16>
    %122 = vector.shape_cast %121 : vector<1x192x64xbf16> to vector<192x64xbf16>
    %cst_66 = arith.constant dense<0.000000e+00> : vector<256x64xf32>
    %123 = tpu.matmul %120, %122, %cst_66 {dimension_numbers = #tpu.dot_dimension_numbers<[1], [0], [0], [1], [0, 0, 1, 1], [], []>} : vector<256x192xbf16>, vector<192x64xbf16>, vector<256x64xf32> -> vector<256x64xf32>
    %124 = arith.addf %118, %123 : vector<256x64xf32>
    %125 = vector.extract_strided_slice %109 {offsets = [2, 0, 0], sizes = [16, 16, 192], strides = [1, 1, 1]} : vector<18x16x192xbf16> to vector<16x16x192xbf16>
    %126 = vector.shape_cast %125 : vector<16x16x192xbf16> to vector<256x192xbf16>
    %c2 = arith.constant 2 : index
    %c0_67 = arith.constant 0 : index
    %c0_68 = arith.constant 0 : index
    %127 = vector.load %arg7[%c2, %c0_67, %c0_68] : memref<3x192x64xbf16, #tpu.memory_space<vmem>>, vector<1x192x64xbf16>
    %128 = vector.shape_cast %127 : vector<1x192x64xbf16> to vector<192x64xbf16>
    %cst_69 = arith.constant dense<0.000000e+00> : vector<256x64xf32>
    %129 = tpu.matmul %126, %128, %cst_69 {dimension_numbers = #tpu.dot_dimension_numbers<[1], [0], [0], [1], [0, 0, 1, 1], [], []>} : vector<256x192xbf16>, vector<192x64xbf16>, vector<256x64xf32> -> vector<256x64xf32>
    %130 = arith.addf %124, %129 : vector<256x64xf32>
    %c0_70 = arith.constant 0 : index
    %c0_71 = arith.constant 0 : index
    %c0_72 = arith.constant 0 : index
    %c0_73 = arith.constant 0 : index
    %131 = vector.load %arg3[%c0_70, %c0_71, %c0_72, %c0_73] : memref<1x16x16x64xf32, #tpu.memory_space<vmem>>, vector<1x16x16x64xf32>
    %132 = vector.shape_cast %131 : vector<1x16x16x64xf32> to vector<16x16x64xf32>
    %133 = vector.shape_cast %132 : vector<16x16x64xf32> to vector<256x64xf32>
    %134 = arith.addf %133, %130 : vector<256x64xf32>
    %cst_74 = arith.constant dense<0.000000e+00> : vector<256xf32>
    %135 = vector.multi_reduction <add>, %134, %cst_74 [1] : vector<256x64xf32> to vector<256xf32>
    %136 = vector.shape_cast %135 : vector<256xf32> to vector<256x1xf32>
    %cst_75 = arith.constant 6.400000e+01 : f32
    %137 = vector.broadcast %cst_75 : f32 to vector<256x1xf32>
    %138 = arith.divf %136, %137 : vector<256x1xf32>
    %139 = vector.broadcast %138 : vector<256x1xf32> to vector<256x64xf32>
    %140 = arith.subf %134, %139 : vector<256x64xf32>
    %141 = arith.mulf %140, %140 : vector<256x64xf32>
    %cst_76 = arith.constant dense<0.000000e+00> : vector<256xf32>
    %142 = vector.multi_reduction <add>, %141, %cst_76 [1] : vector<256x64xf32> to vector<256xf32>
    %143 = vector.shape_cast %142 : vector<256xf32> to vector<256x1xf32>
    %cst_77 = arith.constant 6.400000e+01 : f32
    %144 = vector.broadcast %cst_77 : f32 to vector<256x1xf32>
    %145 = arith.divf %143, %144 : vector<256x1xf32>
    %cst_78 = arith.constant 9.99999997E-7 : f32
    %146 = vector.broadcast %cst_78 : f32 to vector<256x1xf32>
    %147 = arith.addf %145, %146 : vector<256x1xf32>
    %148 = math.rsqrt %147 : vector<256x1xf32>
    %149 = vector.broadcast %148 : vector<256x1xf32> to vector<256x64xf32>
    %150 = arith.mulf %140, %149 : vector<256x64xf32>
    %151 = vector.broadcast %93 : vector<1x64xf32> to vector<256x64xf32>
    %152 = arith.mulf %150, %151 : vector<256x64xf32>
    %153 = vector.broadcast %94 : vector<1x64xf32> to vector<256x64xf32>
    %154 = arith.addf %152, %153 : vector<256x64xf32>
    %155 = arith.truncf %154 : vector<256x64xf32> to vector<256x64xbf16>
    %c0_79 = arith.constant 0 : index
    %c0_80 = arith.constant 0 : index
    %156 = vector.load %arg11[%c0_79, %c0_80] : memref<64x256xbf16, #tpu.memory_space<vmem>>, vector<64x256xbf16>
    %cst_81 = arith.constant dense<0.000000e+00> : vector<256x256xf32>
    %157 = tpu.matmul %155, %156, %cst_81 {dimension_numbers = #tpu.dot_dimension_numbers<[1], [0], [0], [1], [0, 0, 1, 1], [], []>} : vector<256x64xbf16>, vector<64x256xbf16>, vector<256x256xf32> -> vector<256x256xf32>
    %158 = vector.broadcast %96 : vector<1x256xf32> to vector<256x256xf32>
    %159 = arith.addf %157, %158 : vector<256x256xf32>
    %cst_82 = arith.constant 5.000000e-01 : f32
    %160 = vector.broadcast %cst_82 : f32 to vector<256x256xf32>
    %161 = arith.mulf %160, %159 : vector<256x256xf32>
    %cst_83 = arith.constant 4.471500e-02 : f32
    %162 = vector.broadcast %cst_83 : f32 to vector<256x256xf32>
    %163 = arith.mulf %162, %159 : vector<256x256xf32>
    %164 = arith.mulf %163, %159 : vector<256x256xf32>
    %165 = arith.mulf %164, %159 : vector<256x256xf32>
    %166 = arith.addf %159, %165 : vector<256x256xf32>
    %cst_84 = arith.constant 0.797884583 : f32
    %167 = vector.broadcast %cst_84 : f32 to vector<256x256xf32>
    %168 = arith.mulf %167, %166 : vector<256x256xf32>
    %169 = math.tanh %168 : vector<256x256xf32>
    %cst_85 = arith.constant 1.000000e+00 : f32
    %170 = vector.broadcast %cst_85 : f32 to vector<256x256xf32>
    %171 = arith.addf %170, %169 : vector<256x256xf32>
    %172 = arith.mulf %161, %171 : vector<256x256xf32>
    %173 = arith.truncf %172 : vector<256x256xf32> to vector<256x256xbf16>
    %c0_86 = arith.constant 0 : index
    %c0_87 = arith.constant 0 : index
    %174 = vector.load %arg13[%c0_86, %c0_87] : memref<256x64xbf16, #tpu.memory_space<vmem>>, vector<256x64xbf16>
    %cst_88 = arith.constant dense<0.000000e+00> : vector<256x64xf32>
    %175 = tpu.matmul %173, %174, %cst_88 {dimension_numbers = #tpu.dot_dimension_numbers<[1], [0], [0], [1], [0, 0, 1, 1], [], []>} : vector<256x256xbf16>, vector<256x64xbf16>, vector<256x64xf32> -> vector<256x64xf32>
    %176 = vector.broadcast %97 : vector<1x64xf32> to vector<256x64xf32>
    %177 = arith.addf %175, %176 : vector<256x64xf32>
    %178 = arith.addf %134, %177 : vector<256x64xf32>
    %179 = vector.shape_cast %178 : vector<256x64xf32> to vector<16x1024xf32>
    %c0_89 = arith.constant 0 : index
    %c0_90 = arith.constant 0 : index
    %c0_91 = arith.constant 0 : index
    %180 = vector.load %arg15[%c0_89, %c0_90, %c0_91] : memref<1x16x1024xf32, #tpu.memory_space<vmem>>, vector<1x16x1024xf32>
    %181 = vector.shape_cast %180 : vector<1x16x1024xf32> to vector<16x1024xf32>
    %182 = vector.shape_cast %179 : vector<16x1024xf32> to vector<1x16x1024xf32>
    tpu.vector_store %arg15[%c0_89, %c0_90, %c0_91], %182 {strides = array<i32>} : memref<1x16x1024xf32, #tpu.memory_space<vmem>>, vector<1x16x1024xf32>,
    return
  }
  func.func @transform_0(%arg0: i32, %arg1: i32) -> (i32, i32, i32, i32) {
    %c16_i32 = arith.constant 16 : i32
    %0 = arith.muli %arg1, %c16_i32 : i32
    %c1_i32 = arith.constant 1 : i32
    %1 = arith.subi %0, %c1_i32 : i32
    %c0_i32 = arith.constant 0 : i32
    %2 = arith.maxsi %1, %c0_i32 : i32
    %c0_i32_0 = arith.constant 0 : i32
    %c0_i32_1 = arith.constant 0 : i32
    %c0_i32_2 = arith.constant 0 : i32
    return %arg0, %2, %c0_i32_0, %c0_i32_1 : i32, i32, i32, i32
  }
  func.func @transform_1(%arg0: i32, %arg1: i32) -> (i32, i32, i32, i32) {
    %c0_i32 = arith.constant 0 : i32
    %c0_i32_0 = arith.constant 0 : i32
    %c0_i32_1 = arith.constant 0 : i32
    return %arg0, %arg1, %c0_i32, %c0_i32_0 : i32, i32, i32, i32
  }
  func.func @transform_2(%arg0: i32, %arg1: i32) -> (i32, i32, i32, i32) {
    %c1_i32 = arith.constant 1 : i32
    %0 = arith.addi %arg1, %c1_i32 : i32
    %c16_i32 = arith.constant 16 : i32
    %1 = arith.muli %0, %c16_i32 : i32
    %c15_i32 = arith.constant 15 : i32
    %2 = arith.minsi %1, %c15_i32 : i32
    %c0_i32 = arith.constant 0 : i32
    %c0_i32_0 = arith.constant 0 : i32
    %c0_i32_1 = arith.constant 0 : i32
    return %arg0, %2, %c0_i32, %c0_i32_0 : i32, i32, i32, i32
  }
  func.func @transform_3(%arg0: i32, %arg1: i32) -> (i32, i32) {
    %c0_i32 = arith.constant 0 : i32
    %c0_i32_0 = arith.constant 0 : i32
    %c0_i32_1 = arith.constant 0 : i32
    return %c0_i32, %c0_i32_0 : i32, i32
  }
  func.func @transform_4(%arg0: i32, %arg1: i32) -> (i32, i32) {
    %c0_i32 = arith.constant 0 : i32
    %c0_i32_0 = arith.constant 0 : i32
    %c0_i32_1 = arith.constant 0 : i32
    return %c0_i32, %c0_i32_0 : i32, i32
  }
  func.func @transform_5(%arg0: i32, %arg1: i32) -> (i32, i32, i32) {
    %c0_i32 = arith.constant 0 : i32
    %c0_i32_0 = arith.constant 0 : i32
    %c0_i32_1 = arith.constant 0 : i32
    %c0_i32_2 = arith.constant 0 : i32
    return %c0_i32, %c0_i32_0, %c0_i32_1 : i32, i32, i32
  }
  func.func @transform_6(%arg0: i32, %arg1: i32) -> (i32, i32) {
    %c0_i32 = arith.constant 0 : i32
    %c0_i32_0 = arith.constant 0 : i32
    %c0_i32_1 = arith.constant 0 : i32
    return %c0_i32, %c0_i32_0 : i32, i32
  }
  func.func @transform_7(%arg0: i32, %arg1: i32) -> (i32, i32) {
    %c0_i32 = arith.constant 0 : i32
    %c0_i32_0 = arith.constant 0 : i32
    %c0_i32_1 = arith.constant 0 : i32
    return %c0_i32, %c0_i32_0 : i32, i32
  }
  func.func @transform_8(%arg0: i32, %arg1: i32) -> (i32, i32) {
    %c0_i32 = arith.constant 0 : i32
    %c0_i32_0 = arith.constant 0 : i32
    %c0_i32_1 = arith.constant 0 : i32
    return %c0_i32, %c0_i32_0 : i32, i32
  }
  func.func @transform_9(%arg0: i32, %arg1: i32) -> (i32, i32) {
    %c0_i32 = arith.constant 0 : i32
    %c0_i32_0 = arith.constant 0 : i32
    %c0_i32_1 = arith.constant 0 : i32
    return %c0_i32, %c0_i32_0 : i32, i32
  }
  func.func @transform_10(%arg0: i32, %arg1: i32) -> (i32, i32) {
    %c0_i32 = arith.constant 0 : i32
    %c0_i32_0 = arith.constant 0 : i32
    %c0_i32_1 = arith.constant 0 : i32
    return %c0_i32, %c0_i32_0 : i32, i32
  }
  func.func @transform_11(%arg0: i32, %arg1: i32) -> (i32, i32) {
    %c0_i32 = arith.constant 0 : i32
    %c0_i32_0 = arith.constant 0 : i32
    %c0_i32_1 = arith.constant 0 : i32
    return %c0_i32, %c0_i32_0 : i32, i32
  }
  func.func @transform_12(%arg0: i32, %arg1: i32) -> (i32, i32) {
    %c0_i32 = arith.constant 0 : i32
    %c0_i32_0 = arith.constant 0 : i32
    %c0_i32_1 = arith.constant 0 : i32
    return %c0_i32, %c0_i32_0 : i32, i32
  }
  func.func @transform_13(%arg0: i32, %arg1: i32) -> (i32, i32, i32) {
    %c0_i32 = arith.constant 0 : i32
    %c0_i32_0 = arith.constant 0 : i32
    return %arg0, %arg1, %c0_i32 : i32, i32, i32
  }
}

module attributes {stable_mosaic.version = 11 : i64} {
  func.func @_intern_layer_kernel(%arg0: i32, %arg1: i32, %arg2: memref<1x1x16x64xf32, #tpu.memory_space<vmem>>, %arg3: memref<1x16x16x64xf32, #tpu.memory_space<vmem>>, %arg4: memref<1x1x16x64xf32, #tpu.memory_space<vmem>>, %arg5: memref<1x64xf32, #tpu.memory_space<vmem>>, %arg6: memref<1x64xf32, #tpu.memory_space<vmem>>, %arg7: memref<3x192x64xbf16, #tpu.memory_space<vmem>>, %arg8: memref<1x64xf32, #tpu.memory_space<vmem>>, %arg9: memref<1x64xf32, #tpu.memory_space<vmem>>, %arg10: memref<1x64xf32, #tpu.memory_space<vmem>>, %arg11: memref<64x256xbf16, #tpu.memory_space<vmem>>, %arg12: memref<1x256xf32, #tpu.memory_space<vmem>>, %arg13: memref<256x64xbf16, #tpu.memory_space<vmem>>, %arg14: memref<1x64xf32, #tpu.memory_space<vmem>>, %arg15: memref<1x16x1024xf32, #tpu.memory_space<vmem>>, %arg16: memref<18x16x64xbf16, #tpu.memory_space<vmem>>) attributes {dimension_semantics = [#tpu.dimension_semantics<parallel>, #tpu.dimension_semantics<parallel>], iteration_bounds = array<i64: 2, 1>, scalar_prefetch = 0 : i64, scratch_operands = 1 : i64, tpu.core_type = #tpu.core_type<tc>, window_params = [{transform_indices = @transform_0, window_bounds = array<i64: 1, 1, 16, 64>}, {transform_indices = @transform_1, window_bounds = array<i64: 1, 16, 16, 64>}, {transform_indices = @transform_2, window_bounds = array<i64: 1, 1, 16, 64>}, {pipeline_mode = #tpu.pipeline_mode<synchronous>, transform_indices = @transform_3, window_bounds = array<i64: 1, 64>}, {pipeline_mode = #tpu.pipeline_mode<synchronous>, transform_indices = @transform_4, window_bounds = array<i64: 1, 64>}, {pipeline_mode = #tpu.pipeline_mode<synchronous>, transform_indices = @transform_5, window_bounds = array<i64: 3, 192, 64>}, {pipeline_mode = #tpu.pipeline_mode<synchronous>, transform_indices = @transform_6, window_bounds = array<i64: 1, 64>}, {pipeline_mode = #tpu.pipeline_mode<synchronous>, transform_indices = @transform_7, window_bounds = array<i64: 1, 64>}, {pipeline_mode = #tpu.pipeline_mode<synchronous>, transform_indices = @transform_8, window_bounds = array<i64: 1, 64>}, {pipeline_mode = #tpu.pipeline_mode<synchronous>, transform_indices = @transform_9, window_bounds = array<i64: 64, 256>}, {pipeline_mode = #tpu.pipeline_mode<synchronous>, transform_indices = @transform_10, window_bounds = array<i64: 1, 256>}, {pipeline_mode = #tpu.pipeline_mode<synchronous>, transform_indices = @transform_11, window_bounds = array<i64: 256, 64>}, {pipeline_mode = #tpu.pipeline_mode<synchronous>, transform_indices = @transform_12, window_bounds = array<i64: 1, 64>}, {transform_indices = @transform_13, window_bounds = array<i64: 1, 16, 1024>}]} {
    %c0 = arith.constant 0 : index
    %c0_0 = arith.constant 0 : index
    %0 = vector.load %arg5[%c0, %c0_0] : memref<1x64xf32, #tpu.memory_space<vmem>>, vector<1x64xf32>
    %c0_1 = arith.constant 0 : index
    %c0_2 = arith.constant 0 : index
    %1 = vector.load %arg6[%c0_1, %c0_2] : memref<1x64xf32, #tpu.memory_space<vmem>>, vector<1x64xf32>
    %c0_3 = arith.constant 0 : index
    %c0_4 = arith.constant 0 : index
    %c0_5 = arith.constant 0 : index
    %c0_6 = arith.constant 0 : index
    %2 = vector.load %arg3[%c0_3, %c0_4, %c0_5, %c0_6] : memref<1x16x16x64xf32, #tpu.memory_space<vmem>>, vector<1x16x16x64xf32>
    %3 = vector.shape_cast %2 : vector<1x16x16x64xf32> to vector<16x16x64xf32>
    %cst = arith.constant dense<0.000000e+00> : vector<16x16xf32>
    %4 = vector.multi_reduction <add>, %3, %cst [2] : vector<16x16x64xf32> to vector<16x16xf32>
    %5 = vector.shape_cast %4 : vector<16x16xf32> to vector<16x16x1xf32>
    %cst_7 = arith.constant 6.400000e+01 : f32
    %6 = vector.broadcast %cst_7 : f32 to vector<16x16x1xf32>
    %7 = arith.divf %5, %6 : vector<16x16x1xf32>
    %8 = vector.broadcast %7 : vector<16x16x1xf32> to vector<16x16x64xf32>
    %9 = arith.subf %3, %8 : vector<16x16x64xf32>
    %10 = arith.mulf %9, %9 : vector<16x16x64xf32>
    %cst_8 = arith.constant dense<0.000000e+00> : vector<16x16xf32>
    %11 = vector.multi_reduction <add>, %10, %cst_8 [2] : vector<16x16x64xf32> to vector<16x16xf32>
    %12 = vector.shape_cast %11 : vector<16x16xf32> to vector<16x16x1xf32>
    %cst_9 = arith.constant 6.400000e+01 : f32
    %13 = vector.broadcast %cst_9 : f32 to vector<16x16x1xf32>
    %14 = arith.divf %12, %13 : vector<16x16x1xf32>
    %cst_10 = arith.constant 9.99999997E-7 : f32
    %15 = vector.broadcast %cst_10 : f32 to vector<16x16x1xf32>
    %16 = arith.addf %14, %15 : vector<16x16x1xf32>
    %17 = math.rsqrt %16 : vector<16x16x1xf32>
    %18 = vector.broadcast %17 : vector<16x16x1xf32> to vector<16x16x64xf32>
    %19 = arith.mulf %9, %18 : vector<16x16x64xf32>
    %20 = vector.shape_cast %0 : vector<1x64xf32> to vector<1x1x64xf32>
    %21 = vector.broadcast %20 : vector<1x1x64xf32> to vector<16x16x64xf32>
    %22 = arith.mulf %19, %21 : vector<16x16x64xf32>
    %23 = vector.shape_cast %1 : vector<1x64xf32> to vector<1x1x64xf32>
    %24 = vector.broadcast %23 : vector<1x1x64xf32> to vector<16x16x64xf32>
    %25 = arith.addf %22, %24 : vector<16x16x64xf32>
    %26 = arith.truncf %25 : vector<16x16x64xf32> to vector<16x16x64xbf16>
    %c1 = arith.constant 1 : index
    %c0_11 = arith.constant 0 : index
    %c0_12 = arith.constant 0 : index
    %27 = vector.load %arg16[%c1, %c0_11, %c0_12] : memref<18x16x64xbf16, #tpu.memory_space<vmem>>, vector<16x16x64xbf16>
    tpu.vector_store %arg16[%c1, %c0_11, %c0_12], %26 {strides = array<i32>} : memref<18x16x64xbf16, #tpu.memory_space<vmem>>, vector<16x16x64xbf16>,
    %c0_i32 = arith.constant 0 : i32
    %28 = arith.cmpi sgt, %arg1, %c0_i32 : i32
    %cst_13 = arith.constant 1.000000e+00 : f32
    %cst_14 = arith.constant 0.000000e+00 : f32
    %29 = arith.select %28, %cst_13, %cst_14 : f32
    %c0_i32_15 = arith.constant 0 : i32
    %30 = arith.cmpi slt, %arg1, %c0_i32_15 : i32
    %cst_16 = arith.constant 1.000000e+00 : f32
    %cst_17 = arith.constant 0.000000e+00 : f32
    %31 = arith.select %30, %cst_16, %cst_17 : f32
    %c0_18 = arith.constant 0 : index
    %c0_19 = arith.constant 0 : index
    %c0_20 = arith.constant 0 : index
    %c0_21 = arith.constant 0 : index
    %32 = vector.load %arg2[%c0_18, %c0_19, %c0_20, %c0_21] : memref<1x1x16x64xf32, #tpu.memory_space<vmem>>, vector<1x1x16x64xf32>
    %33 = vector.shape_cast %32 : vector<1x1x16x64xf32> to vector<1x16x64xf32>
    %cst_22 = arith.constant dense<0.000000e+00> : vector<1x16xf32>
    %34 = vector.multi_reduction <add>, %33, %cst_22 [2] : vector<1x16x64xf32> to vector<1x16xf32>
    %35 = vector.shape_cast %34 : vector<1x16xf32> to vector<1x16x1xf32>
    %cst_23 = arith.constant 6.400000e+01 : f32
    %36 = vector.broadcast %cst_23 : f32 to vector<1x16x1xf32>
    %37 = arith.divf %35, %36 : vector<1x16x1xf32>
    %38 = vector.broadcast %37 : vector<1x16x1xf32> to vector<1x16x64xf32>
    %39 = arith.subf %33, %38 : vector<1x16x64xf32>
    %40 = arith.mulf %39, %39 : vector<1x16x64xf32>
    %cst_24 = arith.constant dense<0.000000e+00> : vector<1x16xf32>
    %41 = vector.multi_reduction <add>, %40, %cst_24 [2] : vector<1x16x64xf32> to vector<1x16xf32>
    %42 = vector.shape_cast %41 : vector<1x16xf32> to vector<1x16x1xf32>
    %cst_25 = arith.constant 6.400000e+01 : f32
    %43 = vector.broadcast %cst_25 : f32 to vector<1x16x1xf32>
    %44 = arith.divf %42, %43 : vector<1x16x1xf32>
    %cst_26 = arith.constant 9.99999997E-7 : f32
    %45 = vector.broadcast %cst_26 : f32 to vector<1x16x1xf32>
    %46 = arith.addf %44, %45 : vector<1x16x1xf32>
    %47 = math.rsqrt %46 : vector<1x16x1xf32>
    %48 = vector.broadcast %47 : vector<1x16x1xf32> to vector<1x16x64xf32>
    %49 = arith.mulf %39, %48 : vector<1x16x64xf32>
    %50 = vector.shape_cast %0 : vector<1x64xf32> to vector<1x1x64xf32>
    %51 = vector.broadcast %50 : vector<1x1x64xf32> to vector<1x16x64xf32>
    %52 = arith.mulf %49, %51 : vector<1x16x64xf32>
    %53 = vector.shape_cast %1 : vector<1x64xf32> to vector<1x1x64xf32>
    %54 = vector.broadcast %53 : vector<1x1x64xf32> to vector<1x16x64xf32>
    %55 = arith.addf %52, %54 : vector<1x16x64xf32>
    %56 = vector.broadcast %29 : f32 to vector<1x16x64xf32>
    %57 = arith.mulf %55, %56 : vector<1x16x64xf32>
    %58 = arith.truncf %57 : vector<1x16x64xf32> to vector<1x16x64xbf16>
    %c0_27 = arith.constant 0 : index
    %c0_28 = arith.constant 0 : index
    %c0_29 = arith.constant 0 : index
    %59 = vector.load %arg16[%c0_27, %c0_28, %c0_29] : memref<18x16x64xbf16, #tpu.memory_space<vmem>>, vector<1x16x64xbf16>
    tpu.vector_store %arg16[%c0_27, %c0_28, %c0_29], %58 {strides = array<i32>} : memref<18x16x64xbf16, #tpu.memory_space<vmem>>, vector<1x16x64xbf16>,
    %c0_30 = arith.constant 0 : index
    %c0_31 = arith.constant 0 : index
    %c0_32 = arith.constant 0 : index
    %c0_33 = arith.constant 0 : index
    %60 = vector.load %arg4[%c0_30, %c0_31, %c0_32, %c0_33] : memref<1x1x16x64xf32, #tpu.memory_space<vmem>>, vector<1x1x16x64xf32>
    %61 = vector.shape_cast %60 : vector<1x1x16x64xf32> to vector<1x16x64xf32>
    %cst_34 = arith.constant dense<0.000000e+00> : vector<1x16xf32>
    %62 = vector.multi_reduction <add>, %61, %cst_34 [2] : vector<1x16x64xf32> to vector<1x16xf32>
    %63 = vector.shape_cast %62 : vector<1x16xf32> to vector<1x16x1xf32>
    %cst_35 = arith.constant 6.400000e+01 : f32
    %64 = vector.broadcast %cst_35 : f32 to vector<1x16x1xf32>
    %65 = arith.divf %63, %64 : vector<1x16x1xf32>
    %66 = vector.broadcast %65 : vector<1x16x1xf32> to vector<1x16x64xf32>
    %67 = arith.subf %61, %66 : vector<1x16x64xf32>
    %68 = arith.mulf %67, %67 : vector<1x16x64xf32>
    %cst_36 = arith.constant dense<0.000000e+00> : vector<1x16xf32>
    %69 = vector.multi_reduction <add>, %68, %cst_36 [2] : vector<1x16x64xf32> to vector<1x16xf32>
    %70 = vector.shape_cast %69 : vector<1x16xf32> to vector<1x16x1xf32>
    %cst_37 = arith.constant 6.400000e+01 : f32
    %71 = vector.broadcast %cst_37 : f32 to vector<1x16x1xf32>
    %72 = arith.divf %70, %71 : vector<1x16x1xf32>
    %cst_38 = arith.constant 9.99999997E-7 : f32
    %73 = vector.broadcast %cst_38 : f32 to vector<1x16x1xf32>
    %74 = arith.addf %72, %73 : vector<1x16x1xf32>
    %75 = math.rsqrt %74 : vector<1x16x1xf32>
    %76 = vector.broadcast %75 : vector<1x16x1xf32> to vector<1x16x64xf32>
    %77 = arith.mulf %67, %76 : vector<1x16x64xf32>
    %78 = vector.shape_cast %0 : vector<1x64xf32> to vector<1x1x64xf32>
    %79 = vector.broadcast %78 : vector<1x1x64xf32> to vector<1x16x64xf32>
    %80 = arith.mulf %77, %79 : vector<1x16x64xf32>
    %81 = vector.shape_cast %1 : vector<1x64xf32> to vector<1x1x64xf32>
    %82 = vector.broadcast %81 : vector<1x1x64xf32> to vector<1x16x64xf32>
    %83 = arith.addf %80, %82 : vector<1x16x64xf32>
    %84 = vector.broadcast %31 : f32 to vector<1x16x64xf32>
    %85 = arith.mulf %83, %84 : vector<1x16x64xf32>
    %86 = arith.truncf %85 : vector<1x16x64xf32> to vector<1x16x64xbf16>
    %c17 = arith.constant 17 : index
    %c0_39 = arith.constant 0 : index
    %c0_40 = arith.constant 0 : index
    %87 = vector.load %arg16[%c17, %c0_39, %c0_40] : memref<18x16x64xbf16, #tpu.memory_space<vmem>>, vector<1x16x64xbf16>
    tpu.vector_store %arg16[%c17, %c0_39, %c0_40], %86 {strides = array<i32>} : memref<18x16x64xbf16, #tpu.memory_space<vmem>>, vector<1x16x64xbf16>,
    %88 = tpu.iota {dimensions = array<i32: 1>} : vector<18x16x64xi32>
    %c0_i32_41 = arith.constant 0 : i32
    %89 = vector.broadcast %c0_i32_41 : i32 to vector<18x16x64xi32>
    %90 = arith.cmpi sgt, %88, %89 : vector<18x16x64xi32>
    %c15_i32 = arith.constant 15 : i32
    %91 = vector.broadcast %c15_i32 : i32 to vector<18x16x64xi32>
    %92 = arith.cmpi slt, %88, %91 : vector<18x16x64xi32>
    %c0_42 = arith.constant 0 : index
    %c0_43 = arith.constant 0 : index
    %93 = vector.load %arg9[%c0_42, %c0_43] : memref<1x64xf32, #tpu.memory_space<vmem>>, vector<1x64xf32>
    %c0_44 = arith.constant 0 : index
    %c0_45 = arith.constant 0 : index
    %94 = vector.load %arg10[%c0_44, %c0_45] : memref<1x64xf32, #tpu.memory_space<vmem>>, vector<1x64xf32>
    %c0_46 = arith.constant 0 : index
    %c0_47 = arith.constant 0 : index
    %95 = vector.load %arg8[%c0_46, %c0_47] : memref<1x64xf32, #tpu.memory_space<vmem>>, vector<1x64xf32>
    %c0_48 = arith.constant 0 : index
    %c0_49 = arith.constant 0 : index
    %96 = vector.load %arg12[%c0_48, %c0_49] : memref<1x256xf32, #tpu.memory_space<vmem>>, vector<1x256xf32>
    %c0_50 = arith.constant 0 : index
    %c0_51 = arith.constant 0 : index
    %97 = vector.load %arg14[%c0_50, %c0_51] : memref<1x64xf32, #tpu.memory_space<vmem>>, vector<1x64xf32>
    %c0_52 = arith.constant 0 : index
    %c0_53 = arith.constant 0 : index
    %c0_54 = arith.constant 0 : index
    %98 = vector.load %arg16[%c0_52, %c0_53, %c0_54] : memref<18x16x64xbf16, #tpu.memory_space<vmem>>, vector<18x16x64xbf16>
    %99 = arith.extf %98 : vector<18x16x64xbf16> to vector<18x16x64xf32>
    %c1_i32 = arith.constant 1 : i32
    %100 = tpu.dynamic_rotate %99 by %c1_i32 dim 1 : vector<18x16x64xf32>, i32 -> vector<18x16x64xf32>
    %cst_55 = arith.constant 0.000000e+00 : f32
    %101 = vector.broadcast %cst_55 : f32 to vector<18x16x64xf32>
    %102 = arith.select %90, %100, %101 : vector<18x16x64xi1>, vector<18x16x64xf32>
    %c15_i32_56 = arith.constant 15 : i32
    %103 = tpu.dynamic_rotate %99 by %c15_i32_56 dim 1 : vector<18x16x64xf32>, i32 -> vector<18x16x64xf32>
    %cst_57 = arith.constant 0.000000e+00 : f32
    %104 = vector.broadcast %cst_57 : f32 to vector<18x16x64xf32>
    %105 = arith.select %92, %103, %104 : vector<18x16x64xi1>, vector<18x16x64xf32>
    %106 = arith.truncf %102 : vector<18x16x64xf32> to vector<18x16x64xbf16>
    %107 = arith.truncf %99 : vector<18x16x64xf32> to vector<18x16x64xbf16>
    %108 = arith.truncf %105 : vector<18x16x64xf32> to vector<18x16x64xbf16>
    %109 = tpu.concatenate %106, %107, %108 in 2 : vector<18x16x64xbf16>, vector<18x16x64xbf16>, vector<18x16x64xbf16> -> vector<18x16x192xbf16>
    %cst_58 = arith.constant 0.000000e+00 : f32
    %110 = vector.broadcast %cst_58 : f32 to vector<256x64xf32>
    %111 = vector.broadcast %95 : vector<1x64xf32> to vector<256x64xf32>
    %112 = arith.addf %110, %111 : vector<256x64xf32>
    %113 = vector.extract_strided_slice %109 {offsets = [0, 0, 0], sizes = [16, 16, 192], strides = [1, 1, 1]} : vector<18x16x192xbf16> to vector<16x16x192xbf16>
    %114 = vector.shape_cast %113 : vector<16x16x192xbf16> to vector<256x192xbf16>
    %c0_59 = arith.constant 0 : index
    %c0_60 = arith.constant 0 : index
    %c0_61 = arith.constant 0 : index
    %115 = vector.load %arg7[%c0_59, %c0_60, %c0_61] : memref<3x192x64xbf16, #tpu.memory_space<vmem>>, vector<1x192x64xbf16>
    %116 = vector.shape_cast %115 : vector<1x192x64xbf16> to vector<192x64xbf16>
    %cst_62 = arith.constant dense<0.000000e+00> : vector<256x64xf32>
    %117 = tpu.matmul %114, %116, %cst_62 {dimension_numbers = #tpu.dot_dimension_numbers<[1], [0], [0], [1], [0, 0, 1, 1], [], []>} : vector<256x192xbf16>, vector<192x64xbf16>, vector<256x64xf32> -> vector<256x64xf32>
    %118 = arith.addf %112, %117 : vector<256x64xf32>
    %119 = vector.extract_strided_slice %109 {offsets = [1, 0, 0], sizes = [16, 16, 192], strides = [1, 1, 1]} : vector<18x16x192xbf16> to vector<16x16x192xbf16>
    %120 = vector.shape_cast %119 : vector<16x16x192xbf16> to vector<256x192xbf16>
    %c1_63 = arith.constant 1 : index
    %c0_64 = arith.constant 0 : index
    %c0_65 = arith.constant 0 : index
    %121 = vector.load %arg7[%c1_63, %c0_64, %c0_65] : memref<3x192x64xbf16, #tpu.memory_space<vmem>>, vector<1x192x64xbf16>
    %122 = vector.shape_cast %121 : vector<1x192x64xbf16> to vector<192x64xbf16>
    %cst_66 = arith.constant dense<0.000000e+00> : vector<256x64xf32>
    %123 = tpu.matmul %120, %122, %cst_66 {dimension_numbers = #tpu.dot_dimension_numbers<[1], [0], [0], [1], [0, 0, 1, 1], [], []>} : vector<256x192xbf16>, vector<192x64xbf16>, vector<256x64xf32> -> vector<256x64xf32>
    %124 = arith.addf %118, %123 : vector<256x64xf32>
    %125 = vector.extract_strided_slice %109 {offsets = [2, 0, 0], sizes = [16, 16, 192], strides = [1, 1, 1]} : vector<18x16x192xbf16> to vector<16x16x192xbf16>
    %126 = vector.shape_cast %125 : vector<16x16x192xbf16> to vector<256x192xbf16>
    %c2 = arith.constant 2 : index
    %c0_67 = arith.constant 0 : index
    %c0_68 = arith.constant 0 : index
    %127 = vector.load %arg7[%c2, %c0_67, %c0_68] : memref<3x192x64xbf16, #tpu.memory_space<vmem>>, vector<1x192x64xbf16>
    %128 = vector.shape_cast %127 : vector<1x192x64xbf16> to vector<192x64xbf16>
    %cst_69 = arith.constant dense<0.000000e+00> : vector<256x64xf32>
    %129 = tpu.matmul %126, %128, %cst_69 {dimension_numbers = #tpu.dot_dimension_numbers<[1], [0], [0], [1], [0, 0, 1, 1], [], []>} : vector<256x192xbf16>, vector<192x64xbf16>, vector<256x64xf32> -> vector<256x64xf32>
    %130 = arith.addf %124, %129 : vector<256x64xf32>
    %c0_70 = arith.constant 0 : index
    %c0_71 = arith.constant 0 : index
    %c0_72 = arith.constant 0 : index
    %c0_73 = arith.constant 0 : index
    %131 = vector.load %arg3[%c0_70, %c0_71, %c0_72, %c0_73] : memref<1x16x16x64xf32, #tpu.memory_space<vmem>>, vector<1x16x16x64xf32>
    %132 = vector.shape_cast %131 : vector<1x16x16x64xf32> to vector<16x16x64xf32>
    %133 = vector.shape_cast %132 : vector<16x16x64xf32> to vector<256x64xf32>
    %134 = arith.addf %133, %130 : vector<256x64xf32>
    %cst_74 = arith.constant dense<0.000000e+00> : vector<256xf32>
    %135 = vector.multi_reduction <add>, %134, %cst_74 [1] : vector<256x64xf32> to vector<256xf32>
    %136 = vector.shape_cast %135 : vector<256xf32> to vector<256x1xf32>
    %cst_75 = arith.constant 6.400000e+01 : f32
    %137 = vector.broadcast %cst_75 : f32 to vector<256x1xf32>
    %138 = arith.divf %136, %137 : vector<256x1xf32>
    %139 = vector.broadcast %138 : vector<256x1xf32> to vector<256x64xf32>
    %140 = arith.subf %134, %139 : vector<256x64xf32>
    %141 = arith.mulf %140, %140 : vector<256x64xf32>
    %cst_76 = arith.constant dense<0.000000e+00> : vector<256xf32>
    %142 = vector.multi_reduction <add>, %141, %cst_76 [1] : vector<256x64xf32> to vector<256xf32>
    %143 = vector.shape_cast %142 : vector<256xf32> to vector<256x1xf32>
    %cst_77 = arith.constant 6.400000e+01 : f32
    %144 = vector.broadcast %cst_77 : f32 to vector<256x1xf32>
    %145 = arith.divf %143, %144 : vector<256x1xf32>
    %cst_78 = arith.constant 9.99999997E-7 : f32
    %146 = vector.broadcast %cst_78 : f32 to vector<256x1xf32>
    %147 = arith.addf %145, %146 : vector<256x1xf32>
    %148 = math.rsqrt %147 : vector<256x1xf32>
    %149 = vector.broadcast %148 : vector<256x1xf32> to vector<256x64xf32>
    %150 = arith.mulf %140, %149 : vector<256x64xf32>
    %151 = vector.broadcast %93 : vector<1x64xf32> to vector<256x64xf32>
    %152 = arith.mulf %150, %151 : vector<256x64xf32>
    %153 = vector.broadcast %94 : vector<1x64xf32> to vector<256x64xf32>
    %154 = arith.addf %152, %153 : vector<256x64xf32>
    %155 = arith.truncf %154 : vector<256x64xf32> to vector<256x64xbf16>
    %c0_79 = arith.constant 0 : index
    %c0_80 = arith.constant 0 : index
    %156 = vector.load %arg11[%c0_79, %c0_80] : memref<64x256xbf16, #tpu.memory_space<vmem>>, vector<64x256xbf16>
    %cst_81 = arith.constant dense<0.000000e+00> : vector<256x256xf32>
    %157 = tpu.matmul %155, %156, %cst_81 {dimension_numbers = #tpu.dot_dimension_numbers<[1], [0], [0], [1], [0, 0, 1, 1], [], []>} : vector<256x64xbf16>, vector<64x256xbf16>, vector<256x256xf32> -> vector<256x256xf32>
    %158 = vector.broadcast %96 : vector<1x256xf32> to vector<256x256xf32>
    %159 = arith.addf %157, %158 : vector<256x256xf32>
    %cst_82 = arith.constant 5.000000e-01 : f32
    %160 = vector.broadcast %cst_82 : f32 to vector<256x256xf32>
    %161 = arith.mulf %160, %159 : vector<256x256xf32>
    %cst_83 = arith.constant 4.471500e-02 : f32
    %162 = vector.broadcast %cst_83 : f32 to vector<256x256xf32>
    %163 = arith.mulf %162, %159 : vector<256x256xf32>
    %164 = arith.mulf %163, %159 : vector<256x256xf32>
    %165 = arith.mulf %164, %159 : vector<256x256xf32>
    %166 = arith.addf %159, %165 : vector<256x256xf32>
    %cst_84 = arith.constant 0.797884583 : f32
    %167 = vector.broadcast %cst_84 : f32 to vector<256x256xf32>
    %168 = arith.mulf %167, %166 : vector<256x256xf32>
    %169 = math.tanh %168 : vector<256x256xf32>
    %cst_85 = arith.constant 1.000000e+00 : f32
    %170 = vector.broadcast %cst_85 : f32 to vector<256x256xf32>
    %171 = arith.addf %170, %169 : vector<256x256xf32>
    %172 = arith.mulf %161, %171 : vector<256x256xf32>
    %173 = arith.truncf %172 : vector<256x256xf32> to vector<256x256xbf16>
    %c0_86 = arith.constant 0 : index
    %c0_87 = arith.constant 0 : index
    %174 = vector.load %arg13[%c0_86, %c0_87] : memref<256x64xbf16, #tpu.memory_space<vmem>>, vector<256x64xbf16>
    %cst_88 = arith.constant dense<0.000000e+00> : vector<256x64xf32>
    %175 = tpu.matmul %173, %174, %cst_88 {dimension_numbers = #tpu.dot_dimension_numbers<[1], [0], [0], [1], [0, 0, 1, 1], [], []>} : vector<256x256xbf16>, vector<256x64xbf16>, vector<256x64xf32> -> vector<256x64xf32>
    %176 = vector.broadcast %97 : vector<1x64xf32> to vector<256x64xf32>
    %177 = arith.addf %175, %176 : vector<256x64xf32>
    %178 = arith.addf %134, %177 : vector<256x64xf32>
    %179 = vector.shape_cast %178 : vector<256x64xf32> to vector<16x1024xf32>
    %c0_89 = arith.constant 0 : index
    %c0_90 = arith.constant 0 : index
    %c0_91 = arith.constant 0 : index
    %180 = vector.load %arg15[%c0_89, %c0_90, %c0_91] : memref<1x16x1024xf32, #tpu.memory_space<vmem>>, vector<1x16x1024xf32>
    %181 = vector.shape_cast %180 : vector<1x16x1024xf32> to vector<16x1024xf32>
    %182 = vector.shape_cast %179 : vector<16x1024xf32> to vector<1x16x1024xf32>
    tpu.vector_store %arg15[%c0_89, %c0_90, %c0_91], %182 {strides = array<i32>} : memref<1x16x1024xf32, #tpu.memory_space<vmem>>, vector<1x16x1024xf32>,
    return
  }
  func.func @transform_0(%arg0: i32, %arg1: i32) -> (i32, i32, i32, i32) {
    %c16_i32 = arith.constant 16 : i32
    %0 = arith.muli %arg1, %c16_i32 : i32
    %c1_i32 = arith.constant 1 : i32
    %1 = arith.subi %0, %c1_i32 : i32
    %c0_i32 = arith.constant 0 : i32
    %2 = arith.maxsi %1, %c0_i32 : i32
    %c0_i32_0 = arith.constant 0 : i32
    %c0_i32_1 = arith.constant 0 : i32
    %c0_i32_2 = arith.constant 0 : i32
    return %arg0, %2, %c0_i32_0, %c0_i32_1 : i32, i32, i32, i32
  }
  func.func @transform_1(%arg0: i32, %arg1: i32) -> (i32, i32, i32, i32) {
    %c0_i32 = arith.constant 0 : i32
    %c0_i32_0 = arith.constant 0 : i32
    %c0_i32_1 = arith.constant 0 : i32
    return %arg0, %arg1, %c0_i32, %c0_i32_0 : i32, i32, i32, i32
  }
  func.func @transform_2(%arg0: i32, %arg1: i32) -> (i32, i32, i32, i32) {
    %c1_i32 = arith.constant 1 : i32
    %0 = arith.addi %arg1, %c1_i32 : i32
    %c16_i32 = arith.constant 16 : i32
    %1 = arith.muli %0, %c16_i32 : i32
    %c15_i32 = arith.constant 15 : i32
    %2 = arith.minsi %1, %c15_i32 : i32
    %c0_i32 = arith.constant 0 : i32
    %c0_i32_0 = arith.constant 0 : i32
    %c0_i32_1 = arith.constant 0 : i32
    return %arg0, %2, %c0_i32, %c0_i32_0 : i32, i32, i32, i32
  }
  func.func @transform_3(%arg0: i32, %arg1: i32) -> (i32, i32) {
    %c0_i32 = arith.constant 0 : i32
    %c0_i32_0 = arith.constant 0 : i32
    %c0_i32_1 = arith.constant 0 : i32
    return %c0_i32, %c0_i32_0 : i32, i32
  }
  func.func @transform_4(%arg0: i32, %arg1: i32) -> (i32, i32) {
    %c0_i32 = arith.constant 0 : i32
    %c0_i32_0 = arith.constant 0 : i32
    %c0_i32_1 = arith.constant 0 : i32
    return %c0_i32, %c0_i32_0 : i32, i32
  }
  func.func @transform_5(%arg0: i32, %arg1: i32) -> (i32, i32, i32) {
    %c0_i32 = arith.constant 0 : i32
    %c0_i32_0 = arith.constant 0 : i32
    %c0_i32_1 = arith.constant 0 : i32
    %c0_i32_2 = arith.constant 0 : i32
    return %c0_i32, %c0_i32_0, %c0_i32_1 : i32, i32, i32
  }
  func.func @transform_6(%arg0: i32, %arg1: i32) -> (i32, i32) {
    %c0_i32 = arith.constant 0 : i32
    %c0_i32_0 = arith.constant 0 : i32
    %c0_i32_1 = arith.constant 0 : i32
    return %c0_i32, %c0_i32_0 : i32, i32
  }
  func.func @transform_7(%arg0: i32, %arg1: i32) -> (i32, i32) {
    %c0_i32 = arith.constant 0 : i32
    %c0_i32_0 = arith.constant 0 : i32
    %c0_i32_1 = arith.constant 0 : i32
    return %c0_i32, %c0_i32_0 : i32, i32
  }
  func.func @transform_8(%arg0: i32, %arg1: i32) -> (i32, i32) {
    %c0_i32 = arith.constant 0 : i32
    %c0_i32_0 = arith.constant 0 : i32
    %c0_i32_1 = arith.constant 0 : i32
    return %c0_i32, %c0_i32_0 : i32, i32
  }
  func.func @transform_9(%arg0: i32, %arg1: i32) -> (i32, i32) {
    %c0_i32 = arith.constant 0 : i32
    %c0_i32_0 = arith.constant 0 : i32
    %c0_i32_1 = arith.constant 0 : i32
    return %c0_i32, %c0_i32_0 : i32, i32
  }
  func.func @transform_10(%arg0: i32, %arg1: i32) -> (i32, i32) {
    %c0_i32 = arith.constant 0 : i32
    %c0_i32_0 = arith.constant 0 : i32
    %c0_i32_1 = arith.constant 0 : i32
    return %c0_i32, %c0_i32_0 : i32, i32
  }
  func.func @transform_11(%arg0: i32, %arg1: i32) -> (i32, i32) {
    %c0_i32 = arith.constant 0 : i32
    %c0_i32_0 = arith.constant 0 : i32
    %c0_i32_1 = arith.constant 0 : i32
    return %c0_i32, %c0_i32_0 : i32, i32
  }
  func.func @transform_12(%arg0: i32, %arg1: i32) -> (i32, i32) {
    %c0_i32 = arith.constant 0 : i32
    %c0_i32_0 = arith.constant 0 : i32
    %c0_i32_1 = arith.constant 0 : i32
    return %c0_i32, %c0_i32_0 : i32, i32
  }
  func.func @transform_13(%arg0: i32, %arg1: i32) -> (i32, i32, i32) {
    %c0_i32 = arith.constant 0 : i32
    %c0_i32_0 = arith.constant 0 : i32
    return %arg0, %arg1, %c0_i32 : i32, i32, i32
  }
}

module attributes {stable_mosaic.version = 11 : i64} {
  func.func @_intern_layer_kernel(%arg0: i32, %arg1: i32, %arg2: memref<1x1x16x64xf32, #tpu.memory_space<vmem>>, %arg3: memref<1x16x16x64xf32, #tpu.memory_space<vmem>>, %arg4: memref<1x1x16x64xf32, #tpu.memory_space<vmem>>, %arg5: memref<1x64xf32, #tpu.memory_space<vmem>>, %arg6: memref<1x64xf32, #tpu.memory_space<vmem>>, %arg7: memref<3x192x64xbf16, #tpu.memory_space<vmem>>, %arg8: memref<1x64xf32, #tpu.memory_space<vmem>>, %arg9: memref<1x64xf32, #tpu.memory_space<vmem>>, %arg10: memref<1x64xf32, #tpu.memory_space<vmem>>, %arg11: memref<64x256xbf16, #tpu.memory_space<vmem>>, %arg12: memref<1x256xf32, #tpu.memory_space<vmem>>, %arg13: memref<256x64xbf16, #tpu.memory_space<vmem>>, %arg14: memref<1x64xf32, #tpu.memory_space<vmem>>, %arg15: memref<1x16x16x64xf32, #tpu.memory_space<vmem>>, %arg16: memref<18x16x64xbf16, #tpu.memory_space<vmem>>) attributes {dimension_semantics = [#tpu.dimension_semantics<parallel>, #tpu.dimension_semantics<parallel>], iteration_bounds = array<i64: 2, 1>, scalar_prefetch = 0 : i64, scratch_operands = 1 : i64, tpu.core_type = #tpu.core_type<tc>, window_params = [{transform_indices = @transform_0, window_bounds = array<i64: 1, 1, 16, 64>}, {transform_indices = @transform_1, window_bounds = array<i64: 1, 16, 16, 64>}, {transform_indices = @transform_2, window_bounds = array<i64: 1, 1, 16, 64>}, {pipeline_mode = #tpu.pipeline_mode<synchronous>, transform_indices = @transform_3, window_bounds = array<i64: 1, 64>}, {pipeline_mode = #tpu.pipeline_mode<synchronous>, transform_indices = @transform_4, window_bounds = array<i64: 1, 64>}, {pipeline_mode = #tpu.pipeline_mode<synchronous>, transform_indices = @transform_5, window_bounds = array<i64: 3, 192, 64>}, {pipeline_mode = #tpu.pipeline_mode<synchronous>, transform_indices = @transform_6, window_bounds = array<i64: 1, 64>}, {pipeline_mode = #tpu.pipeline_mode<synchronous>, transform_indices = @transform_7, window_bounds = array<i64: 1, 64>}, {pipeline_mode = #tpu.pipeline_mode<synchronous>, transform_indices = @transform_8, window_bounds = array<i64: 1, 64>}, {pipeline_mode = #tpu.pipeline_mode<synchronous>, transform_indices = @transform_9, window_bounds = array<i64: 64, 256>}, {pipeline_mode = #tpu.pipeline_mode<synchronous>, transform_indices = @transform_10, window_bounds = array<i64: 1, 256>}, {pipeline_mode = #tpu.pipeline_mode<synchronous>, transform_indices = @transform_11, window_bounds = array<i64: 256, 64>}, {pipeline_mode = #tpu.pipeline_mode<synchronous>, transform_indices = @transform_12, window_bounds = array<i64: 1, 64>}, {transform_indices = @transform_13, window_bounds = array<i64: 1, 16, 16, 64>}]} {
    %c0 = arith.constant 0 : index
    %c0_0 = arith.constant 0 : index
    %0 = vector.load %arg5[%c0, %c0_0] : memref<1x64xf32, #tpu.memory_space<vmem>>, vector<1x64xf32>
    %c0_1 = arith.constant 0 : index
    %c0_2 = arith.constant 0 : index
    %1 = vector.load %arg6[%c0_1, %c0_2] : memref<1x64xf32, #tpu.memory_space<vmem>>, vector<1x64xf32>
    %c0_3 = arith.constant 0 : index
    %c0_4 = arith.constant 0 : index
    %c0_5 = arith.constant 0 : index
    %c0_6 = arith.constant 0 : index
    %2 = vector.load %arg3[%c0_3, %c0_4, %c0_5, %c0_6] : memref<1x16x16x64xf32, #tpu.memory_space<vmem>>, vector<1x16x16x64xf32>
    %3 = vector.shape_cast %2 : vector<1x16x16x64xf32> to vector<16x16x64xf32>
    %cst = arith.constant dense<0.000000e+00> : vector<16x16xf32>
    %4 = vector.multi_reduction <add>, %3, %cst [2] : vector<16x16x64xf32> to vector<16x16xf32>
    %5 = vector.shape_cast %4 : vector<16x16xf32> to vector<16x16x1xf32>
    %cst_7 = arith.constant 6.400000e+01 : f32
    %6 = vector.broadcast %cst_7 : f32 to vector<16x16x1xf32>
    %7 = arith.divf %5, %6 : vector<16x16x1xf32>
    %8 = vector.broadcast %7 : vector<16x16x1xf32> to vector<16x16x64xf32>
    %9 = arith.subf %3, %8 : vector<16x16x64xf32>
    %10 = arith.mulf %9, %9 : vector<16x16x64xf32>
    %cst_8 = arith.constant dense<0.000000e+00> : vector<16x16xf32>
    %11 = vector.multi_reduction <add>, %10, %cst_8 [2] : vector<16x16x64xf32> to vector<16x16xf32>
    %12 = vector.shape_cast %11 : vector<16x16xf32> to vector<16x16x1xf32>
    %cst_9 = arith.constant 6.400000e+01 : f32
    %13 = vector.broadcast %cst_9 : f32 to vector<16x16x1xf32>
    %14 = arith.divf %12, %13 : vector<16x16x1xf32>
    %cst_10 = arith.constant 9.99999997E-7 : f32
    %15 = vector.broadcast %cst_10 : f32 to vector<16x16x1xf32>
    %16 = arith.addf %14, %15 : vector<16x16x1xf32>
    %17 = math.rsqrt %16 : vector<16x16x1xf32>
    %18 = vector.broadcast %17 : vector<16x16x1xf32> to vector<16x16x64xf32>
    %19 = arith.mulf %9, %18 : vector<16x16x64xf32>
    %20 = vector.shape_cast %0 : vector<1x64xf32> to vector<1x1x64xf32>
    %21 = vector.broadcast %20 : vector<1x1x64xf32> to vector<16x16x64xf32>
    %22 = arith.mulf %19, %21 : vector<16x16x64xf32>
    %23 = vector.shape_cast %1 : vector<1x64xf32> to vector<1x1x64xf32>
    %24 = vector.broadcast %23 : vector<1x1x64xf32> to vector<16x16x64xf32>
    %25 = arith.addf %22, %24 : vector<16x16x64xf32>
    %26 = arith.truncf %25 : vector<16x16x64xf32> to vector<16x16x64xbf16>
    %c1 = arith.constant 1 : index
    %c0_11 = arith.constant 0 : index
    %c0_12 = arith.constant 0 : index
    %27 = vector.load %arg16[%c1, %c0_11, %c0_12] : memref<18x16x64xbf16, #tpu.memory_space<vmem>>, vector<16x16x64xbf16>
    tpu.vector_store %arg16[%c1, %c0_11, %c0_12], %26 {strides = array<i32>} : memref<18x16x64xbf16, #tpu.memory_space<vmem>>, vector<16x16x64xbf16>,
    %c0_i32 = arith.constant 0 : i32
    %28 = arith.cmpi sgt, %arg1, %c0_i32 : i32
    %cst_13 = arith.constant 1.000000e+00 : f32
    %cst_14 = arith.constant 0.000000e+00 : f32
    %29 = arith.select %28, %cst_13, %cst_14 : f32
    %c0_i32_15 = arith.constant 0 : i32
    %30 = arith.cmpi slt, %arg1, %c0_i32_15 : i32
    %cst_16 = arith.constant 1.000000e+00 : f32
    %cst_17 = arith.constant 0.000000e+00 : f32
    %31 = arith.select %30, %cst_16, %cst_17 : f32
    %c0_18 = arith.constant 0 : index
    %c0_19 = arith.constant 0 : index
    %c0_20 = arith.constant 0 : index
    %c0_21 = arith.constant 0 : index
    %32 = vector.load %arg2[%c0_18, %c0_19, %c0_20, %c0_21] : memref<1x1x16x64xf32, #tpu.memory_space<vmem>>, vector<1x1x16x64xf32>
    %33 = vector.shape_cast %32 : vector<1x1x16x64xf32> to vector<1x16x64xf32>
    %cst_22 = arith.constant dense<0.000000e+00> : vector<1x16xf32>
    %34 = vector.multi_reduction <add>, %33, %cst_22 [2] : vector<1x16x64xf32> to vector<1x16xf32>
    %35 = vector.shape_cast %34 : vector<1x16xf32> to vector<1x16x1xf32>
    %cst_23 = arith.constant 6.400000e+01 : f32
    %36 = vector.broadcast %cst_23 : f32 to vector<1x16x1xf32>
    %37 = arith.divf %35, %36 : vector<1x16x1xf32>
    %38 = vector.broadcast %37 : vector<1x16x1xf32> to vector<1x16x64xf32>
    %39 = arith.subf %33, %38 : vector<1x16x64xf32>
    %40 = arith.mulf %39, %39 : vector<1x16x64xf32>
    %cst_24 = arith.constant dense<0.000000e+00> : vector<1x16xf32>
    %41 = vector.multi_reduction <add>, %40, %cst_24 [2] : vector<1x16x64xf32> to vector<1x16xf32>
    %42 = vector.shape_cast %41 : vector<1x16xf32> to vector<1x16x1xf32>
    %cst_25 = arith.constant 6.400000e+01 : f32
    %43 = vector.broadcast %cst_25 : f32 to vector<1x16x1xf32>
    %44 = arith.divf %42, %43 : vector<1x16x1xf32>
    %cst_26 = arith.constant 9.99999997E-7 : f32
    %45 = vector.broadcast %cst_26 : f32 to vector<1x16x1xf32>
    %46 = arith.addf %44, %45 : vector<1x16x1xf32>
    %47 = math.rsqrt %46 : vector<1x16x1xf32>
    %48 = vector.broadcast %47 : vector<1x16x1xf32> to vector<1x16x64xf32>
    %49 = arith.mulf %39, %48 : vector<1x16x64xf32>
    %50 = vector.shape_cast %0 : vector<1x64xf32> to vector<1x1x64xf32>
    %51 = vector.broadcast %50 : vector<1x1x64xf32> to vector<1x16x64xf32>
    %52 = arith.mulf %49, %51 : vector<1x16x64xf32>
    %53 = vector.shape_cast %1 : vector<1x64xf32> to vector<1x1x64xf32>
    %54 = vector.broadcast %53 : vector<1x1x64xf32> to vector<1x16x64xf32>
    %55 = arith.addf %52, %54 : vector<1x16x64xf32>
    %56 = vector.broadcast %29 : f32 to vector<1x16x64xf32>
    %57 = arith.mulf %55, %56 : vector<1x16x64xf32>
    %58 = arith.truncf %57 : vector<1x16x64xf32> to vector<1x16x64xbf16>
    %c0_27 = arith.constant 0 : index
    %c0_28 = arith.constant 0 : index
    %c0_29 = arith.constant 0 : index
    %59 = vector.load %arg16[%c0_27, %c0_28, %c0_29] : memref<18x16x64xbf16, #tpu.memory_space<vmem>>, vector<1x16x64xbf16>
    tpu.vector_store %arg16[%c0_27, %c0_28, %c0_29], %58 {strides = array<i32>} : memref<18x16x64xbf16, #tpu.memory_space<vmem>>, vector<1x16x64xbf16>,
    %c0_30 = arith.constant 0 : index
    %c0_31 = arith.constant 0 : index
    %c0_32 = arith.constant 0 : index
    %c0_33 = arith.constant 0 : index
    %60 = vector.load %arg4[%c0_30, %c0_31, %c0_32, %c0_33] : memref<1x1x16x64xf32, #tpu.memory_space<vmem>>, vector<1x1x16x64xf32>
    %61 = vector.shape_cast %60 : vector<1x1x16x64xf32> to vector<1x16x64xf32>
    %cst_34 = arith.constant dense<0.000000e+00> : vector<1x16xf32>
    %62 = vector.multi_reduction <add>, %61, %cst_34 [2] : vector<1x16x64xf32> to vector<1x16xf32>
    %63 = vector.shape_cast %62 : vector<1x16xf32> to vector<1x16x1xf32>
    %cst_35 = arith.constant 6.400000e+01 : f32
    %64 = vector.broadcast %cst_35 : f32 to vector<1x16x1xf32>
    %65 = arith.divf %63, %64 : vector<1x16x1xf32>
    %66 = vector.broadcast %65 : vector<1x16x1xf32> to vector<1x16x64xf32>
    %67 = arith.subf %61, %66 : vector<1x16x64xf32>
    %68 = arith.mulf %67, %67 : vector<1x16x64xf32>
    %cst_36 = arith.constant dense<0.000000e+00> : vector<1x16xf32>
    %69 = vector.multi_reduction <add>, %68, %cst_36 [2] : vector<1x16x64xf32> to vector<1x16xf32>
    %70 = vector.shape_cast %69 : vector<1x16xf32> to vector<1x16x1xf32>
    %cst_37 = arith.constant 6.400000e+01 : f32
    %71 = vector.broadcast %cst_37 : f32 to vector<1x16x1xf32>
    %72 = arith.divf %70, %71 : vector<1x16x1xf32>
    %cst_38 = arith.constant 9.99999997E-7 : f32
    %73 = vector.broadcast %cst_38 : f32 to vector<1x16x1xf32>
    %74 = arith.addf %72, %73 : vector<1x16x1xf32>
    %75 = math.rsqrt %74 : vector<1x16x1xf32>
    %76 = vector.broadcast %75 : vector<1x16x1xf32> to vector<1x16x64xf32>
    %77 = arith.mulf %67, %76 : vector<1x16x64xf32>
    %78 = vector.shape_cast %0 : vector<1x64xf32> to vector<1x1x64xf32>
    %79 = vector.broadcast %78 : vector<1x1x64xf32> to vector<1x16x64xf32>
    %80 = arith.mulf %77, %79 : vector<1x16x64xf32>
    %81 = vector.shape_cast %1 : vector<1x64xf32> to vector<1x1x64xf32>
    %82 = vector.broadcast %81 : vector<1x1x64xf32> to vector<1x16x64xf32>
    %83 = arith.addf %80, %82 : vector<1x16x64xf32>
    %84 = vector.broadcast %31 : f32 to vector<1x16x64xf32>
    %85 = arith.mulf %83, %84 : vector<1x16x64xf32>
    %86 = arith.truncf %85 : vector<1x16x64xf32> to vector<1x16x64xbf16>
    %c17 = arith.constant 17 : index
    %c0_39 = arith.constant 0 : index
    %c0_40 = arith.constant 0 : index
    %87 = vector.load %arg16[%c17, %c0_39, %c0_40] : memref<18x16x64xbf16, #tpu.memory_space<vmem>>, vector<1x16x64xbf16>
    tpu.vector_store %arg16[%c17, %c0_39, %c0_40], %86 {strides = array<i32>} : memref<18x16x64xbf16, #tpu.memory_space<vmem>>, vector<1x16x64xbf16>,
    %88 = tpu.iota {dimensions = array<i32: 1>} : vector<18x16x64xi32>
    %c0_i32_41 = arith.constant 0 : i32
    %89 = vector.broadcast %c0_i32_41 : i32 to vector<18x16x64xi32>
    %90 = arith.cmpi sgt, %88, %89 : vector<18x16x64xi32>
    %c15_i32 = arith.constant 15 : i32
    %91 = vector.broadcast %c15_i32 : i32 to vector<18x16x64xi32>
    %92 = arith.cmpi slt, %88, %91 : vector<18x16x64xi32>
    %c0_42 = arith.constant 0 : index
    %c0_43 = arith.constant 0 : index
    %93 = vector.load %arg9[%c0_42, %c0_43] : memref<1x64xf32, #tpu.memory_space<vmem>>, vector<1x64xf32>
    %c0_44 = arith.constant 0 : index
    %c0_45 = arith.constant 0 : index
    %94 = vector.load %arg10[%c0_44, %c0_45] : memref<1x64xf32, #tpu.memory_space<vmem>>, vector<1x64xf32>
    %c0_46 = arith.constant 0 : index
    %c0_47 = arith.constant 0 : index
    %95 = vector.load %arg8[%c0_46, %c0_47] : memref<1x64xf32, #tpu.memory_space<vmem>>, vector<1x64xf32>
    %c0_48 = arith.constant 0 : index
    %c0_49 = arith.constant 0 : index
    %96 = vector.load %arg12[%c0_48, %c0_49] : memref<1x256xf32, #tpu.memory_space<vmem>>, vector<1x256xf32>
    %c0_50 = arith.constant 0 : index
    %c0_51 = arith.constant 0 : index
    %97 = vector.load %arg14[%c0_50, %c0_51] : memref<1x64xf32, #tpu.memory_space<vmem>>, vector<1x64xf32>
    %c0_52 = arith.constant 0 : index
    %c0_53 = arith.constant 0 : index
    %c0_54 = arith.constant 0 : index
    %98 = vector.load %arg16[%c0_52, %c0_53, %c0_54] : memref<18x16x64xbf16, #tpu.memory_space<vmem>>, vector<18x16x64xbf16>
    %99 = arith.extf %98 : vector<18x16x64xbf16> to vector<18x16x64xf32>
    %c1_i32 = arith.constant 1 : i32
    %100 = tpu.dynamic_rotate %99 by %c1_i32 dim 1 : vector<18x16x64xf32>, i32 -> vector<18x16x64xf32>
    %cst_55 = arith.constant 0.000000e+00 : f32
    %101 = vector.broadcast %cst_55 : f32 to vector<18x16x64xf32>
    %102 = arith.select %90, %100, %101 : vector<18x16x64xi1>, vector<18x16x64xf32>
    %c15_i32_56 = arith.constant 15 : i32
    %103 = tpu.dynamic_rotate %99 by %c15_i32_56 dim 1 : vector<18x16x64xf32>, i32 -> vector<18x16x64xf32>
    %cst_57 = arith.constant 0.000000e+00 : f32
    %104 = vector.broadcast %cst_57 : f32 to vector<18x16x64xf32>
    %105 = arith.select %92, %103, %104 : vector<18x16x64xi1>, vector<18x16x64xf32>
    %106 = arith.truncf %102 : vector<18x16x64xf32> to vector<18x16x64xbf16>
    %107 = arith.truncf %99 : vector<18x16x64xf32> to vector<18x16x64xbf16>
    %108 = arith.truncf %105 : vector<18x16x64xf32> to vector<18x16x64xbf16>
    %109 = tpu.concatenate %106, %107, %108 in 2 : vector<18x16x64xbf16>, vector<18x16x64xbf16>, vector<18x16x64xbf16> -> vector<18x16x192xbf16>
    %cst_58 = arith.constant 0.000000e+00 : f32
    %110 = vector.broadcast %cst_58 : f32 to vector<256x64xf32>
    %111 = vector.broadcast %95 : vector<1x64xf32> to vector<256x64xf32>
    %112 = arith.addf %110, %111 : vector<256x64xf32>
    %113 = vector.extract_strided_slice %109 {offsets = [0, 0, 0], sizes = [16, 16, 192], strides = [1, 1, 1]} : vector<18x16x192xbf16> to vector<16x16x192xbf16>
    %114 = vector.shape_cast %113 : vector<16x16x192xbf16> to vector<256x192xbf16>
    %c0_59 = arith.constant 0 : index
    %c0_60 = arith.constant 0 : index
    %c0_61 = arith.constant 0 : index
    %115 = vector.load %arg7[%c0_59, %c0_60, %c0_61] : memref<3x192x64xbf16, #tpu.memory_space<vmem>>, vector<1x192x64xbf16>
    %116 = vector.shape_cast %115 : vector<1x192x64xbf16> to vector<192x64xbf16>
    %cst_62 = arith.constant dense<0.000000e+00> : vector<256x64xf32>
    %117 = tpu.matmul %114, %116, %cst_62 {dimension_numbers = #tpu.dot_dimension_numbers<[1], [0], [0], [1], [0, 0, 1, 1], [], []>} : vector<256x192xbf16>, vector<192x64xbf16>, vector<256x64xf32> -> vector<256x64xf32>
    %118 = arith.addf %112, %117 : vector<256x64xf32>
    %119 = vector.extract_strided_slice %109 {offsets = [1, 0, 0], sizes = [16, 16, 192], strides = [1, 1, 1]} : vector<18x16x192xbf16> to vector<16x16x192xbf16>
    %120 = vector.shape_cast %119 : vector<16x16x192xbf16> to vector<256x192xbf16>
    %c1_63 = arith.constant 1 : index
    %c0_64 = arith.constant 0 : index
    %c0_65 = arith.constant 0 : index
    %121 = vector.load %arg7[%c1_63, %c0_64, %c0_65] : memref<3x192x64xbf16, #tpu.memory_space<vmem>>, vector<1x192x64xbf16>
    %122 = vector.shape_cast %121 : vector<1x192x64xbf16> to vector<192x64xbf16>
    %cst_66 = arith.constant dense<0.000000e+00> : vector<256x64xf32>
    %123 = tpu.matmul %120, %122, %cst_66 {dimension_numbers = #tpu.dot_dimension_numbers<[1], [0], [0], [1], [0, 0, 1, 1], [], []>} : vector<256x192xbf16>, vector<192x64xbf16>, vector<256x64xf32> -> vector<256x64xf32>
    %124 = arith.addf %118, %123 : vector<256x64xf32>
    %125 = vector.extract_strided_slice %109 {offsets = [2, 0, 0], sizes = [16, 16, 192], strides = [1, 1, 1]} : vector<18x16x192xbf16> to vector<16x16x192xbf16>
    %126 = vector.shape_cast %125 : vector<16x16x192xbf16> to vector<256x192xbf16>
    %c2 = arith.constant 2 : index
    %c0_67 = arith.constant 0 : index
    %c0_68 = arith.constant 0 : index
    %127 = vector.load %arg7[%c2, %c0_67, %c0_68] : memref<3x192x64xbf16, #tpu.memory_space<vmem>>, vector<1x192x64xbf16>
    %128 = vector.shape_cast %127 : vector<1x192x64xbf16> to vector<192x64xbf16>
    %cst_69 = arith.constant dense<0.000000e+00> : vector<256x64xf32>
    %129 = tpu.matmul %126, %128, %cst_69 {dimension_numbers = #tpu.dot_dimension_numbers<[1], [0], [0], [1], [0, 0, 1, 1], [], []>} : vector<256x192xbf16>, vector<192x64xbf16>, vector<256x64xf32> -> vector<256x64xf32>
    %130 = arith.addf %124, %129 : vector<256x64xf32>
    %c0_70 = arith.constant 0 : index
    %c0_71 = arith.constant 0 : index
    %c0_72 = arith.constant 0 : index
    %c0_73 = arith.constant 0 : index
    %131 = vector.load %arg3[%c0_70, %c0_71, %c0_72, %c0_73] : memref<1x16x16x64xf32, #tpu.memory_space<vmem>>, vector<1x16x16x64xf32>
    %132 = vector.shape_cast %131 : vector<1x16x16x64xf32> to vector<16x16x64xf32>
    %133 = vector.shape_cast %132 : vector<16x16x64xf32> to vector<256x64xf32>
    %134 = arith.addf %133, %130 : vector<256x64xf32>
    %cst_74 = arith.constant dense<0.000000e+00> : vector<256xf32>
    %135 = vector.multi_reduction <add>, %134, %cst_74 [1] : vector<256x64xf32> to vector<256xf32>
    %136 = vector.shape_cast %135 : vector<256xf32> to vector<256x1xf32>
    %cst_75 = arith.constant 6.400000e+01 : f32
    %137 = vector.broadcast %cst_75 : f32 to vector<256x1xf32>
    %138 = arith.divf %136, %137 : vector<256x1xf32>
    %139 = vector.broadcast %138 : vector<256x1xf32> to vector<256x64xf32>
    %140 = arith.subf %134, %139 : vector<256x64xf32>
    %141 = arith.mulf %140, %140 : vector<256x64xf32>
    %cst_76 = arith.constant dense<0.000000e+00> : vector<256xf32>
    %142 = vector.multi_reduction <add>, %141, %cst_76 [1] : vector<256x64xf32> to vector<256xf32>
    %143 = vector.shape_cast %142 : vector<256xf32> to vector<256x1xf32>
    %cst_77 = arith.constant 6.400000e+01 : f32
    %144 = vector.broadcast %cst_77 : f32 to vector<256x1xf32>
    %145 = arith.divf %143, %144 : vector<256x1xf32>
    %cst_78 = arith.constant 9.99999997E-7 : f32
    %146 = vector.broadcast %cst_78 : f32 to vector<256x1xf32>
    %147 = arith.addf %145, %146 : vector<256x1xf32>
    %148 = math.rsqrt %147 : vector<256x1xf32>
    %149 = vector.broadcast %148 : vector<256x1xf32> to vector<256x64xf32>
    %150 = arith.mulf %140, %149 : vector<256x64xf32>
    %151 = vector.broadcast %93 : vector<1x64xf32> to vector<256x64xf32>
    %152 = arith.mulf %150, %151 : vector<256x64xf32>
    %153 = vector.broadcast %94 : vector<1x64xf32> to vector<256x64xf32>
    %154 = arith.addf %152, %153 : vector<256x64xf32>
    %155 = arith.truncf %154 : vector<256x64xf32> to vector<256x64xbf16>
    %c0_79 = arith.constant 0 : index
    %c0_80 = arith.constant 0 : index
    %156 = vector.load %arg11[%c0_79, %c0_80] : memref<64x256xbf16, #tpu.memory_space<vmem>>, vector<64x256xbf16>
    %cst_81 = arith.constant dense<0.000000e+00> : vector<256x256xf32>
    %157 = tpu.matmul %155, %156, %cst_81 {dimension_numbers = #tpu.dot_dimension_numbers<[1], [0], [0], [1], [0, 0, 1, 1], [], []>} : vector<256x64xbf16>, vector<64x256xbf16>, vector<256x256xf32> -> vector<256x256xf32>
    %158 = vector.broadcast %96 : vector<1x256xf32> to vector<256x256xf32>
    %159 = arith.addf %157, %158 : vector<256x256xf32>
    %cst_82 = arith.constant 5.000000e-01 : f32
    %160 = vector.broadcast %cst_82 : f32 to vector<256x256xf32>
    %161 = arith.mulf %160, %159 : vector<256x256xf32>
    %cst_83 = arith.constant 4.471500e-02 : f32
    %162 = vector.broadcast %cst_83 : f32 to vector<256x256xf32>
    %163 = arith.mulf %162, %159 : vector<256x256xf32>
    %164 = arith.mulf %163, %159 : vector<256x256xf32>
    %165 = arith.mulf %164, %159 : vector<256x256xf32>
    %166 = arith.addf %159, %165 : vector<256x256xf32>
    %cst_84 = arith.constant 0.797884583 : f32
    %167 = vector.broadcast %cst_84 : f32 to vector<256x256xf32>
    %168 = arith.mulf %167, %166 : vector<256x256xf32>
    %169 = math.tanh %168 : vector<256x256xf32>
    %cst_85 = arith.constant 1.000000e+00 : f32
    %170 = vector.broadcast %cst_85 : f32 to vector<256x256xf32>
    %171 = arith.addf %170, %169 : vector<256x256xf32>
    %172 = arith.mulf %161, %171 : vector<256x256xf32>
    %173 = arith.truncf %172 : vector<256x256xf32> to vector<256x256xbf16>
    %c0_86 = arith.constant 0 : index
    %c0_87 = arith.constant 0 : index
    %174 = vector.load %arg13[%c0_86, %c0_87] : memref<256x64xbf16, #tpu.memory_space<vmem>>, vector<256x64xbf16>
    %cst_88 = arith.constant dense<0.000000e+00> : vector<256x64xf32>
    %175 = tpu.matmul %173, %174, %cst_88 {dimension_numbers = #tpu.dot_dimension_numbers<[1], [0], [0], [1], [0, 0, 1, 1], [], []>} : vector<256x256xbf16>, vector<256x64xbf16>, vector<256x64xf32> -> vector<256x64xf32>
    %176 = vector.broadcast %97 : vector<1x64xf32> to vector<256x64xf32>
    %177 = arith.addf %175, %176 : vector<256x64xf32>
    %178 = arith.addf %134, %177 : vector<256x64xf32>
    %179 = vector.shape_cast %178 : vector<256x64xf32> to vector<16x16x64xf32>
    %c0_89 = arith.constant 0 : index
    %c0_90 = arith.constant 0 : index
    %c0_91 = arith.constant 0 : index
    %c0_92 = arith.constant 0 : index
    %180 = vector.load %arg15[%c0_89, %c0_90, %c0_91, %c0_92] : memref<1x16x16x64xf32, #tpu.memory_space<vmem>>, vector<1x16x16x64xf32>
    %181 = vector.shape_cast %180 : vector<1x16x16x64xf32> to vector<16x16x64xf32>
    %182 = vector.shape_cast %179 : vector<16x16x64xf32> to vector<1x16x16x64xf32>
    tpu.vector_store %arg15[%c0_89, %c0_90, %c0_91, %c0_92], %182 {strides = array<i32>} : memref<1x16x16x64xf32, #tpu.memory_space<vmem>>, vector<1x16x16x64xf32>,
    return
  }
  func.func @transform_0(%arg0: i32, %arg1: i32) -> (i32, i32, i32, i32) {
    %c16_i32 = arith.constant 16 : i32
    %0 = arith.muli %arg1, %c16_i32 : i32
    %c1_i32 = arith.constant 1 : i32
    %1 = arith.subi %0, %c1_i32 : i32
    %c0_i32 = arith.constant 0 : i32
    %2 = arith.maxsi %1, %c0_i32 : i32
    %c0_i32_0 = arith.constant 0 : i32
    %c0_i32_1 = arith.constant 0 : i32
    %c0_i32_2 = arith.constant 0 : i32
    return %arg0, %2, %c0_i32_0, %c0_i32_1 : i32, i32, i32, i32
  }
  func.func @transform_1(%arg0: i32, %arg1: i32) -> (i32, i32, i32, i32) {
    %c0_i32 = arith.constant 0 : i32
    %c0_i32_0 = arith.constant 0 : i32
    %c0_i32_1 = arith.constant 0 : i32
    return %arg0, %arg1, %c0_i32, %c0_i32_0 : i32, i32, i32, i32
  }
  func.func @transform_2(%arg0: i32, %arg1: i32) -> (i32, i32, i32, i32) {
    %c1_i32 = arith.constant 1 : i32
    %0 = arith.addi %arg1, %c1_i32 : i32
    %c16_i32 = arith.constant 16 : i32
    %1 = arith.muli %0, %c16_i32 : i32
    %c15_i32 = arith.constant 15 : i32
    %2 = arith.minsi %1, %c15_i32 : i32
    %c0_i32 = arith.constant 0 : i32
    %c0_i32_0 = arith.constant 0 : i32
    %c0_i32_1 = arith.constant 0 : i32
    return %arg0, %2, %c0_i32, %c0_i32_0 : i32, i32, i32, i32
  }
  func.func @transform_3(%arg0: i32, %arg1: i32) -> (i32, i32) {
    %c0_i32 = arith.constant 0 : i32
    %c0_i32_0 = arith.constant 0 : i32
    %c0_i32_1 = arith.constant 0 : i32
    return %c0_i32, %c0_i32_0 : i32, i32
  }
  func.func @transform_4(%arg0: i32, %arg1: i32) -> (i32, i32) {
    %c0_i32 = arith.constant 0 : i32
    %c0_i32_0 = arith.constant 0 : i32
    %c0_i32_1 = arith.constant 0 : i32
    return %c0_i32, %c0_i32_0 : i32, i32
  }
  func.func @transform_5(%arg0: i32, %arg1: i32) -> (i32, i32, i32) {
    %c0_i32 = arith.constant 0 : i32
    %c0_i32_0 = arith.constant 0 : i32
    %c0_i32_1 = arith.constant 0 : i32
    %c0_i32_2 = arith.constant 0 : i32
    return %c0_i32, %c0_i32_0, %c0_i32_1 : i32, i32, i32
  }
  func.func @transform_6(%arg0: i32, %arg1: i32) -> (i32, i32) {
    %c0_i32 = arith.constant 0 : i32
    %c0_i32_0 = arith.constant 0 : i32
    %c0_i32_1 = arith.constant 0 : i32
    return %c0_i32, %c0_i32_0 : i32, i32
  }
  func.func @transform_7(%arg0: i32, %arg1: i32) -> (i32, i32) {
    %c0_i32 = arith.constant 0 : i32
    %c0_i32_0 = arith.constant 0 : i32
    %c0_i32_1 = arith.constant 0 : i32
    return %c0_i32, %c0_i32_0 : i32, i32
  }
  func.func @transform_8(%arg0: i32, %arg1: i32) -> (i32, i32) {
    %c0_i32 = arith.constant 0 : i32
    %c0_i32_0 = arith.constant 0 : i32
    %c0_i32_1 = arith.constant 0 : i32
    return %c0_i32, %c0_i32_0 : i32, i32
  }
  func.func @transform_9(%arg0: i32, %arg1: i32) -> (i32, i32) {
    %c0_i32 = arith.constant 0 : i32
    %c0_i32_0 = arith.constant 0 : i32
    %c0_i32_1 = arith.constant 0 : i32
    return %c0_i32, %c0_i32_0 : i32, i32
  }
  func.func @transform_10(%arg0: i32, %arg1: i32) -> (i32, i32) {
    %c0_i32 = arith.constant 0 : i32
    %c0_i32_0 = arith.constant 0 : i32
    %c0_i32_1 = arith.constant 0 : i32
    return %c0_i32, %c0_i32_0 : i32, i32
  }
  func.func @transform_11(%arg0: i32, %arg1: i32) -> (i32, i32) {
    %c0_i32 = arith.constant 0 : i32
    %c0_i32_0 = arith.constant 0 : i32
    %c0_i32_1 = arith.constant 0 : i32
    return %c0_i32, %c0_i32_0 : i32, i32
  }
  func.func @transform_12(%arg0: i32, %arg1: i32) -> (i32, i32) {
    %c0_i32 = arith.constant 0 : i32
    %c0_i32_0 = arith.constant 0 : i32
    %c0_i32_1 = arith.constant 0 : i32
    return %c0_i32, %c0_i32_0 : i32, i32
  }
  func.func @transform_13(%arg0: i32, %arg1: i32) -> (i32, i32, i32, i32) {
    %c0_i32 = arith.constant 0 : i32
    %c0_i32_0 = arith.constant 0 : i32
    %c0_i32_1 = arith.constant 0 : i32
    return %arg0, %arg1, %c0_i32, %c0_i32_0 : i32, i32, i32, i32
  }
}

module attributes {stable_mosaic.version = 11 : i64} {
  func.func @_intern_layer_kernel(%arg0: i32, %arg1: i32, %arg2: memref<1x1x16x64xf32, #tpu.memory_space<vmem>>, %arg3: memref<1x16x16x64xf32, #tpu.memory_space<vmem>>, %arg4: memref<1x1x16x64xf32, #tpu.memory_space<vmem>>, %arg5: memref<1x64xf32, #tpu.memory_space<vmem>>, %arg6: memref<1x64xf32, #tpu.memory_space<vmem>>, %arg7: memref<3x192x64xbf16, #tpu.memory_space<vmem>>, %arg8: memref<1x64xf32, #tpu.memory_space<vmem>>, %arg9: memref<1x64xf32, #tpu.memory_space<vmem>>, %arg10: memref<1x64xf32, #tpu.memory_space<vmem>>, %arg11: memref<64x256xbf16, #tpu.memory_space<vmem>>, %arg12: memref<1x256xf32, #tpu.memory_space<vmem>>, %arg13: memref<256x64xbf16, #tpu.memory_space<vmem>>, %arg14: memref<1x64xf32, #tpu.memory_space<vmem>>, %arg15: memref<1x16x16x64xf32, #tpu.memory_space<vmem>>, %arg16: memref<18x16x64xbf16, #tpu.memory_space<vmem>>) attributes {dimension_semantics = [#tpu.dimension_semantics<parallel>, #tpu.dimension_semantics<parallel>], iteration_bounds = array<i64: 2, 1>, scalar_prefetch = 0 : i64, scratch_operands = 1 : i64, tpu.core_type = #tpu.core_type<tc>, window_params = [{transform_indices = @transform_0, window_bounds = array<i64: 1, 1, 16, 64>}, {transform_indices = @transform_1, window_bounds = array<i64: 1, 16, 16, 64>}, {transform_indices = @transform_2, window_bounds = array<i64: 1, 1, 16, 64>}, {pipeline_mode = #tpu.pipeline_mode<synchronous>, transform_indices = @transform_3, window_bounds = array<i64: 1, 64>}, {pipeline_mode = #tpu.pipeline_mode<synchronous>, transform_indices = @transform_4, window_bounds = array<i64: 1, 64>}, {pipeline_mode = #tpu.pipeline_mode<synchronous>, transform_indices = @transform_5, window_bounds = array<i64: 3, 192, 64>}, {pipeline_mode = #tpu.pipeline_mode<synchronous>, transform_indices = @transform_6, window_bounds = array<i64: 1, 64>}, {pipeline_mode = #tpu.pipeline_mode<synchronous>, transform_indices = @transform_7, window_bounds = array<i64: 1, 64>}, {pipeline_mode = #tpu.pipeline_mode<synchronous>, transform_indices = @transform_8, window_bounds = array<i64: 1, 64>}, {pipeline_mode = #tpu.pipeline_mode<synchronous>, transform_indices = @transform_9, window_bounds = array<i64: 64, 256>}, {pipeline_mode = #tpu.pipeline_mode<synchronous>, transform_indices = @transform_10, window_bounds = array<i64: 1, 256>}, {pipeline_mode = #tpu.pipeline_mode<synchronous>, transform_indices = @transform_11, window_bounds = array<i64: 256, 64>}, {pipeline_mode = #tpu.pipeline_mode<synchronous>, transform_indices = @transform_12, window_bounds = array<i64: 1, 64>}, {transform_indices = @transform_13, window_bounds = array<i64: 1, 16, 16, 64>}]} {
    %c0 = arith.constant 0 : index
    %c0_0 = arith.constant 0 : index
    %0 = vector.load %arg5[%c0, %c0_0] : memref<1x64xf32, #tpu.memory_space<vmem>>, vector<1x64xf32>
    %c0_1 = arith.constant 0 : index
    %c0_2 = arith.constant 0 : index
    %1 = vector.load %arg6[%c0_1, %c0_2] : memref<1x64xf32, #tpu.memory_space<vmem>>, vector<1x64xf32>
    %c0_3 = arith.constant 0 : index
    %c0_4 = arith.constant 0 : index
    %c0_5 = arith.constant 0 : index
    %c0_6 = arith.constant 0 : index
    %2 = vector.load %arg3[%c0_3, %c0_4, %c0_5, %c0_6] : memref<1x16x16x64xf32, #tpu.memory_space<vmem>>, vector<1x16x16x64xf32>
    %3 = vector.shape_cast %2 : vector<1x16x16x64xf32> to vector<16x16x64xf32>
    %cst = arith.constant dense<0.000000e+00> : vector<16x16xf32>
    %4 = vector.multi_reduction <add>, %3, %cst [2] : vector<16x16x64xf32> to vector<16x16xf32>
    %5 = vector.shape_cast %4 : vector<16x16xf32> to vector<16x16x1xf32>
    %cst_7 = arith.constant 6.400000e+01 : f32
    %6 = vector.broadcast %cst_7 : f32 to vector<16x16x1xf32>
    %7 = arith.divf %5, %6 : vector<16x16x1xf32>
    %8 = vector.broadcast %7 : vector<16x16x1xf32> to vector<16x16x64xf32>
    %9 = arith.subf %3, %8 : vector<16x16x64xf32>
    %10 = arith.mulf %9, %9 : vector<16x16x64xf32>
    %cst_8 = arith.constant dense<0.000000e+00> : vector<16x16xf32>
    %11 = vector.multi_reduction <add>, %10, %cst_8 [2] : vector<16x16x64xf32> to vector<16x16xf32>
    %12 = vector.shape_cast %11 : vector<16x16xf32> to vector<16x16x1xf32>
    %cst_9 = arith.constant 6.400000e+01 : f32
    %13 = vector.broadcast %cst_9 : f32 to vector<16x16x1xf32>
    %14 = arith.divf %12, %13 : vector<16x16x1xf32>
    %cst_10 = arith.constant 9.99999997E-7 : f32
    %15 = vector.broadcast %cst_10 : f32 to vector<16x16x1xf32>
    %16 = arith.addf %14, %15 : vector<16x16x1xf32>
    %17 = math.rsqrt %16 : vector<16x16x1xf32>
    %18 = vector.broadcast %17 : vector<16x16x1xf32> to vector<16x16x64xf32>
    %19 = arith.mulf %9, %18 : vector<16x16x64xf32>
    %20 = vector.shape_cast %0 : vector<1x64xf32> to vector<1x1x64xf32>
    %21 = vector.broadcast %20 : vector<1x1x64xf32> to vector<16x16x64xf32>
    %22 = arith.mulf %19, %21 : vector<16x16x64xf32>
    %23 = vector.shape_cast %1 : vector<1x64xf32> to vector<1x1x64xf32>
    %24 = vector.broadcast %23 : vector<1x1x64xf32> to vector<16x16x64xf32>
    %25 = arith.addf %22, %24 : vector<16x16x64xf32>
    %26 = arith.truncf %25 : vector<16x16x64xf32> to vector<16x16x64xbf16>
    %c1 = arith.constant 1 : index
    %c0_11 = arith.constant 0 : index
    %c0_12 = arith.constant 0 : index
    %27 = vector.load %arg16[%c1, %c0_11, %c0_12] : memref<18x16x64xbf16, #tpu.memory_space<vmem>>, vector<16x16x64xbf16>
    tpu.vector_store %arg16[%c1, %c0_11, %c0_12], %26 {strides = array<i32>} : memref<18x16x64xbf16, #tpu.memory_space<vmem>>, vector<16x16x64xbf16>,
    %c0_i32 = arith.constant 0 : i32
    %28 = arith.cmpi sgt, %arg1, %c0_i32 : i32
    %cst_13 = arith.constant 1.000000e+00 : f32
    %cst_14 = arith.constant 0.000000e+00 : f32
    %29 = arith.select %28, %cst_13, %cst_14 : f32
    %c0_i32_15 = arith.constant 0 : i32
    %30 = arith.cmpi slt, %arg1, %c0_i32_15 : i32
    %cst_16 = arith.constant 1.000000e+00 : f32
    %cst_17 = arith.constant 0.000000e+00 : f32
    %31 = arith.select %30, %cst_16, %cst_17 : f32
    %c0_18 = arith.constant 0 : index
    %c0_19 = arith.constant 0 : index
    %c0_20 = arith.constant 0 : index
    %c0_21 = arith.constant 0 : index
    %32 = vector.load %arg2[%c0_18, %c0_19, %c0_20, %c0_21] : memref<1x1x16x64xf32, #tpu.memory_space<vmem>>, vector<1x1x16x64xf32>
    %33 = vector.shape_cast %32 : vector<1x1x16x64xf32> to vector<1x16x64xf32>
    %cst_22 = arith.constant dense<0.000000e+00> : vector<1x16xf32>
    %34 = vector.multi_reduction <add>, %33, %cst_22 [2] : vector<1x16x64xf32> to vector<1x16xf32>
    %35 = vector.shape_cast %34 : vector<1x16xf32> to vector<1x16x1xf32>
    %cst_23 = arith.constant 6.400000e+01 : f32
    %36 = vector.broadcast %cst_23 : f32 to vector<1x16x1xf32>
    %37 = arith.divf %35, %36 : vector<1x16x1xf32>
    %38 = vector.broadcast %37 : vector<1x16x1xf32> to vector<1x16x64xf32>
    %39 = arith.subf %33, %38 : vector<1x16x64xf32>
    %40 = arith.mulf %39, %39 : vector<1x16x64xf32>
    %cst_24 = arith.constant dense<0.000000e+00> : vector<1x16xf32>
    %41 = vector.multi_reduction <add>, %40, %cst_24 [2] : vector<1x16x64xf32> to vector<1x16xf32>
    %42 = vector.shape_cast %41 : vector<1x16xf32> to vector<1x16x1xf32>
    %cst_25 = arith.constant 6.400000e+01 : f32
    %43 = vector.broadcast %cst_25 : f32 to vector<1x16x1xf32>
    %44 = arith.divf %42, %43 : vector<1x16x1xf32>
    %cst_26 = arith.constant 9.99999997E-7 : f32
    %45 = vector.broadcast %cst_26 : f32 to vector<1x16x1xf32>
    %46 = arith.addf %44, %45 : vector<1x16x1xf32>
    %47 = math.rsqrt %46 : vector<1x16x1xf32>
    %48 = vector.broadcast %47 : vector<1x16x1xf32> to vector<1x16x64xf32>
    %49 = arith.mulf %39, %48 : vector<1x16x64xf32>
    %50 = vector.shape_cast %0 : vector<1x64xf32> to vector<1x1x64xf32>
    %51 = vector.broadcast %50 : vector<1x1x64xf32> to vector<1x16x64xf32>
    %52 = arith.mulf %49, %51 : vector<1x16x64xf32>
    %53 = vector.shape_cast %1 : vector<1x64xf32> to vector<1x1x64xf32>
    %54 = vector.broadcast %53 : vector<1x1x64xf32> to vector<1x16x64xf32>
    %55 = arith.addf %52, %54 : vector<1x16x64xf32>
    %56 = vector.broadcast %29 : f32 to vector<1x16x64xf32>
    %57 = arith.mulf %55, %56 : vector<1x16x64xf32>
    %58 = arith.truncf %57 : vector<1x16x64xf32> to vector<1x16x64xbf16>
    %c0_27 = arith.constant 0 : index
    %c0_28 = arith.constant 0 : index
    %c0_29 = arith.constant 0 : index
    %59 = vector.load %arg16[%c0_27, %c0_28, %c0_29] : memref<18x16x64xbf16, #tpu.memory_space<vmem>>, vector<1x16x64xbf16>
    tpu.vector_store %arg16[%c0_27, %c0_28, %c0_29], %58 {strides = array<i32>} : memref<18x16x64xbf16, #tpu.memory_space<vmem>>, vector<1x16x64xbf16>,
    %c0_30 = arith.constant 0 : index
    %c0_31 = arith.constant 0 : index
    %c0_32 = arith.constant 0 : index
    %c0_33 = arith.constant 0 : index
    %60 = vector.load %arg4[%c0_30, %c0_31, %c0_32, %c0_33] : memref<1x1x16x64xf32, #tpu.memory_space<vmem>>, vector<1x1x16x64xf32>
    %61 = vector.shape_cast %60 : vector<1x1x16x64xf32> to vector<1x16x64xf32>
    %cst_34 = arith.constant dense<0.000000e+00> : vector<1x16xf32>
    %62 = vector.multi_reduction <add>, %61, %cst_34 [2] : vector<1x16x64xf32> to vector<1x16xf32>
    %63 = vector.shape_cast %62 : vector<1x16xf32> to vector<1x16x1xf32>
    %cst_35 = arith.constant 6.400000e+01 : f32
    %64 = vector.broadcast %cst_35 : f32 to vector<1x16x1xf32>
    %65 = arith.divf %63, %64 : vector<1x16x1xf32>
    %66 = vector.broadcast %65 : vector<1x16x1xf32> to vector<1x16x64xf32>
    %67 = arith.subf %61, %66 : vector<1x16x64xf32>
    %68 = arith.mulf %67, %67 : vector<1x16x64xf32>
    %cst_36 = arith.constant dense<0.000000e+00> : vector<1x16xf32>
    %69 = vector.multi_reduction <add>, %68, %cst_36 [2] : vector<1x16x64xf32> to vector<1x16xf32>
    %70 = vector.shape_cast %69 : vector<1x16xf32> to vector<1x16x1xf32>
    %cst_37 = arith.constant 6.400000e+01 : f32
    %71 = vector.broadcast %cst_37 : f32 to vector<1x16x1xf32>
    %72 = arith.divf %70, %71 : vector<1x16x1xf32>
    %cst_38 = arith.constant 9.99999997E-7 : f32
    %73 = vector.broadcast %cst_38 : f32 to vector<1x16x1xf32>
    %74 = arith.addf %72, %73 : vector<1x16x1xf32>
    %75 = math.rsqrt %74 : vector<1x16x1xf32>
    %76 = vector.broadcast %75 : vector<1x16x1xf32> to vector<1x16x64xf32>
    %77 = arith.mulf %67, %76 : vector<1x16x64xf32>
    %78 = vector.shape_cast %0 : vector<1x64xf32> to vector<1x1x64xf32>
    %79 = vector.broadcast %78 : vector<1x1x64xf32> to vector<1x16x64xf32>
    %80 = arith.mulf %77, %79 : vector<1x16x64xf32>
    %81 = vector.shape_cast %1 : vector<1x64xf32> to vector<1x1x64xf32>
    %82 = vector.broadcast %81 : vector<1x1x64xf32> to vector<1x16x64xf32>
    %83 = arith.addf %80, %82 : vector<1x16x64xf32>
    %84 = vector.broadcast %31 : f32 to vector<1x16x64xf32>
    %85 = arith.mulf %83, %84 : vector<1x16x64xf32>
    %86 = arith.truncf %85 : vector<1x16x64xf32> to vector<1x16x64xbf16>
    %c17 = arith.constant 17 : index
    %c0_39 = arith.constant 0 : index
    %c0_40 = arith.constant 0 : index
    %87 = vector.load %arg16[%c17, %c0_39, %c0_40] : memref<18x16x64xbf16, #tpu.memory_space<vmem>>, vector<1x16x64xbf16>
    tpu.vector_store %arg16[%c17, %c0_39, %c0_40], %86 {strides = array<i32>} : memref<18x16x64xbf16, #tpu.memory_space<vmem>>, vector<1x16x64xbf16>,
    %88 = tpu.iota {dimensions = array<i32: 1>} : vector<18x16x64xi32>
    %c0_i32_41 = arith.constant 0 : i32
    %89 = vector.broadcast %c0_i32_41 : i32 to vector<18x16x64xi32>
    %90 = arith.cmpi sgt, %88, %89 : vector<18x16x64xi32>
    %c15_i32 = arith.constant 15 : i32
    %91 = vector.broadcast %c15_i32 : i32 to vector<18x16x64xi32>
    %92 = arith.cmpi slt, %88, %91 : vector<18x16x64xi32>
    %c0_42 = arith.constant 0 : index
    %c0_43 = arith.constant 0 : index
    %93 = vector.load %arg9[%c0_42, %c0_43] : memref<1x64xf32, #tpu.memory_space<vmem>>, vector<1x64xf32>
    %c0_44 = arith.constant 0 : index
    %c0_45 = arith.constant 0 : index
    %94 = vector.load %arg10[%c0_44, %c0_45] : memref<1x64xf32, #tpu.memory_space<vmem>>, vector<1x64xf32>
    %c0_46 = arith.constant 0 : index
    %c0_47 = arith.constant 0 : index
    %95 = vector.load %arg8[%c0_46, %c0_47] : memref<1x64xf32, #tpu.memory_space<vmem>>, vector<1x64xf32>
    %c0_48 = arith.constant 0 : index
    %c0_49 = arith.constant 0 : index
    %96 = vector.load %arg12[%c0_48, %c0_49] : memref<1x256xf32, #tpu.memory_space<vmem>>, vector<1x256xf32>
    %c0_50 = arith.constant 0 : index
    %c0_51 = arith.constant 0 : index
    %97 = vector.load %arg14[%c0_50, %c0_51] : memref<1x64xf32, #tpu.memory_space<vmem>>, vector<1x64xf32>
    %c0_52 = arith.constant 0 : index
    %c0_53 = arith.constant 0 : index
    %c0_54 = arith.constant 0 : index
    %98 = vector.load %arg16[%c0_52, %c0_53, %c0_54] : memref<18x16x64xbf16, #tpu.memory_space<vmem>>, vector<18x16x64xbf16>
    %99 = arith.extf %98 : vector<18x16x64xbf16> to vector<18x16x64xf32>
    %c1_i32 = arith.constant 1 : i32
    %100 = tpu.dynamic_rotate %99 by %c1_i32 dim 1 : vector<18x16x64xf32>, i32 -> vector<18x16x64xf32>
    %cst_55 = arith.constant 0.000000e+00 : f32
    %101 = vector.broadcast %cst_55 : f32 to vector<18x16x64xf32>
    %102 = arith.select %90, %100, %101 : vector<18x16x64xi1>, vector<18x16x64xf32>
    %c15_i32_56 = arith.constant 15 : i32
    %103 = tpu.dynamic_rotate %99 by %c15_i32_56 dim 1 : vector<18x16x64xf32>, i32 -> vector<18x16x64xf32>
    %cst_57 = arith.constant 0.000000e+00 : f32
    %104 = vector.broadcast %cst_57 : f32 to vector<18x16x64xf32>
    %105 = arith.select %92, %103, %104 : vector<18x16x64xi1>, vector<18x16x64xf32>
    %106 = arith.truncf %102 : vector<18x16x64xf32> to vector<18x16x64xbf16>
    %107 = arith.truncf %99 : vector<18x16x64xf32> to vector<18x16x64xbf16>
    %108 = arith.truncf %105 : vector<18x16x64xf32> to vector<18x16x64xbf16>
    %109 = tpu.concatenate %106, %107, %108 in 2 : vector<18x16x64xbf16>, vector<18x16x64xbf16>, vector<18x16x64xbf16> -> vector<18x16x192xbf16>
    %cst_58 = arith.constant 0.000000e+00 : f32
    %110 = vector.broadcast %cst_58 : f32 to vector<256x64xf32>
    %111 = vector.broadcast %95 : vector<1x64xf32> to vector<256x64xf32>
    %112 = arith.addf %110, %111 : vector<256x64xf32>
    %113 = vector.extract_strided_slice %109 {offsets = [0, 0, 0], sizes = [16, 16, 192], strides = [1, 1, 1]} : vector<18x16x192xbf16> to vector<16x16x192xbf16>
    %114 = vector.shape_cast %113 : vector<16x16x192xbf16> to vector<256x192xbf16>
    %c0_59 = arith.constant 0 : index
    %c0_60 = arith.constant 0 : index
    %c0_61 = arith.constant 0 : index
    %115 = vector.load %arg7[%c0_59, %c0_60, %c0_61] : memref<3x192x64xbf16, #tpu.memory_space<vmem>>, vector<1x192x64xbf16>
    %116 = vector.shape_cast %115 : vector<1x192x64xbf16> to vector<192x64xbf16>
    %cst_62 = arith.constant dense<0.000000e+00> : vector<256x64xf32>
    %117 = tpu.matmul %114, %116, %cst_62 {dimension_numbers = #tpu.dot_dimension_numbers<[1], [0], [0], [1], [0, 0, 1, 1], [], []>} : vector<256x192xbf16>, vector<192x64xbf16>, vector<256x64xf32> -> vector<256x64xf32>
    %118 = arith.addf %112, %117 : vector<256x64xf32>
    %119 = vector.extract_strided_slice %109 {offsets = [1, 0, 0], sizes = [16, 16, 192], strides = [1, 1, 1]} : vector<18x16x192xbf16> to vector<16x16x192xbf16>
    %120 = vector.shape_cast %119 : vector<16x16x192xbf16> to vector<256x192xbf16>
    %c1_63 = arith.constant 1 : index
    %c0_64 = arith.constant 0 : index
    %c0_65 = arith.constant 0 : index
    %121 = vector.load %arg7[%c1_63, %c0_64, %c0_65] : memref<3x192x64xbf16, #tpu.memory_space<vmem>>, vector<1x192x64xbf16>
    %122 = vector.shape_cast %121 : vector<1x192x64xbf16> to vector<192x64xbf16>
    %cst_66 = arith.constant dense<0.000000e+00> : vector<256x64xf32>
    %123 = tpu.matmul %120, %122, %cst_66 {dimension_numbers = #tpu.dot_dimension_numbers<[1], [0], [0], [1], [0, 0, 1, 1], [], []>} : vector<256x192xbf16>, vector<192x64xbf16>, vector<256x64xf32> -> vector<256x64xf32>
    %124 = arith.addf %118, %123 : vector<256x64xf32>
    %125 = vector.extract_strided_slice %109 {offsets = [2, 0, 0], sizes = [16, 16, 192], strides = [1, 1, 1]} : vector<18x16x192xbf16> to vector<16x16x192xbf16>
    %126 = vector.shape_cast %125 : vector<16x16x192xbf16> to vector<256x192xbf16>
    %c2 = arith.constant 2 : index
    %c0_67 = arith.constant 0 : index
    %c0_68 = arith.constant 0 : index
    %127 = vector.load %arg7[%c2, %c0_67, %c0_68] : memref<3x192x64xbf16, #tpu.memory_space<vmem>>, vector<1x192x64xbf16>
    %128 = vector.shape_cast %127 : vector<1x192x64xbf16> to vector<192x64xbf16>
    %cst_69 = arith.constant dense<0.000000e+00> : vector<256x64xf32>
    %129 = tpu.matmul %126, %128, %cst_69 {dimension_numbers = #tpu.dot_dimension_numbers<[1], [0], [0], [1], [0, 0, 1, 1], [], []>} : vector<256x192xbf16>, vector<192x64xbf16>, vector<256x64xf32> -> vector<256x64xf32>
    %130 = arith.addf %124, %129 : vector<256x64xf32>
    %c0_70 = arith.constant 0 : index
    %c0_71 = arith.constant 0 : index
    %c0_72 = arith.constant 0 : index
    %c0_73 = arith.constant 0 : index
    %131 = vector.load %arg3[%c0_70, %c0_71, %c0_72, %c0_73] : memref<1x16x16x64xf32, #tpu.memory_space<vmem>>, vector<1x16x16x64xf32>
    %132 = vector.shape_cast %131 : vector<1x16x16x64xf32> to vector<16x16x64xf32>
    %133 = vector.shape_cast %132 : vector<16x16x64xf32> to vector<256x64xf32>
    %134 = arith.addf %133, %130 : vector<256x64xf32>
    %cst_74 = arith.constant dense<0.000000e+00> : vector<256xf32>
    %135 = vector.multi_reduction <add>, %134, %cst_74 [1] : vector<256x64xf32> to vector<256xf32>
    %136 = vector.shape_cast %135 : vector<256xf32> to vector<256x1xf32>
    %cst_75 = arith.constant 6.400000e+01 : f32
    %137 = vector.broadcast %cst_75 : f32 to vector<256x1xf32>
    %138 = arith.divf %136, %137 : vector<256x1xf32>
    %139 = vector.broadcast %138 : vector<256x1xf32> to vector<256x64xf32>
    %140 = arith.subf %134, %139 : vector<256x64xf32>
    %141 = arith.mulf %140, %140 : vector<256x64xf32>
    %cst_76 = arith.constant dense<0.000000e+00> : vector<256xf32>
    %142 = vector.multi_reduction <add>, %141, %cst_76 [1] : vector<256x64xf32> to vector<256xf32>
    %143 = vector.shape_cast %142 : vector<256xf32> to vector<256x1xf32>
    %cst_77 = arith.constant 6.400000e+01 : f32
    %144 = vector.broadcast %cst_77 : f32 to vector<256x1xf32>
    %145 = arith.divf %143, %144 : vector<256x1xf32>
    %cst_78 = arith.constant 9.99999997E-7 : f32
    %146 = vector.broadcast %cst_78 : f32 to vector<256x1xf32>
    %147 = arith.addf %145, %146 : vector<256x1xf32>
    %148 = math.rsqrt %147 : vector<256x1xf32>
    %149 = vector.broadcast %148 : vector<256x1xf32> to vector<256x64xf32>
    %150 = arith.mulf %140, %149 : vector<256x64xf32>
    %151 = vector.broadcast %93 : vector<1x64xf32> to vector<256x64xf32>
    %152 = arith.mulf %150, %151 : vector<256x64xf32>
    %153 = vector.broadcast %94 : vector<1x64xf32> to vector<256x64xf32>
    %154 = arith.addf %152, %153 : vector<256x64xf32>
    %155 = arith.truncf %154 : vector<256x64xf32> to vector<256x64xbf16>
    %c0_79 = arith.constant 0 : index
    %c0_80 = arith.constant 0 : index
    %156 = vector.load %arg11[%c0_79, %c0_80] : memref<64x256xbf16, #tpu.memory_space<vmem>>, vector<64x256xbf16>
    %cst_81 = arith.constant dense<0.000000e+00> : vector<256x256xf32>
    %157 = tpu.matmul %155, %156, %cst_81 {dimension_numbers = #tpu.dot_dimension_numbers<[1], [0], [0], [1], [0, 0, 1, 1], [], []>} : vector<256x64xbf16>, vector<64x256xbf16>, vector<256x256xf32> -> vector<256x256xf32>
    %158 = vector.broadcast %96 : vector<1x256xf32> to vector<256x256xf32>
    %159 = arith.addf %157, %158 : vector<256x256xf32>
    %cst_82 = arith.constant 5.000000e-01 : f32
    %160 = vector.broadcast %cst_82 : f32 to vector<256x256xf32>
    %161 = arith.mulf %160, %159 : vector<256x256xf32>
    %cst_83 = arith.constant 4.471500e-02 : f32
    %162 = vector.broadcast %cst_83 : f32 to vector<256x256xf32>
    %163 = arith.mulf %162, %159 : vector<256x256xf32>
    %164 = arith.mulf %163, %159 : vector<256x256xf32>
    %165 = arith.mulf %164, %159 : vector<256x256xf32>
    %166 = arith.addf %159, %165 : vector<256x256xf32>
    %cst_84 = arith.constant 0.797884583 : f32
    %167 = vector.broadcast %cst_84 : f32 to vector<256x256xf32>
    %168 = arith.mulf %167, %166 : vector<256x256xf32>
    %169 = math.tanh %168 : vector<256x256xf32>
    %cst_85 = arith.constant 1.000000e+00 : f32
    %170 = vector.broadcast %cst_85 : f32 to vector<256x256xf32>
    %171 = arith.addf %170, %169 : vector<256x256xf32>
    %172 = arith.mulf %161, %171 : vector<256x256xf32>
    %173 = arith.truncf %172 : vector<256x256xf32> to vector<256x256xbf16>
    %c0_86 = arith.constant 0 : index
    %c0_87 = arith.constant 0 : index
    %174 = vector.load %arg13[%c0_86, %c0_87] : memref<256x64xbf16, #tpu.memory_space<vmem>>, vector<256x64xbf16>
    %cst_88 = arith.constant dense<0.000000e+00> : vector<256x64xf32>
    %175 = tpu.matmul %173, %174, %cst_88 {dimension_numbers = #tpu.dot_dimension_numbers<[1], [0], [0], [1], [0, 0, 1, 1], [], []>} : vector<256x256xbf16>, vector<256x64xbf16>, vector<256x64xf32> -> vector<256x64xf32>
    %176 = vector.broadcast %97 : vector<1x64xf32> to vector<256x64xf32>
    %177 = arith.addf %175, %176 : vector<256x64xf32>
    %178 = arith.addf %134, %177 : vector<256x64xf32>
    %179 = vector.shape_cast %178 : vector<256x64xf32> to vector<16x16x64xf32>
    %c0_89 = arith.constant 0 : index
    %c0_90 = arith.constant 0 : index
    %c0_91 = arith.constant 0 : index
    %c0_92 = arith.constant 0 : index
    %180 = vector.load %arg15[%c0_89, %c0_90, %c0_91, %c0_92] : memref<1x16x16x64xf32, #tpu.memory_space<vmem>>, vector<1x16x16x64xf32>
    %181 = vector.shape_cast %180 : vector<1x16x16x64xf32> to vector<16x16x64xf32>
    %182 = vector.shape_cast %179 : vector<16x16x64xf32> to vector<1x16x16x64xf32>
    tpu.vector_store %arg15[%c0_89, %c0_90, %c0_91, %c0_92], %182 {strides = array<i32>} : memref<1x16x16x64xf32, #tpu.memory_space<vmem>>, vector<1x16x16x64xf32>,
    return
  }
  func.func @transform_0(%arg0: i32, %arg1: i32) -> (i32, i32, i32, i32) {
    %c16_i32 = arith.constant 16 : i32
    %0 = arith.muli %arg1, %c16_i32 : i32
    %c1_i32 = arith.constant 1 : i32
    %1 = arith.subi %0, %c1_i32 : i32
    %c0_i32 = arith.constant 0 : i32
    %2 = arith.maxsi %1, %c0_i32 : i32
    %c0_i32_0 = arith.constant 0 : i32
    %c0_i32_1 = arith.constant 0 : i32
    %c0_i32_2 = arith.constant 0 : i32
    return %arg0, %2, %c0_i32_0, %c0_i32_1 : i32, i32, i32, i32
  }
  func.func @transform_1(%arg0: i32, %arg1: i32) -> (i32, i32, i32, i32) {
    %c0_i32 = arith.constant 0 : i32
    %c0_i32_0 = arith.constant 0 : i32
    %c0_i32_1 = arith.constant 0 : i32
    return %arg0, %arg1, %c0_i32, %c0_i32_0 : i32, i32, i32, i32
  }
  func.func @transform_2(%arg0: i32, %arg1: i32) -> (i32, i32, i32, i32) {
    %c1_i32 = arith.constant 1 : i32
    %0 = arith.addi %arg1, %c1_i32 : i32
    %c16_i32 = arith.constant 16 : i32
    %1 = arith.muli %0, %c16_i32 : i32
    %c15_i32 = arith.constant 15 : i32
    %2 = arith.minsi %1, %c15_i32 : i32
    %c0_i32 = arith.constant 0 : i32
    %c0_i32_0 = arith.constant 0 : i32
    %c0_i32_1 = arith.constant 0 : i32
    return %arg0, %2, %c0_i32, %c0_i32_0 : i32, i32, i32, i32
  }
  func.func @transform_3(%arg0: i32, %arg1: i32) -> (i32, i32) {
    %c0_i32 = arith.constant 0 : i32
    %c0_i32_0 = arith.constant 0 : i32
    %c0_i32_1 = arith.constant 0 : i32
    return %c0_i32, %c0_i32_0 : i32, i32
  }
  func.func @transform_4(%arg0: i32, %arg1: i32) -> (i32, i32) {
    %c0_i32 = arith.constant 0 : i32
    %c0_i32_0 = arith.constant 0 : i32
    %c0_i32_1 = arith.constant 0 : i32
    return %c0_i32, %c0_i32_0 : i32, i32
  }
  func.func @transform_5(%arg0: i32, %arg1: i32) -> (i32, i32, i32) {
    %c0_i32 = arith.constant 0 : i32
    %c0_i32_0 = arith.constant 0 : i32
    %c0_i32_1 = arith.constant 0 : i32
    %c0_i32_2 = arith.constant 0 : i32
    return %c0_i32, %c0_i32_0, %c0_i32_1 : i32, i32, i32
  }
  func.func @transform_6(%arg0: i32, %arg1: i32) -> (i32, i32) {
    %c0_i32 = arith.constant 0 : i32
    %c0_i32_0 = arith.constant 0 : i32
    %c0_i32_1 = arith.constant 0 : i32
    return %c0_i32, %c0_i32_0 : i32, i32
  }
  func.func @transform_7(%arg0: i32, %arg1: i32) -> (i32, i32) {
    %c0_i32 = arith.constant 0 : i32
    %c0_i32_0 = arith.constant 0 : i32
    %c0_i32_1 = arith.constant 0 : i32
    return %c0_i32, %c0_i32_0 : i32, i32
  }
  func.func @transform_8(%arg0: i32, %arg1: i32) -> (i32, i32) {
    %c0_i32 = arith.constant 0 : i32
    %c0_i32_0 = arith.constant 0 : i32
    %c0_i32_1 = arith.constant 0 : i32
    return %c0_i32, %c0_i32_0 : i32, i32
  }
  func.func @transform_9(%arg0: i32, %arg1: i32) -> (i32, i32) {
    %c0_i32 = arith.constant 0 : i32
    %c0_i32_0 = arith.constant 0 : i32
    %c0_i32_1 = arith.constant 0 : i32
    return %c0_i32, %c0_i32_0 : i32, i32
  }
  func.func @transform_10(%arg0: i32, %arg1: i32) -> (i32, i32) {
    %c0_i32 = arith.constant 0 : i32
    %c0_i32_0 = arith.constant 0 : i32
    %c0_i32_1 = arith.constant 0 : i32
    return %c0_i32, %c0_i32_0 : i32, i32
  }
  func.func @transform_11(%arg0: i32, %arg1: i32) -> (i32, i32) {
    %c0_i32 = arith.constant 0 : i32
    %c0_i32_0 = arith.constant 0 : i32
    %c0_i32_1 = arith.constant 0 : i32
    return %c0_i32, %c0_i32_0 : i32, i32
  }
  func.func @transform_12(%arg0: i32, %arg1: i32) -> (i32, i32) {
    %c0_i32 = arith.constant 0 : i32
    %c0_i32_0 = arith.constant 0 : i32
    %c0_i32_1 = arith.constant 0 : i32
    return %c0_i32, %c0_i32_0 : i32, i32
  }
  func.func @transform_13(%arg0: i32, %arg1: i32) -> (i32, i32, i32, i32) {
    %c0_i32 = arith.constant 0 : i32
    %c0_i32_0 = arith.constant 0 : i32
    %c0_i32_1 = arith.constant 0 : i32
    return %arg0, %arg1, %c0_i32, %c0_i32_0 : i32, i32, i32, i32
  }
}

</mosaic_0001>

<llo_original>
// kernel: tpu_custom_call.1
$region0: #{tpu_custom_call.1}
  #allocation0 [shape = 'u32[]', space=smem, size = 0x4, offset = 0x4, fixed_abs, tag = 'smem constant byte address 0x4 - core index']
  #allocation1 [shape = 'u32[144,128]{1,0:T(1,128)}', space=vmem, size = 0x12000, scoped, tag = 'internal scratch']
  #allocation2 [shape = 'bf16[18,16,64]{2,1,0:T(16,128)(2,1)}', space=vmem, size = 0x12000, scoped, tag = 'scratch operand']
  %s0 = inlined_call_operand.vmem [shape: f32[2,16,16,64], index: 0, kind: input, shape index: {}]
  %s1 = inlined_call_operand.hbm [shape: f32[2,16,16,64], index: 1, kind: input, shape index: {}]
  %s2 = inlined_call_operand.hbm [shape: f32[2,16,16,64], index: 2, kind: input, shape index: {}]
  %s3 = inlined_call_operand.vmem [shape: f32[1,64], index: 3, kind: input, shape index: {}]
  %s4 = inlined_call_operand.vmem [shape: f32[1,64], index: 4, kind: input, shape index: {}]
  %s5 = inlined_call_operand.vmem [shape: bf16[3,192,64], index: 5, kind: input, shape index: {}]
  %s6 = inlined_call_operand.vmem [shape: f32[1,64], index: 6, kind: input, shape index: {}]
  %s7 = inlined_call_operand.vmem [shape: f32[1,64], index: 7, kind: input, shape index: {}]
  %s8 = inlined_call_operand.vmem [shape: f32[1,64], index: 8, kind: input, shape index: {}]
  %s9 = inlined_call_operand.vmem [shape: bf16[64,256], index: 9, kind: input, shape index: {}]
  %s10 = inlined_call_operand.vmem [shape: f32[1,256], index: 10, kind: input, shape index: {}]
  %s11 = inlined_call_operand.vmem [shape: bf16[256,64], index: 11, kind: input, shape index: {}]
  %s12 = inlined_call_operand.vmem [shape: f32[1,64], index: 12, kind: input, shape index: {}]
  %s13 = inlined_call_operand.hbm [shape: f32[2,16,16,64], index: 13, kind: output, shape index: {}]
  %s14 = sld [smem:[#allocation0]]
  $region93: #{tpu_custom_call.1} parent=0
    _
  %s16 = ssub.s32 1, %s14
  %s17 = scalar_select 0, %s16, %s14
  $region1: #{tpu_custom_call.1} parent=0
    #allocation3 [shape = 'u8[262144]{0}', space=vmem, size = 0x40000, scoped, tag = 'input window, operand 1']
    #allocation4 [shape = 's32[2]{0}', space=sflag, size = 0x8, scoped, tag = 'scoped memory for tpu_custom_call.1']
    #allocation5 [shape = 's32[2]{0}', space=sflag, size = 0x8, scoped, tag = 'scoped memory for tpu_custom_call.1']
    #allocation6 [shape = 'u8[16384]{0}', space=vmem, size = 0x4000, scoped, tag = 'input window, operand 2']
    #allocation7 [shape = 's32[2]{0}', space=sflag, size = 0x8, scoped, tag = 'scoped memory for tpu_custom_call.1']
    #allocation8 [shape = 'u8[262144]{0}', space=vmem, size = 0x40000, scoped, tag = 'output window, operand 0']
    %18 = vsyncpa [#allocation4], 0
    %s19 = scalar_lea.sflag [#allocation4], 1
    %20 = vsyncpa %s19, 0
    %21 = vsyncpa [#allocation7], 0
    %s22 = scalar_lea.sflag [#allocation7], 1
    %23 = vsyncpa %s22, 0
    %24 = vsyncpa [#allocation5], 0
    %s25 = scalar_lea.sflag [#allocation5], 1
    %26 = vsyncpa %s25, 0
    loop: start=0, step=1, limit=4
    $region2: #{tpu_custom_call.1} parent=1 // loop_pre_header
      _
    $region3: #{tpu_custom_call.1} parent=1 // loop_header
      %s28 = sphi 0, %s32
      %p29 = scmp.ge.s32.totalorder %s28, 4
      %s35 = sphi 0, %s47
      %s36 = sphi 0, %s43
      %s37 = sphi 0, %s35
      %s38 = sphi 0, %s36
      %s39 = sphi 0, %s37
      %s40 = sphi 0, %s38
      %s60 = sphi 0, %s62
      %s63 = sphi 0, %s60
      %s64 = sphi 0, %s63
      %s80 = sphi 0, %s64
      %s88 = sphi 0, %s90
      %s91 = sphi 0, %s88
      %s92 = sphi 0, %s91
      %s108 = sphi 0, %s92
      %s124 = sphi 0, %s126
      %s127 = sphi 0, %s124
      %s128 = sphi 0, %s127
      %s144 = sphi 0, %s128
      %s148 = sphi 0, %s148
      %s150 = sphi 0, %s148
      %s151 = sphi 0, %s150
      %s165 = sphi 0, %s151
      %s169 = sphi 0, %s169
      %s171 = sphi 0, %s169
      %s172 = sphi 0, %s171
      %s186 = sphi 0, %s172
      %s190 = sphi 0, %s190
      %s192 = sphi 0, %s190
      %s193 = sphi 0, %s192
      %s207 = sphi 0, %s193
      %s211 = sphi 0, %s211
      %s213 = sphi 0, %s211
      %s214 = sphi 0, %s213
      %s228 = sphi 0, %s214
      %s232 = sphi 0, %s232
      %s234 = sphi 0, %s232
      %s235 = sphi 0, %s234
      %s249 = sphi 0, %s235
      %s253 = sphi 0, %s253
      %s255 = sphi 0, %s253
      %s256 = sphi 0, %s255
      %s270 = sphi 0, %s256
      %s274 = sphi 0, %s274
      %s276 = sphi 0, %s274
      %s277 = sphi 0, %s276
      %s291 = sphi 0, %s277
      %s295 = sphi 0, %s295
      %s297 = sphi 0, %s295
      %s298 = sphi 0, %s297
      %s312 = sphi 0, %s298
      %s316 = sphi 0, %s316
      %s318 = sphi 0, %s316
      %s319 = sphi 0, %s318
      %s333 = sphi 0, %s319
      %s337 = sphi 0, %s337
      %s339 = sphi 0, %s337
      %s340 = sphi 0, %s339
      %s354 = sphi 0, %s340
      %s362 = sphi 0, %s364
      %s365 = sphi 0, %s362
      %s366 = sphi 0, %s365
      %s382 = sphi 0, %s366
    $region4: #{tpu_custom_call.1} parent=1 // loop_header_branch
      %31 = sbr.rel (%p29) target = $region8
    $region5: #{tpu_custom_call.1} parent=1 // loop_body
      %s33 = ssub.s32 %s28, 1
      %s34 = ssub.s32 %s28, 2
      %s41 = sadd.s32 1, %s36
      %p42 = scmp.ge.s32.totalorder %s41, 1
      %s43 = scalar_select %p42, 0, %s41
      %s44 = sadd.s32 1, %s35
      %s45 = scalar_select %p42, %s44, %s35
      %p46 = scmp.ge.s32.totalorder %s45, 2
      %s47 = scalar_select %p46, 0, %s45
      %s48 = smul.u32 %s36, 16
      %s49 = ssub.s32 %s48, 1
      %p50 = scmp.gt.s32.totalorder %s49, 0
      %s51 = scalar_select %p50, %s49, 0
      %s52 = smul.u32 %s43, 16
      %s53 = ssub.s32 %s52, 1
      %p54 = scmp.gt.s32.totalorder %s53, 0
      %s55 = scalar_select %p54, %s53, 0
      %s56 = ssub.s32 %s35, %s47
      %s57 = ssub.s32 %s51, %s55
      %s58 = sor.u32 %s56, %s57
      %p59 = scmp.eq.s32.totalorder %s58, 0
      %s61 = sadd.s32 %s60, 1
      %s62 = scalar_select %p59, %s60, %s61
      %p65 = pneg %p59
      %p66 = scmp.eq.s32.totalorder %s28, 1
      %p67 = por %p65, %p66
      %p68 = scmp.ne.s32.totalorder %s60, %s63
      %p69 = scmp.eq.s32.totalorder %s28, 0
      %p70 = por %p68, %p69
      %p71 = scmp.ne.s32.totalorder %s60, %s63
      %p72 = scmp.eq.s32.totalorder %s33, 1
      %p73 = por %p71, %p72
      %p74 = scmp.ne.s32.totalorder %s63, %s64
      %p75 = scmp.eq.s32.totalorder %s33, 0
      %p76 = por %p74, %p75
      %p77 = scmp.ne.s32.totalorder %s63, %s64
      %p78 = scmp.eq.s32.totalorder %s34, 1
      %p79 = por %p77, %p78
      %p81 = scmp.ne.s32.totalorder %s64, %s80
      %p82 = scmp.eq.s32.totalorder %s34, 0
      %p83 = por %p81, %p82
      %s84 = ssub.s32 %s35, %s47
      %s85 = ssub.s32 %s36, %s43
      %s86 = sor.u32 %s84, %s85
      %p87 = scmp.eq.s32.totalorder %s86, 0
      %s89 = sadd.s32 %s88, 1
      %s90 = scalar_select %p87, %s88, %s89
      %p93 = pneg %p87
      %p94 = scmp.eq.s32.totalorder %s28, 1
      %p95 = por %p93, %p94
      %p96 = scmp.ne.s32.totalorder %s88, %s91
      %p97 = scmp.eq.s32.totalorder %s28, 0
      %p98 = por %p96, %p97
      %p99 = scmp.ne.s32.totalorder %s88, %s91
      %p100 = scmp.eq.s32.totalorder %s33, 1
      %p101 = por %p99, %p100
      %p102 = scmp.ne.s32.totalorder %s91, %s92
      %p103 = scmp.eq.s32.totalorder %s33, 0
      %p104 = por %p102, %p103
      %p105 = scmp.ne.s32.totalorder %s91, %s92
      %p106 = scmp.eq.s32.totalorder %s34, 1
      %p107 = por %p105, %p106
      %p109 = scmp.ne.s32.totalorder %s92, %s108
      %p110 = scmp.eq.s32.totalorder %s34, 0
      %p111 = por %p109, %p110
      %s112 = sadd.s32 %s36, 1
      %s113 = smul.u32 %s112, 16
      %p114 = scmp.lt.s32.totalorder %s113, 15
      %s115 = scalar_select %p114, %s113, 15
      %s116 = sadd.s32 %s43, 1
      %s117 = smul.u32 %s116, 16
      %p118 = scmp.lt.s32.totalorder %s117, 15
      %s119 = scalar_select %p118, %s117, 15
      %s120 = ssub.s32 %s35, %s47
      %s121 = ssub.s32 %s115, %s119
      %s122 = sor.u32 %s120, %s121
      %p123 = scmp.eq.s32.totalorder %s122, 0
      %s125 = sadd.s32 %s124, 1
      %s126 = scalar_select %p123, %s124, %s125
      %p129 = pneg %p123
      %p130 = scmp.eq.s32.totalorder %s28, 1
      %p131 = por %p129, %p130
      %p132 = scmp.ne.s32.totalorder %s124, %s127
      %p133 = scmp.eq.s32.totalorder %s28, 0
      %p134 = por %p132, %p133
      %p135 = scmp.ne.s32.totalorder %s124, %s127
      %p136 = scmp.eq.s32.totalorder %s33, 1
      %p137 = por %p135, %p136
      %p138 = scmp.ne.s32.totalorder %s127, %s128
      %p139 = scmp.eq.s32.totalorder %s33, 0
      %p140 = por %p138, %p139
      %p141 = scmp.ne.s32.totalorder %s127, %s128
      %p142 = scmp.eq.s32.totalorder %s34, 1
      %p143 = por %p141, %p142
      %p145 = scmp.ne.s32.totalorder %s128, %s144
      %p146 = scmp.eq.s32.totalorder %s34, 0
      %p147 = por %p145, %p146
      %s149 = sadd.s32 %s148, 1
      %p152 = scmp.eq.s32.totalorder %s28, 1
      %p153 = scmp.ne.s32.totalorder %s148, %s150
      %p154 = scmp.eq.s32.totalorder %s28, 0
      %p155 = por %p153, %p154
      %p156 = scmp.ne.s32.totalorder %s148, %s150
      %p157 = scmp.eq.s32.totalorder %s33, 1
      %p158 = por %p156, %p157
      %p159 = scmp.ne.s32.totalorder %s150, %s151
      %p160 = scmp.eq.s32.totalorder %s33, 0
      %p161 = por %p159, %p160
      %p162 = scmp.ne.s32.totalorder %s150, %s151
      %p163 = scmp.eq.s32.totalorder %s34, 1
      %p164 = por %p162, %p163
      %p166 = scmp.ne.s32.totalorder %s151, %s165
      %p167 = scmp.eq.s32.totalorder %s34, 0
      %p168 = por %p166, %p167
      %s170 = sadd.s32 %s169, 1
      %p173 = scmp.eq.s32.totalorder %s28, 1
      %p174 = scmp.ne.s32.totalorder %s169, %s171
      %p175 = scmp.eq.s32.totalorder %s28, 0
      %p176 = por %p174, %p175
      %p177 = scmp.ne.s32.totalorder %s169, %s171
      %p178 = scmp.eq.s32.totalorder %s33, 1
      %p179 = por %p177, %p178
      %p180 = scmp.ne.s32.totalorder %s171, %s172
      %p181 = scmp.eq.s32.totalorder %s33, 0
      %p182 = por %p180, %p181
      %p183 = scmp.ne.s32.totalorder %s171, %s172
      %p184 = scmp.eq.s32.totalorder %s34, 1
      %p185 = por %p183, %p184
      %p187 = scmp.ne.s32.totalorder %s172, %s186
      %p188 = scmp.eq.s32.totalorder %s34, 0
      %p189 = por %p187, %p188
      %s191 = sadd.s32 %s190, 1
      %p194 = scmp.eq.s32.totalorder %s28, 1
      %p195 = scmp.ne.s32.totalorder %s190, %s192
      %p196 = scmp.eq.s32.totalorder %s28, 0
      %p197 = por %p195, %p196
      %p198 = scmp.ne.s32.totalorder %s190, %s192
      %p199 = scmp.eq.s32.totalorder %s33, 1
      %p200 = por %p198, %p199
      %p201 = scmp.ne.s32.totalorder %s192, %s193
      %p202 = scmp.eq.s32.totalorder %s33, 0
      %p203 = por %p201, %p202
      %p204 = scmp.ne.s32.totalorder %s192, %s193
      %p205 = scmp.eq.s32.totalorder %s34, 1
      %p206 = por %p204, %p205
      %p208 = scmp.ne.s32.totalorder %s193, %s207
      %p209 = scmp.eq.s32.totalorder %s34, 0
      %p210 = por %p208, %p209
      %s212 = sadd.s32 %s211, 1
      %p215 = scmp.eq.s32.totalorder %s28, 1
      %p216 = scmp.ne.s32.totalorder %s211, %s213
      %p217 = scmp.eq.s32.totalorder %s28, 0
      %p218 = por %p216, %p217
      %p219 = scmp.ne.s32.totalorder %s211, %s213
      %p220 = scmp.eq.s32.totalorder %s33, 1
      %p221 = por %p219, %p220
      %p222 = scmp.ne.s32.totalorder %s213, %s214
      %p223 = scmp.eq.s32.totalorder %s33, 0
      %p224 = por %p222, %p223
      %p225 = scmp.ne.s32.totalorder %s213, %s214
      %p226 = scmp.eq.s32.totalorder %s34, 1
      %p227 = por %p225, %p226
      %p229 = scmp.ne.s32.totalorder %s214, %s228
      %p230 = scmp.eq.s32.totalorder %s34, 0
      %p231 = por %p229, %p230
      %s233 = sadd.s32 %s232, 1
      %p236 = scmp.eq.s32.totalorder %s28, 1
      %p237 = scmp.ne.s32.totalorder %s232, %s234
      %p238 = scmp.eq.s32.totalorder %s28, 0
      %p239 = por %p237, %p238
      %p240 = scmp.ne.s32.totalorder %s232, %s234
      %p241 = scmp.eq.s32.totalorder %s33, 1
      %p242 = por %p240, %p241
      %p243 = scmp.ne.s32.totalorder %s234, %s235
      %p244 = scmp.eq.s32.totalorder %s33, 0
      %p245 = por %p243, %p244
      %p246 = scmp.ne.s32.totalorder %s234, %s235
      %p247 = scmp.eq.s32.totalorder %s34, 1
      %p248 = por %p246, %p247
      %p250 = scmp.ne.s32.totalorder %s235, %s249
      %p251 = scmp.eq.s32.totalorder %s34, 0
      %p252 = por %p250, %p251
      %s254 = sadd.s32 %s253, 1
      %p257 = scmp.eq.s32.totalorder %s28, 1
      %p258 = scmp.ne.s32.totalorder %s253, %s255
      %p259 = scmp.eq.s32.totalorder %s28, 0
      %p260 = por %p258, %p259
      %p261 = scmp.ne.s32.totalorder %s253, %s255
      %p262 = scmp.eq.s32.totalorder %s33, 1
      %p263 = por %p261, %p262
      %p264 = scmp.ne.s32.totalorder %s255, %s256
      %p265 = scmp.eq.s32.totalorder %s33, 0
      %p266 = por %p264, %p265
      %p267 = scmp.ne.s32.totalorder %s255, %s256
      %p268 = scmp.eq.s32.totalorder %s34, 1
      %p269 = por %p267, %p268
      %p271 = scmp.ne.s32.totalorder %s256, %s270
      %p272 = scmp.eq.s32.totalorder %s34, 0
      %p273 = por %p271, %p272
      %s275 = sadd.s32 %s274, 1
      %p278 = scmp.eq.s32.totalorder %s28, 1
      %p279 = scmp.ne.s32.totalorder %s274, %s276
      %p280 = scmp.eq.s32.totalorder %s28, 0
      %p281 = por %p279, %p280
      %p282 = scmp.ne.s32.totalorder %s274, %s276
      %p283 = scmp.eq.s32.totalorder %s33, 1
      %p284 = por %p282, %p283
      %p285 = scmp.ne.s32.totalorder %s276, %s277
      %p286 = scmp.eq.s32.totalorder %s33, 0
      %p287 = por %p285, %p286
      %p288 = scmp.ne.s32.totalorder %s276, %s277
      %p289 = scmp.eq.s32.totalorder %s34, 1
      %p290 = por %p288, %p289
      %p292 = scmp.ne.s32.totalorder %s277, %s291
      %p293 = scmp.eq.s32.totalorder %s34, 0
      %p294 = por %p292, %p293
      %s296 = sadd.s32 %s295, 1
      %p299 = scmp.eq.s32.totalorder %s28, 1
      %p300 = scmp.ne.s32.totalorder %s295, %s297
      %p301 = scmp.eq.s32.totalorder %s28, 0
      %p302 = por %p300, %p301
      %p303 = scmp.ne.s32.totalorder %s295, %s297
      %p304 = scmp.eq.s32.totalorder %s33, 1
      %p305 = por %p303, %p304
      %p306 = scmp.ne.s32.totalorder %s297, %s298
      %p307 = scmp.eq.s32.totalorder %s33, 0
      %p308 = por %p306, %p307
      %p309 = scmp.ne.s32.totalorder %s297, %s298
      %p310 = scmp.eq.s32.totalorder %s34, 1
      %p311 = por %p309, %p310
      %p313 = scmp.ne.s32.totalorder %s298, %s312
      %p314 = scmp.eq.s32.totalorder %s34, 0
      %p315 = por %p313, %p314
      %s317 = sadd.s32 %s316, 1
      %p320 = scmp.eq.s32.totalorder %s28, 1
      %p321 = scmp.ne.s32.totalorder %s316, %s318
      %p322 = scmp.eq.s32.totalorder %s28, 0
      %p323 = por %p321, %p322
      %p324 = scmp.ne.s32.totalorder %s316, %s318
      %p325 = scmp.eq.s32.totalorder %s33, 1
      %p326 = por %p324, %p325
      %p327 = scmp.ne.s32.totalorder %s318, %s319
      %p328 = scmp.eq.s32.totalorder %s33, 0
      %p329 = por %p327, %p328
      %p330 = scmp.ne.s32.totalorder %s318, %s319
      %p331 = scmp.eq.s32.totalorder %s34, 1
      %p332 = por %p330, %p331
      %p334 = scmp.ne.s32.totalorder %s319, %s333
      %p335 = scmp.eq.s32.totalorder %s34, 0
      %p336 = por %p334, %p335
      %s338 = sadd.s32 %s337, 1
      %p341 = scmp.eq.s32.totalorder %s28, 1
      %p342 = scmp.ne.s32.totalorder %s337, %s339
      %p343 = scmp.eq.s32.totalorder %s28, 0
      %p344 = por %p342, %p343
      %p345 = scmp.ne.s32.totalorder %s337, %s339
      %p346 = scmp.eq.s32.totalorder %s33, 1
      %p347 = por %p345, %p346
      %p348 = scmp.ne.s32.totalorder %s339, %s340
      %p349 = scmp.eq.s32.totalorder %s33, 0
      %p350 = por %p348, %p349
      %p351 = scmp.ne.s32.totalorder %s339, %s340
      %p352 = scmp.eq.s32.totalorder %s34, 1
      %p353 = por %p351, %p352
      %p355 = scmp.ne.s32.totalorder %s340, %s354
      %p356 = scmp.eq.s32.totalorder %s34, 0
      %p357 = por %p355, %p356
      %s358 = ssub.s32 %s35, %s47
      %s359 = ssub.s32 %s36, %s43
      %s360 = sor.u32 %s358, %s359
      %p361 = scmp.eq.s32.totalorder %s360, 0
      %s363 = sadd.s32 %s362, 1
      %s364 = scalar_select %p361, %s362, %s363
      %p367 = pneg %p361
      %p368 = scmp.eq.s32.totalorder %s28, 1
      %p369 = por %p367, %p368
      %p370 = scmp.ne.s32.totalorder %s362, %s365
      %p371 = scmp.eq.s32.totalorder %s28, 0
      %p372 = por %p370, %p371
      %p373 = scmp.ne.s32.totalorder %s362, %s365
      %p374 = scmp.eq.s32.totalorder %s33, 1
      %p375 = por %p373, %p374
      %p376 = scmp.ne.s32.totalorder %s365, %s366
      %p377 = scmp.eq.s32.totalorder %s33, 0
      %p378 = por %p376, %p377
      %p379 = scmp.ne.s32.totalorder %s365, %s366
      %p380 = scmp.eq.s32.totalorder %s34, 1
      %p381 = por %p379, %p380
      %p383 = scmp.ne.s32.totalorder %s366, %s382
      %p384 = scmp.eq.s32.totalorder %s34, 0
      %p385 = por %p383, %p384
      %p386 = scmp.le.s32.totalorder 1, %s28
      %p387 = scmp.lt.s32.totalorder %s28, 3
      %p388 = pnand %p386, %p387
      %p389 = pneg %p388
      // Predicated region
      $region9: #{tpu_custom_call.1} parent=5 // pred_check
        _
      $region10: #{tpu_custom_call.1} parent=5 // pred_check_branch
        %391 = sbr.rel (%p388) target = $region12
      $region11: #{tpu_custom_call.1} parent=5 // pred_region
        %s392 = ssub.s32 %s28, 1
        // Predicated region
        $region13: #{tpu_custom_call.1} parent=11 // pred_check
          %p393 = pneg %p161
        $region14: #{tpu_custom_call.1} parent=11 // pred_check_branch
          %395 = sbr.rel (%p393) target = $region16
        $region15: #{tpu_custom_call.1} parent=11 // pred_region
          _
        $region16: #{tpu_custom_call.1} parent=11 // pred_fallthru
          _
        // Predicated region
        $region17: #{tpu_custom_call.1} parent=11 // pred_check
          %p396 = pneg %p182
        $region18: #{tpu_custom_call.1} parent=11 // pred_check_branch
          %398 = sbr.rel (%p396) target = $region20
        $region19: #{tpu_custom_call.1} parent=11 // pred_region
          _
        $region20: #{tpu_custom_call.1} parent=11 // pred_fallthru
          _
        // Predicated region
        $region21: #{tpu_custom_call.1} parent=11 // pred_check
          %p399 = pneg %p203
        $region22: #{tpu_custom_call.1} parent=11 // pred_check_branch
          %401 = sbr.rel (%p399) target = $region24
        $region23: #{tpu_custom_call.1} parent=11 // pred_region
          _
        $region24: #{tpu_custom_call.1} parent=11 // pred_fallthru
          _
        // Predicated region
        $region25: #{tpu_custom_call.1} parent=11 // pred_check
          %p402 = pneg %p224
        $region26: #{tpu_custom_call.1} parent=11 // pred_check_branch
          %404 = sbr.rel (%p402) target = $region28
        $region27: #{tpu_custom_call.1} parent=11 // pred_region
          _
        $region28: #{tpu_custom_call.1} parent=11 // pred_fallthru
          _
        // Predicated region
        $region29: #{tpu_custom_call.1} parent=11 // pred_check
          %p405 = pneg %p245
        $region30: #{tpu_custom_call.1} parent=11 // pred_check_branch
          %407 = sbr.rel (%p405) target = $region32
        $region31: #{tpu_custom_call.1} parent=11 // pred_region
          _
        $region32: #{tpu_custom_call.1} parent=11 // pred_fallthru
          _
        // Predicated region
        $region33: #{tpu_custom_call.1} parent=11 // pred_check
          %p408 = pneg %p266
        $region34: #{tpu_custom_call.1} parent=11 // pred_check_branch
          %410 = sbr.rel (%p408) target = $region36
        $region35: #{tpu_custom_call.1} parent=11 // pred_region
          _
        $region36: #{tpu_custom_call.1} parent=11 // pred_fallthru
          _
        // Predicated region
        $region37: #{tpu_custom_call.1} parent=11 // pred_check
          %p411 = pneg %p287
        $region38: #{tpu_custom_call.1} parent=11 // pred_check_branch
          %413 = sbr.rel (%p411) target = $region40
        $region39: #{tpu_custom_call.1} parent=11 // pred_region
          _
        $region40: #{tpu_custom_call.1} parent=11 // pred_fallthru
          _
        // Predicated region
        $region41: #{tpu_custom_call.1} parent=11 // pred_check
          %p414 = pneg %p308
        $region42: #{tpu_custom_call.1} parent=11 // pred_check_branch
          %416 = sbr.rel (%p414) target = $region44
        $region43: #{tpu_custom_call.1} parent=11 // pred_region
          _
        $region44: #{tpu_custom_call.1} parent=11 // pred_fallthru
          _
        // Predicated region
        $region45: #{tpu_custom_call.1} parent=11 // pred_check
          %p417 = pneg %p329
        $region46: #{tpu_custom_call.1} parent=11 // pred_check_branch
          %419 = sbr.rel (%p417) target = $region48
        $region47: #{tpu_custom_call.1} parent=11 // pred_region
          _
        $region48: #{tpu_custom_call.1} parent=11 // pred_fallthru
          _
        // Predicated region
        $region49: #{tpu_custom_call.1} parent=11 // pred_check
          %p420 = pneg %p350
        $region50: #{tpu_custom_call.1} parent=11 // pred_check_branch
          %422 = sbr.rel (%p420) target = $region52
        $region51: #{tpu_custom_call.1} parent=11 // pred_region
          _
        $region52: #{tpu_custom_call.1} parent=11 // pred_fallthru
          _
      $region12: #{tpu_custom_call.1} parent=5 // pred_fallthru
        _
      %p423 = scmp.lt.s32.totalorder %s28, 2
      // Predicated region
      $region53: #{tpu_custom_call.1} parent=5 // pred_check
        %p424 = pneg %p423
      $region54: #{tpu_custom_call.1} parent=5 // pred_check_branch
        %426 = sbr.rel (%p424) target = $region56
      $region55: #{tpu_custom_call.1} parent=5 // pred_region
        // Predicated region
        $region57: #{tpu_custom_call.1} parent=55 // pred_check
          %p427 = pneg %p70
        $region58: #{tpu_custom_call.1} parent=55 // pred_check_branch
          %429 = sbr.rel (%p427) target = $region60
        $region59: #{tpu_custom_call.1} parent=55 // pred_region
          %s430 = smul.u32 %s36, 16
          %s431 = ssub.s32 %s430, 1
          %p432 = scmp.gt.s32.totalorder %s431, 0
          %s433 = scalar_select %p432, %s431, 0
          %p434 = scmp.lt.s32.totalorder %s35, 1
          %s435 = scalar_select %p434, %s35, 1
          %p436 = scmp.lt.s32.totalorder %s433, 15
          %s437 = scalar_select %p436, %s433, 15
          %s438 = smul.addr %s437, 2
          %s439 = smul.addr %s435, 32
          %s440 = sadd.s32 %s438, %s439
          %s441 = smul.addr %s440, 8
          %s442 = scalar_lea.vmem %s0, %s441
          %s443 = smul.u32 %s36, 16
          %s444 = ssub.s32 %s443, 1
          %p445 = scmp.gt.s32.totalorder %s444, 0
          %s446 = scalar_select %p445, %s444, 0
        $region60: #{tpu_custom_call.1} parent=55 // pred_fallthru
          _
        // Predicated region
        $region61: #{tpu_custom_call.1} parent=55 // pred_check
          %p447 = pneg %p98
        $region62: #{tpu_custom_call.1} parent=55 // pred_check_branch
          %449 = sbr.rel (%p447) target = $region64
        $region63: #{tpu_custom_call.1} parent=55 // pred_region
          %s450 = sand.u32 %s88, 1
          %s451 = scalar_lea.sflag [#allocation4], %s450
          %s452 = sand.u32 %s88, 1
          %s453 = smul.addr %s452, 256
          %s454 = scalar_lea.vmem [#allocation3], %s453
          %s455 = smul.u32 16, %s36
          %s457 = ssub.s32 4096, 4096
          %458 = vsyncadd %s451, %s457
          %s459 = smul.addr %s455, 2
          %s460 = smul.addr %s35, 32
          %s461 = sadd.s32 %s459, %s460
          %s462 = smul.addr %s461, 128
          %s463 = scalar_lea.hbm %s1, %s462
          %s464 = sshll.u32 %s454, 4
          %s465 = int_to_ptr.vmem [resolvable:$true] %s464
          %470 = dma.hbm_to_vmem [thread:$0]  %s463, 4096, %s465, %s451, 128, 128, 8
        $region64: #{tpu_custom_call.1} parent=55 // pred_fallthru
          _
        // Predicated region
        $region65: #{tpu_custom_call.1} parent=55 // pred_check
          %p471 = pneg %p134
        $region66: #{tpu_custom_call.1} parent=55 // pred_check_branch
          %473 = sbr.rel (%p471) target = $region68
        $region67: #{tpu_custom_call.1} parent=55 // pred_region
          %s474 = sand.u32 %s124, 1
          %s475 = scalar_lea.sflag [#allocation7], %s474
          %s476 = sand.u32 %s124, 1
          %s477 = smul.addr %s476, 16
          %s478 = scalar_lea.vmem [#allocation6], %s477
          %s479 = sadd.s32 %s36, 1
          %s480 = smul.u32 %s479, 16
          %p481 = scmp.lt.s32.totalorder %s480, 15
          %s482 = scalar_select %p481, %s480, 15
          %s484 = ssub.s32 256, 256
          %485 = vsyncadd %s475, %s484
          %s486 = smul.addr %s482, 2
          %s487 = smul.addr %s35, 32
          %s488 = sadd.s32 %s486, %s487
          %s489 = smul.addr %s488, 128
          %s490 = scalar_lea.hbm %s2, %s489
          %s491 = sshll.u32 %s478, 4
          %s492 = int_to_ptr.vmem [resolvable:$true] %s491
          %497 = dma.hbm_to_vmem [thread:$0]  %s490, 256, %s492, %s475, 128, 128, 8
        $region68: #{tpu_custom_call.1} parent=55 // pred_fallthru
          _
      $region56: #{tpu_custom_call.1} parent=5 // pred_fallthru
        _
      %p498 = scmp.le.s32.totalorder 1, %s28
      %p499 = scmp.lt.s32.totalorder %s28, 3
      %p500 = pnand %p498, %p499
      %p501 = pneg %p500
      // Predicated region
      $region69: #{tpu_custom_call.1} parent=5 // pred_check
        _
      $region70: #{tpu_custom_call.1} parent=5 // pred_check_branch
        %503 = sbr.rel (%p500) target = $region72
      $region71: #{tpu_custom_call.1} parent=5 // pred_region
        %s504 = ssub.s32 %s28, 1
        %s505 = sand.u32 %s91, 1
        %s506 = scalar_lea.sflag [#allocation4], %s505
        %s507 = sand.u32 %s91, 1
        %s508 = smul.addr %s507, 256
        %s509 = scalar_lea.vmem [#allocation3], %s508
        // Predicated region
        $region73: #{tpu_custom_call.1} parent=71 // pred_check
          %p510 = pneg %p104
        $region74: #{tpu_custom_call.1} parent=71 // pred_check_branch
          %512 = sbr.rel (%p510) target = $region76
        $region75: #{tpu_custom_call.1} parent=71 // pred_region
          %513 = dma.done %s506, 4096
        $region76: #{tpu_custom_call.1} parent=71 // pred_fallthru
          _
        %s514 = sand.u32 %s127, 1
        %s515 = scalar_lea.sflag [#allocation7], %s514
        %s516 = sand.u32 %s127, 1
        %s517 = smul.addr %s516, 16
        %s518 = scalar_lea.vmem [#allocation6], %s517
        // Predicated region
        $region77: #{tpu_custom_call.1} parent=71 // pred_check
          %p519 = pneg %p140
        $region78: #{tpu_custom_call.1} parent=71 // pred_check_branch
          %521 = sbr.rel (%p519) target = $region80
        $region79: #{tpu_custom_call.1} parent=71 // pred_region
          %522 = dma.done %s515, 256
        $region80: #{tpu_custom_call.1} parent=71 // pred_fallthru
          _
        %s523 = smul.u32 %s38, 16
        %s524 = ssub.s32 %s523, 1
        %p525 = scmp.gt.s32.totalorder %s524, 0
        %s526 = scalar_select %p525, %s524, 0
        %p527 = scmp.lt.s32.totalorder %s37, 1
        %s528 = scalar_select %p527, %s37, 1
        %p529 = scmp.lt.s32.totalorder %s526, 15
        %s530 = scalar_select %p529, %s526, 15
        %s531 = smul.addr %s530, 2
        %s532 = smul.addr %s528, 32
        %s533 = sadd.s32 %s531, %s532
        %s534 = smul.addr %s533, 8
        %s535 = scalar_lea.vmem %s0, %s534
        %p536 = pneg %p76
        %p537 = pneg %p73
        %s538 = sand.u32 %s91, 1
        %s539 = scalar_lea.sflag [#allocation4], %s538
        %s540 = sand.u32 %s91, 1
        %s541 = smul.addr %s540, 256
        %s542 = scalar_lea.vmem [#allocation3], %s541
        %p543 = pneg %p104
        %p544 = pneg %p101
        %s545 = sand.u32 %s127, 1
        %s546 = scalar_lea.sflag [#allocation7], %s545
        %s547 = sand.u32 %s127, 1
        %s548 = smul.addr %s547, 16
        %s549 = scalar_lea.vmem [#allocation6], %s548
        %p550 = pneg %p140
        %p551 = pneg %p137
        %p552 = pneg %p161
        %p553 = pneg %p158
        %p554 = pneg %p182
        %p555 = pneg %p179
        %p556 = pneg %p203
        %p557 = pneg %p200
        %p558 = pneg %p224
        %p559 = pneg %p221
        %p560 = pneg %p245
        %p561 = pneg %p242
        %p562 = pneg %p266
        %p563 = pneg %p263
        %p564 = pneg %p287
        %p565 = pneg %p284
        %p566 = pneg %p308
        %p567 = pneg %p305
        %p568 = pneg %p329
        %p569 = pneg %p326
        %p570 = pneg %p350
        %p571 = pneg %p347
        %p572 = pneg %p378
        %p573 = pneg %p375
        %s574 = sand.u32 %s365, 1
        %s575 = scalar_lea.sflag [#allocation5], %s574
        %s576 = sand.u32 %s365, 1
        %s577 = smul.addr %s576, 256
        %s578 = scalar_lea.vmem [#allocation8], %s577
        %s579 = smul.u32 %s38, 16
        %s580 = ssub.s32 %s579, 1
        %p581 = scmp.gt.s32.totalorder %s580, 0
        %s582 = scalar_select %p581, %s580, 0
        %p583 = scmp.lt.s32.totalorder %s37, 1
        %s584 = scalar_select %p583, %s37, 1
        %p585 = scmp.lt.s32.totalorder %s582, 15
        %s586 = scalar_select %p585, %s582, 15
        %s587 = smul.addr %s586, 2
        %s588 = smul.addr %s584, 32
        %s589 = sadd.s32 %s587, %s588
        %s590 = smul.addr %s589, 8
        %s591 = scalar_lea.vmem %s0, %s590
        %s592 = smul.u32 %s38, 16
        %s593 = ssub.s32 %s592, 1
        %p594 = scmp.gt.s32.totalorder %s593, 0
        %s595 = scalar_select %p594, %s593, 0
        %s596 = smul.u32 16, %s38
        %s597 = sadd.s32 %s38, 1
        %s598 = smul.u32 %s597, 16
        %p599 = scmp.lt.s32.totalorder %s598, 15
        %s600 = scalar_select %p599, %s598, 15
        %s601 = smul.u32 16, %s38
        %v603 = vld [vmem:[%s3] sm:$0x1]
        %v604 = vld [vmem:[%s4] sm:$0x1]
        %v605 = vld [vmem:[%s509] sm:$0xff]
        %v606 = vld [vmem:[%s509 + $0x8] sm:$0xff]
        %v607 = vld [vmem:[%s509 + $0x10] sm:$0xff]
        %v608 = vld [vmem:[%s509 + $0x18] sm:$0xff]
        %v609 = vld [vmem:[%s509 + $0x20] sm:$0xff]
        %v610 = vld [vmem:[%s509 + $0x28] sm:$0xff]
        %v611 = vld [vmem:[%s509 + $0x30] sm:$0xff]
        %v612 = vld [vmem:[%s509 + $0x38] sm:$0xff]
        %v613 = vld [vmem:[%s509 + $0x40] sm:$0xff]
        %v614 = vld [vmem:[%s509 + $0x48] sm:$0xff]
        %v615 = vld [vmem:[%s509 + $0x50] sm:$0xff]
        %v616 = vld [vmem:[%s509 + $0x58] sm:$0xff]
        %v617 = vld [vmem:[%s509 + $0x60] sm:$0xff]
        %v618 = vld [vmem:[%s509 + $0x68] sm:$0xff]
        %v619 = vld [vmem:[%s509 + $0x70] sm:$0xff]
        %v620 = vld [vmem:[%s509 + $0x78] sm:$0xff]
        %v621 = vld [vmem:[%s509 + $0x80] sm:$0xff]
        %v622 = vld [vmem:[%s509 + $0x88] sm:$0xff]
        %v623 = vld [vmem:[%s509 + $0x90] sm:$0xff]
        %v624 = vld [vmem:[%s509 + $0x98] sm:$0xff]
        %v625 = vld [vmem:[%s509 + $0xa0] sm:$0xff]
        %v626 = vld [vmem:[%s509 + $0xa8] sm:$0xff]
        %v627 = vld [vmem:[%s509 + $0xb0] sm:$0xff]
        %v628 = vld [vmem:[%s509 + $0xb8] sm:$0xff]
        %v629 = vld [vmem:[%s509 + $0xc0] sm:$0xff]
        %v630 = vld [vmem:[%s509 + $0xc8] sm:$0xff]
        %v631 = vld [vmem:[%s509 + $0xd0] sm:$0xff]
        %v632 = vld [vmem:[%s509 + $0xd8] sm:$0xff]
        %v633 = vld [vmem:[%s509 + $0xe0] sm:$0xff]
        %v634 = vld [vmem:[%s509 + $0xe8] sm:$0xff]
        %v635 = vld [vmem:[%s509 + $0xf0] sm:$0xff]
        %v636 = vld [vmem:[%s509 + $0xf8] sm:$0xff]
        %vm637 = vcmask 523264
        %v638 = vsel %vm637, %v605, 0.0
        %639 = vadd.xlane.f32.xlu0 %v638
        %v640 = vpop.xlane.xlu0 %639
        %v641 = vsel %vm637, %v606, 0.0
        %642 = vadd.xlane.f32.xlu0 %v641
        %v643 = vpop.xlane.xlu0 %642
        %v644 = vsel %vm637, %v607, 0.0
        %645 = vadd.xlane.f32.xlu0 %v644
        %v646 = vpop.xlane.xlu0 %645
        %v647 = vsel %vm637, %v608, 0.0
        %648 = vadd.xlane.f32.xlu0 %v647
        %v649 = vpop.xlane.xlu0 %648
        %v650 = vsel %vm637, %v609, 0.0
        %651 = vadd.xlane.f32.xlu0 %v650
        %v652 = vpop.xlane.xlu0 %651
        %v653 = vsel %vm637, %v610, 0.0
        %654 = vadd.xlane.f32.xlu0 %v653
        %v655 = vpop.xlane.xlu0 %654
        %v656 = vsel %vm637, %v611, 0.0
        %657 = vadd.xlane.f32.xlu0 %v656
        %v658 = vpop.xlane.xlu0 %657
        %v659 = vsel %vm637, %v612, 0.0
        %660 = vadd.xlane.f32.xlu0 %v659
        %v661 = vpop.xlane.xlu0 %660
        %v662 = vsel %vm637, %v613, 0.0
        %663 = vadd.xlane.f32.xlu0 %v662
        %v664 = vpop.xlane.xlu0 %663
        %v665 = vsel %vm637, %v614, 0.0
        %666 = vadd.xlane.f32.xlu0 %v665
        %v667 = vpop.xlane.xlu0 %666
        %v668 = vsel %vm637, %v615, 0.0
        %669 = vadd.xlane.f32.xlu0 %v668
        %v670 = vpop.xlane.xlu0 %669
        %v671 = vsel %vm637, %v616, 0.0
        %672 = vadd.xlane.f32.xlu0 %v671
        %v673 = vpop.xlane.xlu0 %672
        %v674 = vsel %vm637, %v617, 0.0
        %675 = vadd.xlane.f32.xlu0 %v674
        %v676 = vpop.xlane.xlu0 %675
        %v677 = vsel %vm637, %v618, 0.0
        %678 = vadd.xlane.f32.xlu0 %v677
        %v679 = vpop.xlane.xlu0 %678
        %v680 = vsel %vm637, %v619, 0.0
        %681 = vadd.xlane.f32.xlu0 %v680
        %v682 = vpop.xlane.xlu0 %681
        %v683 = vsel %vm637, %v620, 0.0
        %684 = vadd.xlane.f32.xlu0 %v683
        %v685 = vpop.xlane.xlu0 %684
        %v686 = vsel %vm637, %v621, 0.0
        %687 = vadd.xlane.f32.xlu0 %v686
        %v688 = vpop.xlane.xlu0 %687
        %v689 = vsel %vm637, %v622, 0.0
        %690 = vadd.xlane.f32.xlu0 %v689
        %v691 = vpop.xlane.xlu0 %690
        %v692 = vsel %vm637, %v623, 0.0
        %693 = vadd.xlane.f32.xlu0 %v692
        %v694 = vpop.xlane.xlu0 %693
        %v695 = vsel %vm637, %v624, 0.0
        %696 = vadd.xlane.f32.xlu0 %v695
        %v697 = vpop.xlane.xlu0 %696
        %v698 = vsel %vm637, %v625, 0.0
        %699 = vadd.xlane.f32.xlu0 %v698
        %v700 = vpop.xlane.xlu0 %699
        %v701 = vsel %vm637, %v626, 0.0
        %702 = vadd.xlane.f32.xlu0 %v701
        %v703 = vpop.xlane.xlu0 %702
        %v704 = vsel %vm637, %v627, 0.0
        %705 = vadd.xlane.f32.xlu0 %v704
        %v706 = vpop.xlane.xlu0 %705
        %v707 = vsel %vm637, %v628, 0.0
        %708 = vadd.xlane.f32.xlu0 %v707
        %v709 = vpop.xlane.xlu0 %708
        %v710 = vsel %vm637, %v629, 0.0
        %711 = vadd.xlane.f32.xlu0 %v710
        %v712 = vpop.xlane.xlu0 %711
        %v713 = vsel %vm637, %v630, 0.0
        %714 = vadd.xlane.f32.xlu0 %v713
        %v715 = vpop.xlane.xlu0 %714
        %v716 = vsel %vm637, %v631, 0.0
        %717 = vadd.xlane.f32.xlu0 %v716
        %v718 = vpop.xlane.xlu0 %717
        %v719 = vsel %vm637, %v632, 0.0
        %720 = vadd.xlane.f32.xlu0 %v719
        %v721 = vpop.xlane.xlu0 %720
        %v722 = vsel %vm637, %v633, 0.0
        %723 = vadd.xlane.f32.xlu0 %v722
        %v724 = vpop.xlane.xlu0 %723
        %v725 = vsel %vm637, %v634, 0.0
        %726 = vadd.xlane.f32.xlu0 %v725
        %v727 = vpop.xlane.xlu0 %726
        %v728 = vsel %vm637, %v635, 0.0
        %729 = vadd.xlane.f32.xlu0 %v728
        %v730 = vpop.xlane.xlu0 %729
        %v731 = vsel %vm637, %v636, 0.0
        %732 = vadd.xlane.f32.xlu0 %v731
        %v733 = vpop.xlane.xlu0 %732
        %v734 = vrcp.pop 64.0
        %v735 = vmul.f32 %v640, %v734
        %v736 = vmul.f32 %v643, %v734
        %v737 = vmul.f32 %v646, %v734
        %v738 = vmul.f32 %v649, %v734
        %v739 = vmul.f32 %v652, %v734
        %v740 = vmul.f32 %v655, %v734
        %v741 = vmul.f32 %v658, %v734
        %v742 = vmul.f32 %v661, %v734
        %v743 = vmul.f32 %v664, %v734
        %v744 = vmul.f32 %v667, %v734
        %v745 = vmul.f32 %v670, %v734
        %v746 = vmul.f32 %v673, %v734
        %v747 = vmul.f32 %v676, %v734
        %v748 = vmul.f32 %v679, %v734
        %v749 = vmul.f32 %v682, %v734
        %v750 = vmul.f32 %v685, %v734
        %v751 = vmul.f32 %v688, %v734
        %v752 = vmul.f32 %v691, %v734
        %v753 = vmul.f32 %v694, %v734
        %v754 = vmul.f32 %v697, %v734
        %v755 = vmul.f32 %v700, %v734
        %v756 = vmul.f32 %v703, %v734
        %v757 = vmul.f32 %v706, %v734
        %v758 = vmul.f32 %v709, %v734
        %v759 = vmul.f32 %v712, %v734
        %v760 = vmul.f32 %v715, %v734
        %v761 = vmul.f32 %v718, %v734
        %v762 = vmul.f32 %v721, %v734
        %v763 = vmul.f32 %v724, %v734
        %v764 = vmul.f32 %v727, %v734
        %v765 = vmul.f32 %v730, %v734
        %v766 = vmul.f32 %v733, %v734
        %v767 = vsub.f32 %v605, %v735
        %v768 = vsub.f32 %v606, %v736
        %v769 = vsub.f32 %v607, %v737
        %v770 = vsub.f32 %v608, %v738
        %v771 = vsub.f32 %v609, %v739
        %v772 = vsub.f32 %v610, %v740
        %v773 = vsub.f32 %v611, %v741
        %v774 = vsub.f32 %v612, %v742
        %v775 = vsub.f32 %v613, %v743
        %v776 = vsub.f32 %v614, %v744
        %v777 = vsub.f32 %v615, %v745
        %v778 = vsub.f32 %v616, %v746
        %v779 = vsub.f32 %v617, %v747
        %v780 = vsub.f32 %v618, %v748
        %v781 = vsub.f32 %v619, %v749
        %v782 = vsub.f32 %v620, %v750
        %v783 = vsub.f32 %v621, %v751
        %v784 = vsub.f32 %v622, %v752
        %v785 = vsub.f32 %v623, %v753
        %v786 = vsub.f32 %v624, %v754
        %v787 = vsub.f32 %v625, %v755
        %v788 = vsub.f32 %v626, %v756
        %v789 = vsub.f32 %v627, %v757
        %v790 = vsub.f32 %v628, %v758
        %v791 = vsub.f32 %v629, %v759
        %v792 = vsub.f32 %v630, %v760
        %v793 = vsub.f32 %v631, %v761
        %v794 = vsub.f32 %v632, %v762
        %v795 = vsub.f32 %v633, %v763
        %v796 = vsub.f32 %v634, %v764
        %v797 = vsub.f32 %v635, %v765
        %v798 = vsub.f32 %v636, %v766
        %v799 = vmul.f32 %v767, %v767
        %v800 = vmul.f32 %v768, %v768
        %v801 = vmul.f32 %v769, %v769
        %v802 = vmul.f32 %v770, %v770
        %v803 = vmul.f32 %v771, %v771
        %v804 = vmul.f32 %v772, %v772
        %v805 = vmul.f32 %v773, %v773
        %v806 = vmul.f32 %v774, %v774
        %v807 = vmul.f32 %v775, %v775
        %v808 = vmul.f32 %v776, %v776
        %v809 = vmul.f32 %v777, %v777
        %v810 = vmul.f32 %v778, %v778
        %v811 = vmul.f32 %v779, %v779
        %v812 = vmul.f32 %v780, %v780
        %v813 = vmul.f32 %v781, %v781
        %v814 = vmul.f32 %v782, %v782
        %v815 = vmul.f32 %v783, %v783
        %v816 = vmul.f32 %v784, %v784
        %v817 = vmul.f32 %v785, %v785
        %v818 = vmul.f32 %v786, %v786
        %v819 = vmul.f32 %v787, %v787
        %v820 = vmul.f32 %v788, %v788
        %v821 = vmul.f32 %v789, %v789
        %v822 = vmul.f32 %v790, %v790
        %v823 = vmul.f32 %v791, %v791
        %v824 = vmul.f32 %v792, %v792
        %v825 = vmul.f32 %v793, %v793
        %v826 = vmul.f32 %v794, %v794
        %v827 = vmul.f32 %v795, %v795
        %v828 = vmul.f32 %v796, %v796
        %v829 = vmul.f32 %v797, %v797
        %v830 = vmul.f32 %v798, %v798
        %v831 = vsel %vm637, %v799, 0.0
        %832 = vadd.xlane.f32.xlu0 %v831
        %v833 = vpop.xlane.xlu0 %832
        %v834 = vsel %vm637, %v800, 0.0
        %835 = vadd.xlane.f32.xlu0 %v834
        %v836 = vpop.xlane.xlu0 %835
        %v837 = vsel %vm637, %v801, 0.0
        %838 = vadd.xlane.f32.xlu0 %v837
        %v839 = vpop.xlane.xlu0 %838
        %v840 = vsel %vm637, %v802, 0.0
        %841 = vadd.xlane.f32.xlu0 %v840
        %v842 = vpop.xlane.xlu0 %841
        %v843 = vsel %vm637, %v803, 0.0
        %844 = vadd.xlane.f32.xlu0 %v843
        %v845 = vpop.xlane.xlu0 %844
        %v846 = vsel %vm637, %v804, 0.0
        %847 = vadd.xlane.f32.xlu0 %v846
        %v848 = vpop.xlane.xlu0 %847
        %v849 = vsel %vm637, %v805, 0.0
        %850 = vadd.xlane.f32.xlu0 %v849
        %v851 = vpop.xlane.xlu0 %850
        %v852 = vsel %vm637, %v806, 0.0
        %853 = vadd.xlane.f32.xlu0 %v852
        %v854 = vpop.xlane.xlu0 %853
        %v855 = vsel %vm637, %v807, 0.0
        %856 = vadd.xlane.f32.xlu0 %v855
        %v857 = vpop.xlane.xlu0 %856
        %v858 = vsel %vm637, %v808, 0.0
        %859 = vadd.xlane.f32.xlu0 %v858
        %v860 = vpop.xlane.xlu0 %859
        %v861 = vsel %vm637, %v809, 0.0
        %862 = vadd.xlane.f32.xlu0 %v861
        %v863 = vpop.xlane.xlu0 %862
        %v864 = vsel %vm637, %v810, 0.0
        %865 = vadd.xlane.f32.xlu0 %v864
        %v866 = vpop.xlane.xlu0 %865
        %v867 = vsel %vm637, %v811, 0.0
        %868 = vadd.xlane.f32.xlu0 %v867
        %v869 = vpop.xlane.xlu0 %868
        %v870 = vsel %vm637, %v812, 0.0
        %871 = vadd.xlane.f32.xlu0 %v870
        %v872 = vpop.xlane.xlu0 %871
        %v873 = vsel %vm637, %v813, 0.0
        %874 = vadd.xlane.f32.xlu0 %v873
        %v875 = vpop.xlane.xlu0 %874
        %v876 = vsel %vm637, %v814, 0.0
        %877 = vadd.xlane.f32.xlu0 %v876
        %v878 = vpop.xlane.xlu0 %877
        %v879 = vsel %vm637, %v815, 0.0
        %880 = vadd.xlane.f32.xlu0 %v879
        %v881 = vpop.xlane.xlu0 %880
        %v882 = vsel %vm637, %v816, 0.0
        %883 = vadd.xlane.f32.xlu0 %v882
        %v884 = vpop.xlane.xlu0 %883
        %v885 = vsel %vm637, %v817, 0.0
        %886 = vadd.xlane.f32.xlu0 %v885
        %v887 = vpop.xlane.xlu0 %886
        %v888 = vsel %vm637, %v818, 0.0
        %889 = vadd.xlane.f32.xlu0 %v888
        %v890 = vpop.xlane.xlu0 %889
        %v891 = vsel %vm637, %v819, 0.0
        %892 = vadd.xlane.f32.xlu0 %v891
        %v893 = vpop.xlane.xlu0 %892
        %v894 = vsel %vm637, %v820, 0.0
        %895 = vadd.xlane.f32.xlu0 %v894
        %v896 = vpop.xlane.xlu0 %895
        %v897 = vsel %vm637, %v821, 0.0
        %898 = vadd.xlane.f32.xlu0 %v897
        %v899 = vpop.xlane.xlu0 %898
        %v900 = vsel %vm637, %v822, 0.0
        %901 = vadd.xlane.f32.xlu0 %v900
        %v902 = vpop.xlane.xlu0 %901
        %v903 = vsel %vm637, %v823, 0.0
        %904 = vadd.xlane.f32.xlu0 %v903
        %v905 = vpop.xlane.xlu0 %904
        %v906 = vsel %vm637, %v824, 0.0
        %907 = vadd.xlane.f32.xlu0 %v906
        %v908 = vpop.xlane.xlu0 %907
        %v909 = vsel %vm637, %v825, 0.0
        %910 = vadd.xlane.f32.xlu0 %v909
        %v911 = vpop.xlane.xlu0 %910
        %v912 = vsel %vm637, %v826, 0.0
        %913 = vadd.xlane.f32.xlu0 %v912
        %v914 = vpop.xlane.xlu0 %913
        %v915 = vsel %vm637, %v827, 0.0
        %916 = vadd.xlane.f32.xlu0 %v915
        %v917 = vpop.xlane.xlu0 %916
        %v918 = vsel %vm637, %v828, 0.0
        %919 = vadd.xlane.f32.xlu0 %v918
        %v920 = vpop.xlane.xlu0 %919
        %v921 = vsel %vm637, %v829, 0.0
        %922 = vadd.xlane.f32.xlu0 %v921
        %v923 = vpop.xlane.xlu0 %922
        %v924 = vsel %vm637, %v830, 0.0
        %925 = vadd.xlane.f32.xlu0 %v924
        %v926 = vpop.xlane.xlu0 %925
        %v927 = vmul.f32 %v833, %v734
        %v928 = vmul.f32 %v836, %v734
        %v929 = vmul.f32 %v839, %v734
        %v930 = vmul.f32 %v842, %v734
        %v931 = vmul.f32 %v845, %v734
        %v932 = vmul.f32 %v848, %v734
        %v933 = vmul.f32 %v851, %v734
        %v934 = vmul.f32 %v854, %v734
        %v935 = vmul.f32 %v857, %v734
        %v936 = vmul.f32 %v860, %v734
        %v937 = vmul.f32 %v863, %v734
        %v938 = vmul.f32 %v866, %v734
        %v939 = vmul.f32 %v869, %v734
        %v940 = vmul.f32 %v872, %v734
        %v941 = vmul.f32 %v875, %v734
        %v942 = vmul.f32 %v878, %v734
        %v943 = vmul.f32 %v881, %v734
        %v944 = vmul.f32 %v884, %v734
        %v945 = vmul.f32 %v887, %v734
        %v946 = vmul.f32 %v890, %v734
        %v947 = vmul.f32 %v893, %v734
        %v948 = vmul.f32 %v896, %v734
        %v949 = vmul.f32 %v899, %v734
        %v950 = vmul.f32 %v902, %v734
        %v951 = vmul.f32 %v905, %v734
        %v952 = vmul.f32 %v908, %v734
        %v953 = vmul.f32 %v911, %v734
        %v954 = vmul.f32 %v914, %v734
        %v955 = vmul.f32 %v917, %v734
        %v956 = vmul.f32 %v920, %v734
        %v957 = vmul.f32 %v923, %v734
        %v958 = vmul.f32 %v926, %v734
        %v959 = vadd.f32 %v927, 1e-06
        %v960 = vadd.f32 %v928, 1e-06
        %v961 = vadd.f32 %v929, 1e-06
        %v962 = vadd.f32 %v930, 1e-06
        %v963 = vadd.f32 %v931, 1e-06
        %v964 = vadd.f32 %v932, 1e-06
        %v965 = vadd.f32 %v933, 1e-06
        %v966 = vadd.f32 %v934, 1e-06
        %v967 = vadd.f32 %v935, 1e-06
        %v968 = vadd.f32 %v936, 1e-06
        %v969 = vadd.f32 %v937, 1e-06
        %v970 = vadd.f32 %v938, 1e-06
        %v971 = vadd.f32 %v939, 1e-06
        %v972 = vadd.f32 %v940, 1e-06
        %v973 = vadd.f32 %v941, 1e-06
        %v974 = vadd.f32 %v942, 1e-06
        %v975 = vadd.f32 %v943, 1e-06
        %v976 = vadd.f32 %v944, 1e-06
        %v977 = vadd.f32 %v945, 1e-06
        %v978 = vadd.f32 %v946, 1e-06
        %v979 = vadd.f32 %v947, 1e-06
        %v980 = vadd.f32 %v948, 1e-06
        %v981 = vadd.f32 %v949, 1e-06
        %v982 = vadd.f32 %v950, 1e-06
        %v983 = vadd.f32 %v951, 1e-06
        %v984 = vadd.f32 %v952, 1e-06
        %v985 = vadd.f32 %v953, 1e-06
        %v986 = vadd.f32 %v954, 1e-06
        %v987 = vadd.f32 %v955, 1e-06
        %v988 = vadd.f32 %v956, 1e-06
        %v989 = vadd.f32 %v957, 1e-06
        %v990 = vadd.f32 %v958, 1e-06
        %v991 = vrsqrt.pop %v959
        %v992 = vrsqrt.pop %v960
        %v993 = vrsqrt.pop %v961
        %v994 = vrsqrt.pop %v962
        %v995 = vrsqrt.pop %v963
        %v996 = vrsqrt.pop %v964
        %v997 = vrsqrt.pop %v965
        %v998 = vrsqrt.pop %v966
        %v999 = vrsqrt.pop %v967
        %v1000 = vrsqrt.pop %v968
        %v1001 = vrsqrt.pop %v969
        %v1002 = vrsqrt.pop %v970
        %v1003 = vrsqrt.pop %v971
        %v1004 = vrsqrt.pop %v972
        %v1005 = vrsqrt.pop %v973
        %v1006 = vrsqrt.pop %v974
        %v1007 = vrsqrt.pop %v975
        %v1008 = vrsqrt.pop %v976
        %v1009 = vrsqrt.pop %v977
        %v1010 = vrsqrt.pop %v978
        %v1011 = vrsqrt.pop %v979
        %v1012 = vrsqrt.pop %v980
        %v1013 = vrsqrt.pop %v981
        %v1014 = vrsqrt.pop %v982
        %v1015 = vrsqrt.pop %v983
        %v1016 = vrsqrt.pop %v984
        %v1017 = vrsqrt.pop %v985
        %v1018 = vrsqrt.pop %v986
        %v1019 = vrsqrt.pop %v987
        %v1020 = vrsqrt.pop %v988
        %v1021 = vrsqrt.pop %v989
        %v1022 = vrsqrt.pop %v990
        %v1023 = vmul.f32 %v767, %v991
        %v1024 = vmul.f32 %v768, %v992
        %v1025 = vmul.f32 %v769, %v993
        %v1026 = vmul.f32 %v770, %v994
        %v1027 = vmul.f32 %v771, %v995
        %v1028 = vmul.f32 %v772, %v996
        %v1029 = vmul.f32 %v773, %v997
        %v1030 = vmul.f32 %v774, %v998
        %v1031 = vmul.f32 %v775, %v999
        %v1032 = vmul.f32 %v776, %v1000
        %v1033 = vmul.f32 %v777, %v1001
        %v1034 = vmul.f32 %v778, %v1002
        %v1035 = vmul.f32 %v779, %v1003
        %v1036 = vmul.f32 %v780, %v1004
        %v1037 = vmul.f32 %v781, %v1005
        %v1038 = vmul.f32 %v782, %v1006
        %v1039 = vmul.f32 %v783, %v1007
        %v1040 = vmul.f32 %v784, %v1008
        %v1041 = vmul.f32 %v785, %v1009
        %v1042 = vmul.f32 %v786, %v1010
        %v1043 = vmul.f32 %v787, %v1011
        %v1044 = vmul.f32 %v788, %v1012
        %v1045 = vmul.f32 %v789, %v1013
        %v1046 = vmul.f32 %v790, %v1014
        %v1047 = vmul.f32 %v791, %v1015
        %v1048 = vmul.f32 %v792, %v1016
        %v1049 = vmul.f32 %v793, %v1017
        %v1050 = vmul.f32 %v794, %v1018
        %v1051 = vmul.f32 %v795, %v1019
        %v1052 = vmul.f32 %v796, %v1020
        %v1053 = vmul.f32 %v797, %v1021
        %v1054 = vmul.f32 %v798, %v1022
        %v1056 = vlaneseq
        %v1057 = vshrl.u32 %v1056, 7
        %v1058 = vsub.s32 0, %v1057
        %v1059 = vrot.slane %v603, %v1058
        %v1061 = vmul.f32 %v1023, %v1059
        %v1062 = vmul.f32 %v1024, %v1059
        %v1063 = vmul.f32 %v1025, %v1059
        %v1064 = vmul.f32 %v1026, %v1059
        %v1065 = vmul.f32 %v1027, %v1059
        %v1066 = vmul.f32 %v1028, %v1059
        %v1067 = vmul.f32 %v1029, %v1059
        %v1068 = vmul.f32 %v1030, %v1059
        %v1069 = vmul.f32 %v1031, %v1059
        %v1070 = vmul.f32 %v1032, %v1059
        %v1071 = vmul.f32 %v1033, %v1059
        %v1072 = vmul.f32 %v1034, %v1059
        %v1073 = vmul.f32 %v1035, %v1059
        %v1074 = vmul.f32 %v1036, %v1059
        %v1075 = vmul.f32 %v1037, %v1059
        %v1076 = vmul.f32 %v1038, %v1059
        %v1077 = vmul.f32 %v1039, %v1059
        %v1078 = vmul.f32 %v1040, %v1059
        %v1079 = vmul.f32 %v1041, %v1059
        %v1080 = vmul.f32 %v1042, %v1059
        %v1081 = vmul.f32 %v1043, %v1059
        %v1082 = vmul.f32 %v1044, %v1059
        %v1083 = vmul.f32 %v1045, %v1059
        %v1084 = vmul.f32 %v1046, %v1059
        %v1085 = vmul.f32 %v1047, %v1059
        %v1086 = vmul.f32 %v1048, %v1059
        %v1087 = vmul.f32 %v1049, %v1059
        %v1088 = vmul.f32 %v1050, %v1059
        %v1089 = vmul.f32 %v1051, %v1059
        %v1090 = vmul.f32 %v1052, %v1059
        %v1091 = vmul.f32 %v1053, %v1059
        %v1092 = vmul.f32 %v1054, %v1059
        %v1094 = vlaneseq
        %v1095 = vshrl.u32 %v1094, 7
        %v1096 = vsub.s32 0, %v1095
        %v1097 = vrot.slane %v604, %v1096
        %v1099 = vadd.f32 %v1061, %v1097
        %v1100 = vadd.f32 %v1062, %v1097
        %v1101 = vadd.f32 %v1063, %v1097
        %v1102 = vadd.f32 %v1064, %v1097
        %v1103 = vadd.f32 %v1065, %v1097
        %v1104 = vadd.f32 %v1066, %v1097
        %v1105 = vadd.f32 %v1067, %v1097
        %v1106 = vadd.f32 %v1068, %v1097
        %v1107 = vadd.f32 %v1069, %v1097
        %v1108 = vadd.f32 %v1070, %v1097
        %v1109 = vadd.f32 %v1071, %v1097
        %v1110 = vadd.f32 %v1072, %v1097
        %v1111 = vadd.f32 %v1073, %v1097
        %v1112 = vadd.f32 %v1074, %v1097
        %v1113 = vadd.f32 %v1075, %v1097
        %v1114 = vadd.f32 %v1076, %v1097
        %v1115 = vadd.f32 %v1077, %v1097
        %v1116 = vadd.f32 %v1078, %v1097
        %v1117 = vadd.f32 %v1079, %v1097
        %v1118 = vadd.f32 %v1080, %v1097
        %v1119 = vadd.f32 %v1081, %v1097
        %v1120 = vadd.f32 %v1082, %v1097
        %v1121 = vadd.f32 %v1083, %v1097
        %v1122 = vadd.f32 %v1084, %v1097
        %v1123 = vadd.f32 %v1085, %v1097
        %v1124 = vadd.f32 %v1086, %v1097
        %v1125 = vadd.f32 %v1087, %v1097
        %v1126 = vadd.f32 %v1088, %v1097
        %v1127 = vadd.f32 %v1089, %v1097
        %v1128 = vadd.f32 %v1090, %v1097
        %v1129 = vadd.f32 %v1091, %v1097
        %v1130 = vadd.f32 %v1092, %v1097
        %v1131 = vpack.c.bf16 %v1100, %v1099
        %v1132 = vpack.c.bf16 %v1102, %v1101
        %v1133 = vpack.c.bf16 %v1104, %v1103
        %v1134 = vpack.c.bf16 %v1106, %v1105
        %v1135 = vpack.c.bf16 %v1108, %v1107
        %v1136 = vpack.c.bf16 %v1110, %v1109
        %v1137 = vpack.c.bf16 %v1112, %v1111
        %v1138 = vpack.c.bf16 %v1114, %v1113
        %v1139 = vpack.c.bf16 %v1116, %v1115
        %v1140 = vpack.c.bf16 %v1118, %v1117
        %v1141 = vpack.c.bf16 %v1120, %v1119
        %v1142 = vpack.c.bf16 %v1122, %v1121
        %v1143 = vpack.c.bf16 %v1124, %v1123
        %v1144 = vpack.c.bf16 %v1126, %v1125
        %v1145 = vpack.c.bf16 %v1128, %v1127
        %v1146 = vpack.c.bf16 %v1130, %v1129
        %s1147 = scalar_lea.vmem [#allocation2], 8
        %1148 = vst.msk [vmem:[%s1147] sm:$0xff] %vm637, %v1131
        %1149 = vst.msk [vmem:[%s1147 + $0x8] sm:$0xff] %vm637, %v1132
        %1150 = vst.msk [vmem:[%s1147 + $0x10] sm:$0xff] %vm637, %v1133
        %1151 = vst.msk [vmem:[%s1147 + $0x18] sm:$0xff] %vm637, %v1134
        %1152 = vst.msk [vmem:[%s1147 + $0x20] sm:$0xff] %vm637, %v1135
        %1153 = vst.msk [vmem:[%s1147 + $0x28] sm:$0xff] %vm637, %v1136
        %1154 = vst.msk [vmem:[%s1147 + $0x30] sm:$0xff] %vm637, %v1137
        %1155 = vst.msk [vmem:[%s1147 + $0x38] sm:$0xff] %vm637, %v1138
        %1156 = vst.msk [vmem:[%s1147 + $0x40] sm:$0xff] %vm637, %v1139
        %1157 = vst.msk [vmem:[%s1147 + $0x48] sm:$0xff] %vm637, %v1140
        %1158 = vst.msk [vmem:[%s1147 + $0x50] sm:$0xff] %vm637, %v1141
        %1159 = vst.msk [vmem:[%s1147 + $0x58] sm:$0xff] %vm637, %v1142
        %1160 = vst.msk [vmem:[%s1147 + $0x60] sm:$0xff] %vm637, %v1143
        %1161 = vst.msk [vmem:[%s1147 + $0x68] sm:$0xff] %vm637, %v1144
        %1162 = vst.msk [vmem:[%s1147 + $0x70] sm:$0xff] %vm637, %v1145
        %1163 = vst.msk [vmem:[%s1147 + $0x78] sm:$0xff] %vm637, %v1146
        %p1164 = scmp.gt.s32.totalorder %s38, 0
        %s1165 = scalar_select %p1164, 1.0, 0.0
        %p1166 = scmp.lt.s32.totalorder %s38, 0
        %s1167 = scalar_select %p1166, 1.0, 0.0
        %v1168 = vld [vmem:[%s591] sm:$0xff]
        %v1169 = vld [vmem:[%s591 + $0x8] sm:$0xff]
        %v1170 = vsel %vm637, %v1168, 0.0
        %1171 = vadd.xlane.f32.xlu0 %v1170
        %v1172 = vpop.xlane.xlu0 %1171
        %v1173 = vsel %vm637, %v1169, 0.0
        %1174 = vadd.xlane.f32.xlu0 %v1173
        %v1175 = vpop.xlane.xlu0 %1174
        %v1176 = vmul.f32 %v1172, %v734
        %v1177 = vmul.f32 %v1175, %v734
        %v1178 = vsub.f32 %v1168, %v1176
        %v1179 = vsub.f32 %v1169, %v1177
        %v1180 = vmul.f32 %v1178, %v1178
        %v1181 = vmul.f32 %v1179, %v1179
        %v1182 = vsel %vm637, %v1180, 0.0
        %1183 = vadd.xlane.f32.xlu0 %v1182
        %v1184 = vpop.xlane.xlu0 %1183
        %v1185 = vsel %vm637, %v1181, 0.0
        %1186 = vadd.xlane.f32.xlu0 %v1185
        %v1187 = vpop.xlane.xlu0 %1186
        %v1188 = vmul.f32 %v1184, %v734
        %v1189 = vmul.f32 %v1187, %v734
        %v1190 = vadd.f32 %v1188, 1e-06
        %v1191 = vadd.f32 %v1189, 1e-06
        %v1192 = vrsqrt.pop %v1190
        %v1193 = vrsqrt.pop %v1191
        %v1194 = vmul.f32 %v1178, %v1192
        %v1195 = vmul.f32 %v1179, %v1193
        %v1196 = vmul.f32 %v1194, %v1059
        %v1197 = vmul.f32 %v1195, %v1059
        %v1198 = vadd.f32 %v1196, %v1097
        %v1199 = vadd.f32 %v1197, %v1097
        %v1200 = vstv %s1165
        %v1201 = vmul.f32 %v1198, %v1200
        %v1202 = vmul.f32 %v1199, %v1200
        %v1203 = vpack.c.bf16 %v1202, %v1201
        %1204 = vst.msk [vmem:[#allocation2] sm:$0xff] %vm637, %v1203
        %v1205 = vld [vmem:[%s518] sm:$0xff]
        %v1206 = vld [vmem:[%s518 + $0x8] sm:$0xff]
        %v1207 = vsel %vm637, %v1205, 0.0
        %1208 = vadd.xlane.f32.xlu0 %v1207
        %v1209 = vpop.xlane.xlu0 %1208
        %v1210 = vsel %vm637, %v1206, 0.0
        %1211 = vadd.xlane.f32.xlu0 %v1210
        %v1212 = vpop.xlane.xlu0 %1211
        %v1213 = vmul.f32 %v1209, %v734
        %v1214 = vmul.f32 %v1212, %v734
        %v1215 = vsub.f32 %v1205, %v1213
        %v1216 = vsub.f32 %v1206, %v1214
        %v1217 = vmul.f32 %v1215, %v1215
        %v1218 = vmul.f32 %v1216, %v1216
        %v1219 = vsel %vm637, %v1217, 0.0
        %1220 = vadd.xlane.f32.xlu0 %v1219
        %v1221 = vpop.xlane.xlu0 %1220
        %v1222 = vsel %vm637, %v1218, 0.0
        %1223 = vadd.xlane.f32.xlu0 %v1222
        %v1224 = vpop.xlane.xlu0 %1223
        %v1225 = vmul.f32 %v1221, %v734
        %v1226 = vmul.f32 %v1224, %v734
        %v1227 = vadd.f32 %v1225, 1e-06
        %v1228 = vadd.f32 %v1226, 1e-06
        %v1229 = vrsqrt.pop %v1227
        %v1230 = vrsqrt.pop %v1228
        %v1231 = vmul.f32 %v1215, %v1229
        %v1232 = vmul.f32 %v1216, %v1230
        %v1233 = vmul.f32 %v1231, %v1059
        %v1234 = vmul.f32 %v1232, %v1059
        %v1235 = vadd.f32 %v1233, %v1097
        %v1236 = vadd.f32 %v1234, %v1097
        %v1237 = vstv %s1167
        %v1238 = vmul.f32 %v1235, %v1237
        %v1239 = vmul.f32 %v1236, %v1237
        %v1240 = vpack.c.bf16 %v1239, %v1238
        %s1241 = scalar_lea.vmem [#allocation2], 136
        %1242 = vst.msk [vmem:[%s1241] sm:$0xff] %vm637, %v1240
        %v1243 = vlaneseq
        %v1244 = vshrl.u32 %v1243, 7
        %v1245 = vadd.s32 %v1244, 8
        %vm1246 = vcmp.gt.s32.totalorder %v1244, 0
        %vm1247 = vcmp.gt.s32.totalorder %v1245, 0
        %vm1248 = vcmp.lt.s32.totalorder %v1244, 15
        %vm1249 = vcmp.lt.s32.totalorder %v1245, 15
        %v1250 = vld [vmem:[%s7] sm:$0x1]
        %v1251 = vld [vmem:[%s8] sm:$0x1]
        %v1252 = vld [vmem:[%s6] sm:$0x1]
        %v1253 = vld [vmem:[%s10] sm:$0x3]
        %v1254 = vld [vmem:[%s12] sm:$0x1]
        %v1255 = vld [vmem:[#allocation2] sm:$0xff]
        %v1256 = vld [vmem:[#allocation2 + $0x8] sm:$0xff]
        %v1257 = vld [vmem:[#allocation2 + $0x10] sm:$0xff]
        %v1258 = vld [vmem:[#allocation2 + $0x18] sm:$0xff]
        %v1259 = vld [vmem:[#allocation2 + $0x20] sm:$0xff]
        %v1260 = vld [vmem:[#allocation2 + $0x28] sm:$0xff]
        %v1261 = vld [vmem:[#allocation2 + $0x30] sm:$0xff]
        %v1262 = vld [vmem:[#allocation2 + $0x38] sm:$0xff]
        %v1263 = vld [vmem:[#allocation2 + $0x40] sm:$0xff]
        %v1264 = vld [vmem:[#allocation2 + $0x48] sm:$0xff]
        %v1265 = vld [vmem:[#allocation2 + $0x50] sm:$0xff]
        %v1266 = vld [vmem:[#allocation2 + $0x58] sm:$0xff]
        %v1267 = vld [vmem:[#allocation2 + $0x60] sm:$0xff]
        %v1268 = vld [vmem:[#allocation2 + $0x68] sm:$0xff]
        %v1269 = vld [vmem:[#allocation2 + $0x70] sm:$0xff]
        %v1270 = vld [vmem:[#allocation2 + $0x78] sm:$0xff]
        %v1271 = vld [vmem:[#allocation2 + $0x80] sm:$0xff]
        %v1272 = vld [vmem:[#allocation2 + $0x88] sm:$0xff]
        %v1273 = vunpack.c.l.bf16 %v1255
        %v1274 = vunpack.c.h.bf16 %v1255
        %v1275 = vunpack.c.l.bf16 %v1256
        %v1276 = vunpack.c.h.bf16 %v1256
        %v1277 = vunpack.c.l.bf16 %v1257
        %v1278 = vunpack.c.h.bf16 %v1257
        %v1279 = vunpack.c.l.bf16 %v1258
        %v1280 = vunpack.c.h.bf16 %v1258
        %v1281 = vunpack.c.l.bf16 %v1259
        %v1282 = vunpack.c.h.bf16 %v1259
        %v1283 = vunpack.c.l.bf16 %v1260
        %v1284 = vunpack.c.h.bf16 %v1260
        %v1285 = vunpack.c.l.bf16 %v1261
        %v1286 = vunpack.c.h.bf16 %v1261
        %v1287 = vunpack.c.l.bf16 %v1262
        %v1288 = vunpack.c.h.bf16 %v1262
        %v1289 = vunpack.c.l.bf16 %v1263
        %v1290 = vunpack.c.h.bf16 %v1263
        %v1291 = vunpack.c.l.bf16 %v1264
        %v1292 = vunpack.c.h.bf16 %v1264
        %v1293 = vunpack.c.l.bf16 %v1265
        %v1294 = vunpack.c.h.bf16 %v1265
        %v1295 = vunpack.c.l.bf16 %v1266
        %v1296 = vunpack.c.h.bf16 %v1266
        %v1297 = vunpack.c.l.bf16 %v1267
        %v1298 = vunpack.c.h.bf16 %v1267
        %v1299 = vunpack.c.l.bf16 %v1268
        %v1300 = vunpack.c.h.bf16 %v1268
        %v1301 = vunpack.c.l.bf16 %v1269
        %v1302 = vunpack.c.h.bf16 %v1269
        %v1303 = vunpack.c.l.bf16 %v1270
        %v1304 = vunpack.c.h.bf16 %v1270
        %v1305 = vunpack.c.l.bf16 %v1271
        %v1306 = vunpack.c.h.bf16 %v1271
        %v1307 = vunpack.c.l.bf16 %v1272
        %v1308 = vunpack.c.h.bf16 %v1272
        %v1309 = vrot.slane %v1273, 7
        %v1310 = vrot.slane %v1275, 7
        %v1311 = vrot.slane %v1277, 7
        %v1312 = vrot.slane %v1279, 7
        %v1313 = vrot.slane %v1281, 7
        %v1314 = vrot.slane %v1283, 7
        %v1315 = vrot.slane %v1285, 7
        %v1316 = vrot.slane %v1287, 7
        %v1317 = vrot.slane %v1289, 7
        %v1318 = vrot.slane %v1291, 7
        %v1319 = vrot.slane %v1293, 7
        %v1320 = vrot.slane %v1295, 7
        %v1321 = vrot.slane %v1297, 7
        %v1322 = vrot.slane %v1299, 7
        %v1323 = vrot.slane %v1301, 7
        %v1324 = vrot.slane %v1303, 7
        %v1325 = vrot.slane %v1305, 7
        %v1326 = vrot.slane %v1307, 7
        %v1327 = vrot.slane %v1274, 7
        %v1328 = vrot.slane %v1276, 7
        %v1329 = vrot.slane %v1278, 7
        %v1330 = vrot.slane %v1280, 7
        %v1331 = vrot.slane %v1282, 7
        %v1332 = vrot.slane %v1284, 7
        %v1333 = vrot.slane %v1286, 7
        %v1334 = vrot.slane %v1288, 7
        %v1335 = vrot.slane %v1290, 7
        %v1336 = vrot.slane %v1292, 7
        %v1337 = vrot.slane %v1294, 7
        %v1338 = vrot.slane %v1296, 7
        %v1339 = vrot.slane %v1298, 7
        %v1340 = vrot.slane %v1300, 7
        %v1341 = vrot.slane %v1302, 7
        %v1342 = vrot.slane %v1304, 7
        %v1343 = vrot.slane %v1306, 7
        %v1344 = vrot.slane %v1308, 7
        %vm1345 = vcmp.lt.s32.totalorder %v1244, 1
        %v1346 = vsel %vm1345, %v1309, %v1327
        %v1347 = vsel %vm1345, %v1310, %v1328
        %v1348 = vsel %vm1345, %v1311, %v1329
        %v1349 = vsel %vm1345, %v1312, %v1330
        %v1350 = vsel %vm1345, %v1313, %v1331
        %v1351 = vsel %vm1345, %v1314, %v1332
        %v1352 = vsel %vm1345, %v1315, %v1333
        %v1353 = vsel %vm1345, %v1316, %v1334
        %v1354 = vsel %vm1345, %v1317, %v1335
        %v1355 = vsel %vm1345, %v1318, %v1336
        %v1356 = vsel %vm1345, %v1319, %v1337
        %v1357 = vsel %vm1345, %v1320, %v1338
        %v1358 = vsel %vm1345, %v1321, %v1339
        %v1359 = vsel %vm1345, %v1322, %v1340
        %v1360 = vsel %vm1345, %v1323, %v1341
        %v1361 = vsel %vm1345, %v1324, %v1342
        %v1362 = vsel %vm1345, %v1325, %v1343
        %v1363 = vsel %vm1345, %v1326, %v1344
        %v1364 = vsel %vm1345, %v1327, %v1309
        %v1365 = vsel %vm1345, %v1328, %v1310
        %v1366 = vsel %vm1345, %v1329, %v1311
        %v1367 = vsel %vm1345, %v1330, %v1312
        %v1368 = vsel %vm1345, %v1331, %v1313
        %v1369 = vsel %vm1345, %v1332, %v1314
        %v1370 = vsel %vm1345, %v1333, %v1315
        %v1371 = vsel %vm1345, %v1334, %v1316
        %v1372 = vsel %vm1345, %v1335, %v1317
        %v1373 = vsel %vm1345, %v1336, %v1318
        %v1374 = vsel %vm1345, %v1337, %v1319
        %v1375 = vsel %vm1345, %v1338, %v1320
        %v1376 = vsel %vm1345, %v1339, %v1321
        %v1377 = vsel %vm1345, %v1340, %v1322
        %v1378 = vsel %vm1345, %v1341, %v1323
        %v1379 = vsel %vm1345, %v1342, %v1324
        %v1380 = vsel %vm1345, %v1343, %v1325
        %v1381 = vsel %vm1345, %v1344, %v1326
        %v1382 = vsel %vm1246, %v1364, 0.0
        %v1383 = vsel %vm1247, %v1346, 0.0
        %v1384 = vsel %vm1246, %v1365, 0.0
        %v1385 = vsel %vm1247, %v1347, 0.0
        %v1386 = vsel %vm1246, %v1366, 0.0
        %v1387 = vsel %vm1247, %v1348, 0.0
        %v1388 = vsel %vm1246, %v1367, 0.0
        %v1389 = vsel %vm1247, %v1349, 0.0
        %v1390 = vsel %vm1246, %v1368, 0.0
        %v1391 = vsel %vm1247, %v1350, 0.0
        %v1392 = vsel %vm1246, %v1369, 0.0
        %v1393 = vsel %vm1247, %v1351, 0.0
        %v1394 = vsel %vm1246, %v1370, 0.0
        %v1395 = vsel %vm1247, %v1352, 0.0
        %v1396 = vsel %vm1246, %v1371, 0.0
        %v1397 = vsel %vm1247, %v1353, 0.0
        %v1398 = vsel %vm1246, %v1372, 0.0
        %v1399 = vsel %vm1247, %v1354, 0.0
        %v1400 = vsel %vm1246, %v1373, 0.0
        %v1401 = vsel %vm1247, %v1355, 0.0
        %v1402 = vsel %vm1246, %v1374, 0.0
        %v1403 = vsel %vm1247, %v1356, 0.0
        %v1404 = vsel %vm1246, %v1375, 0.0
        %v1405 = vsel %vm1247, %v1357, 0.0
        %v1406 = vsel %vm1246, %v1376, 0.0
        %v1407 = vsel %vm1247, %v1358, 0.0
        %v1408 = vsel %vm1246, %v1377, 0.0
        %v1409 = vsel %vm1247, %v1359, 0.0
        %v1410 = vsel %vm1246, %v1378, 0.0
        %v1411 = vsel %vm1247, %v1360, 0.0
        %v1412 = vsel %vm1246, %v1379, 0.0
        %v1413 = vsel %vm1247, %v1361, 0.0
        %v1414 = vsel %vm1246, %v1380, 0.0
        %v1415 = vsel %vm1247, %v1362, 0.0
        %v1416 = vsel %vm1246, %v1381, 0.0
        %v1417 = vsel %vm1247, %v1363, 0.0
        %v1418 = vrot.slane %v1273, 1
        %v1419 = vrot.slane %v1275, 1
        %v1420 = vrot.slane %v1277, 1
        %v1421 = vrot.slane %v1279, 1
        %v1422 = vrot.slane %v1281, 1
        %v1423 = vrot.slane %v1283, 1
        %v1424 = vrot.slane %v1285, 1
        %v1425 = vrot.slane %v1287, 1
        %v1426 = vrot.slane %v1289, 1
        %v1427 = vrot.slane %v1291, 1
        %v1428 = vrot.slane %v1293, 1
        %v1429 = vrot.slane %v1295, 1
        %v1430 = vrot.slane %v1297, 1
        %v1431 = vrot.slane %v1299, 1
        %v1432 = vrot.slane %v1301, 1
        %v1433 = vrot.slane %v1303, 1
        %v1434 = vrot.slane %v1305, 1
        %v1435 = vrot.slane %v1307, 1
        %v1436 = vrot.slane %v1274, 1
        %v1437 = vrot.slane %v1276, 1
        %v1438 = vrot.slane %v1278, 1
        %v1439 = vrot.slane %v1280, 1
        %v1440 = vrot.slane %v1282, 1
        %v1441 = vrot.slane %v1284, 1
        %v1442 = vrot.slane %v1286, 1
        %v1443 = vrot.slane %v1288, 1
        %v1444 = vrot.slane %v1290, 1
        %v1445 = vrot.slane %v1292, 1
        %v1446 = vrot.slane %v1294, 1
        %v1447 = vrot.slane %v1296, 1
        %v1448 = vrot.slane %v1298, 1
        %v1449 = vrot.slane %v1300, 1
        %v1450 = vrot.slane %v1302, 1
        %v1451 = vrot.slane %v1304, 1
        %v1452 = vrot.slane %v1306, 1
        %v1453 = vrot.slane %v1308, 1
        %vm1454 = vcmp.lt.s32.totalorder %v1244, 7
        %v1455 = vsel %vm1454, %v1418, %v1436
        %v1456 = vsel %vm1454, %v1419, %v1437
        %v1457 = vsel %vm1454, %v1420, %v1438
        %v1458 = vsel %vm1454, %v1421, %v1439
        %v1459 = vsel %vm1454, %v1422, %v1440
        %v1460 = vsel %vm1454, %v1423, %v1441
        %v1461 = vsel %vm1454, %v1424, %v1442
        %v1462 = vsel %vm1454, %v1425, %v1443
        %v1463 = vsel %vm1454, %v1426, %v1444
        %v1464 = vsel %vm1454, %v1427, %v1445
        %v1465 = vsel %vm1454, %v1428, %v1446
        %v1466 = vsel %vm1454, %v1429, %v1447
        %v1467 = vsel %vm1454, %v1430, %v1448
        %v1468 = vsel %vm1454, %v1431, %v1449
        %v1469 = vsel %vm1454, %v1432, %v1450
        %v1470 = vsel %vm1454, %v1433, %v1451
        %v1471 = vsel %vm1454, %v1434, %v1452
        %v1472 = vsel %vm1454, %v1435, %v1453
        %v1473 = vsel %vm1454, %v1436, %v1418
        %v1474 = vsel %vm1454, %v1437, %v1419
        %v1475 = vsel %vm1454, %v1438, %v1420
        %v1476 = vsel %vm1454, %v1439, %v1421
        %v1477 = vsel %vm1454, %v1440, %v1422
        %v1478 = vsel %vm1454, %v1441, %v1423
        %v1479 = vsel %vm1454, %v1442, %v1424
        %v1480 = vsel %vm1454, %v1443, %v1425
        %v1481 = vsel %vm1454, %v1444, %v1426
        %v1482 = vsel %vm1454, %v1445, %v1427
        %v1483 = vsel %vm1454, %v1446, %v1428
        %v1484 = vsel %vm1454, %v1447, %v1429
        %v1485 = vsel %vm1454, %v1448, %v1430
        %v1486 = vsel %vm1454, %v1449, %v1431
        %v1487 = vsel %vm1454, %v1450, %v1432
        %v1488 = vsel %vm1454, %v1451, %v1433
        %v1489 = vsel %vm1454, %v1452, %v1434
        %v1490 = vsel %vm1454, %v1453, %v1435
        %v1491 = vsel %vm1248, %v1455, 0.0
        %v1492 = vsel %vm1249, %v1473, 0.0
        %v1493 = vsel %vm1248, %v1456, 0.0
        %v1494 = vsel %vm1249, %v1474, 0.0
        %v1495 = vsel %vm1248, %v1457, 0.0
        %v1496 = vsel %vm1249, %v1475, 0.0
        %v1497 = vsel %vm1248, %v1458, 0.0
        %v1498 = vsel %vm1249, %v1476, 0.0
        %v1499 = vsel %vm1248, %v1459, 0.0
        %v1500 = vsel %vm1249, %v1477, 0.0
        %v1501 = vsel %vm1248, %v1460, 0.0
        %v1502 = vsel %vm1249, %v1478, 0.0
        %v1503 = vsel %vm1248, %v1461, 0.0
        %v1504 = vsel %vm1249, %v1479, 0.0
        %v1505 = vsel %vm1248, %v1462, 0.0
        %v1506 = vsel %vm1249, %v1480, 0.0
        %v1507 = vsel %vm1248, %v1463, 0.0
        %v1508 = vsel %vm1249, %v1481, 0.0
        %v1509 = vsel %vm1248, %v1464, 0.0
        %v1510 = vsel %vm1249, %v1482, 0.0
        %v1511 = vsel %vm1248, %v1465, 0.0
        %v1512 = vsel %vm1249, %v1483, 0.0
        %v1513 = vsel %vm1248, %v1466, 0.0
        %v1514 = vsel %vm1249, %v1484, 0.0
        %v1515 = vsel %vm1248, %v1467, 0.0
        %v1516 = vsel %vm1249, %v1485, 0.0
        %v1517 = vsel %vm1248, %v1468, 0.0
        %v1518 = vsel %vm1249, %v1486, 0.0
        %v1519 = vsel %vm1248, %v1469, 0.0
        %v1520 = vsel %vm1249, %v1487, 0.0
        %v1521 = vsel %vm1248, %v1470, 0.0
        %v1522 = vsel %vm1249, %v1488, 0.0
        %v1523 = vsel %vm1248, %v1471, 0.0
        %v1524 = vsel %vm1249, %v1489, 0.0
        %v1525 = vsel %vm1248, %v1472, 0.0
        %v1526 = vsel %vm1249, %v1490, 0.0
        %v1527 = vpack.c.bf16 %v1383, %v1382
        %v1528 = vpack.c.bf16 %v1385, %v1384
        %v1529 = vpack.c.bf16 %v1387, %v1386
        %v1530 = vpack.c.bf16 %v1389, %v1388
        %v1531 = vpack.c.bf16 %v1391, %v1390
        %v1532 = vpack.c.bf16 %v1393, %v1392
        %v1533 = vpack.c.bf16 %v1395, %v1394
        %v1534 = vpack.c.bf16 %v1397, %v1396
        %v1535 = vpack.c.bf16 %v1399, %v1398
        %v1536 = vpack.c.bf16 %v1401, %v1400
        %v1537 = vpack.c.bf16 %v1403, %v1402
        %v1538 = vpack.c.bf16 %v1405, %v1404
        %v1539 = vpack.c.bf16 %v1407, %v1406
        %v1540 = vpack.c.bf16 %v1409, %v1408
        %v1541 = vpack.c.bf16 %v1411, %v1410
        %v1542 = vpack.c.bf16 %v1413, %v1412
        %v1543 = vpack.c.bf16 %v1415, %v1414
        %v1544 = vpack.c.bf16 %v1417, %v1416
        %v1545 = vpack.c.bf16 %v1492, %v1491
        %v1546 = vpack.c.bf16 %v1494, %v1493
        %v1547 = vpack.c.bf16 %v1496, %v1495
        %v1548 = vpack.c.bf16 %v1498, %v1497
        %v1549 = vpack.c.bf16 %v1500, %v1499
        %v1550 = vpack.c.bf16 %v1502, %v1501
        %v1551 = vpack.c.bf16 %v1504, %v1503
        %v1552 = vpack.c.bf16 %v1506, %v1505
        %v1553 = vpack.c.bf16 %v1508, %v1507
        %v1554 = vpack.c.bf16 %v1510, %v1509
        %v1555 = vpack.c.bf16 %v1512, %v1511
        %v1556 = vpack.c.bf16 %v1514, %v1513
        %v1557 = vpack.c.bf16 %v1516, %v1515
        %v1558 = vpack.c.bf16 %v1518, %v1517
        %v1559 = vpack.c.bf16 %v1520, %v1519
        %v1560 = vpack.c.bf16 %v1522, %v1521
        %v1561 = vpack.c.bf16 %v1524, %v1523
        %v1562 = vpack.c.bf16 %v1526, %v1525
        %1581 = vrot.lane.b32.xlu0 %v1255, 64
        %v1582 = vpop.permute.xlu0 %1581
        %1583 = vrot.lane.b32.xlu0 %v1256, 64
        %v1584 = vpop.permute.xlu0 %1583
        %1585 = vrot.lane.b32.xlu0 %v1257, 64
        %v1586 = vpop.permute.xlu0 %1585
        %1587 = vrot.lane.b32.xlu0 %v1258, 64
        %v1588 = vpop.permute.xlu0 %1587
        %1589 = vrot.lane.b32.xlu0 %v1259, 64
        %v1590 = vpop.permute.xlu0 %1589
        %1591 = vrot.lane.b32.xlu0 %v1260, 64
        %v1592 = vpop.permute.xlu0 %1591
        %1593 = vrot.lane.b32.xlu0 %v1261, 64
        %v1594 = vpop.permute.xlu0 %1593
        %1595 = vrot.lane.b32.xlu0 %v1262, 64
        %v1596 = vpop.permute.xlu0 %1595
        %1597 = vrot.lane.b32.xlu0 %v1263, 64
        %v1598 = vpop.permute.xlu0 %1597
        %1599 = vrot.lane.b32.xlu0 %v1264, 64
        %v1600 = vpop.permute.xlu0 %1599
        %1601 = vrot.lane.b32.xlu0 %v1265, 64
        %v1602 = vpop.permute.xlu0 %1601
        %1603 = vrot.lane.b32.xlu0 %v1266, 64
        %v1604 = vpop.permute.xlu0 %1603
        %1605 = vrot.lane.b32.xlu0 %v1267, 64
        %v1606 = vpop.permute.xlu0 %1605
        %1607 = vrot.lane.b32.xlu0 %v1268, 64
        %v1608 = vpop.permute.xlu0 %1607
        %1609 = vrot.lane.b32.xlu0 %v1269, 64
        %v1610 = vpop.permute.xlu0 %1609
        %1611 = vrot.lane.b32.xlu0 %v1270, 64
        %v1612 = vpop.permute.xlu0 %1611
        %1613 = vrot.lane.b32.xlu0 %v1271, 64
        %v1614 = vpop.permute.xlu0 %1613
        %1615 = vrot.lane.b32.xlu0 %v1272, 64
        %v1616 = vpop.permute.xlu0 %1615
        %v1619 = vsel %vm637, %v1527, %v1582
        %v1623 = vsel %vm637, %v1528, %v1584
        %v1627 = vsel %vm637, %v1529, %v1586
        %v1631 = vsel %vm637, %v1530, %v1588
        %v1635 = vsel %vm637, %v1531, %v1590
        %v1639 = vsel %vm637, %v1532, %v1592
        %v1643 = vsel %vm637, %v1533, %v1594
        %v1647 = vsel %vm637, %v1534, %v1596
        %v1651 = vsel %vm637, %v1535, %v1598
        %v1655 = vsel %vm637, %v1536, %v1600
        %v1659 = vsel %vm637, %v1537, %v1602
        %v1663 = vsel %vm637, %v1538, %v1604
        %v1667 = vsel %vm637, %v1539, %v1606
        %v1671 = vsel %vm637, %v1540, %v1608
        %v1675 = vsel %vm637, %v1541, %v1610
        %v1679 = vsel %vm637, %v1542, %v1612
        %v1683 = vsel %vm637, %v1543, %v1614
        %v1687 = vsel %vm637, %v1544, %v1616
        %v1690 = vlaneseq
        %v1691 = vshrl.u32 %v1690, 7
        %v1692 = vsub.s32 0, %v1691
        %v1693 = vrot.slane %v1252, %v1692
        %v1695 = vadd.f32 %v1693, 0.0
        %v1696 = vld [vmem:[%s5] sm:$0xf]
        %v1697 = vld [vmem:[%s5 + $0x4] sm:$0xf]
        %v1698 = vld [vmem:[%s5 + $0x8] sm:$0xf]
        %v1699 = vld [vmem:[%s5 + $0xc] sm:$0xf]
        %v1700 = vld [vmem:[%s5 + $0x10] sm:$0xf]
        %v1701 = vld [vmem:[%s5 + $0x14] sm:$0xf]
        %v1702 = vld [vmem:[%s5 + $0x18] sm:$0xf]
        %v1703 = vld [vmem:[%s5 + $0x1c] sm:$0xf]
        %v1704 = vld [vmem:[%s5 + $0x20] sm:$0xf]
        %v1705 = vld [vmem:[%s5 + $0x24] sm:$0xf]
        %v1706 = vld [vmem:[%s5 + $0x28] sm:$0xf]
        %v1707 = vld [vmem:[%s5 + $0x2c] sm:$0xf]
        %v1708 = vld [vmem:[%s5 + $0x30] sm:$0xf]
        %v1709 = vld [vmem:[%s5 + $0x34] sm:$0xf]
        %v1710 = vld [vmem:[%s5 + $0x38] sm:$0xf]
        %v1711 = vld [vmem:[%s5 + $0x3c] sm:$0xf]
        %v1712 = vld [vmem:[%s5 + $0x40] sm:$0xf]
        %v1713 = vld [vmem:[%s5 + $0x44] sm:$0xf]
        %v1714 = vld [vmem:[%s5 + $0x48] sm:$0xf]
        %v1715 = vld [vmem:[%s5 + $0x4c] sm:$0xf]
        %v1716 = vld [vmem:[%s5 + $0x50] sm:$0xf]
        %v1717 = vld [vmem:[%s5 + $0x54] sm:$0xf]
        %v1718 = vld [vmem:[%s5 + $0x58] sm:$0xf]
        %v1719 = vld [vmem:[%s5 + $0x5c] sm:$0xf]
        %v1744 = vunpack.c.l.b16 %v1696
        %v1745 = vunpack.c.l.b16 %v1697
        %v1746 = vunpack.c.l.b16 %v1698
        %v1747 = vunpack.c.l.b16 %v1699
        %v1748 = vunpack.c.l.b16 %v1700
        %v1749 = vunpack.c.l.b16 %v1701
        %v1750 = vunpack.c.l.b16 %v1702
        %v1751 = vunpack.c.l.b16 %v1703
        %v1752 = vunpack.c.l.b16 %v1704
        %v1753 = vunpack.c.l.b16 %v1705
        %v1754 = vunpack.c.l.b16 %v1706
        %v1755 = vunpack.c.l.b16 %v1707
        %v1756 = vunpack.c.l.b16 %v1708
        %v1757 = vunpack.c.l.b16 %v1709
        %v1758 = vunpack.c.l.b16 %v1710
        %v1759 = vunpack.c.l.b16 %v1711
        %v1760 = vunpack.c.l.b16 %v1712
        %v1761 = vunpack.c.l.b16 %v1713
        %v1762 = vunpack.c.l.b16 %v1714
        %v1763 = vunpack.c.l.b16 %v1715
        %v1764 = vunpack.c.l.b16 %v1716
        %v1765 = vunpack.c.l.b16 %v1717
        %v1766 = vunpack.c.l.b16 %v1718
        %v1767 = vunpack.c.l.b16 %v1719
        %v1768 = vpack.c.b16 %v1745, %v1744
        %v1769 = vpack.c.b16 %v1747, %v1746
        %v1770 = vpack.c.b16 %v1749, %v1748
        %v1771 = vpack.c.b16 %v1751, %v1750
        %v1772 = vpack.c.b16 %v1753, %v1752
        %v1773 = vpack.c.b16 %v1755, %v1754
        %v1774 = vpack.c.b16 %v1757, %v1756
        %v1775 = vpack.c.b16 %v1759, %v1758
        %v1776 = vpack.c.b16 %v1761, %v1760
        %v1777 = vpack.c.b16 %v1763, %v1762
        %v1778 = vpack.c.b16 %v1765, %v1764
        %v1779 = vpack.c.b16 %v1767, %v1766
        %v1793 = vsel %vm637, %v1545, 0
        %v1796 = vsel %vm637, %v1546, 0
        %v1799 = vsel %vm637, %v1547, 0
        %v1802 = vsel %vm637, %v1548, 0
        %v1805 = vsel %vm637, %v1549, 0
        %v1808 = vsel %vm637, %v1550, 0
        %v1811 = vsel %vm637, %v1551, 0
        %v1814 = vsel %vm637, %v1552, 0
        %v1817 = vsel %vm637, %v1553, 0
        %v1820 = vsel %vm637, %v1554, 0
        %v1823 = vsel %vm637, %v1555, 0
        %v1826 = vsel %vm637, %v1556, 0
        %v1829 = vsel %vm637, %v1557, 0
        %v1832 = vsel %vm637, %v1558, 0
        %v1835 = vsel %vm637, %v1559, 0
        %v1838 = vsel %vm637, %v1560, 0
        %1840 = vmatprep.subr.bf16.mxu0 0
        %1841 = vmatpush1.bf16.msra.mxu0 %v1768
        %1842 = vmatprep.subr.bf16.mxu0 0
        %1843 = vmatpush1.bf16.msra.mxu0 %v1769
        %1844 = vmatprep.subr.bf16.mxu0 0
        %1845 = vmatpush1.bf16.msra.mxu0 %v1770
        %1846 = vmatprep.subr.bf16.mxu0 0
        %1847 = vmatpush1.bf16.msra.mxu0 %v1771
        %1848 = vmatprep.subr.bf16.mxu0 0
        %1849 = vmatpush1.bf16.msra.mxu0 %v1772
        %1850 = vmatprep.subr.bf16.mxu0 0
        %1851 = vmatpush1.bf16.msra.mxu0 %v1773
        %1852 = vmatprep.subr.bf16.mxu0 0
        %1853 = vmatpush1.bf16.msra.mxu0 %v1774
        %1854 = vmatprep.subr.bf16.mxu0 0
        %1855 = vmatpush1.bf16.msra.mxu0 %v1775
        %1856 = vmatprep.subr.bf16.mxu0 0
        %1857 = vmatpush1.bf16.msra.mxu0 %v1776
        %1858 = vmatprep.subr.bf16.mxu0 0
        %1859 = vmatpush1.bf16.msra.mxu0 %v1777
        %1860 = vmatprep.subr.bf16.mxu0 0
        %1861 = vmatpush1.bf16.msra.mxu0 %v1778
        %1862 = vmatprep.subr.bf16.mxu0 0
        %1863 = vmatpush1.bf16.msra.mxu0 %v1779
        %1864 = vmatprep.subr.bf16.mxu0 0
        %1865 = vmatpush1.bf16.msra.mxu0 0
        %1866 = vmatprep.subr.bf16.mxu0 0
        %1867 = vmatpush1.bf16.msra.mxu0 0
        %1868 = vmatprep.subr.bf16.mxu0 0
        %1869 = vmatpush1.bf16.msra.mxu0 0
        %1870 = vmatprep.subr.bf16.mxu0 0
        %1871 = vmatpush1.bf16.msra.mxu0 0
        %1872 = vmatprep.mubr.bf16.mxu0 %v1793
        %1873 = vmatmul.mubr.bf16.gmra.mrb[0].mxu0 %v1619
        %v1874 = vpop.f32.mrb[0].mxu0
        %v1875 = vadd.f32 0.0, %v1874
        %v1876 = vpop.f32.mrb[0].mxu0
        %v1877 = vpop.f32.mrb[0].mxu0
        %v1878 = vadd.f32 0.0, %v1877
        %v1879 = vpop.f32.mrb[0].mxu0
        %1880 = vmatprep.mubr.bf16.mxu0 %v1796
        %1881 = vmatmul.mubr.bf16.gmra.mrb[0].mxu0 %v1623
        %v1882 = vpop.f32.mrb[0].mxu0
        %v1883 = vadd.f32 0.0, %v1882
        %v1884 = vpop.f32.mrb[0].mxu0
        %v1885 = vpop.f32.mrb[0].mxu0
        %v1886 = vadd.f32 0.0, %v1885
        %v1887 = vpop.f32.mrb[0].mxu0
        %1888 = vmatprep.mubr.bf16.mxu0 %v1799
        %1889 = vmatmul.mubr.bf16.gmra.mrb[0].mxu0 %v1627
        %v1890 = vpop.f32.mrb[0].mxu0
        %v1891 = vadd.f32 0.0, %v1890
        %v1892 = vpop.f32.mrb[0].mxu0
        %v1893 = vpop.f32.mrb[0].mxu0
        %v1894 = vadd.f32 0.0, %v1893
        %v1895 = vpop.f32.mrb[0].mxu0
        %1896 = vmatprep.mubr.bf16.mxu0 %v1802
        %1897 = vmatmul.mubr.bf16.gmra.mrb[0].mxu0 %v1631
        %v1898 = vpop.f32.mrb[0].mxu0
        %v1899 = vadd.f32 0.0, %v1898
        %v1900 = vpop.f32.mrb[0].mxu0
        %v1901 = vpop.f32.mrb[0].mxu0
        %v1902 = vadd.f32 0.0, %v1901
        %v1903 = vpop.f32.mrb[0].mxu0
        %1904 = vmatprep.mubr.bf16.mxu0 %v1805
        %1905 = vmatmul.mubr.bf16.gmra.mrb[0].mxu0 %v1635
        %v1906 = vpop.f32.mrb[0].mxu0
        %v1907 = vadd.f32 0.0, %v1906
        %v1908 = vpop.f32.mrb[0].mxu0
        %v1909 = vpop.f32.mrb[0].mxu0
        %v1910 = vadd.f32 0.0, %v1909
        %v1911 = vpop.f32.mrb[0].mxu0
        %1912 = vmatprep.mubr.bf16.mxu0 %v1808
        %1913 = vmatmul.mubr.bf16.gmra.mrb[0].mxu0 %v1639
        %v1914 = vpop.f32.mrb[0].mxu0
        %v1915 = vadd.f32 0.0, %v1914
        %v1916 = vpop.f32.mrb[0].mxu0
        %v1917 = vpop.f32.mrb[0].mxu0
        %v1918 = vadd.f32 0.0, %v1917
        %v1919 = vpop.f32.mrb[0].mxu0
        %1920 = vmatprep.mubr.bf16.mxu0 %v1811
        %1921 = vmatmul.mubr.bf16.gmra.mrb[0].mxu0 %v1643
        %v1922 = vpop.f32.mrb[0].mxu0
        %v1923 = vadd.f32 0.0, %v1922
        %v1924 = vpop.f32.mrb[0].mxu0
        %v1925 = vpop.f32.mrb[0].mxu0
        %v1926 = vadd.f32 0.0, %v1925
        %v1927 = vpop.f32.mrb[0].mxu0
        %1928 = vmatprep.mubr.bf16.mxu0 %v1814
        %1929 = vmatmul.mubr.bf16.gmra.mrb[0].mxu0 %v1647
        %v1930 = vpop.f32.mrb[0].mxu0
        %v1931 = vadd.f32 0.0, %v1930
        %v1932 = vpop.f32.mrb[0].mxu0
        %v1933 = vpop.f32.mrb[0].mxu0
        %v1934 = vadd.f32 0.0, %v1933
        %v1935 = vpop.f32.mrb[0].mxu0
        %1936 = vmatprep.mubr.bf16.mxu0 %v1817
        %1937 = vmatmul.mubr.bf16.gmra.mrb[0].mxu0 %v1651
        %v1938 = vpop.f32.mrb[0].mxu0
        %v1939 = vadd.f32 0.0, %v1938
        %v1940 = vpop.f32.mrb[0].mxu0
        %v1941 = vpop.f32.mrb[0].mxu0
        %v1942 = vadd.f32 0.0, %v1941
        %v1943 = vpop.f32.mrb[0].mxu0
        %1944 = vmatprep.mubr.bf16.mxu0 %v1820
        %1945 = vmatmul.mubr.bf16.gmra.mrb[0].mxu0 %v1655
        %v1946 = vpop.f32.mrb[0].mxu0
        %v1947 = vadd.f32 0.0, %v1946
        %v1948 = vpop.f32.mrb[0].mxu0
        %v1949 = vpop.f32.mrb[0].mxu0
        %v1950 = vadd.f32 0.0, %v1949
        %v1951 = vpop.f32.mrb[0].mxu0
        %1952 = vmatprep.mubr.bf16.mxu0 %v1823
        %1953 = vmatmul.mubr.bf16.gmra.mrb[0].mxu0 %v1659
        %v1954 = vpop.f32.mrb[0].mxu0
        %v1955 = vadd.f32 0.0, %v1954
        %v1956 = vpop.f32.mrb[0].mxu0
        %v1957 = vpop.f32.mrb[0].mxu0
        %v1958 = vadd.f32 0.0, %v1957
        %v1959 = vpop.f32.mrb[0].mxu0
        %1960 = vmatprep.mubr.bf16.mxu0 %v1826
        %1961 = vmatmul.mubr.bf16.gmra.mrb[0].mxu0 %v1663
        %v1962 = vpop.f32.mrb[0].mxu0
        %v1963 = vadd.f32 0.0, %v1962
        %v1964 = vpop.f32.mrb[0].mxu0
        %v1965 = vpop.f32.mrb[0].mxu0
        %v1966 = vadd.f32 0.0, %v1965
        %v1967 = vpop.f32.mrb[0].mxu0
        %1968 = vmatprep.mubr.bf16.mxu0 %v1829
        %1969 = vmatmul.mubr.bf16.gmra.mrb[0].mxu0 %v1667
        %v1970 = vpop.f32.mrb[0].mxu0
        %v1971 = vadd.f32 0.0, %v1970
        %v1972 = vpop.f32.mrb[0].mxu0
        %v1973 = vpop.f32.mrb[0].mxu0
        %v1974 = vadd.f32 0.0, %v1973
        %v1975 = vpop.f32.mrb[0].mxu0
        %1976 = vmatprep.mubr.bf16.mxu0 %v1832
        %1977 = vmatmul.mubr.bf16.gmra.mrb[0].mxu0 %v1671
        %v1978 = vpop.f32.mrb[0].mxu0
        %v1979 = vadd.f32 0.0, %v1978
        %v1980 = vpop.f32.mrb[0].mxu0
        %v1981 = vpop.f32.mrb[0].mxu0
        %v1982 = vadd.f32 0.0, %v1981
        %v1983 = vpop.f32.mrb[0].mxu0
        %1984 = vmatprep.mubr.bf16.mxu0 %v1835
        %1985 = vmatmul.mubr.bf16.gmra.mrb[0].mxu0 %v1675
        %v1986 = vpop.f32.mrb[0].mxu0
        %v1987 = vadd.f32 0.0, %v1986
        %v1988 = vpop.f32.mrb[0].mxu0
        %v1989 = vpop.f32.mrb[0].mxu0
        %v1990 = vadd.f32 0.0, %v1989
        %v1991 = vpop.f32.mrb[0].mxu0
        %1992 = vmatprep.mubr.bf16.mxu0 %v1838
        %1993 = vmatmul.mubr.bf16.gmra.mrb[0].mxu0 %v1679
        %v1994 = vpop.f32.mrb[0].mxu0
        %v1995 = vadd.f32 0.0, %v1994
        %v1996 = vpop.f32.mrb[0].mxu0
        %v1997 = vpop.f32.mrb[0].mxu0
        %v1998 = vadd.f32 0.0, %v1997
        %v1999 = vpop.f32.mrb[0].mxu0
        %2000 = vdwg.mxu0
        %v2001 = vadd.f32 %v1695, %v1875
        %v2002 = vadd.f32 %v1695, %v1878
        %v2003 = vadd.f32 %v1695, %v1883
        %v2004 = vadd.f32 %v1695, %v1886
        %v2005 = vadd.f32 %v1695, %v1891
        %v2006 = vadd.f32 %v1695, %v1894
        %v2007 = vadd.f32 %v1695, %v1899
        %v2008 = vadd.f32 %v1695, %v1902
        %v2009 = vadd.f32 %v1695, %v1907
        %v2010 = vadd.f32 %v1695, %v1910
        %v2011 = vadd.f32 %v1695, %v1915
        %v2012 = vadd.f32 %v1695, %v1918
        %v2013 = vadd.f32 %v1695, %v1923
        %v2014 = vadd.f32 %v1695, %v1926
        %v2015 = vadd.f32 %v1695, %v1931
        %v2016 = vadd.f32 %v1695, %v1934
        %v2017 = vadd.f32 %v1695, %v1939
        %v2018 = vadd.f32 %v1695, %v1942
        %v2019 = vadd.f32 %v1695, %v1947
        %v2020 = vadd.f32 %v1695, %v1950
        %v2021 = vadd.f32 %v1695, %v1955
        %v2022 = vadd.f32 %v1695, %v1958
        %v2023 = vadd.f32 %v1695, %v1963
        %v2024 = vadd.f32 %v1695, %v1966
        %v2025 = vadd.f32 %v1695, %v1971
        %v2026 = vadd.f32 %v1695, %v1974
        %v2027 = vadd.f32 %v1695, %v1979
        %v2028 = vadd.f32 %v1695, %v1982
        %v2029 = vadd.f32 %v1695, %v1987
        %v2030 = vadd.f32 %v1695, %v1990
        %v2031 = vadd.f32 %v1695, %v1995
        %v2032 = vadd.f32 %v1695, %v1998
        %s2033 = scalar_lea.vmem %s5, 96
        %v2034 = vld [vmem:[%s2033] sm:$0xf]
        %v2035 = vld [vmem:[%s2033 + $0x4] sm:$0xf]
        %v2036 = vld [vmem:[%s2033 + $0x8] sm:$0xf]
        %v2037 = vld [vmem:[%s2033 + $0xc] sm:$0xf]
        %v2038 = vld [vmem:[%s2033 + $0x10] sm:$0xf]
        %v2039 = vld [vmem:[%s2033 + $0x14] sm:$0xf]
        %v2040 = vld [vmem:[%s2033 + $0x18] sm:$0xf]
        %v2041 = vld [vmem:[%s2033 + $0x1c] sm:$0xf]
        %v2042 = vld [vmem:[%s2033 + $0x20] sm:$0xf]
        %v2043 = vld [vmem:[%s2033 + $0x24] sm:$0xf]
        %v2044 = vld [vmem:[%s2033 + $0x28] sm:$0xf]
        %v2045 = vld [vmem:[%s2033 + $0x2c] sm:$0xf]
        %v2046 = vld [vmem:[%s2033 + $0x30] sm:$0xf]
        %v2047 = vld [vmem:[%s2033 + $0x34] sm:$0xf]
        %v2048 = vld [vmem:[%s2033 + $0x38] sm:$0xf]
        %v2049 = vld [vmem:[%s2033 + $0x3c] sm:$0xf]
        %v2050 = vld [vmem:[%s2033 + $0x40] sm:$0xf]
        %v2051 = vld [vmem:[%s2033 + $0x44] sm:$0xf]
        %v2052 = vld [vmem:[%s2033 + $0x48] sm:$0xf]
        %v2053 = vld [vmem:[%s2033 + $0x4c] sm:$0xf]
        %v2054 = vld [vmem:[%s2033 + $0x50] sm:$0xf]
        %v2055 = vld [vmem:[%s2033 + $0x54] sm:$0xf]
        %v2056 = vld [vmem:[%s2033 + $0x58] sm:$0xf]
        %v2057 = vld [vmem:[%s2033 + $0x5c] sm:$0xf]
        %v2082 = vunpack.c.l.b16 %v2034
        %v2083 = vunpack.c.l.b16 %v2035
        %v2084 = vunpack.c.l.b16 %v2036
        %v2085 = vunpack.c.l.b16 %v2037
        %v2086 = vunpack.c.l.b16 %v2038
        %v2087 = vunpack.c.l.b16 %v2039
        %v2088 = vunpack.c.l.b16 %v2040
        %v2089 = vunpack.c.l.b16 %v2041
        %v2090 = vunpack.c.l.b16 %v2042
        %v2091 = vunpack.c.l.b16 %v2043
        %v2092 = vunpack.c.l.b16 %v2044
        %v2093 = vunpack.c.l.b16 %v2045
        %v2094 = vunpack.c.l.b16 %v2046
        %v2095 = vunpack.c.l.b16 %v2047
        %v2096 = vunpack.c.l.b16 %v2048
        %v2097 = vunpack.c.l.b16 %v2049
        %v2098 = vunpack.c.l.b16 %v2050
        %v2099 = vunpack.c.l.b16 %v2051
        %v2100 = vunpack.c.l.b16 %v2052
        %v2101 = vunpack.c.l.b16 %v2053
        %v2102 = vunpack.c.l.b16 %v2054
        %v2103 = vunpack.c.l.b16 %v2055
        %v2104 = vunpack.c.l.b16 %v2056
        %v2105 = vunpack.c.l.b16 %v2057
        %v2106 = vpack.c.b16 %v2083, %v2082
        %v2107 = vpack.c.b16 %v2085, %v2084
        %v2108 = vpack.c.b16 %v2087, %v2086
        %v2109 = vpack.c.b16 %v2089, %v2088
        %v2110 = vpack.c.b16 %v2091, %v2090
        %v2111 = vpack.c.b16 %v2093, %v2092
        %v2112 = vpack.c.b16 %v2095, %v2094
        %v2113 = vpack.c.b16 %v2097, %v2096
        %v2114 = vpack.c.b16 %v2099, %v2098
        %v2115 = vpack.c.b16 %v2101, %v2100
        %v2116 = vpack.c.b16 %v2103, %v2102
        %v2117 = vpack.c.b16 %v2105, %v2104
        %v2131 = vsel %vm637, %v1561, 0
        %2133 = vmatprep.subr.bf16.mxu0 0
        %2134 = vmatpush1.bf16.msra.mxu0 %v2106
        %2135 = vmatprep.subr.bf16.mxu0 0
        %2136 = vmatpush1.bf16.msra.mxu0 %v2107
        %2137 = vmatprep.subr.bf16.mxu0 0
        %2138 = vmatpush1.bf16.msra.mxu0 %v2108
        %2139 = vmatprep.subr.bf16.mxu0 0
        %2140 = vmatpush1.bf16.msra.mxu0 %v2109
        %2141 = vmatprep.subr.bf16.mxu0 0
        %2142 = vmatpush1.bf16.msra.mxu0 %v2110
        %2143 = vmatprep.subr.bf16.mxu0 0
        %2144 = vmatpush1.bf16.msra.mxu0 %v2111
        %2145 = vmatprep.subr.bf16.mxu0 0
        %2146 = vmatpush1.bf16.msra.mxu0 %v2112
        %2147 = vmatprep.subr.bf16.mxu0 0
        %2148 = vmatpush1.bf16.msra.mxu0 %v2113
        %2149 = vmatprep.subr.bf16.mxu0 0
        %2150 = vmatpush1.bf16.msra.mxu0 %v2114
        %2151 = vmatprep.subr.bf16.mxu0 0
        %2152 = vmatpush1.bf16.msra.mxu0 %v2115
        %2153 = vmatprep.subr.bf16.mxu0 0
        %2154 = vmatpush1.bf16.msra.mxu0 %v2116
        %2155 = vmatprep.subr.bf16.mxu0 0
        %2156 = vmatpush1.bf16.msra.mxu0 %v2117
        %2157 = vmatprep.subr.bf16.mxu0 0
        %2158 = vmatpush1.bf16.msra.mxu0 0
        %2159 = vmatprep.subr.bf16.mxu0 0
        %2160 = vmatpush1.bf16.msra.mxu0 0
        %2161 = vmatprep.subr.bf16.mxu0 0
        %2162 = vmatpush1.bf16.msra.mxu0 0
        %2163 = vmatprep.subr.bf16.mxu0 0
        %2164 = vmatpush1.bf16.msra.mxu0 0
        %2165 = vmatprep.mubr.bf16.mxu0 %v1796
        %2166 = vmatmul.mubr.bf16.gmra.mrb[0].mxu0 %v1623
        %v2167 = vpop.f32.mrb[0].mxu0
        %v2168 = vadd.f32 0.0, %v2167
        %v2169 = vpop.f32.mrb[0].mxu0
        %v2170 = vpop.f32.mrb[0].mxu0
        %v2171 = vadd.f32 0.0, %v2170
        %v2172 = vpop.f32.mrb[0].mxu0
        %2173 = vmatprep.mubr.bf16.mxu0 %v1799
        %2174 = vmatmul.mubr.bf16.gmra.mrb[0].mxu0 %v1627
        %v2175 = vpop.f32.mrb[0].mxu0
        %v2176 = vadd.f32 0.0, %v2175
        %v2177 = vpop.f32.mrb[0].mxu0
        %v2178 = vpop.f32.mrb[0].mxu0
        %v2179 = vadd.f32 0.0, %v2178
        %v2180 = vpop.f32.mrb[0].mxu0
        %2181 = vmatprep.mubr.bf16.mxu0 %v1802
        %2182 = vmatmul.mubr.bf16.gmra.mrb[0].mxu0 %v1631
        %v2183 = vpop.f32.mrb[0].mxu0
        %v2184 = vadd.f32 0.0, %v2183
        %v2185 = vpop.f32.mrb[0].mxu0
        %v2186 = vpop.f32.mrb[0].mxu0
        %v2187 = vadd.f32 0.0, %v2186
        %v2188 = vpop.f32.mrb[0].mxu0
        %2189 = vmatprep.mubr.bf16.mxu0 %v1805
        %2190 = vmatmul.mubr.bf16.gmra.mrb[0].mxu0 %v1635
        %v2191 = vpop.f32.mrb[0].mxu0
        %v2192 = vadd.f32 0.0, %v2191
        %v2193 = vpop.f32.mrb[0].mxu0
        %v2194 = vpop.f32.mrb[0].mxu0
        %v2195 = vadd.f32 0.0, %v2194
        %v2196 = vpop.f32.mrb[0].mxu0
        %2197 = vmatprep.mubr.bf16.mxu0 %v1808
        %2198 = vmatmul.mubr.bf16.gmra.mrb[0].mxu0 %v1639
        %v2199 = vpop.f32.mrb[0].mxu0
        %v2200 = vadd.f32 0.0, %v2199
        %v2201 = vpop.f32.mrb[0].mxu0
        %v2202 = vpop.f32.mrb[0].mxu0
        %v2203 = vadd.f32 0.0, %v2202
        %v2204 = vpop.f32.mrb[0].mxu0
        %2205 = vmatprep.mubr.bf16.mxu0 %v1811
        %2206 = vmatmul.mubr.bf16.gmra.mrb[0].mxu0 %v1643
        %v2207 = vpop.f32.mrb[0].mxu0
        %v2208 = vadd.f32 0.0, %v2207
        %v2209 = vpop.f32.mrb[0].mxu0
        %v2210 = vpop.f32.mrb[0].mxu0
        %v2211 = vadd.f32 0.0, %v2210
        %v2212 = vpop.f32.mrb[0].mxu0
        %2213 = vmatprep.mubr.bf16.mxu0 %v1814
        %2214 = vmatmul.mubr.bf16.gmra.mrb[0].mxu0 %v1647
        %v2215 = vpop.f32.mrb[0].mxu0
        %v2216 = vadd.f32 0.0, %v2215
        %v2217 = vpop.f32.mrb[0].mxu0
        %v2218 = vpop.f32.mrb[0].mxu0
        %v2219 = vadd.f32 0.0, %v2218
        %v2220 = vpop.f32.mrb[0].mxu0
        %2221 = vmatprep.mubr.bf16.mxu0 %v1817
        %2222 = vmatmul.mubr.bf16.gmra.mrb[0].mxu0 %v1651
        %v2223 = vpop.f32.mrb[0].mxu0
        %v2224 = vadd.f32 0.0, %v2223
        %v2225 = vpop.f32.mrb[0].mxu0
        %v2226 = vpop.f32.mrb[0].mxu0
        %v2227 = vadd.f32 0.0, %v2226
        %v2228 = vpop.f32.mrb[0].mxu0
        %2229 = vmatprep.mubr.bf16.mxu0 %v1820
        %2230 = vmatmul.mubr.bf16.gmra.mrb[0].mxu0 %v1655
        %v2231 = vpop.f32.mrb[0].mxu0
        %v2232 = vadd.f32 0.0, %v2231
        %v2233 = vpop.f32.mrb[0].mxu0
        %v2234 = vpop.f32.mrb[0].mxu0
        %v2235 = vadd.f32 0.0, %v2234
        %v2236 = vpop.f32.mrb[0].mxu0
        %2237 = vmatprep.mubr.bf16.mxu0 %v1823
        %2238 = vmatmul.mubr.bf16.gmra.mrb[0].mxu0 %v1659
        %v2239 = vpop.f32.mrb[0].mxu0
        %v2240 = vadd.f32 0.0, %v2239
        %v2241 = vpop.f32.mrb[0].mxu0
        %v2242 = vpop.f32.mrb[0].mxu0
        %v2243 = vadd.f32 0.0, %v2242
        %v2244 = vpop.f32.mrb[0].mxu0
        %2245 = vmatprep.mubr.bf16.mxu0 %v1826
        %2246 = vmatmul.mubr.bf16.gmra.mrb[0].mxu0 %v1663
        %v2247 = vpop.f32.mrb[0].mxu0
        %v2248 = vadd.f32 0.0, %v2247
        %v2249 = vpop.f32.mrb[0].mxu0
        %v2250 = vpop.f32.mrb[0].mxu0
        %v2251 = vadd.f32 0.0, %v2250
        %v2252 = vpop.f32.mrb[0].mxu0
        %2253 = vmatprep.mubr.bf16.mxu0 %v1829
        %2254 = vmatmul.mubr.bf16.gmra.mrb[0].mxu0 %v1667
        %v2255 = vpop.f32.mrb[0].mxu0
        %v2256 = vadd.f32 0.0, %v2255
        %v2257 = vpop.f32.mrb[0].mxu0
        %v2258 = vpop.f32.mrb[0].mxu0
        %v2259 = vadd.f32 0.0, %v2258
        %v2260 = vpop.f32.mrb[0].mxu0
        %2261 = vmatprep.mubr.bf16.mxu0 %v1832
        %2262 = vmatmul.mubr.bf16.gmra.mrb[0].mxu0 %v1671
        %v2263 = vpop.f32.mrb[0].mxu0
        %v2264 = vadd.f32 0.0, %v2263
        %v2265 = vpop.f32.mrb[0].mxu0
        %v2266 = vpop.f32.mrb[0].mxu0
        %v2267 = vadd.f32 0.0, %v2266
        %v2268 = vpop.f32.mrb[0].mxu0
        %2269 = vmatprep.mubr.bf16.mxu0 %v1835
        %2270 = vmatmul.mubr.bf16.gmra.mrb[0].mxu0 %v1675
        %v2271 = vpop.f32.mrb[0].mxu0
        %v2272 = vadd.f32 0.0, %v2271
        %v2273 = vpop.f32.mrb[0].mxu0
        %v2274 = vpop.f32.mrb[0].mxu0
        %v2275 = vadd.f32 0.0, %v2274
        %v2276 = vpop.f32.mrb[0].mxu0
        %2277 = vmatprep.mubr.bf16.mxu0 %v1838
        %2278 = vmatmul.mubr.bf16.gmra.mrb[0].mxu0 %v1679
        %v2279 = vpop.f32.mrb[0].mxu0
        %v2280 = vadd.f32 0.0, %v2279
        %v2281 = vpop.f32.mrb[0].mxu0
        %v2282 = vpop.f32.mrb[0].mxu0
        %v2283 = vadd.f32 0.0, %v2282
        %v2284 = vpop.f32.mrb[0].mxu0
        %2285 = vmatprep.mubr.bf16.mxu0 %v2131
        %2286 = vmatmul.mubr.bf16.gmra.mrb[0].mxu0 %v1683
        %v2287 = vpop.f32.mrb[0].mxu0
        %v2288 = vadd.f32 0.0, %v2287
        %v2289 = vpop.f32.mrb[0].mxu0
        %v2290 = vpop.f32.mrb[0].mxu0
        %v2291 = vadd.f32 0.0, %v2290
        %v2292 = vpop.f32.mrb[0].mxu0
        %2293 = vdwg.mxu0
        %v2294 = vadd.f32 %v2001, %v2168
        %v2295 = vadd.f32 %v2002, %v2171
        %v2296 = vadd.f32 %v2003, %v2176
        %v2297 = vadd.f32 %v2004, %v2179
        %v2298 = vadd.f32 %v2005, %v2184
        %v2299 = vadd.f32 %v2006, %v2187
        %v2300 = vadd.f32 %v2007, %v2192
        %v2301 = vadd.f32 %v2008, %v2195
        %v2302 = vadd.f32 %v2009, %v2200
        %v2303 = vadd.f32 %v2010, %v2203
        %v2304 = vadd.f32 %v2011, %v2208
        %v2305 = vadd.f32 %v2012, %v2211
        %v2306 = vadd.f32 %v2013, %v2216
        %v2307 = vadd.f32 %v2014, %v2219
        %v2308 = vadd.f32 %v2015, %v2224
        %v2309 = vadd.f32 %v2016, %v2227
        %v2310 = vadd.f32 %v2017, %v2232
        %v2311 = vadd.f32 %v2018, %v2235
        %v2312 = vadd.f32 %v2019, %v2240
        %v2313 = vadd.f32 %v2020, %v2243
        %v2314 = vadd.f32 %v2021, %v2248
        %v2315 = vadd.f32 %v2022, %v2251
        %v2316 = vadd.f32 %v2023, %v2256
        %v2317 = vadd.f32 %v2024, %v2259
        %v2318 = vadd.f32 %v2025, %v2264
        %v2319 = vadd.f32 %v2026, %v2267
        %v2320 = vadd.f32 %v2027, %v2272
        %v2321 = vadd.f32 %v2028, %v2275
        %v2322 = vadd.f32 %v2029, %v2280
        %v2323 = vadd.f32 %v2030, %v2283
        %v2324 = vadd.f32 %v2031, %v2288
        %v2325 = vadd.f32 %v2032, %v2291
        %s2326 = scalar_lea.vmem %s5, 192
        %v2327 = vld [vmem:[%s2326] sm:$0xf]
        %v2328 = vld [vmem:[%s2326 + $0x4] sm:$0xf]
        %v2329 = vld [vmem:[%s2326 + $0x8] sm:$0xf]
        %v2330 = vld [vmem:[%s2326 + $0xc] sm:$0xf]
        %v2331 = vld [vmem:[%s2326 + $0x10] sm:$0xf]
        %v2332 = vld [vmem:[%s2326 + $0x14] sm:$0xf]
        %v2333 = vld [vmem:[%s2326 + $0x18] sm:$0xf]
        %v2334 = vld [vmem:[%s2326 + $0x1c] sm:$0xf]
        %v2335 = vld [vmem:[%s2326 + $0x20] sm:$0xf]
        %v2336 = vld [vmem:[%s2326 + $0x24] sm:$0xf]
        %v2337 = vld [vmem:[%s2326 + $0x28] sm:$0xf]
        %v2338 = vld [vmem:[%s2326 + $0x2c] sm:$0xf]
        %v2339 = vld [vmem:[%s2326 + $0x30] sm:$0xf]
        %v2340 = vld [vmem:[%s2326 + $0x34] sm:$0xf]
        %v2341 = vld [vmem:[%s2326 + $0x38] sm:$0xf]
        %v2342 = vld [vmem:[%s2326 + $0x3c] sm:$0xf]
        %v2343 = vld [vmem:[%s2326 + $0x40] sm:$0xf]
        %v2344 = vld [vmem:[%s2326 + $0x44] sm:$0xf]
        %v2345 = vld [vmem:[%s2326 + $0x48] sm:$0xf]
        %v2346 = vld [vmem:[%s2326 + $0x4c] sm:$0xf]
        %v2347 = vld [vmem:[%s2326 + $0x50] sm:$0xf]
        %v2348 = vld [vmem:[%s2326 + $0x54] sm:$0xf]
        %v2349 = vld [vmem:[%s2326 + $0x58] sm:$0xf]
        %v2350 = vld [vmem:[%s2326 + $0x5c] sm:$0xf]
        %v2375 = vunpack.c.l.b16 %v2327
        %v2376 = vunpack.c.l.b16 %v2328
        %v2377 = vunpack.c.l.b16 %v2329
        %v2378 = vunpack.c.l.b16 %v2330
        %v2379 = vunpack.c.l.b16 %v2331
        %v2380 = vunpack.c.l.b16 %v2332
        %v2381 = vunpack.c.l.b16 %v2333
        %v2382 = vunpack.c.l.b16 %v2334
        %v2383 = vunpack.c.l.b16 %v2335
        %v2384 = vunpack.c.l.b16 %v2336
        %v2385 = vunpack.c.l.b16 %v2337
        %v2386 = vunpack.c.l.b16 %v2338
        %v2387 = vunpack.c.l.b16 %v2339
        %v2388 = vunpack.c.l.b16 %v2340
        %v2389 = vunpack.c.l.b16 %v2341
        %v2390 = vunpack.c.l.b16 %v2342
        %v2391 = vunpack.c.l.b16 %v2343
        %v2392 = vunpack.c.l.b16 %v2344
        %v2393 = vunpack.c.l.b16 %v2345
        %v2394 = vunpack.c.l.b16 %v2346
        %v2395 = vunpack.c.l.b16 %v2347
        %v2396 = vunpack.c.l.b16 %v2348
        %v2397 = vunpack.c.l.b16 %v2349
        %v2398 = vunpack.c.l.b16 %v2350
        %v2399 = vpack.c.b16 %v2376, %v2375
        %v2400 = vpack.c.b16 %v2378, %v2377
        %v2401 = vpack.c.b16 %v2380, %v2379
        %v2402 = vpack.c.b16 %v2382, %v2381
        %v2403 = vpack.c.b16 %v2384, %v2383
        %v2404 = vpack.c.b16 %v2386, %v2385
        %v2405 = vpack.c.b16 %v2388, %v2387
        %v2406 = vpack.c.b16 %v2390, %v2389
        %v2407 = vpack.c.b16 %v2392, %v2391
        %v2408 = vpack.c.b16 %v2394, %v2393
        %v2409 = vpack.c.b16 %v2396, %v2395
        %v2410 = vpack.c.b16 %v2398, %v2397
        %v2424 = vsel %vm637, %v1562, 0
        %2426 = vmatprep.subr.bf16.mxu0 0
        %2427 = vmatpush1.bf16.msra.mxu0 %v2399
        %2428 = vmatprep.subr.bf16.mxu0 0
        %2429 = vmatpush1.bf16.msra.mxu0 %v2400
        %2430 = vmatprep.subr.bf16.mxu0 0
        %2431 = vmatpush1.bf16.msra.mxu0 %v2401
        %2432 = vmatprep.subr.bf16.mxu0 0
        %2433 = vmatpush1.bf16.msra.mxu0 %v2402
        %2434 = vmatprep.subr.bf16.mxu0 0
        %2435 = vmatpush1.bf16.msra.mxu0 %v2403
        %2436 = vmatprep.subr.bf16.mxu0 0
        %2437 = vmatpush1.bf16.msra.mxu0 %v2404
        %2438 = vmatprep.subr.bf16.mxu0 0
        %2439 = vmatpush1.bf16.msra.mxu0 %v2405
        %2440 = vmatprep.subr.bf16.mxu0 0
        %2441 = vmatpush1.bf16.msra.mxu0 %v2406
        %2442 = vmatprep.subr.bf16.mxu0 0
        %2443 = vmatpush1.bf16.msra.mxu0 %v2407
        %2444 = vmatprep.subr.bf16.mxu0 0
        %2445 = vmatpush1.bf16.msra.mxu0 %v2408
        %2446 = vmatprep.subr.bf16.mxu0 0
        %2447 = vmatpush1.bf16.msra.mxu0 %v2409
        %2448 = vmatprep.subr.bf16.mxu0 0
        %2449 = vmatpush1.bf16.msra.mxu0 %v2410
        %2450 = vmatprep.subr.bf16.mxu0 0
        %2451 = vmatpush1.bf16.msra.mxu0 0
        %2452 = vmatprep.subr.bf16.mxu0 0
        %2453 = vmatpush1.bf16.msra.mxu0 0
        %2454 = vmatprep.subr.bf16.mxu0 0
        %2455 = vmatpush1.bf16.msra.mxu0 0
        %2456 = vmatprep.subr.bf16.mxu0 0
        %2457 = vmatpush1.bf16.msra.mxu0 0
        %2458 = vmatprep.mubr.bf16.mxu0 %v1799
        %2459 = vmatmul.mubr.bf16.gmra.mrb[0].mxu0 %v1627
        %v2460 = vpop.f32.mrb[0].mxu0
        %v2461 = vadd.f32 0.0, %v2460
        %v2462 = vpop.f32.mrb[0].mxu0
        %v2463 = vpop.f32.mrb[0].mxu0
        %v2464 = vadd.f32 0.0, %v2463
        %v2465 = vpop.f32.mrb[0].mxu0
        %2466 = vmatprep.mubr.bf16.mxu0 %v1802
        %2467 = vmatmul.mubr.bf16.gmra.mrb[0].mxu0 %v1631
        %v2468 = vpop.f32.mrb[0].mxu0
        %v2469 = vadd.f32 0.0, %v2468
        %v2470 = vpop.f32.mrb[0].mxu0
        %v2471 = vpop.f32.mrb[0].mxu0
        %v2472 = vadd.f32 0.0, %v2471
        %v2473 = vpop.f32.mrb[0].mxu0
        %2474 = vmatprep.mubr.bf16.mxu0 %v1805
        %2475 = vmatmul.mubr.bf16.gmra.mrb[0].mxu0 %v1635
        %v2476 = vpop.f32.mrb[0].mxu0
        %v2477 = vadd.f32 0.0, %v2476
        %v2478 = vpop.f32.mrb[0].mxu0
        %v2479 = vpop.f32.mrb[0].mxu0
        %v2480 = vadd.f32 0.0, %v2479
        %v2481 = vpop.f32.mrb[0].mxu0
        %2482 = vmatprep.mubr.bf16.mxu0 %v1808
        %2483 = vmatmul.mubr.bf16.gmra.mrb[0].mxu0 %v1639
        %v2484 = vpop.f32.mrb[0].mxu0
        %v2485 = vadd.f32 0.0, %v2484
        %v2486 = vpop.f32.mrb[0].mxu0
        %v2487 = vpop.f32.mrb[0].mxu0
        %v2488 = vadd.f32 0.0, %v2487
        %v2489 = vpop.f32.mrb[0].mxu0
        %2490 = vmatprep.mubr.bf16.mxu0 %v1811
        %2491 = vmatmul.mubr.bf16.gmra.mrb[0].mxu0 %v1643
        %v2492 = vpop.f32.mrb[0].mxu0
        %v2493 = vadd.f32 0.0, %v2492
        %v2494 = vpop.f32.mrb[0].mxu0
        %v2495 = vpop.f32.mrb[0].mxu0
        %v2496 = vadd.f32 0.0, %v2495
        %v2497 = vpop.f32.mrb[0].mxu0
        %2498 = vmatprep.mubr.bf16.mxu0 %v1814
        %2499 = vmatmul.mubr.bf16.gmra.mrb[0].mxu0 %v1647
        %v2500 = vpop.f32.mrb[0].mxu0
        %v2501 = vadd.f32 0.0, %v2500
        %v2502 = vpop.f32.mrb[0].mxu0
        %v2503 = vpop.f32.mrb[0].mxu0
        %v2504 = vadd.f32 0.0, %v2503
        %v2505 = vpop.f32.mrb[0].mxu0
        %2506 = vmatprep.mubr.bf16.mxu0 %v1817
        %2507 = vmatmul.mubr.bf16.gmra.mrb[0].mxu0 %v1651
        %v2508 = vpop.f32.mrb[0].mxu0
        %v2509 = vadd.f32 0.0, %v2508
        %v2510 = vpop.f32.mrb[0].mxu0
        %v2511 = vpop.f32.mrb[0].mxu0
        %v2512 = vadd.f32 0.0, %v2511
        %v2513 = vpop.f32.mrb[0].mxu0
        %2514 = vmatprep.mubr.bf16.mxu0 %v1820
        %2515 = vmatmul.mubr.bf16.gmra.mrb[0].mxu0 %v1655
        %v2516 = vpop.f32.mrb[0].mxu0
        %v2517 = vadd.f32 0.0, %v2516
        %v2518 = vpop.f32.mrb[0].mxu0
        %v2519 = vpop.f32.mrb[0].mxu0
        %v2520 = vadd.f32 0.0, %v2519
        %v2521 = vpop.f32.mrb[0].mxu0
        %2522 = vmatprep.mubr.bf16.mxu0 %v1823
        %2523 = vmatmul.mubr.bf16.gmra.mrb[0].mxu0 %v1659
        %v2524 = vpop.f32.mrb[0].mxu0
        %v2525 = vadd.f32 0.0, %v2524
        %v2526 = vpop.f32.mrb[0].mxu0
        %v2527 = vpop.f32.mrb[0].mxu0
        %v2528 = vadd.f32 0.0, %v2527
        %v2529 = vpop.f32.mrb[0].mxu0
        %2530 = vmatprep.mubr.bf16.mxu0 %v1826
        %2531 = vmatmul.mubr.bf16.gmra.mrb[0].mxu0 %v1663
        %v2532 = vpop.f32.mrb[0].mxu0
        %v2533 = vadd.f32 0.0, %v2532
        %v2534 = vpop.f32.mrb[0].mxu0
        %v2535 = vpop.f32.mrb[0].mxu0
        %v2536 = vadd.f32 0.0, %v2535
        %v2537 = vpop.f32.mrb[0].mxu0
        %2538 = vmatprep.mubr.bf16.mxu0 %v1829
        %2539 = vmatmul.mubr.bf16.gmra.mrb[0].mxu0 %v1667
        %v2540 = vpop.f32.mrb[0].mxu0
        %v2541 = vadd.f32 0.0, %v2540
        %v2542 = vpop.f32.mrb[0].mxu0
        %v2543 = vpop.f32.mrb[0].mxu0
        %v2544 = vadd.f32 0.0, %v2543
        %v2545 = vpop.f32.mrb[0].mxu0
        %2546 = vmatprep.mubr.bf16.mxu0 %v1832
        %2547 = vmatmul.mubr.bf16.gmra.mrb[0].mxu0 %v1671
        %v2548 = vpop.f32.mrb[0].mxu0
        %v2549 = vadd.f32 0.0, %v2548
        %v2550 = vpop.f32.mrb[0].mxu0
        %v2551 = vpop.f32.mrb[0].mxu0
        %v2552 = vadd.f32 0.0, %v2551
        %v2553 = vpop.f32.mrb[0].mxu0
        %2554 = vmatprep.mubr.bf16.mxu0 %v1835
        %2555 = vmatmul.mubr.bf16.gmra.mrb[0].mxu0 %v1675
        %v2556 = vpop.f32.mrb[0].mxu0
        %v2557 = vadd.f32 0.0, %v2556
        %v2558 = vpop.f32.mrb[0].mxu0
        %v2559 = vpop.f32.mrb[0].mxu0
        %v2560 = vadd.f32 0.0, %v2559
        %v2561 = vpop.f32.mrb[0].mxu0
        %2562 = vmatprep.mubr.bf16.mxu0 %v1838
        %2563 = vmatmul.mubr.bf16.gmra.mrb[0].mxu0 %v1679
        %v2564 = vpop.f32.mrb[0].mxu0
        %v2565 = vadd.f32 0.0, %v2564
        %v2566 = vpop.f32.mrb[0].mxu0
        %v2567 = vpop.f32.mrb[0].mxu0
        %v2568 = vadd.f32 0.0, %v2567
        %v2569 = vpop.f32.mrb[0].mxu0
        %2570 = vmatprep.mubr.bf16.mxu0 %v2131
        %2571 = vmatmul.mubr.bf16.gmra.mrb[0].mxu0 %v1683
        %v2572 = vpop.f32.mrb[0].mxu0
        %v2573 = vadd.f32 0.0, %v2572
        %v2574 = vpop.f32.mrb[0].mxu0
        %v2575 = vpop.f32.mrb[0].mxu0
        %v2576 = vadd.f32 0.0, %v2575
        %v2577 = vpop.f32.mrb[0].mxu0
        %2578 = vmatprep.mubr.bf16.mxu0 %v2424
        %2579 = vmatmul.mubr.bf16.gmra.mrb[0].mxu0 %v1687
        %v2580 = vpop.f32.mrb[0].mxu0
        %v2581 = vadd.f32 0.0, %v2580
        %v2582 = vpop.f32.mrb[0].mxu0
        %v2583 = vpop.f32.mrb[0].mxu0
        %v2584 = vadd.f32 0.0, %v2583
        %v2585 = vpop.f32.mrb[0].mxu0
        %2586 = vdwg.mxu0
        %v2587 = vadd.f32 %v2294, %v2461
        %v2588 = vadd.f32 %v2295, %v2464
        %v2589 = vadd.f32 %v2296, %v2469
        %v2590 = vadd.f32 %v2297, %v2472
        %v2591 = vadd.f32 %v2298, %v2477
        %v2592 = vadd.f32 %v2299, %v2480
        %v2593 = vadd.f32 %v2300, %v2485
        %v2594 = vadd.f32 %v2301, %v2488
        %v2595 = vadd.f32 %v2302, %v2493
        %v2596 = vadd.f32 %v2303, %v2496
        %v2597 = vadd.f32 %v2304, %v2501
        %v2598 = vadd.f32 %v2305, %v2504
        %v2599 = vadd.f32 %v2306, %v2509
        %v2600 = vadd.f32 %v2307, %v2512
        %v2601 = vadd.f32 %v2308, %v2517
        %v2602 = vadd.f32 %v2309, %v2520
        %v2603 = vadd.f32 %v2310, %v2525
        %v2604 = vadd.f32 %v2311, %v2528
        %v2605 = vadd.f32 %v2312, %v2533
        %v2606 = vadd.f32 %v2313, %v2536
        %v2607 = vadd.f32 %v2314, %v2541
        %v2608 = vadd.f32 %v2315, %v2544
        %v2609 = vadd.f32 %v2316, %v2549
        %v2610 = vadd.f32 %v2317, %v2552
        %v2611 = vadd.f32 %v2318, %v2557
        %v2612 = vadd.f32 %v2319, %v2560
        %v2613 = vadd.f32 %v2320, %v2565
        %v2614 = vadd.f32 %v2321, %v2568
        %v2615 = vadd.f32 %v2322, %v2573
        %v2616 = vadd.f32 %v2323, %v2576
        %v2617 = vadd.f32 %v2324, %v2581
        %v2618 = vadd.f32 %v2325, %v2584
        %v2619 = vld [vmem:[%s509] sm:$0xff]
        %v2620 = vld [vmem:[%s509 + $0x8] sm:$0xff]
        %v2621 = vld [vmem:[%s509 + $0x10] sm:$0xff]
        %v2622 = vld [vmem:[%s509 + $0x18] sm:$0xff]
        %v2623 = vld [vmem:[%s509 + $0x20] sm:$0xff]
        %v2624 = vld [vmem:[%s509 + $0x28] sm:$0xff]
        %v2625 = vld [vmem:[%s509 + $0x30] sm:$0xff]
        %v2626 = vld [vmem:[%s509 + $0x38] sm:$0xff]
        %v2627 = vld [vmem:[%s509 + $0x40] sm:$0xff]
        %v2628 = vld [vmem:[%s509 + $0x48] sm:$0xff]
        %v2629 = vld [vmem:[%s509 + $0x50] sm:$0xff]
        %v2630 = vld [vmem:[%s509 + $0x58] sm:$0xff]
        %v2631 = vld [vmem:[%s509 + $0x60] sm:$0xff]
        %v2632 = vld [vmem:[%s509 + $0x68] sm:$0xff]
        %v2633 = vld [vmem:[%s509 + $0x70] sm:$0xff]
        %v2634 = vld [vmem:[%s509 + $0x78] sm:$0xff]
        %v2635 = vld [vmem:[%s509 + $0x80] sm:$0xff]
        %v2636 = vld [vmem:[%s509 + $0x88] sm:$0xff]
        %v2637 = vld [vmem:[%s509 + $0x90] sm:$0xff]
        %v2638 = vld [vmem:[%s509 + $0x98] sm:$0xff]
        %v2639 = vld [vmem:[%s509 + $0xa0] sm:$0xff]
        %v2640 = vld [vmem:[%s509 + $0xa8] sm:$0xff]
        %v2641 = vld [vmem:[%s509 + $0xb0] sm:$0xff]
        %v2642 = vld [vmem:[%s509 + $0xb8] sm:$0xff]
        %v2643 = vld [vmem:[%s509 + $0xc0] sm:$0xff]
        %v2644 = vld [vmem:[%s509 + $0xc8] sm:$0xff]
        %v2645 = vld [vmem:[%s509 + $0xd0] sm:$0xff]
        %v2646 = vld [vmem:[%s509 + $0xd8] sm:$0xff]
        %v2647 = vld [vmem:[%s509 + $0xe0] sm:$0xff]
        %v2648 = vld [vmem:[%s509 + $0xe8] sm:$0xff]
        %v2649 = vld [vmem:[%s509 + $0xf0] sm:$0xff]
        %v2650 = vld [vmem:[%s509 + $0xf8] sm:$0xff]
        %v2651 = vadd.f32 %v2619, %v2587
        %v2652 = vadd.f32 %v2620, %v2588
        %v2653 = vadd.f32 %v2621, %v2589
        %v2654 = vadd.f32 %v2622, %v2590
        %v2655 = vadd.f32 %v2623, %v2591
        %v2656 = vadd.f32 %v2624, %v2592
        %v2657 = vadd.f32 %v2625, %v2593
        %v2658 = vadd.f32 %v2626, %v2594
        %v2659 = vadd.f32 %v2627, %v2595
        %v2660 = vadd.f32 %v2628, %v2596
        %v2661 = vadd.f32 %v2629, %v2597
        %v2662 = vadd.f32 %v2630, %v2598
        %v2663 = vadd.f32 %v2631, %v2599
        %v2664 = vadd.f32 %v2632, %v2600
        %v2665 = vadd.f32 %v2633, %v2601
        %v2666 = vadd.f32 %v2634, %v2602
        %v2667 = vadd.f32 %v2635, %v2603
        %v2668 = vadd.f32 %v2636, %v2604
        %v2669 = vadd.f32 %v2637, %v2605
        %v2670 = vadd.f32 %v2638, %v2606
        %v2671 = vadd.f32 %v2639, %v2607
        %v2672 = vadd.f32 %v2640, %v2608
        %v2673 = vadd.f32 %v2641, %v2609
        %v2674 = vadd.f32 %v2642, %v2610
        %v2675 = vadd.f32 %v2643, %v2611
        %v2676 = vadd.f32 %v2644, %v2612
        %v2677 = vadd.f32 %v2645, %v2613
        %v2678 = vadd.f32 %v2646, %v2614
        %v2679 = vadd.f32 %v2647, %v2615
        %v2680 = vadd.f32 %v2648, %v2616
        %v2681 = vadd.f32 %v2649, %v2617
        %v2682 = vadd.f32 %v2650, %v2618
        %v2683 = vsel %vm637, %v2651, 0.0
        %2684 = vadd.xlane.f32.xlu0 %v2683
        %v2685 = vpop.xlane.xlu0 %2684
        %v2686 = vsel %vm637, %v2652, 0.0
        %2687 = vadd.xlane.f32.xlu0 %v2686
        %v2688 = vpop.xlane.xlu0 %2687
        %v2689 = vsel %vm637, %v2653, 0.0
        %2690 = vadd.xlane.f32.xlu0 %v2689
        %v2691 = vpop.xlane.xlu0 %2690
        %v2692 = vsel %vm637, %v2654, 0.0
        %2693 = vadd.xlane.f32.xlu0 %v2692
        %v2694 = vpop.xlane.xlu0 %2693
        %v2695 = vsel %vm637, %v2655, 0.0
        %2696 = vadd.xlane.f32.xlu0 %v2695
        %v2697 = vpop.xlane.xlu0 %2696
        %v2698 = vsel %vm637, %v2656, 0.0
        %2699 = vadd.xlane.f32.xlu0 %v2698
        %v2700 = vpop.xlane.xlu0 %2699
        %v2701 = vsel %vm637, %v2657, 0.0
        %2702 = vadd.xlane.f32.xlu0 %v2701
        %v2703 = vpop.xlane.xlu0 %2702
        %v2704 = vsel %vm637, %v2658, 0.0
        %2705 = vadd.xlane.f32.xlu0 %v2704
        %v2706 = vpop.xlane.xlu0 %2705
        %v2707 = vsel %vm637, %v2659, 0.0
        %2708 = vadd.xlane.f32.xlu0 %v2707
        %v2709 = vpop.xlane.xlu0 %2708
        %v2710 = vsel %vm637, %v2660, 0.0
        %2711 = vadd.xlane.f32.xlu0 %v2710
        %v2712 = vpop.xlane.xlu0 %2711
        %v2713 = vsel %vm637, %v2661, 0.0
        %2714 = vadd.xlane.f32.xlu0 %v2713
        %v2715 = vpop.xlane.xlu0 %2714
        %v2716 = vsel %vm637, %v2662, 0.0
        %2717 = vadd.xlane.f32.xlu0 %v2716
        %v2718 = vpop.xlane.xlu0 %2717
        %v2719 = vsel %vm637, %v2663, 0.0
        %2720 = vadd.xlane.f32.xlu0 %v2719
        %v2721 = vpop.xlane.xlu0 %2720
        %v2722 = vsel %vm637, %v2664, 0.0
        %2723 = vadd.xlane.f32.xlu0 %v2722
        %v2724 = vpop.xlane.xlu0 %2723
        %v2725 = vsel %vm637, %v2665, 0.0
        %2726 = vadd.xlane.f32.xlu0 %v2725
        %v2727 = vpop.xlane.xlu0 %2726
        %v2728 = vsel %vm637, %v2666, 0.0
        %2729 = vadd.xlane.f32.xlu0 %v2728
        %v2730 = vpop.xlane.xlu0 %2729
        %v2731 = vsel %vm637, %v2667, 0.0
        %2732 = vadd.xlane.f32.xlu0 %v2731
        %v2733 = vpop.xlane.xlu0 %2732
        %v2734 = vsel %vm637, %v2668, 0.0
        %2735 = vadd.xlane.f32.xlu0 %v2734
        %v2736 = vpop.xlane.xlu0 %2735
        %v2737 = vsel %vm637, %v2669, 0.0
        %2738 = vadd.xlane.f32.xlu0 %v2737
        %v2739 = vpop.xlane.xlu0 %2738
        %v2740 = vsel %vm637, %v2670, 0.0
        %2741 = vadd.xlane.f32.xlu0 %v2740
        %v2742 = vpop.xlane.xlu0 %2741
        %v2743 = vsel %vm637, %v2671, 0.0
        %2744 = vadd.xlane.f32.xlu0 %v2743
        %v2745 = vpop.xlane.xlu0 %2744
        %v2746 = vsel %vm637, %v2672, 0.0
        %2747 = vadd.xlane.f32.xlu0 %v2746
        %v2748 = vpop.xlane.xlu0 %2747
        %v2749 = vsel %vm637, %v2673, 0.0
        %2750 = vadd.xlane.f32.xlu0 %v2749
        %v2751 = vpop.xlane.xlu0 %2750
        %v2752 = vsel %vm637, %v2674, 0.0
        %2753 = vadd.xlane.f32.xlu0 %v2752
        %v2754 = vpop.xlane.xlu0 %2753
        %v2755 = vsel %vm637, %v2675, 0.0
        %2756 = vadd.xlane.f32.xlu0 %v2755
        %v2757 = vpop.xlane.xlu0 %2756
        %v2758 = vsel %vm637, %v2676, 0.0
        %2759 = vadd.xlane.f32.xlu0 %v2758
        %v2760 = vpop.xlane.xlu0 %2759
        %v2761 = vsel %vm637, %v2677, 0.0
        %2762 = vadd.xlane.f32.xlu0 %v2761
        %v2763 = vpop.xlane.xlu0 %2762
        %v2764 = vsel %vm637, %v2678, 0.0
        %2765 = vadd.xlane.f32.xlu0 %v2764
        %v2766 = vpop.xlane.xlu0 %2765
        %v2767 = vsel %vm637, %v2679, 0.0
        %2768 = vadd.xlane.f32.xlu0 %v2767
        %v2769 = vpop.xlane.xlu0 %2768
        %v2770 = vsel %vm637, %v2680, 0.0
        %2771 = vadd.xlane.f32.xlu0 %v2770
        %v2772 = vpop.xlane.xlu0 %2771
        %v2773 = vsel %vm637, %v2681, 0.0
        %2774 = vadd.xlane.f32.xlu0 %v2773
        %v2775 = vpop.xlane.xlu0 %2774
        %v2776 = vsel %vm637, %v2682, 0.0
        %2777 = vadd.xlane.f32.xlu0 %v2776
        %v2778 = vpop.xlane.xlu0 %2777
        %v2779 = vmul.f32 %v2685, %v734
        %v2780 = vmul.f32 %v2688, %v734
        %v2781 = vmul.f32 %v2691, %v734
        %v2782 = vmul.f32 %v2694, %v734
        %v2783 = vmul.f32 %v2697, %v734
        %v2784 = vmul.f32 %v2700, %v734
        %v2785 = vmul.f32 %v2703, %v734
        %v2786 = vmul.f32 %v2706, %v734
        %v2787 = vmul.f32 %v2709, %v734
        %v2788 = vmul.f32 %v2712, %v734
        %v2789 = vmul.f32 %v2715, %v734
        %v2790 = vmul.f32 %v2718, %v734
        %v2791 = vmul.f32 %v2721, %v734
        %v2792 = vmul.f32 %v2724, %v734
        %v2793 = vmul.f32 %v2727, %v734
        %v2794 = vmul.f32 %v2730, %v734
        %v2795 = vmul.f32 %v2733, %v734
        %v2796 = vmul.f32 %v2736, %v734
        %v2797 = vmul.f32 %v2739, %v734
        %v2798 = vmul.f32 %v2742, %v734
        %v2799 = vmul.f32 %v2745, %v734
        %v2800 = vmul.f32 %v2748, %v734
        %v2801 = vmul.f32 %v2751, %v734
        %v2802 = vmul.f32 %v2754, %v734
        %v2803 = vmul.f32 %v2757, %v734
        %v2804 = vmul.f32 %v2760, %v734
        %v2805 = vmul.f32 %v2763, %v734
        %v2806 = vmul.f32 %v2766, %v734
        %v2807 = vmul.f32 %v2769, %v734
        %v2808 = vmul.f32 %v2772, %v734
        %v2809 = vmul.f32 %v2775, %v734
        %v2810 = vmul.f32 %v2778, %v734
        %v2811 = vsub.f32 %v2651, %v2779
        %v2812 = vsub.f32 %v2652, %v2780
        %v2813 = vsub.f32 %v2653, %v2781
        %v2814 = vsub.f32 %v2654, %v2782
        %v2815 = vsub.f32 %v2655, %v2783
        %v2816 = vsub.f32 %v2656, %v2784
        %v2817 = vsub.f32 %v2657, %v2785
        %v2818 = vsub.f32 %v2658, %v2786
        %v2819 = vsub.f32 %v2659, %v2787
        %v2820 = vsub.f32 %v2660, %v2788
        %v2821 = vsub.f32 %v2661, %v2789
        %v2822 = vsub.f32 %v2662, %v2790
        %v2823 = vsub.f32 %v2663, %v2791
        %v2824 = vsub.f32 %v2664, %v2792
        %v2825 = vsub.f32 %v2665, %v2793
        %v2826 = vsub.f32 %v2666, %v2794
        %v2827 = vsub.f32 %v2667, %v2795
        %v2828 = vsub.f32 %v2668, %v2796
        %v2829 = vsub.f32 %v2669, %v2797
        %v2830 = vsub.f32 %v2670, %v2798
        %v2831 = vsub.f32 %v2671, %v2799
        %v2832 = vsub.f32 %v2672, %v2800
        %v2833 = vsub.f32 %v2673, %v2801
        %v2834 = vsub.f32 %v2674, %v2802
        %v2835 = vsub.f32 %v2675, %v2803
        %v2836 = vsub.f32 %v2676, %v2804
        %v2837 = vsub.f32 %v2677, %v2805
        %v2838 = vsub.f32 %v2678, %v2806
        %v2839 = vsub.f32 %v2679, %v2807
        %v2840 = vsub.f32 %v2680, %v2808
        %v2841 = vsub.f32 %v2681, %v2809
        %v2842 = vsub.f32 %v2682, %v2810
        %v2843 = vmul.f32 %v2811, %v2811
        %v2844 = vmul.f32 %v2812, %v2812
        %v2845 = vmul.f32 %v2813, %v2813
        %v2846 = vmul.f32 %v2814, %v2814
        %v2847 = vmul.f32 %v2815, %v2815
        %v2848 = vmul.f32 %v2816, %v2816
        %v2849 = vmul.f32 %v2817, %v2817
        %v2850 = vmul.f32 %v2818, %v2818
        %v2851 = vmul.f32 %v2819, %v2819
        %v2852 = vmul.f32 %v2820, %v2820
        %v2853 = vmul.f32 %v2821, %v2821
        %v2854 = vmul.f32 %v2822, %v2822
        %v2855 = vmul.f32 %v2823, %v2823
        %v2856 = vmul.f32 %v2824, %v2824
        %v2857 = vmul.f32 %v2825, %v2825
        %v2858 = vmul.f32 %v2826, %v2826
        %v2859 = vmul.f32 %v2827, %v2827
        %v2860 = vmul.f32 %v2828, %v2828
        %v2861 = vmul.f32 %v2829, %v2829
        %v2862 = vmul.f32 %v2830, %v2830
        %v2863 = vmul.f32 %v2831, %v2831
        %v2864 = vmul.f32 %v2832, %v2832
        %v2865 = vmul.f32 %v2833, %v2833
        %v2866 = vmul.f32 %v2834, %v2834
        %v2867 = vmul.f32 %v2835, %v2835
        %v2868 = vmul.f32 %v2836, %v2836
        %v2869 = vmul.f32 %v2837, %v2837
        %v2870 = vmul.f32 %v2838, %v2838
        %v2871 = vmul.f32 %v2839, %v2839
        %v2872 = vmul.f32 %v2840, %v2840
        %v2873 = vmul.f32 %v2841, %v2841
        %v2874 = vmul.f32 %v2842, %v2842
        %v2875 = vsel %vm637, %v2843, 0.0
        %2876 = vadd.xlane.f32.xlu0 %v2875
        %v2877 = vpop.xlane.xlu0 %2876
        %v2878 = vsel %vm637, %v2844, 0.0
        %2879 = vadd.xlane.f32.xlu0 %v2878
        %v2880 = vpop.xlane.xlu0 %2879
        %v2881 = vsel %vm637, %v2845, 0.0
        %2882 = vadd.xlane.f32.xlu0 %v2881
        %v2883 = vpop.xlane.xlu0 %2882
        %v2884 = vsel %vm637, %v2846, 0.0
        %2885 = vadd.xlane.f32.xlu0 %v2884
        %v2886 = vpop.xlane.xlu0 %2885
        %v2887 = vsel %vm637, %v2847, 0.0
        %2888 = vadd.xlane.f32.xlu0 %v2887
        %v2889 = vpop.xlane.xlu0 %2888
        %v2890 = vsel %vm637, %v2848, 0.0
        %2891 = vadd.xlane.f32.xlu0 %v2890
        %v2892 = vpop.xlane.xlu0 %2891
        %v2893 = vsel %vm637, %v2849, 0.0
        %2894 = vadd.xlane.f32.xlu0 %v2893
        %v2895 = vpop.xlane.xlu0 %2894
        %v2896 = vsel %vm637, %v2850, 0.0
        %2897 = vadd.xlane.f32.xlu0 %v2896
        %v2898 = vpop.xlane.xlu0 %2897
        %v2899 = vsel %vm637, %v2851, 0.0
        %2900 = vadd.xlane.f32.xlu0 %v2899
        %v2901 = vpop.xlane.xlu0 %2900
        %v2902 = vsel %vm637, %v2852, 0.0
        %2903 = vadd.xlane.f32.xlu0 %v2902
        %v2904 = vpop.xlane.xlu0 %2903
        %v2905 = vsel %vm637, %v2853, 0.0
        %2906 = vadd.xlane.f32.xlu0 %v2905
        %v2907 = vpop.xlane.xlu0 %2906
        %v2908 = vsel %vm637, %v2854, 0.0
        %2909 = vadd.xlane.f32.xlu0 %v2908
        %v2910 = vpop.xlane.xlu0 %2909
        %v2911 = vsel %vm637, %v2855, 0.0
        %2912 = vadd.xlane.f32.xlu0 %v2911
        %v2913 = vpop.xlane.xlu0 %2912
        %v2914 = vsel %vm637, %v2856, 0.0
        %2915 = vadd.xlane.f32.xlu0 %v2914
        %v2916 = vpop.xlane.xlu0 %2915
        %v2917 = vsel %vm637, %v2857, 0.0
        %2918 = vadd.xlane.f32.xlu0 %v2917
        %v2919 = vpop.xlane.xlu0 %2918
        %v2920 = vsel %vm637, %v2858, 0.0
        %2921 = vadd.xlane.f32.xlu0 %v2920
        %v2922 = vpop.xlane.xlu0 %2921
        %v2923 = vsel %vm637, %v2859, 0.0
        %2924 = vadd.xlane.f32.xlu0 %v2923
        %v2925 = vpop.xlane.xlu0 %2924
        %v2926 = vsel %vm637, %v2860, 0.0
        %2927 = vadd.xlane.f32.xlu0 %v2926
        %v2928 = vpop.xlane.xlu0 %2927
        %v2929 = vsel %vm637, %v2861, 0.0
        %2930 = vadd.xlane.f32.xlu0 %v2929
        %v2931 = vpop.xlane.xlu0 %2930
        %v2932 = vsel %vm637, %v2862, 0.0
        %2933 = vadd.xlane.f32.xlu0 %v2932
        %v2934 = vpop.xlane.xlu0 %2933
        %v2935 = vsel %vm637, %v2863, 0.0
        %2936 = vadd.xlane.f32.xlu0 %v2935
        %v2937 = vpop.xlane.xlu0 %2936
        %v2938 = vsel %vm637, %v2864, 0.0
        %2939 = vadd.xlane.f32.xlu0 %v2938
        %v2940 = vpop.xlane.xlu0 %2939
        %v2941 = vsel %vm637, %v2865, 0.0
        %2942 = vadd.xlane.f32.xlu0 %v2941
        %v2943 = vpop.xlane.xlu0 %2942
        %v2944 = vsel %vm637, %v2866, 0.0
        %2945 = vadd.xlane.f32.xlu0 %v2944
        %v2946 = vpop.xlane.xlu0 %2945
        %v2947 = vsel %vm637, %v2867, 0.0
        %2948 = vadd.xlane.f32.xlu0 %v2947
        %v2949 = vpop.xlane.xlu0 %2948
        %v2950 = vsel %vm637, %v2868, 0.0
        %2951 = vadd.xlane.f32.xlu0 %v2950
        %v2952 = vpop.xlane.xlu0 %2951
        %v2953 = vsel %vm637, %v2869, 0.0
        %2954 = vadd.xlane.f32.xlu0 %v2953
        %v2955 = vpop.xlane.xlu0 %2954
        %v2956 = vsel %vm637, %v2870, 0.0
        %2957 = vadd.xlane.f32.xlu0 %v2956
        %v2958 = vpop.xlane.xlu0 %2957
        %v2959 = vsel %vm637, %v2871, 0.0
        %2960 = vadd.xlane.f32.xlu0 %v2959
        %v2961 = vpop.xlane.xlu0 %2960
        %v2962 = vsel %vm637, %v2872, 0.0
        %2963 = vadd.xlane.f32.xlu0 %v2962
        %v2964 = vpop.xlane.xlu0 %2963
        %v2965 = vsel %vm637, %v2873, 0.0
        %2966 = vadd.xlane.f32.xlu0 %v2965
        %v2967 = vpop.xlane.xlu0 %2966
        %v2968 = vsel %vm637, %v2874, 0.0
        %2969 = vadd.xlane.f32.xlu0 %v2968
        %v2970 = vpop.xlane.xlu0 %2969
        %v2971 = vmul.f32 %v2877, %v734
        %v2972 = vmul.f32 %v2880, %v734
        %v2973 = vmul.f32 %v2883, %v734
        %v2974 = vmul.f32 %v2886, %v734
        %v2975 = vmul.f32 %v2889, %v734
        %v2976 = vmul.f32 %v2892, %v734
        %v2977 = vmul.f32 %v2895, %v734
        %v2978 = vmul.f32 %v2898, %v734
        %v2979 = vmul.f32 %v2901, %v734
        %v2980 = vmul.f32 %v2904, %v734
        %v2981 = vmul.f32 %v2907, %v734
        %v2982 = vmul.f32 %v2910, %v734
        %v2983 = vmul.f32 %v2913, %v734
        %v2984 = vmul.f32 %v2916, %v734
        %v2985 = vmul.f32 %v2919, %v734
        %v2986 = vmul.f32 %v2922, %v734
        %v2987 = vmul.f32 %v2925, %v734
        %v2988 = vmul.f32 %v2928, %v734
        %v2989 = vmul.f32 %v2931, %v734
        %v2990 = vmul.f32 %v2934, %v734
        %v2991 = vmul.f32 %v2937, %v734
        %v2992 = vmul.f32 %v2940, %v734
        %v2993 = vmul.f32 %v2943, %v734
        %v2994 = vmul.f32 %v2946, %v734
        %v2995 = vmul.f32 %v2949, %v734
        %v2996 = vmul.f32 %v2952, %v734
        %v2997 = vmul.f32 %v2955, %v734
        %v2998 = vmul.f32 %v2958, %v734
        %v2999 = vmul.f32 %v2961, %v734
        %v3000 = vmul.f32 %v2964, %v734
        %v3001 = vmul.f32 %v2967, %v734
        %v3002 = vmul.f32 %v2970, %v734
        %v3003 = vadd.f32 %v2971, 1e-06
        %v3004 = vadd.f32 %v2972, 1e-06
        %v3005 = vadd.f32 %v2973, 1e-06
        %v3006 = vadd.f32 %v2974, 1e-06
        %v3007 = vadd.f32 %v2975, 1e-06
        %v3008 = vadd.f32 %v2976, 1e-06
        %v3009 = vadd.f32 %v2977, 1e-06
        %v3010 = vadd.f32 %v2978, 1e-06
        %v3011 = vadd.f32 %v2979, 1e-06
        %v3012 = vadd.f32 %v2980, 1e-06
        %v3013 = vadd.f32 %v2981, 1e-06
        %v3014 = vadd.f32 %v2982, 1e-06
        %v3015 = vadd.f32 %v2983, 1e-06
        %v3016 = vadd.f32 %v2984, 1e-06
        %v3017 = vadd.f32 %v2985, 1e-06
        %v3018 = vadd.f32 %v2986, 1e-06
        %v3019 = vadd.f32 %v2987, 1e-06
        %v3020 = vadd.f32 %v2988, 1e-06
        %v3021 = vadd.f32 %v2989, 1e-06
        %v3022 = vadd.f32 %v2990, 1e-06
        %v3023 = vadd.f32 %v2991, 1e-06
        %v3024 = vadd.f32 %v2992, 1e-06
        %v3025 = vadd.f32 %v2993, 1e-06
        %v3026 = vadd.f32 %v2994, 1e-06
        %v3027 = vadd.f32 %v2995, 1e-06
        %v3028 = vadd.f32 %v2996, 1e-06
        %v3029 = vadd.f32 %v2997, 1e-06
        %v3030 = vadd.f32 %v2998, 1e-06
        %v3031 = vadd.f32 %v2999, 1e-06
        %v3032 = vadd.f32 %v3000, 1e-06
        %v3033 = vadd.f32 %v3001, 1e-06
        %v3034 = vadd.f32 %v3002, 1e-06
        %v3035 = vrsqrt.pop %v3003
        %v3036 = vrsqrt.pop %v3004
        %v3037 = vrsqrt.pop %v3005
        %v3038 = vrsqrt.pop %v3006
        %v3039 = vrsqrt.pop %v3007
        %v3040 = vrsqrt.pop %v3008
        %v3041 = vrsqrt.pop %v3009
        %v3042 = vrsqrt.pop %v3010
        %v3043 = vrsqrt.pop %v3011
        %v3044 = vrsqrt.pop %v3012
        %v3045 = vrsqrt.pop %v3013
        %v3046 = vrsqrt.pop %v3014
        %v3047 = vrsqrt.pop %v3015
        %v3048 = vrsqrt.pop %v3016
        %v3049 = vrsqrt.pop %v3017
        %v3050 = vrsqrt.pop %v3018
        %v3051 = vrsqrt.pop %v3019
        %v3052 = vrsqrt.pop %v3020
        %v3053 = vrsqrt.pop %v3021
        %v3054 = vrsqrt.pop %v3022
        %v3055 = vrsqrt.pop %v3023
        %v3056 = vrsqrt.pop %v3024
        %v3057 = vrsqrt.pop %v3025
        %v3058 = vrsqrt.pop %v3026
        %v3059 = vrsqrt.pop %v3027
        %v3060 = vrsqrt.pop %v3028
        %v3061 = vrsqrt.pop %v3029
        %v3062 = vrsqrt.pop %v3030
        %v3063 = vrsqrt.pop %v3031
        %v3064 = vrsqrt.pop %v3032
        %v3065 = vrsqrt.pop %v3033
        %v3066 = vrsqrt.pop %v3034
        %v3067 = vmul.f32 %v2811, %v3035
        %v3068 = vmul.f32 %v2812, %v3036
        %v3069 = vmul.f32 %v2813, %v3037
        %v3070 = vmul.f32 %v2814, %v3038
        %v3071 = vmul.f32 %v2815, %v3039
        %v3072 = vmul.f32 %v2816, %v3040
        %v3073 = vmul.f32 %v2817, %v3041
        %v3074 = vmul.f32 %v2818, %v3042
        %v3075 = vmul.f32 %v2819, %v3043
        %v3076 = vmul.f32 %v2820, %v3044
        %v3077 = vmul.f32 %v2821, %v3045
        %v3078 = vmul.f32 %v2822, %v3046
        %v3079 = vmul.f32 %v2823, %v3047
        %v3080 = vmul.f32 %v2824, %v3048
        %v3081 = vmul.f32 %v2825, %v3049
        %v3082 = vmul.f32 %v2826, %v3050
        %v3083 = vmul.f32 %v2827, %v3051
        %v3084 = vmul.f32 %v2828, %v3052
        %v3085 = vmul.f32 %v2829, %v3053
        %v3086 = vmul.f32 %v2830, %v3054
        %v3087 = vmul.f32 %v2831, %v3055
        %v3088 = vmul.f32 %v2832, %v3056
        %v3089 = vmul.f32 %v2833, %v3057
        %v3090 = vmul.f32 %v2834, %v3058
        %v3091 = vmul.f32 %v2835, %v3059
        %v3092 = vmul.f32 %v2836, %v3060
        %v3093 = vmul.f32 %v2837, %v3061
        %v3094 = vmul.f32 %v2838, %v3062
        %v3095 = vmul.f32 %v2839, %v3063
        %v3096 = vmul.f32 %v2840, %v3064
        %v3097 = vmul.f32 %v2841, %v3065
        %v3098 = vmul.f32 %v2842, %v3066
        %v3100 = vlaneseq
        %v3101 = vshrl.u32 %v3100, 7
        %v3102 = vsub.s32 0, %v3101
        %v3103 = vrot.slane %v1250, %v3102
        %v3105 = vmul.f32 %v3067, %v3103
        %v3106 = vmul.f32 %v3068, %v3103
        %v3107 = vmul.f32 %v3069, %v3103
        %v3108 = vmul.f32 %v3070, %v3103
        %v3109 = vmul.f32 %v3071, %v3103
        %v3110 = vmul.f32 %v3072, %v3103
        %v3111 = vmul.f32 %v3073, %v3103
        %v3112 = vmul.f32 %v3074, %v3103
        %v3113 = vmul.f32 %v3075, %v3103
        %v3114 = vmul.f32 %v3076, %v3103
        %v3115 = vmul.f32 %v3077, %v3103
        %v3116 = vmul.f32 %v3078, %v3103
        %v3117 = vmul.f32 %v3079, %v3103
        %v3118 = vmul.f32 %v3080, %v3103
        %v3119 = vmul.f32 %v3081, %v3103
        %v3120 = vmul.f32 %v3082, %v3103
        %v3121 = vmul.f32 %v3083, %v3103
        %v3122 = vmul.f32 %v3084, %v3103
        %v3123 = vmul.f32 %v3085, %v3103
        %v3124 = vmul.f32 %v3086, %v3103
        %v3125 = vmul.f32 %v3087, %v3103
        %v3126 = vmul.f32 %v3088, %v3103
        %v3127 = vmul.f32 %v3089, %v3103
        %v3128 = vmul.f32 %v3090, %v3103
        %v3129 = vmul.f32 %v3091, %v3103
        %v3130 = vmul.f32 %v3092, %v3103
        %v3131 = vmul.f32 %v3093, %v3103
        %v3132 = vmul.f32 %v3094, %v3103
        %v3133 = vmul.f32 %v3095, %v3103
        %v3134 = vmul.f32 %v3096, %v3103
        %v3135 = vmul.f32 %v3097, %v3103
        %v3136 = vmul.f32 %v3098, %v3103
        %v3138 = vlaneseq
        %v3139 = vshrl.u32 %v3138, 7
        %v3140 = vsub.s32 0, %v3139
        %v3141 = vrot.slane %v1251, %v3140
        %v3143 = vadd.f32 %v3105, %v3141
        %v3144 = vadd.f32 %v3106, %v3141
        %v3145 = vadd.f32 %v3107, %v3141
        %v3146 = vadd.f32 %v3108, %v3141
        %v3147 = vadd.f32 %v3109, %v3141
        %v3148 = vadd.f32 %v3110, %v3141
        %v3149 = vadd.f32 %v3111, %v3141
        %v3150 = vadd.f32 %v3112, %v3141
        %v3151 = vadd.f32 %v3113, %v3141
        %v3152 = vadd.f32 %v3114, %v3141
        %v3153 = vadd.f32 %v3115, %v3141
        %v3154 = vadd.f32 %v3116, %v3141
        %v3155 = vadd.f32 %v3117, %v3141
        %v3156 = vadd.f32 %v3118, %v3141
        %v3157 = vadd.f32 %v3119, %v3141
        %v3158 = vadd.f32 %v3120, %v3141
        %v3159 = vadd.f32 %v3121, %v3141
        %v3160 = vadd.f32 %v3122, %v3141
        %v3161 = vadd.f32 %v3123, %v3141
        %v3162 = vadd.f32 %v3124, %v3141
        %v3163 = vadd.f32 %v3125, %v3141
        %v3164 = vadd.f32 %v3126, %v3141
        %v3165 = vadd.f32 %v3127, %v3141
        %v3166 = vadd.f32 %v3128, %v3141
        %v3167 = vadd.f32 %v3129, %v3141
        %v3168 = vadd.f32 %v3130, %v3141
        %v3169 = vadd.f32 %v3131, %v3141
        %v3170 = vadd.f32 %v3132, %v3141
        %v3171 = vadd.f32 %v3133, %v3141
        %v3172 = vadd.f32 %v3134, %v3141
        %v3173 = vadd.f32 %v3135, %v3141
        %v3174 = vadd.f32 %v3136, %v3141
        %v3175 = vpack.c.bf16 %v3144, %v3143
        %v3176 = vpack.c.bf16 %v3146, %v3145
        %v3177 = vpack.c.bf16 %v3148, %v3147
        %v3178 = vpack.c.bf16 %v3150, %v3149
        %v3179 = vpack.c.bf16 %v3152, %v3151
        %v3180 = vpack.c.bf16 %v3154, %v3153
        %v3181 = vpack.c.bf16 %v3156, %v3155
        %v3182 = vpack.c.bf16 %v3158, %v3157
        %v3183 = vpack.c.bf16 %v3160, %v3159
        %v3184 = vpack.c.bf16 %v3162, %v3161
        %v3185 = vpack.c.bf16 %v3164, %v3163
        %v3186 = vpack.c.bf16 %v3166, %v3165
        %v3187 = vpack.c.bf16 %v3168, %v3167
        %v3188 = vpack.c.bf16 %v3170, %v3169
        %v3189 = vpack.c.bf16 %v3172, %v3171
        %v3190 = vpack.c.bf16 %v3174, %v3173
        %v3191 = vld [vmem:[%s9] sm:$0xff]
        %v3192 = vld [vmem:[%s9 + $0x8] sm:$0xff]
        %v3193 = vld [vmem:[%s9 + $0x10] sm:$0xff]
        %v3194 = vld [vmem:[%s9 + $0x18] sm:$0xff]
        %v3195 = vld [vmem:[%s9 + $0x20] sm:$0xff]
        %v3196 = vld [vmem:[%s9 + $0x28] sm:$0xff]
        %v3197 = vld [vmem:[%s9 + $0x30] sm:$0xff]
        %v3198 = vld [vmem:[%s9 + $0x38] sm:$0xff]
        %v3200 = vlaneseq
        %v3201 = vshrl.u32 %v3200, 7
        %v3202 = vsub.s32 0, %v3201
        %v3203 = vrot.slane %v1253, %v3202
        %v3204 = vlaneseq
        %v3205 = vshrl.u32 %v3204, 7
        %v3206 = vsub.s32 1, %v3205
        %v3207 = vrot.slane %v1253, %v3206
        %v3218 = vunpack.c.l.b16 %v3191
        %v3219 = vunpack.c.h.b16 %v3191
        %v3220 = vunpack.c.l.b16 %v3192
        %v3221 = vunpack.c.h.b16 %v3192
        %v3222 = vunpack.c.l.b16 %v3193
        %v3223 = vunpack.c.h.b16 %v3193
        %v3224 = vunpack.c.l.b16 %v3194
        %v3225 = vunpack.c.h.b16 %v3194
        %v3226 = vunpack.c.l.b16 %v3195
        %v3227 = vunpack.c.h.b16 %v3195
        %v3228 = vunpack.c.l.b16 %v3196
        %v3229 = vunpack.c.h.b16 %v3196
        %v3230 = vunpack.c.l.b16 %v3197
        %v3231 = vunpack.c.h.b16 %v3197
        %v3232 = vunpack.c.l.b16 %v3198
        %v3233 = vunpack.c.h.b16 %v3198
        %v3234 = vpack.c.b16 %v3220, %v3218
        %v3235 = vpack.c.b16 %v3221, %v3219
        %v3236 = vpack.c.b16 %v3224, %v3222
        %v3237 = vpack.c.b16 %v3225, %v3223
        %v3238 = vpack.c.b16 %v3228, %v3226
        %v3239 = vpack.c.b16 %v3229, %v3227
        %v3240 = vpack.c.b16 %v3232, %v3230
        %v3241 = vpack.c.b16 %v3233, %v3231
        %v3251 = vsel %vm637, %v3175, 0
        %v3254 = vsel %vm637, %v3176, 0
        %v3257 = vsel %vm637, %v3177, 0
        %v3260 = vsel %vm637, %v3178, 0
        %v3263 = vsel %vm637, %v3179, 0
        %v3266 = vsel %vm637, %v3180, 0
        %v3269 = vsel %vm637, %v3181, 0
        %v3272 = vsel %vm637, %v3182, 0
        %v3275 = vsel %vm637, %v3183, 0
        %v3278 = vsel %vm637, %v3184, 0
        %v3281 = vsel %vm637, %v3185, 0
        %v3284 = vsel %vm637, %v3186, 0
        %v3287 = vsel %vm637, %v3187, 0
        %v3290 = vsel %vm637, %v3188, 0
        %v3293 = vsel %vm637, %v3189, 0
        %v3296 = vsel %vm637, %v3190, 0
        %3298 = vmatprep.subr.bf16.mxu0 %v3235
        %3299 = vmatpush1.bf16.msra.mxu0 %v3234
        %3300 = vmatprep.subr.bf16.mxu0 %v3237
        %3301 = vmatpush1.bf16.msra.mxu0 %v3236
        %3302 = vmatprep.subr.bf16.mxu0 %v3239
        %3303 = vmatpush1.bf16.msra.mxu0 %v3238
        %3304 = vmatprep.subr.bf16.mxu0 %v3241
        %3305 = vmatpush1.bf16.msra.mxu0 %v3240
        %3306 = vmatprep.subr.bf16.mxu0 0
        %3307 = vmatpush1.bf16.msra.mxu0 0
        %3308 = vmatprep.subr.bf16.mxu0 0
        %3309 = vmatpush1.bf16.msra.mxu0 0
        %3310 = vmatprep.subr.bf16.mxu0 0
        %3311 = vmatpush1.bf16.msra.mxu0 0
        %3312 = vmatprep.subr.bf16.mxu0 0
        %3313 = vmatpush1.bf16.msra.mxu0 0
        %3314 = vmatprep.subr.bf16.mxu0 0
        %3315 = vmatpush1.bf16.msra.mxu0 0
        %3316 = vmatprep.subr.bf16.mxu0 0
        %3317 = vmatpush1.bf16.msra.mxu0 0
        %3318 = vmatprep.subr.bf16.mxu0 0
        %3319 = vmatpush1.bf16.msra.mxu0 0
        %3320 = vmatprep.subr.bf16.mxu0 0
        %3321 = vmatpush1.bf16.msra.mxu0 0
        %3322 = vmatprep.subr.bf16.mxu0 0
        %3323 = vmatpush1.bf16.msra.mxu0 0
        %3324 = vmatprep.subr.bf16.mxu0 0
        %3325 = vmatpush1.bf16.msra.mxu0 0
        %3326 = vmatprep.subr.bf16.mxu0 0
        %3327 = vmatpush1.bf16.msra.mxu0 0
        %3328 = vmatprep.subr.bf16.mxu0 0
        %3329 = vmatpush1.bf16.msra.mxu0 0
        %3330 = vmatprep.mubr.bf16.mxu0 0
        %3331 = vmatmul.mubr.bf16.gmra.mrb[0].mxu0 %v3251
        %v3332 = vpop.f32.mrb[0].mxu0
        %v3333 = vadd.f32 %v3203, %v3332
        %v3334 = vpop.f32.mrb[0].mxu0
        %v3335 = vadd.f32 %v3207, %v3334
        %v3336 = vpop.f32.mrb[0].mxu0
        %v3337 = vadd.f32 %v3203, %v3336
        %v3338 = vpop.f32.mrb[0].mxu0
        %v3339 = vadd.f32 %v3207, %v3338
        %3340 = vmatprep.mubr.bf16.mxu0 0
        %3341 = vmatmul.mubr.bf16.gmra.mrb[0].mxu0 %v3254
        %v3342 = vpop.f32.mrb[0].mxu0
        %v3343 = vadd.f32 %v3203, %v3342
        %v3344 = vpop.f32.mrb[0].mxu0
        %v3345 = vadd.f32 %v3207, %v3344
        %v3346 = vpop.f32.mrb[0].mxu0
        %v3347 = vadd.f32 %v3203, %v3346
        %v3348 = vpop.f32.mrb[0].mxu0
        %v3349 = vadd.f32 %v3207, %v3348
        %3350 = vmatprep.mubr.bf16.mxu0 0
        %3351 = vmatmul.mubr.bf16.gmra.mrb[0].mxu0 %v3257
        %v3352 = vpop.f32.mrb[0].mxu0
        %v3353 = vadd.f32 %v3203, %v3352
        %v3354 = vpop.f32.mrb[0].mxu0
        %v3355 = vadd.f32 %v3207, %v3354
        %v3356 = vpop.f32.mrb[0].mxu0
        %v3357 = vadd.f32 %v3203, %v3356
        %v3358 = vpop.f32.mrb[0].mxu0
        %v3359 = vadd.f32 %v3207, %v3358
        %3360 = vmatprep.mubr.bf16.mxu0 0
        %3361 = vmatmul.mubr.bf16.gmra.mrb[0].mxu0 %v3260
        %v3362 = vpop.f32.mrb[0].mxu0
        %v3363 = vadd.f32 %v3203, %v3362
        %v3364 = vpop.f32.mrb[0].mxu0
        %v3365 = vadd.f32 %v3207, %v3364
        %v3366 = vpop.f32.mrb[0].mxu0
        %v3367 = vadd.f32 %v3203, %v3366
        %v3368 = vpop.f32.mrb[0].mxu0
        %v3369 = vadd.f32 %v3207, %v3368
        %3370 = vmatprep.mubr.bf16.mxu0 0
        %3371 = vmatmul.mubr.bf16.gmra.mrb[0].mxu0 %v3263
        %v3372 = vpop.f32.mrb[0].mxu0
        %v3373 = vadd.f32 %v3203, %v3372
        %v3374 = vpop.f32.mrb[0].mxu0
        %v3375 = vadd.f32 %v3207, %v3374
        %v3376 = vpop.f32.mrb[0].mxu0
        %v3377 = vadd.f32 %v3203, %v3376
        %v3378 = vpop.f32.mrb[0].mxu0
        %v3379 = vadd.f32 %v3207, %v3378
        %3380 = vmatprep.mubr.bf16.mxu0 0
        %3381 = vmatmul.mubr.bf16.gmra.mrb[0].mxu0 %v3266
        %v3382 = vpop.f32.mrb[0].mxu0
        %v3383 = vadd.f32 %v3203, %v3382
        %v3384 = vpop.f32.mrb[0].mxu0
        %v3385 = vadd.f32 %v3207, %v3384
        %v3386 = vpop.f32.mrb[0].mxu0
        %v3387 = vadd.f32 %v3203, %v3386
        %v3388 = vpop.f32.mrb[0].mxu0
        %v3389 = vadd.f32 %v3207, %v3388
        %3390 = vmatprep.mubr.bf16.mxu0 0
        %3391 = vmatmul.mubr.bf16.gmra.mrb[0].mxu0 %v3269
        %v3392 = vpop.f32.mrb[0].mxu0
        %v3393 = vadd.f32 %v3203, %v3392
        %v3394 = vpop.f32.mrb[0].mxu0
        %v3395 = vadd.f32 %v3207, %v3394
        %v3396 = vpop.f32.mrb[0].mxu0
        %v3397 = vadd.f32 %v3203, %v3396
        %v3398 = vpop.f32.mrb[0].mxu0
        %v3399 = vadd.f32 %v3207, %v3398
        %3400 = vmatprep.mubr.bf16.mxu0 0
        %3401 = vmatmul.mubr.bf16.gmra.mrb[0].mxu0 %v3272
        %v3402 = vpop.f32.mrb[0].mxu0
        %v3403 = vadd.f32 %v3203, %v3402
        %v3404 = vpop.f32.mrb[0].mxu0
        %v3405 = vadd.f32 %v3207, %v3404
        %v3406 = vpop.f32.mrb[0].mxu0
        %v3407 = vadd.f32 %v3203, %v3406
        %v3408 = vpop.f32.mrb[0].mxu0
        %v3409 = vadd.f32 %v3207, %v3408
        %3410 = vmatprep.mubr.bf16.mxu0 0
        %3411 = vmatmul.mubr.bf16.gmra.mrb[0].mxu0 %v3275
        %v3412 = vpop.f32.mrb[0].mxu0
        %v3413 = vadd.f32 %v3203, %v3412
        %v3414 = vpop.f32.mrb[0].mxu0
        %v3415 = vadd.f32 %v3207, %v3414
        %v3416 = vpop.f32.mrb[0].mxu0
        %v3417 = vadd.f32 %v3203, %v3416
        %v3418 = vpop.f32.mrb[0].mxu0
        %v3419 = vadd.f32 %v3207, %v3418
        %3420 = vmatprep.mubr.bf16.mxu0 0
        %3421 = vmatmul.mubr.bf16.gmra.mrb[0].mxu0 %v3278
        %v3422 = vpop.f32.mrb[0].mxu0
        %v3423 = vadd.f32 %v3203, %v3422
        %v3424 = vpop.f32.mrb[0].mxu0
        %v3425 = vadd.f32 %v3207, %v3424
        %v3426 = vpop.f32.mrb[0].mxu0
        %v3427 = vadd.f32 %v3203, %v3426
        %v3428 = vpop.f32.mrb[0].mxu0
        %v3429 = vadd.f32 %v3207, %v3428
        %3430 = vmatprep.mubr.bf16.mxu0 0
        %3431 = vmatmul.mubr.bf16.gmra.mrb[0].mxu0 %v3281
        %v3432 = vpop.f32.mrb[0].mxu0
        %v3433 = vadd.f32 %v3203, %v3432
        %v3434 = vpop.f32.mrb[0].mxu0
        %v3435 = vadd.f32 %v3207, %v3434
        %v3436 = vpop.f32.mrb[0].mxu0
        %v3437 = vadd.f32 %v3203, %v3436
        %v3438 = vpop.f32.mrb[0].mxu0
        %v3439 = vadd.f32 %v3207, %v3438
        %3440 = vmatprep.mubr.bf16.mxu0 0
        %3441 = vmatmul.mubr.bf16.gmra.mrb[0].mxu0 %v3284
        %v3442 = vpop.f32.mrb[0].mxu0
        %v3443 = vadd.f32 %v3203, %v3442
        %v3444 = vpop.f32.mrb[0].mxu0
        %v3445 = vadd.f32 %v3207, %v3444
        %v3446 = vpop.f32.mrb[0].mxu0
        %v3447 = vadd.f32 %v3203, %v3446
        %v3448 = vpop.f32.mrb[0].mxu0
        %v3449 = vadd.f32 %v3207, %v3448
        %3450 = vmatprep.mubr.bf16.mxu0 0
        %3451 = vmatmul.mubr.bf16.gmra.mrb[0].mxu0 %v3287
        %v3452 = vpop.f32.mrb[0].mxu0
        %v3453 = vadd.f32 %v3203, %v3452
        %v3454 = vpop.f32.mrb[0].mxu0
        %v3455 = vadd.f32 %v3207, %v3454
        %v3456 = vpop.f32.mrb[0].mxu0
        %v3457 = vadd.f32 %v3203, %v3456
        %v3458 = vpop.f32.mrb[0].mxu0
        %v3459 = vadd.f32 %v3207, %v3458
        %3460 = vmatprep.mubr.bf16.mxu0 0
        %3461 = vmatmul.mubr.bf16.gmra.mrb[0].mxu0 %v3290
        %v3462 = vpop.f32.mrb[0].mxu0
        %v3463 = vadd.f32 %v3203, %v3462
        %v3464 = vpop.f32.mrb[0].mxu0
        %v3465 = vadd.f32 %v3207, %v3464
        %v3466 = vpop.f32.mrb[0].mxu0
        %v3467 = vadd.f32 %v3203, %v3466
        %v3468 = vpop.f32.mrb[0].mxu0
        %v3469 = vadd.f32 %v3207, %v3468
        %3470 = vmatprep.mubr.bf16.mxu0 0
        %3471 = vmatmul.mubr.bf16.gmra.mrb[0].mxu0 %v3293
        %v3472 = vpop.f32.mrb[0].mxu0
        %v3473 = vadd.f32 %v3203, %v3472
        %v3474 = vpop.f32.mrb[0].mxu0
        %v3475 = vadd.f32 %v3207, %v3474
        %v3476 = vpop.f32.mrb[0].mxu0
        %v3477 = vadd.f32 %v3203, %v3476
        %v3478 = vpop.f32.mrb[0].mxu0
        %v3479 = vadd.f32 %v3207, %v3478
        %3480 = vmatprep.mubr.bf16.mxu0 0
        %3481 = vmatmul.mubr.bf16.gmra.mrb[0].mxu0 %v3296
        %v3482 = vpop.f32.mrb[0].mxu0
        %v3483 = vadd.f32 %v3203, %v3482
        %v3484 = vpop.f32.mrb[0].mxu0
        %v3485 = vadd.f32 %v3207, %v3484
        %v3486 = vpop.f32.mrb[0].mxu0
        %v3487 = vadd.f32 %v3203, %v3486
        %v3488 = vpop.f32.mrb[0].mxu0
        %v3489 = vadd.f32 %v3207, %v3488
        %3490 = vdwg.mxu0
        %v3491 = vmul.f32 %v3333, 0.5
        %v3492 = vmul.f32 %v3335, 0.5
        %v3493 = vmul.f32 %v3337, 0.5
        %v3494 = vmul.f32 %v3339, 0.5
        %v3495 = vmul.f32 %v3343, 0.5
        %v3496 = vmul.f32 %v3345, 0.5
        %v3497 = vmul.f32 %v3347, 0.5
        %v3498 = vmul.f32 %v3349, 0.5
        %v3499 = vmul.f32 %v3353, 0.5
        %v3500 = vmul.f32 %v3355, 0.5
        %v3501 = vmul.f32 %v3357, 0.5
        %v3502 = vmul.f32 %v3359, 0.5
        %v3503 = vmul.f32 %v3363, 0.5
        %v3504 = vmul.f32 %v3365, 0.5
        %v3505 = vmul.f32 %v3367, 0.5
        %v3506 = vmul.f32 %v3369, 0.5
        %v3507 = vmul.f32 %v3373, 0.5
        %v3508 = vmul.f32 %v3375, 0.5
        %v3509 = vmul.f32 %v3377, 0.5
        %v3510 = vmul.f32 %v3379, 0.5
        %v3511 = vmul.f32 %v3383, 0.5
        %v3512 = vmul.f32 %v3385, 0.5
        %v3513 = vmul.f32 %v3387, 0.5
        %v3514 = vmul.f32 %v3389, 0.5
        %v3515 = vmul.f32 %v3393, 0.5
        %v3516 = vmul.f32 %v3395, 0.5
        %v3517 = vmul.f32 %v3397, 0.5
        %v3518 = vmul.f32 %v3399, 0.5
        %v3519 = vmul.f32 %v3403, 0.5
        %v3520 = vmul.f32 %v3405, 0.5
        %v3521 = vmul.f32 %v3407, 0.5
        %v3522 = vmul.f32 %v3409, 0.5
        %v3523 = vmul.f32 %v3413, 0.5
        %v3524 = vmul.f32 %v3415, 0.5
        %v3525 = vmul.f32 %v3417, 0.5
        %v3526 = vmul.f32 %v3419, 0.5
        %v3527 = vmul.f32 %v3423, 0.5
        %v3528 = vmul.f32 %v3425, 0.5
        %v3529 = vmul.f32 %v3427, 0.5
        %v3530 = vmul.f32 %v3429, 0.5
        %v3531 = vmul.f32 %v3433, 0.5
        %v3532 = vmul.f32 %v3435, 0.5
        %v3533 = vmul.f32 %v3437, 0.5
        %v3534 = vmul.f32 %v3439, 0.5
        %v3535 = vmul.f32 %v3443, 0.5
        %v3536 = vmul.f32 %v3445, 0.5
        %v3537 = vmul.f32 %v3447, 0.5
        %v3538 = vmul.f32 %v3449, 0.5
        %v3539 = vmul.f32 %v3453, 0.5
        %v3540 = vmul.f32 %v3455, 0.5
        %v3541 = vmul.f32 %v3457, 0.5
        %v3542 = vmul.f32 %v3459, 0.5
        %v3543 = vmul.f32 %v3463, 0.5
        %v3544 = vmul.f32 %v3465, 0.5
        %v3545 = vmul.f32 %v3467, 0.5
        %v3546 = vmul.f32 %v3469, 0.5
        %v3547 = vmul.f32 %v3473, 0.5
        %v3548 = vmul.f32 %v3475, 0.5
        %v3549 = vmul.f32 %v3477, 0.5
        %v3550 = vmul.f32 %v3479, 0.5
        %v3551 = vmul.f32 %v3483, 0.5
        %v3552 = vmul.f32 %v3485, 0.5
        %v3553 = vmul.f32 %v3487, 0.5
        %v3554 = vmul.f32 %v3489, 0.5
        %v3555 = vmul.f32 %v3333, 0.044715
        %v3556 = vmul.f32 %v3335, 0.044715
        %v3557 = vmul.f32 %v3337, 0.044715
        %v3558 = vmul.f32 %v3339, 0.044715
        %v3559 = vmul.f32 %v3343, 0.044715
        %v3560 = vmul.f32 %v3345, 0.044715
        %v3561 = vmul.f32 %v3347, 0.044715
        %v3562 = vmul.f32 %v3349, 0.044715
        %v3563 = vmul.f32 %v3353, 0.044715
        %v3564 = vmul.f32 %v3355, 0.044715
        %v3565 = vmul.f32 %v3357, 0.044715
        %v3566 = vmul.f32 %v3359, 0.044715
        %v3567 = vmul.f32 %v3363, 0.044715
        %v3568 = vmul.f32 %v3365, 0.044715
        %v3569 = vmul.f32 %v3367, 0.044715
        %v3570 = vmul.f32 %v3369, 0.044715
        %v3571 = vmul.f32 %v3373, 0.044715
        %v3572 = vmul.f32 %v3375, 0.044715
        %v3573 = vmul.f32 %v3377, 0.044715
        %v3574 = vmul.f32 %v3379, 0.044715
        %v3575 = vmul.f32 %v3383, 0.044715
        %v3576 = vmul.f32 %v3385, 0.044715
        %v3577 = vmul.f32 %v3387, 0.044715
        %v3578 = vmul.f32 %v3389, 0.044715
        %v3579 = vmul.f32 %v3393, 0.044715
        %v3580 = vmul.f32 %v3395, 0.044715
        %v3581 = vmul.f32 %v3397, 0.044715
        %v3582 = vmul.f32 %v3399, 0.044715
        %v3583 = vmul.f32 %v3403, 0.044715
        %v3584 = vmul.f32 %v3405, 0.044715
        %v3585 = vmul.f32 %v3407, 0.044715
        %v3586 = vmul.f32 %v3409, 0.044715
        %v3587 = vmul.f32 %v3413, 0.044715
        %v3588 = vmul.f32 %v3415, 0.044715
        %v3589 = vmul.f32 %v3417, 0.044715
        %v3590 = vmul.f32 %v3419, 0.044715
        %v3591 = vmul.f32 %v3423, 0.044715
        %v3592 = vmul.f32 %v3425, 0.044715
        %v3593 = vmul.f32 %v3427, 0.044715
        %v3594 = vmul.f32 %v3429, 0.044715
        %v3595 = vmul.f32 %v3433, 0.044715
        %v3596 = vmul.f32 %v3435, 0.044715
        %v3597 = vmul.f32 %v3437, 0.044715
        %v3598 = vmul.f32 %v3439, 0.044715
        %v3599 = vmul.f32 %v3443, 0.044715
        %v3600 = vmul.f32 %v3445, 0.044715
        %v3601 = vmul.f32 %v3447, 0.044715
        %v3602 = vmul.f32 %v3449, 0.044715
        %v3603 = vmul.f32 %v3453, 0.044715
        %v3604 = vmul.f32 %v3455, 0.044715
        %v3605 = vmul.f32 %v3457, 0.044715
        %v3606 = vmul.f32 %v3459, 0.044715
        %v3607 = vmul.f32 %v3463, 0.044715
        %v3608 = vmul.f32 %v3465, 0.044715
        %v3609 = vmul.f32 %v3467, 0.044715
        %v3610 = vmul.f32 %v3469, 0.044715
        %v3611 = vmul.f32 %v3473, 0.044715
        %v3612 = vmul.f32 %v3475, 0.044715
        %v3613 = vmul.f32 %v3477, 0.044715
        %v3614 = vmul.f32 %v3479, 0.044715
        %v3615 = vmul.f32 %v3483, 0.044715
        %v3616 = vmul.f32 %v3485, 0.044715
        %v3617 = vmul.f32 %v3487, 0.044715
        %v3618 = vmul.f32 %v3489, 0.044715
        %v3619 = vmul.f32 %v3555, %v3333
        %v3620 = vmul.f32 %v3556, %v3335
        %v3621 = vmul.f32 %v3557, %v3337
        %v3622 = vmul.f32 %v3558, %v3339
        %v3623 = vmul.f32 %v3559, %v3343
        %v3624 = vmul.f32 %v3560, %v3345
        %v3625 = vmul.f32 %v3561, %v3347
        %v3626 = vmul.f32 %v3562, %v3349
        %v3627 = vmul.f32 %v3563, %v3353
        %v3628 = vmul.f32 %v3564, %v3355
        %v3629 = vmul.f32 %v3565, %v3357
        %v3630 = vmul.f32 %v3566, %v3359
        %v3631 = vmul.f32 %v3567, %v3363
        %v3632 = vmul.f32 %v3568, %v3365
        %v3633 = vmul.f32 %v3569, %v3367
        %v3634 = vmul.f32 %v3570, %v3369
        %v3635 = vmul.f32 %v3571, %v3373
        %v3636 = vmul.f32 %v3572, %v3375
        %v3637 = vmul.f32 %v3573, %v3377
        %v3638 = vmul.f32 %v3574, %v3379
        %v3639 = vmul.f32 %v3575, %v3383
        %v3640 = vmul.f32 %v3576, %v3385
        %v3641 = vmul.f32 %v3577, %v3387
        %v3642 = vmul.f32 %v3578, %v3389
        %v3643 = vmul.f32 %v3579, %v3393
        %v3644 = vmul.f32 %v3580, %v3395
        %v3645 = vmul.f32 %v3581, %v3397
        %v3646 = vmul.f32 %v3582, %v3399
        %v3647 = vmul.f32 %v3583, %v3403
        %v3648 = vmul.f32 %v3584, %v3405
        %v3649 = vmul.f32 %v3585, %v3407
        %v3650 = vmul.f32 %v3586, %v3409
        %v3651 = vmul.f32 %v3587, %v3413
        %v3652 = vmul.f32 %v3588, %v3415
        %v3653 = vmul.f32 %v3589, %v3417
        %v3654 = vmul.f32 %v3590, %v3419
        %v3655 = vmul.f32 %v3591, %v3423
        %v3656 = vmul.f32 %v3592, %v3425
        %v3657 = vmul.f32 %v3593, %v3427
        %v3658 = vmul.f32 %v3594, %v3429
        %v3659 = vmul.f32 %v3595, %v3433
        %v3660 = vmul.f32 %v3596, %v3435
        %v3661 = vmul.f32 %v3597, %v3437
        %v3662 = vmul.f32 %v3598, %v3439
        %v3663 = vmul.f32 %v3599, %v3443
        %v3664 = vmul.f32 %v3600, %v3445
        %v3665 = vmul.f32 %v3601, %v3447
        %v3666 = vmul.f32 %v3602, %v3449
        %v3667 = vmul.f32 %v3603, %v3453
        %v3668 = vmul.f32 %v3604, %v3455
        %v3669 = vmul.f32 %v3605, %v3457
        %v3670 = vmul.f32 %v3606, %v3459
        %v3671 = vmul.f32 %v3607, %v3463
        %v3672 = vmul.f32 %v3608, %v3465
        %v3673 = vmul.f32 %v3609, %v3467
        %v3674 = vmul.f32 %v3610, %v3469
        %v3675 = vmul.f32 %v3611, %v3473
        %v3676 = vmul.f32 %v3612, %v3475
        %v3677 = vmul.f32 %v3613, %v3477
        %v3678 = vmul.f32 %v3614, %v3479
        %v3679 = vmul.f32 %v3615, %v3483
        %v3680 = vmul.f32 %v3616, %v3485
        %v3681 = vmul.f32 %v3617, %v3487
        %v3682 = vmul.f32 %v3618, %v3489
        %v3683 = vmul.f32 %v3619, %v3333
        %v3684 = vmul.f32 %v3620, %v3335
        %v3685 = vmul.f32 %v3621, %v3337
        %v3686 = vmul.f32 %v3622, %v3339
        %v3687 = vmul.f32 %v3623, %v3343
        %v3688 = vmul.f32 %v3624, %v3345
        %v3689 = vmul.f32 %v3625, %v3347
        %v3690 = vmul.f32 %v3626, %v3349
        %v3691 = vmul.f32 %v3627, %v3353
        %v3692 = vmul.f32 %v3628, %v3355
        %v3693 = vmul.f32 %v3629, %v3357
        %v3694 = vmul.f32 %v3630, %v3359
        %v3695 = vmul.f32 %v3631, %v3363
        %v3696 = vmul.f32 %v3632, %v3365
        %v3697 = vmul.f32 %v3633, %v3367
        %v3698 = vmul.f32 %v3634, %v3369
        %v3699 = vmul.f32 %v3635, %v3373
        %v3700 = vmul.f32 %v3636, %v3375
        %v3701 = vmul.f32 %v3637, %v3377
        %v3702 = vmul.f32 %v3638, %v3379
        %v3703 = vmul.f32 %v3639, %v3383
        %v3704 = vmul.f32 %v3640, %v3385
        %v3705 = vmul.f32 %v3641, %v3387
        %v3706 = vmul.f32 %v3642, %v3389
        %v3707 = vmul.f32 %v3643, %v3393
        %v3708 = vmul.f32 %v3644, %v3395
        %v3709 = vmul.f32 %v3645, %v3397
        %v3710 = vmul.f32 %v3646, %v3399
        %v3711 = vmul.f32 %v3647, %v3403
        %v3712 = vmul.f32 %v3648, %v3405
        %v3713 = vmul.f32 %v3649, %v3407
        %v3714 = vmul.f32 %v3650, %v3409
        %v3715 = vmul.f32 %v3651, %v3413
        %v3716 = vmul.f32 %v3652, %v3415
        %v3717 = vmul.f32 %v3653, %v3417
        %v3718 = vmul.f32 %v3654, %v3419
        %v3719 = vmul.f32 %v3655, %v3423
        %v3720 = vmul.f32 %v3656, %v3425
        %v3721 = vmul.f32 %v3657, %v3427
        %v3722 = vmul.f32 %v3658, %v3429
        %v3723 = vmul.f32 %v3659, %v3433
        %v3724 = vmul.f32 %v3660, %v3435
        %v3725 = vmul.f32 %v3661, %v3437
        %v3726 = vmul.f32 %v3662, %v3439
        %v3727 = vmul.f32 %v3663, %v3443
        %v3728 = vmul.f32 %v3664, %v3445
        %v3729 = vmul.f32 %v3665, %v3447
        %v3730 = vmul.f32 %v3666, %v3449
        %v3731 = vmul.f32 %v3667, %v3453
        %v3732 = vmul.f32 %v3668, %v3455
        %v3733 = vmul.f32 %v3669, %v3457
        %v3734 = vmul.f32 %v3670, %v3459
        %v3735 = vmul.f32 %v3671, %v3463
        %v3736 = vmul.f32 %v3672, %v3465
        %v3737 = vmul.f32 %v3673, %v3467
        %v3738 = vmul.f32 %v3674, %v3469
        %v3739 = vmul.f32 %v3675, %v3473
        %v3740 = vmul.f32 %v3676, %v3475
        %v3741 = vmul.f32 %v3677, %v3477
        %v3742 = vmul.f32 %v3678, %v3479
        %v3743 = vmul.f32 %v3679, %v3483
        %v3744 = vmul.f32 %v3680, %v3485
        %v3745 = vmul.f32 %v3681, %v3487
        %v3746 = vmul.f32 %v3682, %v3489
        %v3747 = vadd.f32 %v3333, %v3683
        %v3748 = vadd.f32 %v3335, %v3684
        %v3749 = vadd.f32 %v3337, %v3685
        %v3750 = vadd.f32 %v3339, %v3686
        %v3751 = vadd.f32 %v3343, %v3687
        %v3752 = vadd.f32 %v3345, %v3688
        %v3753 = vadd.f32 %v3347, %v3689
        %v3754 = vadd.f32 %v3349, %v3690
        %v3755 = vadd.f32 %v3353, %v3691
        %v3756 = vadd.f32 %v3355, %v3692
        %v3757 = vadd.f32 %v3357, %v3693
        %v3758 = vadd.f32 %v3359, %v3694
        %v3759 = vadd.f32 %v3363, %v3695
        %v3760 = vadd.f32 %v3365, %v3696
        %v3761 = vadd.f32 %v3367, %v3697
        %v3762 = vadd.f32 %v3369, %v3698
        %v3763 = vadd.f32 %v3373, %v3699
        %v3764 = vadd.f32 %v3375, %v3700
        %v3765 = vadd.f32 %v3377, %v3701
        %v3766 = vadd.f32 %v3379, %v3702
        %v3767 = vadd.f32 %v3383, %v3703
        %v3768 = vadd.f32 %v3385, %v3704
        %v3769 = vadd.f32 %v3387, %v3705
        %v3770 = vadd.f32 %v3389, %v3706
        %v3771 = vadd.f32 %v3393, %v3707
        %v3772 = vadd.f32 %v3395, %v3708
        %v3773 = vadd.f32 %v3397, %v3709
        %v3774 = vadd.f32 %v3399, %v3710
        %v3775 = vadd.f32 %v3403, %v3711
        %v3776 = vadd.f32 %v3405, %v3712
        %v3777 = vadd.f32 %v3407, %v3713
        %v3778 = vadd.f32 %v3409, %v3714
        %v3779 = vadd.f32 %v3413, %v3715
        %v3780 = vadd.f32 %v3415, %v3716
        %v3781 = vadd.f32 %v3417, %v3717
        %v3782 = vadd.f32 %v3419, %v3718
        %v3783 = vadd.f32 %v3423, %v3719
        %v3784 = vadd.f32 %v3425, %v3720
        %v3785 = vadd.f32 %v3427, %v3721
        %v3786 = vadd.f32 %v3429, %v3722
        %v3787 = vadd.f32 %v3433, %v3723
        %v3788 = vadd.f32 %v3435, %v3724
        %v3789 = vadd.f32 %v3437, %v3725
        %v3790 = vadd.f32 %v3439, %v3726
        %v3791 = vadd.f32 %v3443, %v3727
        %v3792 = vadd.f32 %v3445, %v3728
        %v3793 = vadd.f32 %v3447, %v3729
        %v3794 = vadd.f32 %v3449, %v3730
        %v3795 = vadd.f32 %v3453, %v3731
        %v3796 = vadd.f32 %v3455, %v3732
        %v3797 = vadd.f32 %v3457, %v3733
        %v3798 = vadd.f32 %v3459, %v3734
        %v3799 = vadd.f32 %v3463, %v3735
        %v3800 = vadd.f32 %v3465, %v3736
        %v3801 = vadd.f32 %v3467, %v3737
        %v3802 = vadd.f32 %v3469, %v3738
        %v3803 = vadd.f32 %v3473, %v3739
        %v3804 = vadd.f32 %v3475, %v3740
        %v3805 = vadd.f32 %v3477, %v3741
        %v3806 = vadd.f32 %v3479, %v3742
        %v3807 = vadd.f32 %v3483, %v3743
        %v3808 = vadd.f32 %v3485, %v3744
        %v3809 = vadd.f32 %v3487, %v3745
        %v3810 = vadd.f32 %v3489, %v3746
        %v3811 = vmul.f32 %v3747, 0.7978846
        %v3812 = vmul.f32 %v3748, 0.7978846
        %v3813 = vmul.f32 %v3749, 0.7978846
        %v3814 = vmul.f32 %v3750, 0.7978846
        %v3815 = vmul.f32 %v3751, 0.7978846
        %v3816 = vmul.f32 %v3752, 0.7978846
        %v3817 = vmul.f32 %v3753, 0.7978846
        %v3818 = vmul.f32 %v3754, 0.7978846
        %v3819 = vmul.f32 %v3755, 0.7978846
        %v3820 = vmul.f32 %v3756, 0.7978846
        %v3821 = vmul.f32 %v3757, 0.7978846
        %v3822 = vmul.f32 %v3758, 0.7978846
        %v3823 = vmul.f32 %v3759, 0.7978846
        %v3824 = vmul.f32 %v3760, 0.7978846
        %v3825 = vmul.f32 %v3761, 0.7978846
        %v3826 = vmul.f32 %v3762, 0.7978846
        %v3827 = vmul.f32 %v3763, 0.7978846
        %v3828 = vmul.f32 %v3764, 0.7978846
        %v3829 = vmul.f32 %v3765, 0.7978846
        %v3830 = vmul.f32 %v3766, 0.7978846
        %v3831 = vmul.f32 %v3767, 0.7978846
        %v3832 = vmul.f32 %v3768, 0.7978846
        %v3833 = vmul.f32 %v3769, 0.7978846
        %v3834 = vmul.f32 %v3770, 0.7978846
        %v3835 = vmul.f32 %v3771, 0.7978846
        %v3836 = vmul.f32 %v3772, 0.7978846
        %v3837 = vmul.f32 %v3773, 0.7978846
        %v3838 = vmul.f32 %v3774, 0.7978846
        %v3839 = vmul.f32 %v3775, 0.7978846
        %v3840 = vmul.f32 %v3776, 0.7978846
        %v3841 = vmul.f32 %v3777, 0.7978846
        %v3842 = vmul.f32 %v3778, 0.7978846
        %v3843 = vmul.f32 %v3779, 0.7978846
        %v3844 = vmul.f32 %v3780, 0.7978846
        %v3845 = vmul.f32 %v3781, 0.7978846
        %v3846 = vmul.f32 %v3782, 0.7978846
        %v3847 = vmul.f32 %v3783, 0.7978846
        %v3848 = vmul.f32 %v3784, 0.7978846
        %v3849 = vmul.f32 %v3785, 0.7978846
        %v3850 = vmul.f32 %v3786, 0.7978846
        %v3851 = vmul.f32 %v3787, 0.7978846
        %v3852 = vmul.f32 %v3788, 0.7978846
        %v3853 = vmul.f32 %v3789, 0.7978846
        %v3854 = vmul.f32 %v3790, 0.7978846
        %v3855 = vmul.f32 %v3791, 0.7978846
        %v3856 = vmul.f32 %v3792, 0.7978846
        %v3857 = vmul.f32 %v3793, 0.7978846
        %v3858 = vmul.f32 %v3794, 0.7978846
        %v3859 = vmul.f32 %v3795, 0.7978846
        %v3860 = vmul.f32 %v3796, 0.7978846
        %v3861 = vmul.f32 %v3797, 0.7978846
        %v3862 = vmul.f32 %v3798, 0.7978846
        %v3863 = vmul.f32 %v3799, 0.7978846
        %v3864 = vmul.f32 %v3800, 0.7978846
        %v3865 = vmul.f32 %v3801, 0.7978846
        %v3866 = vmul.f32 %v3802, 0.7978846
        %v3867 = vmul.f32 %v3803, 0.7978846
        %v3868 = vmul.f32 %v3804, 0.7978846
        %v3869 = vmul.f32 %v3805, 0.7978846
        %v3870 = vmul.f32 %v3806, 0.7978846
        %v3871 = vmul.f32 %v3807, 0.7978846
        %v3872 = vmul.f32 %v3808, 0.7978846
        %v3873 = vmul.f32 %v3809, 0.7978846
        %v3874 = vmul.f32 %v3810, 0.7978846
        %v3875 = vtanh.pop %v3811
        %v3876 = vtanh.pop %v3812
        %v3877 = vtanh.pop %v3813
        %v3878 = vtanh.pop %v3814
        %v3879 = vtanh.pop %v3815
        %v3880 = vtanh.pop %v3816
        %v3881 = vtanh.pop %v3817
        %v3882 = vtanh.pop %v3818
        %v3883 = vtanh.pop %v3819
        %v3884 = vtanh.pop %v3820
        %v3885 = vtanh.pop %v3821
        %v3886 = vtanh.pop %v3822
        %v3887 = vtanh.pop %v3823
        %v3888 = vtanh.pop %v3824
        %v3889 = vtanh.pop %v3825
        %v3890 = vtanh.pop %v3826
        %v3891 = vtanh.pop %v3827
        %v3892 = vtanh.pop %v3828
        %v3893 = vtanh.pop %v3829
        %v3894 = vtanh.pop %v3830
        %v3895 = vtanh.pop %v3831
        %v3896 = vtanh.pop %v3832
        %v3897 = vtanh.pop %v3833
        %v3898 = vtanh.pop %v3834
        %v3899 = vtanh.pop %v3835
        %v3900 = vtanh.pop %v3836
        %v3901 = vtanh.pop %v3837
        %v3902 = vtanh.pop %v3838
        %v3903 = vtanh.pop %v3839
        %v3904 = vtanh.pop %v3840
        %v3905 = vtanh.pop %v3841
        %v3906 = vtanh.pop %v3842
        %v3907 = vtanh.pop %v3843
        %v3908 = vtanh.pop %v3844
        %v3909 = vtanh.pop %v3845
        %v3910 = vtanh.pop %v3846
        %v3911 = vtanh.pop %v3847
        %v3912 = vtanh.pop %v3848
        %v3913 = vtanh.pop %v3849
        %v3914 = vtanh.pop %v3850
        %v3915 = vtanh.pop %v3851
        %v3916 = vtanh.pop %v3852
        %v3917 = vtanh.pop %v3853
        %v3918 = vtanh.pop %v3854
        %v3919 = vtanh.pop %v3855
        %v3920 = vtanh.pop %v3856
        %v3921 = vtanh.pop %v3857
        %v3922 = vtanh.pop %v3858
        %v3923 = vtanh.pop %v3859
        %v3924 = vtanh.pop %v3860
        %v3925 = vtanh.pop %v3861
        %v3926 = vtanh.pop %v3862
        %v3927 = vtanh.pop %v3863
        %v3928 = vtanh.pop %v3864
        %v3929 = vtanh.pop %v3865
        %v3930 = vtanh.pop %v3866
        %v3931 = vtanh.pop %v3867
        %v3932 = vtanh.pop %v3868
        %v3933 = vtanh.pop %v3869
        %v3934 = vtanh.pop %v3870
        %v3935 = vtanh.pop %v3871
        %v3936 = vtanh.pop %v3872
        %v3937 = vtanh.pop %v3873
        %v3938 = vtanh.pop %v3874
        %v3939 = vadd.f32 %v3875, 1.0
        %v3940 = vadd.f32 %v3876, 1.0
        %v3941 = vadd.f32 %v3877, 1.0
        %v3942 = vadd.f32 %v3878, 1.0
        %v3943 = vadd.f32 %v3879, 1.0
        %v3944 = vadd.f32 %v3880, 1.0
        %v3945 = vadd.f32 %v3881, 1.0
        %v3946 = vadd.f32 %v3882, 1.0
        %v3947 = vadd.f32 %v3883, 1.0
        %v3948 = vadd.f32 %v3884, 1.0
        %v3949 = vadd.f32 %v3885, 1.0
        %v3950 = vadd.f32 %v3886, 1.0
        %v3951 = vadd.f32 %v3887, 1.0
        %v3952 = vadd.f32 %v3888, 1.0
        %v3953 = vadd.f32 %v3889, 1.0
        %v3954 = vadd.f32 %v3890, 1.0
        %v3955 = vadd.f32 %v3891, 1.0
        %v3956 = vadd.f32 %v3892, 1.0
        %v3957 = vadd.f32 %v3893, 1.0
        %v3958 = vadd.f32 %v3894, 1.0
        %v3959 = vadd.f32 %v3895, 1.0
        %v3960 = vadd.f32 %v3896, 1.0
        %v3961 = vadd.f32 %v3897, 1.0
        %v3962 = vadd.f32 %v3898, 1.0
        %v3963 = vadd.f32 %v3899, 1.0
        %v3964 = vadd.f32 %v3900, 1.0
        %v3965 = vadd.f32 %v3901, 1.0
        %v3966 = vadd.f32 %v3902, 1.0
        %v3967 = vadd.f32 %v3903, 1.0
        %v3968 = vadd.f32 %v3904, 1.0
        %v3969 = vadd.f32 %v3905, 1.0
        %v3970 = vadd.f32 %v3906, 1.0
        %v3971 = vadd.f32 %v3907, 1.0
        %v3972 = vadd.f32 %v3908, 1.0
        %v3973 = vadd.f32 %v3909, 1.0
        %v3974 = vadd.f32 %v3910, 1.0
        %v3975 = vadd.f32 %v3911, 1.0
        %v3976 = vadd.f32 %v3912, 1.0
        %v3977 = vadd.f32 %v3913, 1.0
        %v3978 = vadd.f32 %v3914, 1.0
        %v3979 = vadd.f32 %v3915, 1.0
        %v3980 = vadd.f32 %v3916, 1.0
        %v3981 = vadd.f32 %v3917, 1.0
        %v3982 = vadd.f32 %v3918, 1.0
        %v3983 = vadd.f32 %v3919, 1.0
        %v3984 = vadd.f32 %v3920, 1.0
        %v3985 = vadd.f32 %v3921, 1.0
        %v3986 = vadd.f32 %v3922, 1.0
        %v3987 = vadd.f32 %v3923, 1.0
        %v3988 = vadd.f32 %v3924, 1.0
        %v3989 = vadd.f32 %v3925, 1.0
        %v3990 = vadd.f32 %v3926, 1.0
        %v3991 = vadd.f32 %v3927, 1.0
        %v3992 = vadd.f32 %v3928, 1.0
        %v3993 = vadd.f32 %v3929, 1.0
        %v3994 = vadd.f32 %v3930, 1.0
        %v3995 = vadd.f32 %v3931, 1.0
        %v3996 = vadd.f32 %v3932, 1.0
        %v3997 = vadd.f32 %v3933, 1.0
        %v3998 = vadd.f32 %v3934, 1.0
        %v3999 = vadd.f32 %v3935, 1.0
        %v4000 = vadd.f32 %v3936, 1.0
        %v4001 = vadd.f32 %v3937, 1.0
        %v4002 = vadd.f32 %v3938, 1.0
        %v4003 = vmul.f32 %v3491, %v3939
        %v4004 = vmul.f32 %v3492, %v3940
        %v4005 = vmul.f32 %v3493, %v3941
        %v4006 = vmul.f32 %v3494, %v3942
        %v4007 = vmul.f32 %v3495, %v3943
        %v4008 = vmul.f32 %v3496, %v3944
        %v4009 = vmul.f32 %v3497, %v3945
        %v4010 = vmul.f32 %v3498, %v3946
        %v4011 = vmul.f32 %v3499, %v3947
        %v4012 = vmul.f32 %v3500, %v3948
        %v4013 = vmul.f32 %v3501, %v3949
        %v4014 = vmul.f32 %v3502, %v3950
        %v4015 = vmul.f32 %v3503, %v3951
        %v4016 = vmul.f32 %v3504, %v3952
        %v4017 = vmul.f32 %v3505, %v3953
        %v4018 = vmul.f32 %v3506, %v3954
        %v4019 = vmul.f32 %v3507, %v3955
        %v4020 = vmul.f32 %v3508, %v3956
        %v4021 = vmul.f32 %v3509, %v3957
        %v4022 = vmul.f32 %v3510, %v3958
        %v4023 = vmul.f32 %v3511, %v3959
        %v4024 = vmul.f32 %v3512, %v3960
        %v4025 = vmul.f32 %v3513, %v3961
        %v4026 = vmul.f32 %v3514, %v3962
        %v4027 = vmul.f32 %v3515, %v3963
        %v4028 = vmul.f32 %v3516, %v3964
        %v4029 = vmul.f32 %v3517, %v3965
        %v4030 = vmul.f32 %v3518, %v3966
        %v4031 = vmul.f32 %v3519, %v3967
        %v4032 = vmul.f32 %v3520, %v3968
        %v4033 = vmul.f32 %v3521, %v3969
        %v4034 = vmul.f32 %v3522, %v3970
        %v4035 = vmul.f32 %v3523, %v3971
        %v4036 = vmul.f32 %v3524, %v3972
        %v4037 = vmul.f32 %v3525, %v3973
        %v4038 = vmul.f32 %v3526, %v3974
        %v4039 = vmul.f32 %v3527, %v3975
        %v4040 = vmul.f32 %v3528, %v3976
        %v4041 = vmul.f32 %v3529, %v3977
        %v4042 = vmul.f32 %v3530, %v3978
        %v4043 = vmul.f32 %v3531, %v3979
        %v4044 = vmul.f32 %v3532, %v3980
        %v4045 = vmul.f32 %v3533, %v3981
        %v4046 = vmul.f32 %v3534, %v3982
        %v4047 = vmul.f32 %v3535, %v3983
        %v4048 = vmul.f32 %v3536, %v3984
        %v4049 = vmul.f32 %v3537, %v3985
        %v4050 = vmul.f32 %v3538, %v3986
        %v4051 = vmul.f32 %v3539, %v3987
        %v4052 = vmul.f32 %v3540, %v3988
        %v4053 = vmul.f32 %v3541, %v3989
        %v4054 = vmul.f32 %v3542, %v3990
        %v4055 = vmul.f32 %v3543, %v3991
        %v4056 = vmul.f32 %v3544, %v3992
        %v4057 = vmul.f32 %v3545, %v3993
        %v4058 = vmul.f32 %v3546, %v3994
        %v4059 = vmul.f32 %v3547, %v3995
        %v4060 = vmul.f32 %v3548, %v3996
        %v4061 = vmul.f32 %v3549, %v3997
        %v4062 = vmul.f32 %v3550, %v3998
        %v4063 = vmul.f32 %v3551, %v3999
        %v4064 = vmul.f32 %v3552, %v4000
        %v4065 = vmul.f32 %v3553, %v4001
        %v4066 = vmul.f32 %v3554, %v4002
        %v4067 = vpack.c.bf16 %v4005, %v4003
        %v4068 = vpack.c.bf16 %v4006, %v4004
        %v4069 = vpack.c.bf16 %v4009, %v4007
        %v4070 = vpack.c.bf16 %v4010, %v4008
        %v4071 = vpack.c.bf16 %v4013, %v4011
        %v4072 = vpack.c.bf16 %v4014, %v4012
        %v4073 = vpack.c.bf16 %v4017, %v4015
        %v4074 = vpack.c.bf16 %v4018, %v4016
        %v4075 = vpack.c.bf16 %v4021, %v4019
        %v4076 = vpack.c.bf16 %v4022, %v4020
        %v4077 = vpack.c.bf16 %v4025, %v4023
        %v4078 = vpack.c.bf16 %v4026, %v4024
        %v4079 = vpack.c.bf16 %v4029, %v4027
        %v4080 = vpack.c.bf16 %v4030, %v4028
        %v4081 = vpack.c.bf16 %v4033, %v4031
        %v4082 = vpack.c.bf16 %v4034, %v4032
        %v4083 = vpack.c.bf16 %v4037, %v4035
        %v4084 = vpack.c.bf16 %v4038, %v4036
        %v4085 = vpack.c.bf16 %v4041, %v4039
        %v4086 = vpack.c.bf16 %v4042, %v4040
        %v4087 = vpack.c.bf16 %v4045, %v4043
        %v4088 = vpack.c.bf16 %v4046, %v4044
        %v4089 = vpack.c.bf16 %v4049, %v4047
        %v4090 = vpack.c.bf16 %v4050, %v4048
        %v4091 = vpack.c.bf16 %v4053, %v4051
        %v4092 = vpack.c.bf16 %v4054, %v4052
        %v4093 = vpack.c.bf16 %v4057, %v4055
        %v4094 = vpack.c.bf16 %v4058, %v4056
        %v4095 = vpack.c.bf16 %v4061, %v4059
        %v4096 = vpack.c.bf16 %v4062, %v4060
        %v4097 = vpack.c.bf16 %v4065, %v4063
        %v4098 = vpack.c.bf16 %v4066, %v4064
        %v4099 = vld [vmem:[%s11] sm:$0xf]
        %v4100 = vld [vmem:[%s11 + $0x4] sm:$0xf]
        %v4101 = vld [vmem:[%s11 + $0x8] sm:$0xf]
        %v4102 = vld [vmem:[%s11 + $0xc] sm:$0xf]
        %v4103 = vld [vmem:[%s11 + $0x10] sm:$0xf]
        %v4104 = vld [vmem:[%s11 + $0x14] sm:$0xf]
        %v4105 = vld [vmem:[%s11 + $0x18] sm:$0xf]
        %v4106 = vld [vmem:[%s11 + $0x1c] sm:$0xf]
        %v4107 = vld [vmem:[%s11 + $0x20] sm:$0xf]
        %v4108 = vld [vmem:[%s11 + $0x24] sm:$0xf]
        %v4109 = vld [vmem:[%s11 + $0x28] sm:$0xf]
        %v4110 = vld [vmem:[%s11 + $0x2c] sm:$0xf]
        %v4111 = vld [vmem:[%s11 + $0x30] sm:$0xf]
        %v4112 = vld [vmem:[%s11 + $0x34] sm:$0xf]
        %v4113 = vld [vmem:[%s11 + $0x38] sm:$0xf]
        %v4114 = vld [vmem:[%s11 + $0x3c] sm:$0xf]
        %v4115 = vld [vmem:[%s11 + $0x40] sm:$0xf]
        %v4116 = vld [vmem:[%s11 + $0x44] sm:$0xf]
        %v4117 = vld [vmem:[%s11 + $0x48] sm:$0xf]
        %v4118 = vld [vmem:[%s11 + $0x4c] sm:$0xf]
        %v4119 = vld [vmem:[%s11 + $0x50] sm:$0xf]
        %v4120 = vld [vmem:[%s11 + $0x54] sm:$0xf]
        %v4121 = vld [vmem:[%s11 + $0x58] sm:$0xf]
        %v4122 = vld [vmem:[%s11 + $0x5c] sm:$0xf]
        %v4123 = vld [vmem:[%s11 + $0x60] sm:$0xf]
        %v4124 = vld [vmem:[%s11 + $0x64] sm:$0xf]
        %v4125 = vld [vmem:[%s11 + $0x68] sm:$0xf]
        %v4126 = vld [vmem:[%s11 + $0x6c] sm:$0xf]
        %v4127 = vld [vmem:[%s11 + $0x70] sm:$0xf]
        %v4128 = vld [vmem:[%s11 + $0x74] sm:$0xf]
        %v4129 = vld [vmem:[%s11 + $0x78] sm:$0xf]
        %v4130 = vld [vmem:[%s11 + $0x7c] sm:$0xf]
        %v4132 = vlaneseq
        %v4133 = vshrl.u32 %v4132, 7
        %v4134 = vsub.s32 0, %v4133
        %v4135 = vrot.slane %v1254, %v4134
        %v4169 = vunpack.c.l.b16 %v4099
        %v4170 = vunpack.c.l.b16 %v4100
        %v4171 = vunpack.c.l.b16 %v4101
        %v4172 = vunpack.c.l.b16 %v4102
        %v4173 = vunpack.c.l.b16 %v4103
        %v4174 = vunpack.c.l.b16 %v4104
        %v4175 = vunpack.c.l.b16 %v4105
        %v4176 = vunpack.c.l.b16 %v4106
        %v4177 = vunpack.c.l.b16 %v4107
        %v4178 = vunpack.c.l.b16 %v4108
        %v4179 = vunpack.c.l.b16 %v4109
        %v4180 = vunpack.c.l.b16 %v4110
        %v4181 = vunpack.c.l.b16 %v4111
        %v4182 = vunpack.c.l.b16 %v4112
        %v4183 = vunpack.c.l.b16 %v4113
        %v4184 = vunpack.c.l.b16 %v4114
        %v4185 = vunpack.c.l.b16 %v4115
        %v4186 = vunpack.c.l.b16 %v4116
        %v4187 = vunpack.c.l.b16 %v4117
        %v4188 = vunpack.c.l.b16 %v4118
        %v4189 = vunpack.c.l.b16 %v4119
        %v4190 = vunpack.c.l.b16 %v4120
        %v4191 = vunpack.c.l.b16 %v4121
        %v4192 = vunpack.c.l.b16 %v4122
        %v4193 = vunpack.c.l.b16 %v4123
        %v4194 = vunpack.c.l.b16 %v4124
        %v4195 = vunpack.c.l.b16 %v4125
        %v4196 = vunpack.c.l.b16 %v4126
        %v4197 = vunpack.c.l.b16 %v4127
        %v4198 = vunpack.c.l.b16 %v4128
        %v4199 = vunpack.c.l.b16 %v4129
        %v4200 = vunpack.c.l.b16 %v4130
        %v4201 = vpack.c.b16 %v4170, %v4169
        %v4202 = vpack.c.b16 %v4172, %v4171
        %v4203 = vpack.c.b16 %v4174, %v4173
        %v4204 = vpack.c.b16 %v4176, %v4175
        %v4205 = vpack.c.b16 %v4178, %v4177
        %v4206 = vpack.c.b16 %v4180, %v4179
        %v4207 = vpack.c.b16 %v4182, %v4181
        %v4208 = vpack.c.b16 %v4184, %v4183
        %v4209 = vpack.c.b16 %v4186, %v4185
        %v4210 = vpack.c.b16 %v4188, %v4187
        %v4211 = vpack.c.b16 %v4190, %v4189
        %v4212 = vpack.c.b16 %v4192, %v4191
        %v4213 = vpack.c.b16 %v4194, %v4193
        %v4214 = vpack.c.b16 %v4196, %v4195
        %v4215 = vpack.c.b16 %v4198, %v4197
        %v4216 = vpack.c.b16 %v4200, %v4199
        %4233 = vmatprep.subr.bf16.mxu0 0
        %4234 = vmatpush1.bf16.msra.mxu0 %v4201
        %4235 = vmatprep.subr.bf16.mxu0 0
        %4236 = vmatpush1.bf16.msra.mxu0 %v4202
        %4237 = vmatprep.subr.bf16.mxu0 0
        %4238 = vmatpush1.bf16.msra.mxu0 %v4203
        %4239 = vmatprep.subr.bf16.mxu0 0
        %4240 = vmatpush1.bf16.msra.mxu0 %v4204
        %4241 = vmatprep.subr.bf16.mxu0 0
        %4242 = vmatpush1.bf16.msra.mxu0 %v4205
        %4243 = vmatprep.subr.bf16.mxu0 0
        %4244 = vmatpush1.bf16.msra.mxu0 %v4206
        %4245 = vmatprep.subr.bf16.mxu0 0
        %4246 = vmatpush1.bf16.msra.mxu0 %v4207
        %4247 = vmatprep.subr.bf16.mxu0 0
        %4248 = vmatpush1.bf16.msra.mxu0 %v4208
        %4249 = vmatprep.subr.bf16.mxu0 0
        %4250 = vmatpush1.bf16.msra.mxu0 %v4209
        %4251 = vmatprep.subr.bf16.mxu0 0
        %4252 = vmatpush1.bf16.msra.mxu0 %v4210
        %4253 = vmatprep.subr.bf16.mxu0 0
        %4254 = vmatpush1.bf16.msra.mxu0 %v4211
        %4255 = vmatprep.subr.bf16.mxu0 0
        %4256 = vmatpush1.bf16.msra.mxu0 %v4212
        %4257 = vmatprep.subr.bf16.mxu0 0
        %4258 = vmatpush1.bf16.msra.mxu0 %v4213
        %4259 = vmatprep.subr.bf16.mxu0 0
        %4260 = vmatpush1.bf16.msra.mxu0 %v4214
        %4261 = vmatprep.subr.bf16.mxu0 0
        %4262 = vmatpush1.bf16.msra.mxu0 %v4215
        %4263 = vmatprep.subr.bf16.mxu0 0
        %4264 = vmatpush1.bf16.msra.mxu0 %v4216
        %4265 = vmatprep.mubr.bf16.mxu0 %v4068
        %4266 = vmatmul.mubr.bf16.gmra.mrb[0].mxu0 %v4067
        %v4267 = vpop.f32.mrb[0].mxu0
        %v4268 = vadd.f32 %v4135, %v4267
        %v4269 = vpop.f32.mrb[0].mxu0
        %v4270 = vpop.f32.mrb[0].mxu0
        %v4271 = vadd.f32 %v4135, %v4270
        %v4272 = vpop.f32.mrb[0].mxu0
        %4273 = vmatprep.mubr.bf16.mxu0 %v4070
        %4274 = vmatmul.mubr.bf16.gmra.mrb[0].mxu0 %v4069
        %v4275 = vpop.f32.mrb[0].mxu0
        %v4276 = vadd.f32 %v4135, %v4275
        %v4277 = vpop.f32.mrb[0].mxu0
        %v4278 = vpop.f32.mrb[0].mxu0
        %v4279 = vadd.f32 %v4135, %v4278
        %v4280 = vpop.f32.mrb[0].mxu0
        %4281 = vmatprep.mubr.bf16.mxu0 %v4072
        %4282 = vmatmul.mubr.bf16.gmra.mrb[0].mxu0 %v4071
        %v4283 = vpop.f32.mrb[0].mxu0
        %v4284 = vadd.f32 %v4135, %v4283
        %v4285 = vpop.f32.mrb[0].mxu0
        %v4286 = vpop.f32.mrb[0].mxu0
        %v4287 = vadd.f32 %v4135, %v4286
        %v4288 = vpop.f32.mrb[0].mxu0
        %4289 = vmatprep.mubr.bf16.mxu0 %v4074
        %4290 = vmatmul.mubr.bf16.gmra.mrb[0].mxu0 %v4073
        %v4291 = vpop.f32.mrb[0].mxu0
        %v4292 = vadd.f32 %v4135, %v4291
        %v4293 = vpop.f32.mrb[0].mxu0
        %v4294 = vpop.f32.mrb[0].mxu0
        %v4295 = vadd.f32 %v4135, %v4294
        %v4296 = vpop.f32.mrb[0].mxu0
        %4297 = vmatprep.mubr.bf16.mxu0 %v4076
        %4298 = vmatmul.mubr.bf16.gmra.mrb[0].mxu0 %v4075
        %v4299 = vpop.f32.mrb[0].mxu0
        %v4300 = vadd.f32 %v4135, %v4299
        %v4301 = vpop.f32.mrb[0].mxu0
        %v4302 = vpop.f32.mrb[0].mxu0
        %v4303 = vadd.f32 %v4135, %v4302
        %v4304 = vpop.f32.mrb[0].mxu0
        %4305 = vmatprep.mubr.bf16.mxu0 %v4078
        %4306 = vmatmul.mubr.bf16.gmra.mrb[0].mxu0 %v4077
        %v4307 = vpop.f32.mrb[0].mxu0
        %v4308 = vadd.f32 %v4135, %v4307
        %v4309 = vpop.f32.mrb[0].mxu0
        %v4310 = vpop.f32.mrb[0].mxu0
        %v4311 = vadd.f32 %v4135, %v4310
        %v4312 = vpop.f32.mrb[0].mxu0
        %4313 = vmatprep.mubr.bf16.mxu0 %v4080
        %4314 = vmatmul.mubr.bf16.gmra.mrb[0].mxu0 %v4079
        %v4315 = vpop.f32.mrb[0].mxu0
        %v4316 = vadd.f32 %v4135, %v4315
        %v4317 = vpop.f32.mrb[0].mxu0
        %v4318 = vpop.f32.mrb[0].mxu0
        %v4319 = vadd.f32 %v4135, %v4318
        %v4320 = vpop.f32.mrb[0].mxu0
        %4321 = vmatprep.mubr.bf16.mxu0 %v4082
        %4322 = vmatmul.mubr.bf16.gmra.mrb[0].mxu0 %v4081
        %v4323 = vpop.f32.mrb[0].mxu0
        %v4324 = vadd.f32 %v4135, %v4323
        %v4325 = vpop.f32.mrb[0].mxu0
        %v4326 = vpop.f32.mrb[0].mxu0
        %v4327 = vadd.f32 %v4135, %v4326
        %v4328 = vpop.f32.mrb[0].mxu0
        %4329 = vmatprep.mubr.bf16.mxu0 %v4084
        %4330 = vmatmul.mubr.bf16.gmra.mrb[0].mxu0 %v4083
        %v4331 = vpop.f32.mrb[0].mxu0
        %v4332 = vadd.f32 %v4135, %v4331
        %v4333 = vpop.f32.mrb[0].mxu0
        %v4334 = vpop.f32.mrb[0].mxu0
        %v4335 = vadd.f32 %v4135, %v4334
        %v4336 = vpop.f32.mrb[0].mxu0
        %4337 = vmatprep.mubr.bf16.mxu0 %v4086
        %4338 = vmatmul.mubr.bf16.gmra.mrb[0].mxu0 %v4085
        %v4339 = vpop.f32.mrb[0].mxu0
        %v4340 = vadd.f32 %v4135, %v4339
        %v4341 = vpop.f32.mrb[0].mxu0
        %v4342 = vpop.f32.mrb[0].mxu0
        %v4343 = vadd.f32 %v4135, %v4342
        %v4344 = vpop.f32.mrb[0].mxu0
        %4345 = vmatprep.mubr.bf16.mxu0 %v4088
        %4346 = vmatmul.mubr.bf16.gmra.mrb[0].mxu0 %v4087
        %v4347 = vpop.f32.mrb[0].mxu0
        %v4348 = vadd.f32 %v4135, %v4347
        %v4349 = vpop.f32.mrb[0].mxu0
        %v4350 = vpop.f32.mrb[0].mxu0
        %v4351 = vadd.f32 %v4135, %v4350
        %v4352 = vpop.f32.mrb[0].mxu0
        %4353 = vmatprep.mubr.bf16.mxu0 %v4090
        %4354 = vmatmul.mubr.bf16.gmra.mrb[0].mxu0 %v4089
        %v4355 = vpop.f32.mrb[0].mxu0
        %v4356 = vadd.f32 %v4135, %v4355
        %v4357 = vpop.f32.mrb[0].mxu0
        %v4358 = vpop.f32.mrb[0].mxu0
        %v4359 = vadd.f32 %v4135, %v4358
        %v4360 = vpop.f32.mrb[0].mxu0
        %4361 = vmatprep.mubr.bf16.mxu0 %v4092
        %4362 = vmatmul.mubr.bf16.gmra.mrb[0].mxu0 %v4091
        %v4363 = vpop.f32.mrb[0].mxu0
        %v4364 = vadd.f32 %v4135, %v4363
        %v4365 = vpop.f32.mrb[0].mxu0
        %v4366 = vpop.f32.mrb[0].mxu0
        %v4367 = vadd.f32 %v4135, %v4366
        %v4368 = vpop.f32.mrb[0].mxu0
        %4369 = vmatprep.mubr.bf16.mxu0 %v4094
        %4370 = vmatmul.mubr.bf16.gmra.mrb[0].mxu0 %v4093
        %v4371 = vpop.f32.mrb[0].mxu0
        %v4372 = vadd.f32 %v4135, %v4371
        %v4373 = vpop.f32.mrb[0].mxu0
        %v4374 = vpop.f32.mrb[0].mxu0
        %v4375 = vadd.f32 %v4135, %v4374
        %v4376 = vpop.f32.mrb[0].mxu0
        %4377 = vmatprep.mubr.bf16.mxu0 %v4096
        %4378 = vmatmul.mubr.bf16.gmra.mrb[0].mxu0 %v4095
        %v4379 = vpop.f32.mrb[0].mxu0
        %v4380 = vadd.f32 %v4135, %v4379
        %v4381 = vpop.f32.mrb[0].mxu0
        %v4382 = vpop.f32.mrb[0].mxu0
        %v4383 = vadd.f32 %v4135, %v4382
        %v4384 = vpop.f32.mrb[0].mxu0
        %4385 = vmatprep.mubr.bf16.mxu0 %v4098
        %4386 = vmatmul.mubr.bf16.gmra.mrb[0].mxu0 %v4097
        %v4387 = vpop.f32.mrb[0].mxu0
        %v4388 = vadd.f32 %v4135, %v4387
        %v4389 = vpop.f32.mrb[0].mxu0
        %v4390 = vpop.f32.mrb[0].mxu0
        %v4391 = vadd.f32 %v4135, %v4390
        %v4392 = vpop.f32.mrb[0].mxu0
        %4393 = vdwg.mxu0
        %v4394 = vadd.f32 %v2651, %v4268
        %v4395 = vadd.f32 %v2652, %v4271
        %v4396 = vadd.f32 %v2653, %v4276
        %v4397 = vadd.f32 %v2654, %v4279
        %v4398 = vadd.f32 %v2655, %v4284
        %v4399 = vadd.f32 %v2656, %v4287
        %v4400 = vadd.f32 %v2657, %v4292
        %v4401 = vadd.f32 %v2658, %v4295
        %v4402 = vadd.f32 %v2659, %v4300
        %v4403 = vadd.f32 %v2660, %v4303
        %v4404 = vadd.f32 %v2661, %v4308
        %v4405 = vadd.f32 %v2662, %v4311
        %v4406 = vadd.f32 %v2663, %v4316
        %v4407 = vadd.f32 %v2664, %v4319
        %v4408 = vadd.f32 %v2665, %v4324
        %v4409 = vadd.f32 %v2666, %v4327
        %v4410 = vadd.f32 %v2667, %v4332
        %v4411 = vadd.f32 %v2668, %v4335
        %v4412 = vadd.f32 %v2669, %v4340
        %v4413 = vadd.f32 %v2670, %v4343
        %v4414 = vadd.f32 %v2671, %v4348
        %v4415 = vadd.f32 %v2672, %v4351
        %v4416 = vadd.f32 %v2673, %v4356
        %v4417 = vadd.f32 %v2674, %v4359
        %v4418 = vadd.f32 %v2675, %v4364
        %v4419 = vadd.f32 %v2676, %v4367
        %v4420 = vadd.f32 %v2677, %v4372
        %v4421 = vadd.f32 %v2678, %v4375
        %v4422 = vadd.f32 %v2679, %v4380
        %v4423 = vadd.f32 %v2680, %v4383
        %v4424 = vadd.f32 %v2681, %v4388
        %v4425 = vadd.f32 %v2682, %v4391
        %4426 = vst.msk [vmem:[%s578] sm:$0xff] %vm637, %v4394
        %4427 = vst.msk [vmem:[%s578 + $0x8] sm:$0xff] %vm637, %v4395
        %4428 = vst.msk [vmem:[%s578 + $0x10] sm:$0xff] %vm637, %v4396
        %4429 = vst.msk [vmem:[%s578 + $0x18] sm:$0xff] %vm637, %v4397
        %4430 = vst.msk [vmem:[%s578 + $0x20] sm:$0xff] %vm637, %v4398
        %4431 = vst.msk [vmem:[%s578 + $0x28] sm:$0xff] %vm637, %v4399
        %4432 = vst.msk [vmem:[%s578 + $0x30] sm:$0xff] %vm637, %v4400
        %4433 = vst.msk [vmem:[%s578 + $0x38] sm:$0xff] %vm637, %v4401
        %4434 = vst.msk [vmem:[%s578 + $0x40] sm:$0xff] %vm637, %v4402
        %4435 = vst.msk [vmem:[%s578 + $0x48] sm:$0xff] %vm637, %v4403
        %4436 = vst.msk [vmem:[%s578 + $0x50] sm:$0xff] %vm637, %v4404
        %4437 = vst.msk [vmem:[%s578 + $0x58] sm:$0xff] %vm637, %v4405
        %4438 = vst.msk [vmem:[%s578 + $0x60] sm:$0xff] %vm637, %v4406
        %4439 = vst.msk [vmem:[%s578 + $0x68] sm:$0xff] %vm637, %v4407
        %4440 = vst.msk [vmem:[%s578 + $0x70] sm:$0xff] %vm637, %v4408
        %4441 = vst.msk [vmem:[%s578 + $0x78] sm:$0xff] %vm637, %v4409
        %4442 = vst.msk [vmem:[%s578 + $0x80] sm:$0xff] %vm637, %v4410
        %4443 = vst.msk [vmem:[%s578 + $0x88] sm:$0xff] %vm637, %v4411
        %4444 = vst.msk [vmem:[%s578 + $0x90] sm:$0xff] %vm637, %v4412
        %4445 = vst.msk [vmem:[%s578 + $0x98] sm:$0xff] %vm637, %v4413
        %4446 = vst.msk [vmem:[%s578 + $0xa0] sm:$0xff] %vm637, %v4414
        %4447 = vst.msk [vmem:[%s578 + $0xa8] sm:$0xff] %vm637, %v4415
        %4448 = vst.msk [vmem:[%s578 + $0xb0] sm:$0xff] %vm637, %v4416
        %4449 = vst.msk [vmem:[%s578 + $0xb8] sm:$0xff] %vm637, %v4417
        %4450 = vst.msk [vmem:[%s578 + $0xc0] sm:$0xff] %vm637, %v4418
        %4451 = vst.msk [vmem:[%s578 + $0xc8] sm:$0xff] %vm637, %v4419
        %4452 = vst.msk [vmem:[%s578 + $0xd0] sm:$0xff] %vm637, %v4420
        %4453 = vst.msk [vmem:[%s578 + $0xd8] sm:$0xff] %vm637, %v4421
        %4454 = vst.msk [vmem:[%s578 + $0xe0] sm:$0xff] %vm637, %v4422
        %4455 = vst.msk [vmem:[%s578 + $0xe8] sm:$0xff] %vm637, %v4423
        %4456 = vst.msk [vmem:[%s578 + $0xf0] sm:$0xff] %vm637, %v4424
        %4457 = vst.msk [vmem:[%s578 + $0xf8] sm:$0xff] %vm637, %v4425
        %s4458 = sand.u32 %s365, 1
        %s4459 = scalar_lea.sflag [#allocation5], %s4458
        %s4460 = sand.u32 %s365, 1
        %s4461 = smul.addr %s4460, 256
        %s4462 = scalar_lea.vmem [#allocation8], %s4461
        // Predicated region
        $region81: #{tpu_custom_call.1} parent=71 // pred_check
          %p4463 = pneg %p375
        $region82: #{tpu_custom_call.1} parent=71 // pred_check_branch
          %4465 = sbr.rel (%p4463) target = $region84
        $region83: #{tpu_custom_call.1} parent=71 // pred_region
          %s4466 = smul.u32 16, %s38
          %s4468 = ssub.s32 4096, 4096
          %4469 = vsyncadd %s4459, %s4468
          %s4470 = smul.addr %s4466, 2
          %s4471 = smul.addr %s37, 32
          %s4472 = sadd.s32 %s4470, %s4471
          %s4473 = smul.addr %s4472, 128
          %s4474 = scalar_lea.hbm %s13, %s4473
          %s4475 = sshll.u32 %s4462, 4
          %s4476 = int_to_ptr.vmem [resolvable:$true] %s4475
          %4481 = dma.vmem_to_hbm [thread:$0]  %s4476, 4096, %s4474, %s4459, 128, 128, 8
        $region84: #{tpu_custom_call.1} parent=71 // pred_fallthru
          _
      $region72: #{tpu_custom_call.1} parent=5 // pred_fallthru
        _
      %p4482 = scmp.le.s32.totalorder 2, %s28
      // Predicated region
      $region85: #{tpu_custom_call.1} parent=5 // pred_check
        %p4483 = pneg %p4482
      $region86: #{tpu_custom_call.1} parent=5 // pred_check_branch
        %4485 = sbr.rel (%p4483) target = $region88
      $region87: #{tpu_custom_call.1} parent=5 // pred_region
        %s4486 = ssub.s32 %s28, 2
        // Predicated region
        $region89: #{tpu_custom_call.1} parent=87 // pred_check
          %p4487 = pneg %p381
        $region90: #{tpu_custom_call.1} parent=87 // pred_check_branch
          %4489 = sbr.rel (%p4487) target = $region92
        $region91: #{tpu_custom_call.1} parent=87 // pred_region
          %s4490 = sand.u32 %s366, 1
          %s4491 = scalar_lea.sflag [#allocation5], %s4490
          %s4492 = sand.u32 %s366, 1
          %s4493 = smul.addr %s4492, 256
          %s4494 = scalar_lea.vmem [#allocation8], %s4493
          %4495 = dma.done %s4491, 4096
        $region92: #{tpu_custom_call.1} parent=87 // pred_fallthru
          _
      $region88: #{tpu_custom_call.1} parent=5 // pred_fallthru
        _
    $region6: #{tpu_custom_call.1} parent=1 // loop_footer
      %s32 = sadd.s32 1, %s28
    $region7: #{tpu_custom_call.1} parent=1 // loop_footer_branch
      %27 = sbr.rel target = $region3
    $region8: #{tpu_custom_call.1} parent=1 // loop_exit
      _
    %4496 = vsyncpa [#allocation4], 1
    %s4497 = scalar_lea.sflag [#allocation4], 1
    %4498 = vsyncpa %s4497, 1
    %4499 = vsyncpa [#allocation7], 1
    %s4500 = scalar_lea.sflag [#allocation7], 1
    %4501 = vsyncpa %s4500, 1
    %4502 = vsyncpa [#allocation5], 1
    %s4503 = scalar_lea.sflag [#allocation5], 1
    %4504 = vsyncpa %s4503, 1

// kernel: tpu_custom_call.1
$region0: #{tpu_custom_call.1}
  #allocation0 [shape = 'u32[]', space=smem, size = 0x4, offset = 0x4, fixed_abs, tag = 'smem constant byte address 0x4 - core index']
  #allocation1 [shape = 'u32[144,128]{1,0:T(1,128)}', space=vmem, size = 0x12000, scoped, tag = 'internal scratch']
  #allocation2 [shape = 'bf16[18,16,64]{2,1,0:T(16,128)(2,1)}', space=vmem, size = 0x12000, scoped, tag = 'scratch operand']
  %s0 = inlined_call_operand.vmem [shape: f32[2,16,16,64], index: 0, kind: input, shape index: {}]
  %s1 = inlined_call_operand.hbm [shape: f32[2,16,16,64], index: 1, kind: input, shape index: {}]
  %s2 = inlined_call_operand.hbm [shape: f32[2,16,16,64], index: 2, kind: input, shape index: {}]
  %s3 = inlined_call_operand.vmem [shape: f32[1,64], index: 3, kind: input, shape index: {}]
  %s4 = inlined_call_operand.vmem [shape: f32[1,64], index: 4, kind: input, shape index: {}]
  %s5 = inlined_call_operand.vmem [shape: bf16[3,192,64], index: 5, kind: input, shape index: {}]
  %s6 = inlined_call_operand.vmem [shape: f32[1,64], index: 6, kind: input, shape index: {}]
  %s7 = inlined_call_operand.vmem [shape: f32[1,64], index: 7, kind: input, shape index: {}]
  %s8 = inlined_call_operand.vmem [shape: f32[1,64], index: 8, kind: input, shape index: {}]
  %s9 = inlined_call_operand.vmem [shape: bf16[64,256], index: 9, kind: input, shape index: {}]
  %s10 = inlined_call_operand.vmem [shape: f32[1,256], index: 10, kind: input, shape index: {}]
  %s11 = inlined_call_operand.vmem [shape: bf16[256,64], index: 11, kind: input, shape index: {}]
  %s12 = inlined_call_operand.vmem [shape: f32[1,64], index: 12, kind: input, shape index: {}]
  %s13 = inlined_call_operand.hbm [shape: f32[2,16,16,64], index: 13, kind: output, shape index: {}]
  %s14 = sld [smem:[#allocation0]]
  $region93: #{tpu_custom_call.1} parent=0
    _
  %s16 = ssub.s32 1, %s14
  %s17 = scalar_select 0, %s16, %s14
  $region1: #{tpu_custom_call.1} parent=0
    #allocation3 [shape = 'u8[262144]{0}', space=vmem, size = 0x40000, scoped, tag = 'input window, operand 1']
    #allocation4 [shape = 's32[2]{0}', space=sflag, size = 0x8, scoped, tag = 'scoped memory for tpu_custom_call.1']
    #allocation5 [shape = 's32[2]{0}', space=sflag, size = 0x8, scoped, tag = 'scoped memory for tpu_custom_call.1']
    #allocation6 [shape = 'u8[16384]{0}', space=vmem, size = 0x4000, scoped, tag = 'input window, operand 2']
    #allocation7 [shape = 's32[2]{0}', space=sflag, size = 0x8, scoped, tag = 'scoped memory for tpu_custom_call.1']
    #allocation8 [shape = 'u8[262144]{0}', space=vmem, size = 0x40000, scoped, tag = 'output window, operand 0']
    %18 = vsyncpa [#allocation4], 0
    %s19 = scalar_lea.sflag [#allocation4], 1
    %20 = vsyncpa %s19, 0
    %21 = vsyncpa [#allocation7], 0
    %s22 = scalar_lea.sflag [#allocation7], 1
    %23 = vsyncpa %s22, 0
    %24 = vsyncpa [#allocation5], 0
    %s25 = scalar_lea.sflag [#allocation5], 1
    %26 = vsyncpa %s25, 0
    loop: start=0, step=1, limit=4
    $region2: #{tpu_custom_call.1} parent=1 // loop_pre_header
      _
    $region3: #{tpu_custom_call.1} parent=1 // loop_header
      %s28 = sphi 0, %s32
      %p29 = scmp.ge.s32.totalorder %s28, 4
      %s35 = sphi 0, %s47
      %s36 = sphi 0, %s43
      %s37 = sphi 0, %s35
      %s38 = sphi 0, %s36
      %s39 = sphi 0, %s37
      %s40 = sphi 0, %s38
      %s60 = sphi 0, %s62
      %s63 = sphi 0, %s60
      %s64 = sphi 0, %s63
      %s80 = sphi 0, %s64
      %s88 = sphi 0, %s90
      %s91 = sphi 0, %s88
      %s92 = sphi 0, %s91
      %s108 = sphi 0, %s92
      %s124 = sphi 0, %s126
      %s127 = sphi 0, %s124
      %s128 = sphi 0, %s127
      %s144 = sphi 0, %s128
      %s148 = sphi 0, %s148
      %s150 = sphi 0, %s148
      %s151 = sphi 0, %s150
      %s165 = sphi 0, %s151
      %s169 = sphi 0, %s169
      %s171 = sphi 0, %s169
      %s172 = sphi 0, %s171
      %s186 = sphi 0, %s172
      %s190 = sphi 0, %s190
      %s192 = sphi 0, %s190
      %s193 = sphi 0, %s192
      %s207 = sphi 0, %s193
      %s211 = sphi 0, %s211
      %s213 = sphi 0, %s211
      %s214 = sphi 0, %s213
      %s228 = sphi 0, %s214
      %s232 = sphi 0, %s232
      %s234 = sphi 0, %s232
      %s235 = sphi 0, %s234
      %s249 = sphi 0, %s235
      %s253 = sphi 0, %s253
      %s255 = sphi 0, %s253
      %s256 = sphi 0, %s255
      %s270 = sphi 0, %s256
      %s274 = sphi 0, %s274
      %s276 = sphi 0, %s274
      %s277 = sphi 0, %s276
      %s291 = sphi 0, %s277
      %s295 = sphi 0, %s295
      %s297 = sphi 0, %s295
      %s298 = sphi 0, %s297
      %s312 = sphi 0, %s298
      %s316 = sphi 0, %s316
      %s318 = sphi 0, %s316
      %s319 = sphi 0, %s318
      %s333 = sphi 0, %s319
      %s337 = sphi 0, %s337
      %s339 = sphi 0, %s337
      %s340 = sphi 0, %s339
      %s354 = sphi 0, %s340
      %s362 = sphi 0, %s364
      %s365 = sphi 0, %s362
      %s366 = sphi 0, %s365
      %s382 = sphi 0, %s366
    $region4: #{tpu_custom_call.1} parent=1 // loop_header_branch
      %31 = sbr.rel (%p29) target = $region8
    $region5: #{tpu_custom_call.1} parent=1 // loop_body
      %s33 = ssub.s32 %s28, 1
      %s34 = ssub.s32 %s28, 2
      %s41 = sadd.s32 1, %s36
      %p42 = scmp.ge.s32.totalorder %s41, 1
      %s43 = scalar_select %p42, 0, %s41
      %s44 = sadd.s32 1, %s35
      %s45 = scalar_select %p42, %s44, %s35
      %p46 = scmp.ge.s32.totalorder %s45, 2
      %s47 = scalar_select %p46, 0, %s45
      %s48 = smul.u32 %s36, 16
      %s49 = ssub.s32 %s48, 1
      %p50 = scmp.gt.s32.totalorder %s49, 0
      %s51 = scalar_select %p50, %s49, 0
      %s52 = smul.u32 %s43, 16
      %s53 = ssub.s32 %s52, 1
      %p54 = scmp.gt.s32.totalorder %s53, 0
      %s55 = scalar_select %p54, %s53, 0
      %s56 = ssub.s32 %s35, %s47
      %s57 = ssub.s32 %s51, %s55
      %s58 = sor.u32 %s56, %s57
      %p59 = scmp.eq.s32.totalorder %s58, 0
      %s61 = sadd.s32 %s60, 1
      %s62 = scalar_select %p59, %s60, %s61
      %p65 = pneg %p59
      %p66 = scmp.eq.s32.totalorder %s28, 1
      %p67 = por %p65, %p66
      %p68 = scmp.ne.s32.totalorder %s60, %s63
      %p69 = scmp.eq.s32.totalorder %s28, 0
      %p70 = por %p68, %p69
      %p71 = scmp.ne.s32.totalorder %s60, %s63
      %p72 = scmp.eq.s32.totalorder %s33, 1
      %p73 = por %p71, %p72
      %p74 = scmp.ne.s32.totalorder %s63, %s64
      %p75 = scmp.eq.s32.totalorder %s33, 0
      %p76 = por %p74, %p75
      %p77 = scmp.ne.s32.totalorder %s63, %s64
      %p78 = scmp.eq.s32.totalorder %s34, 1
      %p79 = por %p77, %p78
      %p81 = scmp.ne.s32.totalorder %s64, %s80
      %p82 = scmp.eq.s32.totalorder %s34, 0
      %p83 = por %p81, %p82
      %s84 = ssub.s32 %s35, %s47
      %s85 = ssub.s32 %s36, %s43
      %s86 = sor.u32 %s84, %s85
      %p87 = scmp.eq.s32.totalorder %s86, 0
      %s89 = sadd.s32 %s88, 1
      %s90 = scalar_select %p87, %s88, %s89
      %p93 = pneg %p87
      %p94 = scmp.eq.s32.totalorder %s28, 1
      %p95 = por %p93, %p94
      %p96 = scmp.ne.s32.totalorder %s88, %s91
      %p97 = scmp.eq.s32.totalorder %s28, 0
      %p98 = por %p96, %p97
      %p99 = scmp.ne.s32.totalorder %s88, %s91
      %p100 = scmp.eq.s32.totalorder %s33, 1
      %p101 = por %p99, %p100
      %p102 = scmp.ne.s32.totalorder %s91, %s92
      %p103 = scmp.eq.s32.totalorder %s33, 0
      %p104 = por %p102, %p103
      %p105 = scmp.ne.s32.totalorder %s91, %s92
      %p106 = scmp.eq.s32.totalorder %s34, 1
      %p107 = por %p105, %p106
      %p109 = scmp.ne.s32.totalorder %s92, %s108
      %p110 = scmp.eq.s32.totalorder %s34, 0
      %p111 = por %p109, %p110
      %s112 = sadd.s32 %s36, 1
      %s113 = smul.u32 %s112, 16
      %p114 = scmp.lt.s32.totalorder %s113, 15
      %s115 = scalar_select %p114, %s113, 15
      %s116 = sadd.s32 %s43, 1
      %s117 = smul.u32 %s116, 16
      %p118 = scmp.lt.s32.totalorder %s117, 15
      %s119 = scalar_select %p118, %s117, 15
      %s120 = ssub.s32 %s35, %s47
      %s121 = ssub.s32 %s115, %s119
      %s122 = sor.u32 %s120, %s121
      %p123 = scmp.eq.s32.totalorder %s122, 0
      %s125 = sadd.s32 %s124, 1
      %s126 = scalar_select %p123, %s124, %s125
      %p129 = pneg %p123
      %p130 = scmp.eq.s32.totalorder %s28, 1
      %p131 = por %p129, %p130
      %p132 = scmp.ne.s32.totalorder %s124, %s127
      %p133 = scmp.eq.s32.totalorder %s28, 0
      %p134 = por %p132, %p133
      %p135 = scmp.ne.s32.totalorder %s124, %s127
      %p136 = scmp.eq.s32.totalorder %s33, 1
      %p137 = por %p135, %p136
      %p138 = scmp.ne.s32.totalorder %s127, %s128
      %p139 = scmp.eq.s32.totalorder %s33, 0
      %p140 = por %p138, %p139
      %p141 = scmp.ne.s32.totalorder %s127, %s128
      %p142 = scmp.eq.s32.totalorder %s34, 1
      %p143 = por %p141, %p142
      %p145 = scmp.ne.s32.totalorder %s128, %s144
      %p146 = scmp.eq.s32.totalorder %s34, 0
      %p147 = por %p145, %p146
      %s149 = sadd.s32 %s148, 1
      %p152 = scmp.eq.s32.totalorder %s28, 1
      %p153 = scmp.ne.s32.totalorder %s148, %s150
      %p154 = scmp.eq.s32.totalorder %s28, 0
      %p155 = por %p153, %p154
      %p156 = scmp.ne.s32.totalorder %s148, %s150
      %p157 = scmp.eq.s32.totalorder %s33, 1
      %p158 = por %p156, %p157
      %p159 = scmp.ne.s32.totalorder %s150, %s151
      %p160 = scmp.eq.s32.totalorder %s33, 0
      %p161 = por %p159, %p160
      %p162 = scmp.ne.s32.totalorder %s150, %s151
      %p163 = scmp.eq.s32.totalorder %s34, 1
      %p164 = por %p162, %p163
      %p166 = scmp.ne.s32.totalorder %s151, %s165
      %p167 = scmp.eq.s32.totalorder %s34, 0
      %p168 = por %p166, %p167
      %s170 = sadd.s32 %s169, 1
      %p173 = scmp.eq.s32.totalorder %s28, 1
      %p174 = scmp.ne.s32.totalorder %s169, %s171
      %p175 = scmp.eq.s32.totalorder %s28, 0
      %p176 = por %p174, %p175
      %p177 = scmp.ne.s32.totalorder %s169, %s171
      %p178 = scmp.eq.s32.totalorder %s33, 1
      %p179 = por %p177, %p178
      %p180 = scmp.ne.s32.totalorder %s171, %s172
      %p181 = scmp.eq.s32.totalorder %s33, 0
      %p182 = por %p180, %p181
      %p183 = scmp.ne.s32.totalorder %s171, %s172
      %p184 = scmp.eq.s32.totalorder %s34, 1
      %p185 = por %p183, %p184
      %p187 = scmp.ne.s32.totalorder %s172, %s186
      %p188 = scmp.eq.s32.totalorder %s34, 0
      %p189 = por %p187, %p188
      %s191 = sadd.s32 %s190, 1
      %p194 = scmp.eq.s32.totalorder %s28, 1
      %p195 = scmp.ne.s32.totalorder %s190, %s192
      %p196 = scmp.eq.s32.totalorder %s28, 0
      %p197 = por %p195, %p196
      %p198 = scmp.ne.s32.totalorder %s190, %s192
      %p199 = scmp.eq.s32.totalorder %s33, 1
      %p200 = por %p198, %p199
      %p201 = scmp.ne.s32.totalorder %s192, %s193
      %p202 = scmp.eq.s32.totalorder %s33, 0
      %p203 = por %p201, %p202
      %p204 = scmp.ne.s32.totalorder %s192, %s193
      %p205 = scmp.eq.s32.totalorder %s34, 1
      %p206 = por %p204, %p205
      %p208 = scmp.ne.s32.totalorder %s193, %s207
      %p209 = scmp.eq.s32.totalorder %s34, 0
      %p210 = por %p208, %p209
      %s212 = sadd.s32 %s211, 1
      %p215 = scmp.eq.s32.totalorder %s28, 1
      %p216 = scmp.ne.s32.totalorder %s211, %s213
      %p217 = scmp.eq.s32.totalorder %s28, 0
      %p218 = por %p216, %p217
      %p219 = scmp.ne.s32.totalorder %s211, %s213
      %p220 = scmp.eq.s32.totalorder %s33, 1
      %p221 = por %p219, %p220
      %p222 = scmp.ne.s32.totalorder %s213, %s214
      %p223 = scmp.eq.s32.totalorder %s33, 0
      %p224 = por %p222, %p223
      %p225 = scmp.ne.s32.totalorder %s213, %s214
      %p226 = scmp.eq.s32.totalorder %s34, 1
      %p227 = por %p225, %p226
      %p229 = scmp.ne.s32.totalorder %s214, %s228
      %p230 = scmp.eq.s32.totalorder %s34, 0
      %p231 = por %p229, %p230
      %s233 = sadd.s32 %s232, 1
      %p236 = scmp.eq.s32.totalorder %s28, 1
      %p237 = scmp.ne.s32.totalorder %s232, %s234
      %p238 = scmp.eq.s32.totalorder %s28, 0
      %p239 = por %p237, %p238
      %p240 = scmp.ne.s32.totalorder %s232, %s234
      %p241 = scmp.eq.s32.totalorder %s33, 1
      %p242 = por %p240, %p241
      %p243 = scmp.ne.s32.totalorder %s234, %s235
      %p244 = scmp.eq.s32.totalorder %s33, 0
      %p245 = por %p243, %p244
      %p246 = scmp.ne.s32.totalorder %s234, %s235
      %p247 = scmp.eq.s32.totalorder %s34, 1
      %p248 = por %p246, %p247
      %p250 = scmp.ne.s32.totalorder %s235, %s249
      %p251 = scmp.eq.s32.totalorder %s34, 0
      %p252 = por %p250, %p251
      %s254 = sadd.s32 %s253, 1
      %p257 = scmp.eq.s32.totalorder %s28, 1
      %p258 = scmp.ne.s32.totalorder %s253, %s255
      %p259 = scmp.eq.s32.totalorder %s28, 0
      %p260 = por %p258, %p259
      %p261 = scmp.ne.s32.totalorder %s253, %s255
      %p262 = scmp.eq.s32.totalorder %s33, 1
      %p263 = por %p261, %p262
      %p264 = scmp.ne.s32.totalorder %s255, %s256
      %p265 = scmp.eq.s32.totalorder %s33, 0
      %p266 = por %p264, %p265
      %p267 = scmp.ne.s32.totalorder %s255, %s256
      %p268 = scmp.eq.s32.totalorder %s34, 1
      %p269 = por %p267, %p268
      %p271 = scmp.ne.s32.totalorder %s256, %s270
      %p272 = scmp.eq.s32.totalorder %s34, 0
      %p273 = por %p271, %p272
      %s275 = sadd.s32 %s274, 1
      %p278 = scmp.eq.s32.totalorder %s28, 1
      %p279 = scmp.ne.s32.totalorder %s274, %s276
      %p280 = scmp.eq.s32.totalorder %s28, 0
      %p281 = por %p279, %p280
      %p282 = scmp.ne.s32.totalorder %s274, %s276
      %p283 = scmp.eq.s32.totalorder %s33, 1
      %p284 = por %p282, %p283
      %p285 = scmp.ne.s32.totalorder %s276, %s277
      %p286 = scmp.eq.s32.totalorder %s33, 0
      %p287 = por %p285, %p286
      %p288 = scmp.ne.s32.totalorder %s276, %s277
      %p289 = scmp.eq.s32.totalorder %s34, 1
      %p290 = por %p288, %p289
      %p292 = scmp.ne.s32.totalorder %s277, %s291
      %p293 = scmp.eq.s32.totalorder %s34, 0
      %p294 = por %p292, %p293
      %s296 = sadd.s32 %s295, 1
      %p299 = scmp.eq.s32.totalorder %s28, 1
      %p300 = scmp.ne.s32.totalorder %s295, %s297
      %p301 = scmp.eq.s32.totalorder %s28, 0
      %p302 = por %p300, %p301
      %p303 = scmp.ne.s32.totalorder %s295, %s297
      %p304 = scmp.eq.s32.totalorder %s33, 1
      %p305 = por %p303, %p304
      %p306 = scmp.ne.s32.totalorder %s297, %s298
      %p307 = scmp.eq.s32.totalorder %s33, 0
      %p308 = por %p306, %p307
      %p309 = scmp.ne.s32.totalorder %s297, %s298
      %p310 = scmp.eq.s32.totalorder %s34, 1
      %p311 = por %p309, %p310
      %p313 = scmp.ne.s32.totalorder %s298, %s312
      %p314 = scmp.eq.s32.totalorder %s34, 0
      %p315 = por %p313, %p314
      %s317 = sadd.s32 %s316, 1
      %p320 = scmp.eq.s32.totalorder %s28, 1
      %p321 = scmp.ne.s32.totalorder %s316, %s318
      %p322 = scmp.eq.s32.totalorder %s28, 0
      %p323 = por %p321, %p322
      %p324 = scmp.ne.s32.totalorder %s316, %s318
      %p325 = scmp.eq.s32.totalorder %s33, 1
      %p326 = por %p324, %p325
      %p327 = scmp.ne.s32.totalorder %s318, %s319
      %p328 = scmp.eq.s32.totalorder %s33, 0
      %p329 = por %p327, %p328
      %p330 = scmp.ne.s32.totalorder %s318, %s319
      %p331 = scmp.eq.s32.totalorder %s34, 1
      %p332 = por %p330, %p331
      %p334 = scmp.ne.s32.totalorder %s319, %s333
      %p335 = scmp.eq.s32.totalorder %s34, 0
      %p336 = por %p334, %p335
      %s338 = sadd.s32 %s337, 1
      %p341 = scmp.eq.s32.totalorder %s28, 1
      %p342 = scmp.ne.s32.totalorder %s337, %s339
      %p343 = scmp.eq.s32.totalorder %s28, 0
      %p344 = por %p342, %p343
      %p345 = scmp.ne.s32.totalorder %s337, %s339
      %p346 = scmp.eq.s32.totalorder %s33, 1
      %p347 = por %p345, %p346
      %p348 = scmp.ne.s32.totalorder %s339, %s340
      %p349 = scmp.eq.s32.totalorder %s33, 0
      %p350 = por %p348, %p349
      %p351 = scmp.ne.s32.totalorder %s339, %s340
      %p352 = scmp.eq.s32.totalorder %s34, 1
      %p353 = por %p351, %p352
      %p355 = scmp.ne.s32.totalorder %s340, %s354
      %p356 = scmp.eq.s32.totalorder %s34, 0
      %p357 = por %p355, %p356
      %s358 = ssub.s32 %s35, %s47
      %s359 = ssub.s32 %s36, %s43
      %s360 = sor.u32 %s358, %s359
      %p361 = scmp.eq.s32.totalorder %s360, 0
      %s363 = sadd.s32 %s362, 1
      %s364 = scalar_select %p361, %s362, %s363
      %p367 = pneg %p361
      %p368 = scmp.eq.s32.totalorder %s28, 1
      %p369 = por %p367, %p368
      %p370 = scmp.ne.s32.totalorder %s362, %s365
      %p371 = scmp.eq.s32.totalorder %s28, 0
      %p372 = por %p370, %p371
      %p373 = scmp.ne.s32.totalorder %s362, %s365
      %p374 = scmp.eq.s32.totalorder %s33, 1
      %p375 = por %p373, %p374
      %p376 = scmp.ne.s32.totalorder %s365, %s366
      %p377 = scmp.eq.s32.totalorder %s33, 0
      %p378 = por %p376, %p377
      %p379 = scmp.ne.s32.totalorder %s365, %s366
      %p380 = scmp.eq.s32.totalorder %s34, 1
      %p381 = por %p379, %p380
      %p383 = scmp.ne.s32.totalorder %s366, %s382
      %p384 = scmp.eq.s32.totalorder %s34, 0
      %p385 = por %p383, %p384
      %p386 = scmp.le.s32.totalorder 1, %s28
      %p387 = scmp.lt.s32.totalorder %s28, 3
      %p388 = pnand %p386, %p387
      %p389 = pneg %p388
      // Predicated region
      $region9: #{tpu_custom_call.1} parent=5 // pred_check
        _
      $region10: #{tpu_custom_call.1} parent=5 // pred_check_branch
        %391 = sbr.rel (%p388) target = $region12
      $region11: #{tpu_custom_call.1} parent=5 // pred_region
        %s392 = ssub.s32 %s28, 1
        // Predicated region
        $region13: #{tpu_custom_call.1} parent=11 // pred_check
          %p393 = pneg %p161
        $region14: #{tpu_custom_call.1} parent=11 // pred_check_branch
          %395 = sbr.rel (%p393) target = $region16
        $region15: #{tpu_custom_call.1} parent=11 // pred_region
          _
        $region16: #{tpu_custom_call.1} parent=11 // pred_fallthru
          _
        // Predicated region
        $region17: #{tpu_custom_call.1} parent=11 // pred_check
          %p396 = pneg %p182
        $region18: #{tpu_custom_call.1} parent=11 // pred_check_branch
          %398 = sbr.rel (%p396) target = $region20
        $region19: #{tpu_custom_call.1} parent=11 // pred_region
          _
        $region20: #{tpu_custom_call.1} parent=11 // pred_fallthru
          _
        // Predicated region
        $region21: #{tpu_custom_call.1} parent=11 // pred_check
          %p399 = pneg %p203
        $region22: #{tpu_custom_call.1} parent=11 // pred_check_branch
          %401 = sbr.rel (%p399) target = $region24
        $region23: #{tpu_custom_call.1} parent=11 // pred_region
          _
        $region24: #{tpu_custom_call.1} parent=11 // pred_fallthru
          _
        // Predicated region
        $region25: #{tpu_custom_call.1} parent=11 // pred_check
          %p402 = pneg %p224
        $region26: #{tpu_custom_call.1} parent=11 // pred_check_branch
          %404 = sbr.rel (%p402) target = $region28
        $region27: #{tpu_custom_call.1} parent=11 // pred_region
          _
        $region28: #{tpu_custom_call.1} parent=11 // pred_fallthru
          _
        // Predicated region
        $region29: #{tpu_custom_call.1} parent=11 // pred_check
          %p405 = pneg %p245
        $region30: #{tpu_custom_call.1} parent=11 // pred_check_branch
          %407 = sbr.rel (%p405) target = $region32
        $region31: #{tpu_custom_call.1} parent=11 // pred_region
          _
        $region32: #{tpu_custom_call.1} parent=11 // pred_fallthru
          _
        // Predicated region
        $region33: #{tpu_custom_call.1} parent=11 // pred_check
          %p408 = pneg %p266
        $region34: #{tpu_custom_call.1} parent=11 // pred_check_branch
          %410 = sbr.rel (%p408) target = $region36
        $region35: #{tpu_custom_call.1} parent=11 // pred_region
          _
        $region36: #{tpu_custom_call.1} parent=11 // pred_fallthru
          _
        // Predicated region
        $region37: #{tpu_custom_call.1} parent=11 // pred_check
          %p411 = pneg %p287
        $region38: #{tpu_custom_call.1} parent=11 // pred_check_branch
          %413 = sbr.rel (%p411) target = $region40
        $region39: #{tpu_custom_call.1} parent=11 // pred_region
          _
        $region40: #{tpu_custom_call.1} parent=11 // pred_fallthru
          _
        // Predicated region
        $region41: #{tpu_custom_call.1} parent=11 // pred_check
          %p414 = pneg %p308
        $region42: #{tpu_custom_call.1} parent=11 // pred_check_branch
          %416 = sbr.rel (%p414) target = $region44
        $region43: #{tpu_custom_call.1} parent=11 // pred_region
          _
        $region44: #{tpu_custom_call.1} parent=11 // pred_fallthru
          _
        // Predicated region
        $region45: #{tpu_custom_call.1} parent=11 // pred_check
          %p417 = pneg %p329
        $region46: #{tpu_custom_call.1} parent=11 // pred_check_branch
          %419 = sbr.rel (%p417) target = $region48
        $region47: #{tpu_custom_call.1} parent=11 // pred_region
          _
        $region48: #{tpu_custom_call.1} parent=11 // pred_fallthru
          _
        // Predicated region
        $region49: #{tpu_custom_call.1} parent=11 // pred_check
          %p420 = pneg %p350
        $region50: #{tpu_custom_call.1} parent=11 // pred_check_branch
          %422 = sbr.rel (%p420) target = $region52
        $region51: #{tpu_custom_call.1} parent=11 // pred_region
          _
        $region52: #{tpu_custom_call.1} parent=11 // pred_fallthru
          _
      $region12: #{tpu_custom_call.1} parent=5 // pred_fallthru
        _
      %p423 = scmp.lt.s32.totalorder %s28, 2
      // Predicated region
      $region53: #{tpu_custom_call.1} parent=5 // pred_check
        %p424 = pneg %p423
      $region54: #{tpu_custom_call.1} parent=5 // pred_check_branch
        %426 = sbr.rel (%p424) target = $region56
      $region55: #{tpu_custom_call.1} parent=5 // pred_region
        // Predicated region
        $region57: #{tpu_custom_call.1} parent=55 // pred_check
          %p427 = pneg %p70
        $region58: #{tpu_custom_call.1} parent=55 // pred_check_branch
          %429 = sbr.rel (%p427) target = $region60
        $region59: #{tpu_custom_call.1} parent=55 // pred_region
          %s430 = smul.u32 %s36, 16
          %s431 = ssub.s32 %s430, 1
          %p432 = scmp.gt.s32.totalorder %s431, 0
          %s433 = scalar_select %p432, %s431, 0
          %p434 = scmp.lt.s32.totalorder %s35, 1
          %s435 = scalar_select %p434, %s35, 1
          %p436 = scmp.lt.s32.totalorder %s433, 15
          %s437 = scalar_select %p436, %s433, 15
          %s438 = smul.addr %s437, 2
          %s439 = smul.addr %s435, 32
          %s440 = sadd.s32 %s438, %s439
          %s441 = smul.addr %s440, 8
          %s442 = scalar_lea.vmem %s0, %s441
          %s443 = smul.u32 %s36, 16
          %s444 = ssub.s32 %s443, 1
          %p445 = scmp.gt.s32.totalorder %s444, 0
          %s446 = scalar_select %p445, %s444, 0
        $region60: #{tpu_custom_call.1} parent=55 // pred_fallthru
          _
        // Predicated region
        $region61: #{tpu_custom_call.1} parent=55 // pred_check
          %p447 = pneg %p98
        $region62: #{tpu_custom_call.1} parent=55 // pred_check_branch
          %449 = sbr.rel (%p447) target = $region64
        $region63: #{tpu_custom_call.1} parent=55 // pred_region
          %s450 = sand.u32 %s88, 1
          %s451 = scalar_lea.sflag [#allocation4], %s450
          %s452 = sand.u32 %s88, 1
          %s453 = smul.addr %s452, 256
          %s454 = scalar_lea.vmem [#allocation3], %s453
          %s455 = smul.u32 16, %s36
          %s457 = ssub.s32 4096, 4096
          %458 = vsyncadd %s451, %s457
          %s459 = smul.addr %s455, 2
          %s460 = smul.addr %s35, 32
          %s461 = sadd.s32 %s459, %s460
          %s462 = smul.addr %s461, 128
          %s463 = scalar_lea.hbm %s1, %s462
          %s464 = sshll.u32 %s454, 4
          %s465 = int_to_ptr.vmem [resolvable:$true] %s464
          %470 = dma.hbm_to_vmem [thread:$0]  %s463, 4096, %s465, %s451, 128, 128, 8
        $region64: #{tpu_custom_call.1} parent=55 // pred_fallthru
          _
        // Predicated region
        $region65: #{tpu_custom_call.1} parent=55 // pred_check
          %p471 = pneg %p134
        $region66: #{tpu_custom_call.1} parent=55 // pred_check_branch
          %473 = sbr.rel (%p471) target = $region68
        $region67: #{tpu_custom_call.1} parent=55 // pred_region
          %s474 = sand.u32 %s124, 1
          %s475 = scalar_lea.sflag [#allocation7], %s474
          %s476 = sand.u32 %s124, 1
          %s477 = smul.addr %s476, 16
          %s478 = scalar_lea.vmem [#allocation6], %s477
          %s479 = sadd.s32 %s36, 1
          %s480 = smul.u32 %s479, 16
          %p481 = scmp.lt.s32.totalorder %s480, 15
          %s482 = scalar_select %p481, %s480, 15
          %s484 = ssub.s32 256, 256
          %485 = vsyncadd %s475, %s484
          %s486 = smul.addr %s482, 2
          %s487 = smul.addr %s35, 32
          %s488 = sadd.s32 %s486, %s487
          %s489 = smul.addr %s488, 128
          %s490 = scalar_lea.hbm %s2, %s489
          %s491 = sshll.u32 %s478, 4
          %s492 = int_to_ptr.vmem [resolvable:$true] %s491
          %497 = dma.hbm_to_vmem [thread:$0]  %s490, 256, %s492, %s475, 128, 128, 8
        $region68: #{tpu_custom_call.1} parent=55 // pred_fallthru
          _
      $region56: #{tpu_custom_call.1} parent=5 // pred_fallthru
        _
      %p498 = scmp.le.s32.totalorder 1, %s28
      %p499 = scmp.lt.s32.totalorder %s28, 3
      %p500 = pnand %p498, %p499
      %p501 = pneg %p500
      // Predicated region
      $region69: #{tpu_custom_call.1} parent=5 // pred_check
        _
      $region70: #{tpu_custom_call.1} parent=5 // pred_check_branch
        %503 = sbr.rel (%p500) target = $region72
      $region71: #{tpu_custom_call.1} parent=5 // pred_region
        %s504 = ssub.s32 %s28, 1
        %s505 = sand.u32 %s91, 1
        %s506 = scalar_lea.sflag [#allocation4], %s505
        %s507 = sand.u32 %s91, 1
        %s508 = smul.addr %s507, 256
        %s509 = scalar_lea.vmem [#allocation3], %s508
        // Predicated region
        $region73: #{tpu_custom_call.1} parent=71 // pred_check
          %p510 = pneg %p104
        $region74: #{tpu_custom_call.1} parent=71 // pred_check_branch
          %512 = sbr.rel (%p510) target = $region76
        $region75: #{tpu_custom_call.1} parent=71 // pred_region
          %513 = dma.done %s506, 4096
        $region76: #{tpu_custom_call.1} parent=71 // pred_fallthru
          _
        %s514 = sand.u32 %s127, 1
        %s515 = scalar_lea.sflag [#allocation7], %s514
        %s516 = sand.u32 %s127, 1
        %s517 = smul.addr %s516, 16
        %s518 = scalar_lea.vmem [#allocation6], %s517
        // Predicated region
        $region77: #{tpu_custom_call.1} parent=71 // pred_check
          %p519 = pneg %p140
        $region78: #{tpu_custom_call.1} parent=71 // pred_check_branch
          %521 = sbr.rel (%p519) target = $region80
        $region79: #{tpu_custom_call.1} parent=71 // pred_region
          %522 = dma.done %s515, 256
        $region80: #{tpu_custom_call.1} parent=71 // pred_fallthru
          _
        %s523 = smul.u32 %s38, 16
        %s524 = ssub.s32 %s523, 1
        %p525 = scmp.gt.s32.totalorder %s524, 0
        %s526 = scalar_select %p525, %s524, 0
        %p527 = scmp.lt.s32.totalorder %s37, 1
        %s528 = scalar_select %p527, %s37, 1
        %p529 = scmp.lt.s32.totalorder %s526, 15
        %s530 = scalar_select %p529, %s526, 15
        %s531 = smul.addr %s530, 2
        %s532 = smul.addr %s528, 32
        %s533 = sadd.s32 %s531, %s532
        %s534 = smul.addr %s533, 8
        %s535 = scalar_lea.vmem %s0, %s534
        %p536 = pneg %p76
        %p537 = pneg %p73
        %s538 = sand.u32 %s91, 1
        %s539 = scalar_lea.sflag [#allocation4], %s538
        %s540 = sand.u32 %s91, 1
        %s541 = smul.addr %s540, 256
        %s542 = scalar_lea.vmem [#allocation3], %s541
        %p543 = pneg %p104
        %p544 = pneg %p101
        %s545 = sand.u32 %s127, 1
        %s546 = scalar_lea.sflag [#allocation7], %s545
        %s547 = sand.u32 %s127, 1
        %s548 = smul.addr %s547, 16
        %s549 = scalar_lea.vmem [#allocation6], %s548
        %p550 = pneg %p140
        %p551 = pneg %p137
        %p552 = pneg %p161
        %p553 = pneg %p158
        %p554 = pneg %p182
        %p555 = pneg %p179
        %p556 = pneg %p203
        %p557 = pneg %p200
        %p558 = pneg %p224
        %p559 = pneg %p221
        %p560 = pneg %p245
        %p561 = pneg %p242
        %p562 = pneg %p266
        %p563 = pneg %p263
        %p564 = pneg %p287
        %p565 = pneg %p284
        %p566 = pneg %p308
        %p567 = pneg %p305
        %p568 = pneg %p329
        %p569 = pneg %p326
        %p570 = pneg %p350
        %p571 = pneg %p347
        %p572 = pneg %p378
        %p573 = pneg %p375
        %s574 = sand.u32 %s365, 1
        %s575 = scalar_lea.sflag [#allocation5], %s574
        %s576 = sand.u32 %s365, 1
        %s577 = smul.addr %s576, 256
        %s578 = scalar_lea.vmem [#allocation8], %s577
        %s579 = smul.u32 %s38, 16
        %s580 = ssub.s32 %s579, 1
        %p581 = scmp.gt.s32.totalorder %s580, 0
        %s582 = scalar_select %p581, %s580, 0
        %p583 = scmp.lt.s32.totalorder %s37, 1
        %s584 = scalar_select %p583, %s37, 1
        %p585 = scmp.lt.s32.totalorder %s582, 15
        %s586 = scalar_select %p585, %s582, 15
        %s587 = smul.addr %s586, 2
        %s588 = smul.addr %s584, 32
        %s589 = sadd.s32 %s587, %s588
        %s590 = smul.addr %s589, 8
        %s591 = scalar_lea.vmem %s0, %s590
        %s592 = smul.u32 %s38, 16
        %s593 = ssub.s32 %s592, 1
        %p594 = scmp.gt.s32.totalorder %s593, 0
        %s595 = scalar_select %p594, %s593, 0
        %s596 = smul.u32 16, %s38
        %s597 = sadd.s32 %s38, 1
        %s598 = smul.u32 %s597, 16
        %p599 = scmp.lt.s32.totalorder %s598, 15
        %s600 = scalar_select %p599, %s598, 15
        %s601 = smul.u32 16, %s38
        %v603 = vld [vmem:[%s3] sm:$0x1]
        %v604 = vld [vmem:[%s4] sm:$0x1]
        %v605 = vld [vmem:[%s509] sm:$0xff]
        %v606 = vld [vmem:[%s509 + $0x8] sm:$0xff]
        %v607 = vld [vmem:[%s509 + $0x10] sm:$0xff]
        %v608 = vld [vmem:[%s509 + $0x18] sm:$0xff]
        %v609 = vld [vmem:[%s509 + $0x20] sm:$0xff]
        %v610 = vld [vmem:[%s509 + $0x28] sm:$0xff]
        %v611 = vld [vmem:[%s509 + $0x30] sm:$0xff]
        %v612 = vld [vmem:[%s509 + $0x38] sm:$0xff]
        %v613 = vld [vmem:[%s509 + $0x40] sm:$0xff]
        %v614 = vld [vmem:[%s509 + $0x48] sm:$0xff]
        %v615 = vld [vmem:[%s509 + $0x50] sm:$0xff]
        %v616 = vld [vmem:[%s509 + $0x58] sm:$0xff]
        %v617 = vld [vmem:[%s509 + $0x60] sm:$0xff]
        %v618 = vld [vmem:[%s509 + $0x68] sm:$0xff]
        %v619 = vld [vmem:[%s509 + $0x70] sm:$0xff]
        %v620 = vld [vmem:[%s509 + $0x78] sm:$0xff]
        %v621 = vld [vmem:[%s509 + $0x80] sm:$0xff]
        %v622 = vld [vmem:[%s509 + $0x88] sm:$0xff]
        %v623 = vld [vmem:[%s509 + $0x90] sm:$0xff]
        %v624 = vld [vmem:[%s509 + $0x98] sm:$0xff]
        %v625 = vld [vmem:[%s509 + $0xa0] sm:$0xff]
        %v626 = vld [vmem:[%s509 + $0xa8] sm:$0xff]
        %v627 = vld [vmem:[%s509 + $0xb0] sm:$0xff]
        %v628 = vld [vmem:[%s509 + $0xb8] sm:$0xff]
        %v629 = vld [vmem:[%s509 + $0xc0] sm:$0xff]
        %v630 = vld [vmem:[%s509 + $0xc8] sm:$0xff]
        %v631 = vld [vmem:[%s509 + $0xd0] sm:$0xff]
        %v632 = vld [vmem:[%s509 + $0xd8] sm:$0xff]
        %v633 = vld [vmem:[%s509 + $0xe0] sm:$0xff]
        %v634 = vld [vmem:[%s509 + $0xe8] sm:$0xff]
        %v635 = vld [vmem:[%s509 + $0xf0] sm:$0xff]
        %v636 = vld [vmem:[%s509 + $0xf8] sm:$0xff]
        %vm637 = vcmask 523264
        %v638 = vsel %vm637, %v605, 0.0
        %639 = vadd.xlane.f32.xlu0 %v638
        %v640 = vpop.xlane.xlu0 %639
        %v641 = vsel %vm637, %v606, 0.0
        %642 = vadd.xlane.f32.xlu0 %v641
        %v643 = vpop.xlane.xlu0 %642
        %v644 = vsel %vm637, %v607, 0.0
        %645 = vadd.xlane.f32.xlu0 %v644
        %v646 = vpop.xlane.xlu0 %645
        %v647 = vsel %vm637, %v608, 0.0
        %648 = vadd.xlane.f32.xlu0 %v647
        %v649 = vpop.xlane.xlu0 %648
        %v650 = vsel %vm637, %v609, 0.0
        %651 = vadd.xlane.f32.xlu0 %v650
        %v652 = vpop.xlane.xlu0 %651
        %v653 = vsel %vm637, %v610, 0.0
        %654 = vadd.xlane.f32.xlu0 %v653
        %v655 = vpop.xlane.xlu0 %654
        %v656 = vsel %vm637, %v611, 0.0
        %657 = vadd.xlane.f32.xlu0 %v656
        %v658 = vpop.xlane.xlu0 %657
        %v659 = vsel %vm637, %v612, 0.0
        %660 = vadd.xlane.f32.xlu0 %v659
        %v661 = vpop.xlane.xlu0 %660
        %v662 = vsel %vm637, %v613, 0.0
        %663 = vadd.xlane.f32.xlu0 %v662
        %v664 = vpop.xlane.xlu0 %663
        %v665 = vsel %vm637, %v614, 0.0
        %666 = vadd.xlane.f32.xlu0 %v665
        %v667 = vpop.xlane.xlu0 %666
        %v668 = vsel %vm637, %v615, 0.0
        %669 = vadd.xlane.f32.xlu0 %v668
        %v670 = vpop.xlane.xlu0 %669
        %v671 = vsel %vm637, %v616, 0.0
        %672 = vadd.xlane.f32.xlu0 %v671
        %v673 = vpop.xlane.xlu0 %672
        %v674 = vsel %vm637, %v617, 0.0
        %675 = vadd.xlane.f32.xlu0 %v674
        %v676 = vpop.xlane.xlu0 %675
        %v677 = vsel %vm637, %v618, 0.0
        %678 = vadd.xlane.f32.xlu0 %v677
        %v679 = vpop.xlane.xlu0 %678
        %v680 = vsel %vm637, %v619, 0.0
        %681 = vadd.xlane.f32.xlu0 %v680
        %v682 = vpop.xlane.xlu0 %681
        %v683 = vsel %vm637, %v620, 0.0
        %684 = vadd.xlane.f32.xlu0 %v683
        %v685 = vpop.xlane.xlu0 %684
        %v686 = vsel %vm637, %v621, 0.0
        %687 = vadd.xlane.f32.xlu0 %v686
        %v688 = vpop.xlane.xlu0 %687
        %v689 = vsel %vm637, %v622, 0.0
        %690 = vadd.xlane.f32.xlu0 %v689
        %v691 = vpop.xlane.xlu0 %690
        %v692 = vsel %vm637, %v623, 0.0
        %693 = vadd.xlane.f32.xlu0 %v692
        %v694 = vpop.xlane.xlu0 %693
        %v695 = vsel %vm637, %v624, 0.0
        %696 = vadd.xlane.f32.xlu0 %v695
        %v697 = vpop.xlane.xlu0 %696
        %v698 = vsel %vm637, %v625, 0.0
        %699 = vadd.xlane.f32.xlu0 %v698
        %v700 = vpop.xlane.xlu0 %699
        %v701 = vsel %vm637, %v626, 0.0
        %702 = vadd.xlane.f32.xlu0 %v701
        %v703 = vpop.xlane.xlu0 %702
        %v704 = vsel %vm637, %v627, 0.0
        %705 = vadd.xlane.f32.xlu0 %v704
        %v706 = vpop.xlane.xlu0 %705
        %v707 = vsel %vm637, %v628, 0.0
        %708 = vadd.xlane.f32.xlu0 %v707
        %v709 = vpop.xlane.xlu0 %708
        %v710 = vsel %vm637, %v629, 0.0
        %711 = vadd.xlane.f32.xlu0 %v710
        %v712 = vpop.xlane.xlu0 %711
        %v713 = vsel %vm637, %v630, 0.0
        %714 = vadd.xlane.f32.xlu0 %v713
        %v715 = vpop.xlane.xlu0 %714
        %v716 = vsel %vm637, %v631, 0.0
        %717 = vadd.xlane.f32.xlu0 %v716
        %v718 = vpop.xlane.xlu0 %717
        %v719 = vsel %vm637, %v632, 0.0
        %720 = vadd.xlane.f32.xlu0 %v719
        %v721 = vpop.xlane.xlu0 %720
        %v722 = vsel %vm637, %v633, 0.0
        %723 = vadd.xlane.f32.xlu0 %v722
        %v724 = vpop.xlane.xlu0 %723
        %v725 = vsel %vm637, %v634, 0.0
        %726 = vadd.xlane.f32.xlu0 %v725
        %v727 = vpop.xlane.xlu0 %726
        %v728 = vsel %vm637, %v635, 0.0
        %729 = vadd.xlane.f32.xlu0 %v728
        %v730 = vpop.xlane.xlu0 %729
        %v731 = vsel %vm637, %v636, 0.0
        %732 = vadd.xlane.f32.xlu0 %v731
        %v733 = vpop.xlane.xlu0 %732
        %v734 = vrcp.pop 64.0
        %v735 = vmul.f32 %v640, %v734
        %v736 = vmul.f32 %v643, %v734
        %v737 = vmul.f32 %v646, %v734
        %v738 = vmul.f32 %v649, %v734
        %v739 = vmul.f32 %v652, %v734
        %v740 = vmul.f32 %v655, %v734
        %v741 = vmul.f32 %v658, %v734
        %v742 = vmul.f32 %v661, %v734
        %v743 = vmul.f32 %v664, %v734
        %v744 = vmul.f32 %v667, %v734
        %v745 = vmul.f32 %v670, %v734
        %v746 = vmul.f32 %v673, %v734
        %v747 = vmul.f32 %v676, %v734
        %v748 = vmul.f32 %v679, %v734
        %v749 = vmul.f32 %v682, %v734
        %v750 = vmul.f32 %v685, %v734
        %v751 = vmul.f32 %v688, %v734
        %v752 = vmul.f32 %v691, %v734
        %v753 = vmul.f32 %v694, %v734
        %v754 = vmul.f32 %v697, %v734
        %v755 = vmul.f32 %v700, %v734
        %v756 = vmul.f32 %v703, %v734
        %v757 = vmul.f32 %v706, %v734
        %v758 = vmul.f32 %v709, %v734
        %v759 = vmul.f32 %v712, %v734
        %v760 = vmul.f32 %v715, %v734
        %v761 = vmul.f32 %v718, %v734
        %v762 = vmul.f32 %v721, %v734
        %v763 = vmul.f32 %v724, %v734
        %v764 = vmul.f32 %v727, %v734
        %v765 = vmul.f32 %v730, %v734
        %v766 = vmul.f32 %v733, %v734
        %v767 = vsub.f32 %v605, %v735
        %v768 = vsub.f32 %v606, %v736
        %v769 = vsub.f32 %v607, %v737
        %v770 = vsub.f32 %v608, %v738
        %v771 = vsub.f32 %v609, %v739
        %v772 = vsub.f32 %v610, %v740
        %v773 = vsub.f32 %v611, %v741
        %v774 = vsub.f32 %v612, %v742
        %v775 = vsub.f32 %v613, %v743
        %v776 = vsub.f32 %v614, %v744
        %v777 = vsub.f32 %v615, %v745
        %v778 = vsub.f32 %v616, %v746
        %v779 = vsub.f32 %v617, %v747
        %v780 = vsub.f32 %v618, %v748
        %v781 = vsub.f32 %v619, %v749
        %v782 = vsub.f32 %v620, %v750
        %v783 = vsub.f32 %v621, %v751
        %v784 = vsub.f32 %v622, %v752
        %v785 = vsub.f32 %v623, %v753
        %v786 = vsub.f32 %v624, %v754
        %v787 = vsub.f32 %v625, %v755
        %v788 = vsub.f32 %v626, %v756
        %v789 = vsub.f32 %v627, %v757
        %v790 = vsub.f32 %v628, %v758
        %v791 = vsub.f32 %v629, %v759
        %v792 = vsub.f32 %v630, %v760
        %v793 = vsub.f32 %v631, %v761
        %v794 = vsub.f32 %v632, %v762
        %v795 = vsub.f32 %v633, %v763
        %v796 = vsub.f32 %v634, %v764
        %v797 = vsub.f32 %v635, %v765
        %v798 = vsub.f32 %v636, %v766
        %v799 = vmul.f32 %v767, %v767
        %v800 = vmul.f32 %v768, %v768
        %v801 = vmul.f32 %v769, %v769
        %v802 = vmul.f32 %v770, %v770
        %v803 = vmul.f32 %v771, %v771
        %v804 = vmul.f32 %v772, %v772
        %v805 = vmul.f32 %v773, %v773
        %v806 = vmul.f32 %v774, %v774
        %v807 = vmul.f32 %v775, %v775
        %v808 = vmul.f32 %v776, %v776
        %v809 = vmul.f32 %v777, %v777
        %v810 = vmul.f32 %v778, %v778
        %v811 = vmul.f32 %v779, %v779
        %v812 = vmul.f32 %v780, %v780
        %v813 = vmul.f32 %v781, %v781
        %v814 = vmul.f32 %v782, %v782
        %v815 = vmul.f32 %v783, %v783
        %v816 = vmul.f32 %v784, %v784
        %v817 = vmul.f32 %v785, %v785
        %v818 = vmul.f32 %v786, %v786
        %v819 = vmul.f32 %v787, %v787
        %v820 = vmul.f32 %v788, %v788
        %v821 = vmul.f32 %v789, %v789
        %v822 = vmul.f32 %v790, %v790
        %v823 = vmul.f32 %v791, %v791
        %v824 = vmul.f32 %v792, %v792
        %v825 = vmul.f32 %v793, %v793
        %v826 = vmul.f32 %v794, %v794
        %v827 = vmul.f32 %v795, %v795
        %v828 = vmul.f32 %v796, %v796
        %v829 = vmul.f32 %v797, %v797
        %v830 = vmul.f32 %v798, %v798
        %v831 = vsel %vm637, %v799, 0.0
        %832 = vadd.xlane.f32.xlu0 %v831
        %v833 = vpop.xlane.xlu0 %832
        %v834 = vsel %vm637, %v800, 0.0
        %835 = vadd.xlane.f32.xlu0 %v834
        %v836 = vpop.xlane.xlu0 %835
        %v837 = vsel %vm637, %v801, 0.0
        %838 = vadd.xlane.f32.xlu0 %v837
        %v839 = vpop.xlane.xlu0 %838
        %v840 = vsel %vm637, %v802, 0.0
        %841 = vadd.xlane.f32.xlu0 %v840
        %v842 = vpop.xlane.xlu0 %841
        %v843 = vsel %vm637, %v803, 0.0
        %844 = vadd.xlane.f32.xlu0 %v843
        %v845 = vpop.xlane.xlu0 %844
        %v846 = vsel %vm637, %v804, 0.0
        %847 = vadd.xlane.f32.xlu0 %v846
        %v848 = vpop.xlane.xlu0 %847
        %v849 = vsel %vm637, %v805, 0.0
        %850 = vadd.xlane.f32.xlu0 %v849
        %v851 = vpop.xlane.xlu0 %850
        %v852 = vsel %vm637, %v806, 0.0
        %853 = vadd.xlane.f32.xlu0 %v852
        %v854 = vpop.xlane.xlu0 %853
        %v855 = vsel %vm637, %v807, 0.0
        %856 = vadd.xlane.f32.xlu0 %v855
        %v857 = vpop.xlane.xlu0 %856
        %v858 = vsel %vm637, %v808, 0.0
        %859 = vadd.xlane.f32.xlu0 %v858
        %v860 = vpop.xlane.xlu0 %859
        %v861 = vsel %vm637, %v809, 0.0
        %862 = vadd.xlane.f32.xlu0 %v861
        %v863 = vpop.xlane.xlu0 %862
        %v864 = vsel %vm637, %v810, 0.0
        %865 = vadd.xlane.f32.xlu0 %v864
        %v866 = vpop.xlane.xlu0 %865
        %v867 = vsel %vm637, %v811, 0.0
        %868 = vadd.xlane.f32.xlu0 %v867
        %v869 = vpop.xlane.xlu0 %868
        %v870 = vsel %vm637, %v812, 0.0
        %871 = vadd.xlane.f32.xlu0 %v870
        %v872 = vpop.xlane.xlu0 %871
        %v873 = vsel %vm637, %v813, 0.0
        %874 = vadd.xlane.f32.xlu0 %v873
        %v875 = vpop.xlane.xlu0 %874
        %v876 = vsel %vm637, %v814, 0.0
        %877 = vadd.xlane.f32.xlu0 %v876
        %v878 = vpop.xlane.xlu0 %877
        %v879 = vsel %vm637, %v815, 0.0
        %880 = vadd.xlane.f32.xlu0 %v879
        %v881 = vpop.xlane.xlu0 %880
        %v882 = vsel %vm637, %v816, 0.0
        %883 = vadd.xlane.f32.xlu0 %v882
        %v884 = vpop.xlane.xlu0 %883
        %v885 = vsel %vm637, %v817, 0.0
        %886 = vadd.xlane.f32.xlu0 %v885
        %v887 = vpop.xlane.xlu0 %886
        %v888 = vsel %vm637, %v818, 0.0
        %889 = vadd.xlane.f32.xlu0 %v888
        %v890 = vpop.xlane.xlu0 %889
        %v891 = vsel %vm637, %v819, 0.0
        %892 = vadd.xlane.f32.xlu0 %v891
        %v893 = vpop.xlane.xlu0 %892
        %v894 = vsel %vm637, %v820, 0.0
        %895 = vadd.xlane.f32.xlu0 %v894
        %v896 = vpop.xlane.xlu0 %895
        %v897 = vsel %vm637, %v821, 0.0
        %898 = vadd.xlane.f32.xlu0 %v897
        %v899 = vpop.xlane.xlu0 %898
        %v900 = vsel %vm637, %v822, 0.0
        %901 = vadd.xlane.f32.xlu0 %v900
        %v902 = vpop.xlane.xlu0 %901
        %v903 = vsel %vm637, %v823, 0.0
        %904 = vadd.xlane.f32.xlu0 %v903
        %v905 = vpop.xlane.xlu0 %904
        %v906 = vsel %vm637, %v824, 0.0
        %907 = vadd.xlane.f32.xlu0 %v906
        %v908 = vpop.xlane.xlu0 %907
        %v909 = vsel %vm637, %v825, 0.0
        %910 = vadd.xlane.f32.xlu0 %v909
        %v911 = vpop.xlane.xlu0 %910
        %v912 = vsel %vm637, %v826, 0.0
        %913 = vadd.xlane.f32.xlu0 %v912
        %v914 = vpop.xlane.xlu0 %913
        %v915 = vsel %vm637, %v827, 0.0
        %916 = vadd.xlane.f32.xlu0 %v915
        %v917 = vpop.xlane.xlu0 %916
        %v918 = vsel %vm637, %v828, 0.0
        %919 = vadd.xlane.f32.xlu0 %v918
        %v920 = vpop.xlane.xlu0 %919
        %v921 = vsel %vm637, %v829, 0.0
        %922 = vadd.xlane.f32.xlu0 %v921
        %v923 = vpop.xlane.xlu0 %922
        %v924 = vsel %vm637, %v830, 0.0
        %925 = vadd.xlane.f32.xlu0 %v924
        %v926 = vpop.xlane.xlu0 %925
        %v927 = vmul.f32 %v833, %v734
        %v928 = vmul.f32 %v836, %v734
        %v929 = vmul.f32 %v839, %v734
        %v930 = vmul.f32 %v842, %v734
        %v931 = vmul.f32 %v845, %v734
        %v932 = vmul.f32 %v848, %v734
        %v933 = vmul.f32 %v851, %v734
        %v934 = vmul.f32 %v854, %v734
        %v935 = vmul.f32 %v857, %v734
        %v936 = vmul.f32 %v860, %v734
        %v937 = vmul.f32 %v863, %v734
        %v938 = vmul.f32 %v866, %v734
        %v939 = vmul.f32 %v869, %v734
        %v940 = vmul.f32 %v872, %v734
        %v941 = vmul.f32 %v875, %v734
        %v942 = vmul.f32 %v878, %v734
        %v943 = vmul.f32 %v881, %v734
        %v944 = vmul.f32 %v884, %v734
        %v945 = vmul.f32 %v887, %v734
        %v946 = vmul.f32 %v890, %v734
        %v947 = vmul.f32 %v893, %v734
        %v948 = vmul.f32 %v896, %v734
        %v949 = vmul.f32 %v899, %v734
        %v950 = vmul.f32 %v902, %v734
        %v951 = vmul.f32 %v905, %v734
        %v952 = vmul.f32 %v908, %v734
        %v953 = vmul.f32 %v911, %v734
        %v954 = vmul.f32 %v914, %v734
        %v955 = vmul.f32 %v917, %v734
        %v956 = vmul.f32 %v920, %v734
        %v957 = vmul.f32 %v923, %v734
        %v958 = vmul.f32 %v926, %v734
        %v959 = vadd.f32 %v927, 1e-06
        %v960 = vadd.f32 %v928, 1e-06
        %v961 = vadd.f32 %v929, 1e-06
        %v962 = vadd.f32 %v930, 1e-06
        %v963 = vadd.f32 %v931, 1e-06
        %v964 = vadd.f32 %v932, 1e-06
        %v965 = vadd.f32 %v933, 1e-06
        %v966 = vadd.f32 %v934, 1e-06
        %v967 = vadd.f32 %v935, 1e-06
        %v968 = vadd.f32 %v936, 1e-06
        %v969 = vadd.f32 %v937, 1e-06
        %v970 = vadd.f32 %v938, 1e-06
        %v971 = vadd.f32 %v939, 1e-06
        %v972 = vadd.f32 %v940, 1e-06
        %v973 = vadd.f32 %v941, 1e-06
        %v974 = vadd.f32 %v942, 1e-06
        %v975 = vadd.f32 %v943, 1e-06
        %v976 = vadd.f32 %v944, 1e-06
        %v977 = vadd.f32 %v945, 1e-06
        %v978 = vadd.f32 %v946, 1e-06
        %v979 = vadd.f32 %v947, 1e-06
        %v980 = vadd.f32 %v948, 1e-06
        %v981 = vadd.f32 %v949, 1e-06
        %v982 = vadd.f32 %v950, 1e-06
        %v983 = vadd.f32 %v951, 1e-06
        %v984 = vadd.f32 %v952, 1e-06
        %v985 = vadd.f32 %v953, 1e-06
        %v986 = vadd.f32 %v954, 1e-06
        %v987 = vadd.f32 %v955, 1e-06
        %v988 = vadd.f32 %v956, 1e-06
        %v989 = vadd.f32 %v957, 1e-06
        %v990 = vadd.f32 %v958, 1e-06
        %v991 = vrsqrt.pop %v959
        %v992 = vrsqrt.pop %v960
        %v993 = vrsqrt.pop %v961
        %v994 = vrsqrt.pop %v962
        %v995 = vrsqrt.pop %v963
        %v996 = vrsqrt.pop %v964
        %v997 = vrsqrt.pop %v965
        %v998 = vrsqrt.pop %v966
        %v999 = vrsqrt.pop %v967
        %v1000 = vrsqrt.pop %v968
        %v1001 = vrsqrt.pop %v969
        %v1002 = vrsqrt.pop %v970
        %v1003 = vrsqrt.pop %v971
        %v1004 = vrsqrt.pop %v972
        %v1005 = vrsqrt.pop %v973
        %v1006 = vrsqrt.pop %v974
        %v1007 = vrsqrt.pop %v975
        %v1008 = vrsqrt.pop %v976
        %v1009 = vrsqrt.pop %v977
        %v1010 = vrsqrt.pop %v978
        %v1011 = vrsqrt.pop %v979
        %v1012 = vrsqrt.pop %v980
        %v1013 = vrsqrt.pop %v981
        %v1014 = vrsqrt.pop %v982
        %v1015 = vrsqrt.pop %v983
        %v1016 = vrsqrt.pop %v984
        %v1017 = vrsqrt.pop %v985
        %v1018 = vrsqrt.pop %v986
        %v1019 = vrsqrt.pop %v987
        %v1020 = vrsqrt.pop %v988
        %v1021 = vrsqrt.pop %v989
        %v1022 = vrsqrt.pop %v990
        %v1023 = vmul.f32 %v767, %v991
        %v1024 = vmul.f32 %v768, %v992
        %v1025 = vmul.f32 %v769, %v993
        %v1026 = vmul.f32 %v770, %v994
        %v1027 = vmul.f32 %v771, %v995
        %v1028 = vmul.f32 %v772, %v996
        %v1029 = vmul.f32 %v773, %v997
        %v1030 = vmul.f32 %v774, %v998
        %v1031 = vmul.f32 %v775, %v999
        %v1032 = vmul.f32 %v776, %v1000
        %v1033 = vmul.f32 %v777, %v1001
        %v1034 = vmul.f32 %v778, %v1002
        %v1035 = vmul.f32 %v779, %v1003
        %v1036 = vmul.f32 %v780, %v1004
        %v1037 = vmul.f32 %v781, %v1005
        %v1038 = vmul.f32 %v782, %v1006
        %v1039 = vmul.f32 %v783, %v1007
        %v1040 = vmul.f32 %v784, %v1008
        %v1041 = vmul.f32 %v785, %v1009
        %v1042 = vmul.f32 %v786, %v1010
        %v1043 = vmul.f32 %v787, %v1011
        %v1044 = vmul.f32 %v788, %v1012
        %v1045 = vmul.f32 %v789, %v1013
        %v1046 = vmul.f32 %v790, %v1014
        %v1047 = vmul.f32 %v791, %v1015
        %v1048 = vmul.f32 %v792, %v1016
        %v1049 = vmul.f32 %v793, %v1017
        %v1050 = vmul.f32 %v794, %v1018
        %v1051 = vmul.f32 %v795, %v1019
        %v1052 = vmul.f32 %v796, %v1020
        %v1053 = vmul.f32 %v797, %v1021
        %v1054 = vmul.f32 %v798, %v1022
        %v1056 = vlaneseq
        %v1057 = vshrl.u32 %v1056, 7
        %v1058 = vsub.s32 0, %v1057
        %v1059 = vrot.slane %v603, %v1058
        %v1061 = vmul.f32 %v1023, %v1059
        %v1062 = vmul.f32 %v1024, %v1059
        %v1063 = vmul.f32 %v1025, %v1059
        %v1064 = vmul.f32 %v1026, %v1059
        %v1065 = vmul.f32 %v1027, %v1059
        %v1066 = vmul.f32 %v1028, %v1059
        %v1067 = vmul.f32 %v1029, %v1059
        %v1068 = vmul.f32 %v1030, %v1059
        %v1069 = vmul.f32 %v1031, %v1059
        %v1070 = vmul.f32 %v1032, %v1059
        %v1071 = vmul.f32 %v1033, %v1059
        %v1072 = vmul.f32 %v1034, %v1059
        %v1073 = vmul.f32 %v1035, %v1059
        %v1074 = vmul.f32 %v1036, %v1059
        %v1075 = vmul.f32 %v1037, %v1059
        %v1076 = vmul.f32 %v1038, %v1059
        %v1077 = vmul.f32 %v1039, %v1059
        %v1078 = vmul.f32 %v1040, %v1059
        %v1079 = vmul.f32 %v1041, %v1059
        %v1080 = vmul.f32 %v1042, %v1059
        %v1081 = vmul.f32 %v1043, %v1059
        %v1082 = vmul.f32 %v1044, %v1059
        %v1083 = vmul.f32 %v1045, %v1059
        %v1084 = vmul.f32 %v1046, %v1059
        %v1085 = vmul.f32 %v1047, %v1059
        %v1086 = vmul.f32 %v1048, %v1059
        %v1087 = vmul.f32 %v1049, %v1059
        %v1088 = vmul.f32 %v1050, %v1059
        %v1089 = vmul.f32 %v1051, %v1059
        %v1090 = vmul.f32 %v1052, %v1059
        %v1091 = vmul.f32 %v1053, %v1059
        %v1092 = vmul.f32 %v1054, %v1059
        %v1094 = vlaneseq
        %v1095 = vshrl.u32 %v1094, 7
        %v1096 = vsub.s32 0, %v1095
        %v1097 = vrot.slane %v604, %v1096
        %v1099 = vadd.f32 %v1061, %v1097
        %v1100 = vadd.f32 %v1062, %v1097
        %v1101 = vadd.f32 %v1063, %v1097
        %v1102 = vadd.f32 %v1064, %v1097
        %v1103 = vadd.f32 %v1065, %v1097
        %v1104 = vadd.f32 %v1066, %v1097
        %v1105 = vadd.f32 %v1067, %v1097
        %v1106 = vadd.f32 %v1068, %v1097
        %v1107 = vadd.f32 %v1069, %v1097
        %v1108 = vadd.f32 %v1070, %v1097
        %v1109 = vadd.f32 %v1071, %v1097
        %v1110 = vadd.f32 %v1072, %v1097
        %v1111 = vadd.f32 %v1073, %v1097
        %v1112 = vadd.f32 %v1074, %v1097
        %v1113 = vadd.f32 %v1075, %v1097
        %v1114 = vadd.f32 %v1076, %v1097
        %v1115 = vadd.f32 %v1077, %v1097
        %v1116 = vadd.f32 %v1078, %v1097
        %v1117 = vadd.f32 %v1079, %v1097
        %v1118 = vadd.f32 %v1080, %v1097
        %v1119 = vadd.f32 %v1081, %v1097
        %v1120 = vadd.f32 %v1082, %v1097
        %v1121 = vadd.f32 %v1083, %v1097
        %v1122 = vadd.f32 %v1084, %v1097
        %v1123 = vadd.f32 %v1085, %v1097
        %v1124 = vadd.f32 %v1086, %v1097
        %v1125 = vadd.f32 %v1087, %v1097
        %v1126 = vadd.f32 %v1088, %v1097
        %v1127 = vadd.f32 %v1089, %v1097
        %v1128 = vadd.f32 %v1090, %v1097
        %v1129 = vadd.f32 %v1091, %v1097
        %v1130 = vadd.f32 %v1092, %v1097
        %v1131 = vpack.c.bf16 %v1100, %v1099
        %v1132 = vpack.c.bf16 %v1102, %v1101
        %v1133 = vpack.c.bf16 %v1104, %v1103
        %v1134 = vpack.c.bf16 %v1106, %v1105
        %v1135 = vpack.c.bf16 %v1108, %v1107
        %v1136 = vpack.c.bf16 %v1110, %v1109
        %v1137 = vpack.c.bf16 %v1112, %v1111
        %v1138 = vpack.c.bf16 %v1114, %v1113
        %v1139 = vpack.c.bf16 %v1116, %v1115
        %v1140 = vpack.c.bf16 %v1118, %v1117
        %v1141 = vpack.c.bf16 %v1120, %v1119
        %v1142 = vpack.c.bf16 %v1122, %v1121
        %v1143 = vpack.c.bf16 %v1124, %v1123
        %v1144 = vpack.c.bf16 %v1126, %v1125
        %v1145 = vpack.c.bf16 %v1128, %v1127
        %v1146 = vpack.c.bf16 %v1130, %v1129
        %s1147 = scalar_lea.vmem [#allocation2], 8
        %1148 = vst.msk [vmem:[%s1147] sm:$0xff] %vm637, %v1131
        %1149 = vst.msk [vmem:[%s1147 + $0x8] sm:$0xff] %vm637, %v1132
        %1150 = vst.msk [vmem:[%s1147 + $0x10] sm:$0xff] %vm637, %v1133
        %1151 = vst.msk [vmem:[%s1147 + $0x18] sm:$0xff] %vm637, %v1134
        %1152 = vst.msk [vmem:[%s1147 + $0x20] sm:$0xff] %vm637, %v1135
        %1153 = vst.msk [vmem:[%s1147 + $0x28] sm:$0xff] %vm637, %v1136
        %1154 = vst.msk [vmem:[%s1147 + $0x30] sm:$0xff] %vm637, %v1137
        %1155 = vst.msk [vmem:[%s1147 + $0x38] sm:$0xff] %vm637, %v1138
        %1156 = vst.msk [vmem:[%s1147 + $0x40] sm:$0xff] %vm637, %v1139
        %1157 = vst.msk [vmem:[%s1147 + $0x48] sm:$0xff] %vm637, %v1140
        %1158 = vst.msk [vmem:[%s1147 + $0x50] sm:$0xff] %vm637, %v1141
        %1159 = vst.msk [vmem:[%s1147 + $0x58] sm:$0xff] %vm637, %v1142
        %1160 = vst.msk [vmem:[%s1147 + $0x60] sm:$0xff] %vm637, %v1143
        %1161 = vst.msk [vmem:[%s1147 + $0x68] sm:$0xff] %vm637, %v1144
        %1162 = vst.msk [vmem:[%s1147 + $0x70] sm:$0xff] %vm637, %v1145
        %1163 = vst.msk [vmem:[%s1147 + $0x78] sm:$0xff] %vm637, %v1146
        %p1164 = scmp.gt.s32.totalorder %s38, 0
        %s1165 = scalar_select %p1164, 1.0, 0.0
        %p1166 = scmp.lt.s32.totalorder %s38, 0
        %s1167 = scalar_select %p1166, 1.0, 0.0
        %v1168 = vld [vmem:[%s591] sm:$0xff]
        %v1169 = vld [vmem:[%s591 + $0x8] sm:$0xff]
        %v1170 = vsel %vm637, %v1168, 0.0
        %1171 = vadd.xlane.f32.xlu0 %v1170
        %v1172 = vpop.xlane.xlu0 %1171
        %v1173 = vsel %vm637, %v1169, 0.0
        %1174 = vadd.xlane.f32.xlu0 %v1173
        %v1175 = vpop.xlane.xlu0 %1174
        %v1176 = vmul.f32 %v1172, %v734
        %v1177 = vmul.f32 %v1175, %v734
        %v1178 = vsub.f32 %v1168, %v1176
        %v1179 = vsub.f32 %v1169, %v1177
        %v1180 = vmul.f32 %v1178, %v1178
        %v1181 = vmul.f32 %v1179, %v1179
        %v1182 = vsel %vm637, %v1180, 0.0
        %1183 = vadd.xlane.f32.xlu0 %v1182
        %v1184 = vpop.xlane.xlu0 %1183
        %v1185 = vsel %vm637, %v1181, 0.0
        %1186 = vadd.xlane.f32.xlu0 %v1185
        %v1187 = vpop.xlane.xlu0 %1186
        %v1188 = vmul.f32 %v1184, %v734
        %v1189 = vmul.f32 %v1187, %v734
        %v1190 = vadd.f32 %v1188, 1e-06
        %v1191 = vadd.f32 %v1189, 1e-06
        %v1192 = vrsqrt.pop %v1190
        %v1193 = vrsqrt.pop %v1191
        %v1194 = vmul.f32 %v1178, %v1192
        %v1195 = vmul.f32 %v1179, %v1193
        %v1196 = vmul.f32 %v1194, %v1059
        %v1197 = vmul.f32 %v1195, %v1059
        %v1198 = vadd.f32 %v1196, %v1097
        %v1199 = vadd.f32 %v1197, %v1097
        %v1200 = vstv %s1165
        %v1201 = vmul.f32 %v1198, %v1200
        %v1202 = vmul.f32 %v1199, %v1200
        %v1203 = vpack.c.bf16 %v1202, %v1201
        %1204 = vst.msk [vmem:[#allocation2] sm:$0xff] %vm637, %v1203
        %v1205 = vld [vmem:[%s518] sm:$0xff]
        %v1206 = vld [vmem:[%s518 + $0x8] sm:$0xff]
        %v1207 = vsel %vm637, %v1205, 0.0
        %1208 = vadd.xlane.f32.xlu0 %v1207
        %v1209 = vpop.xlane.xlu0 %1208
        %v1210 = vsel %vm637, %v1206, 0.0
        %1211 = vadd.xlane.f32.xlu0 %v1210
        %v1212 = vpop.xlane.xlu0 %1211
        %v1213 = vmul.f32 %v1209, %v734
        %v1214 = vmul.f32 %v1212, %v734
        %v1215 = vsub.f32 %v1205, %v1213
        %v1216 = vsub.f32 %v1206, %v1214
        %v1217 = vmul.f32 %v1215, %v1215
        %v1218 = vmul.f32 %v1216, %v1216
        %v1219 = vsel %vm637, %v1217, 0.0
        %1220 = vadd.xlane.f32.xlu0 %v1219
        %v1221 = vpop.xlane.xlu0 %1220
        %v1222 = vsel %vm637, %v1218, 0.0
        %1223 = vadd.xlane.f32.xlu0 %v1222
        %v1224 = vpop.xlane.xlu0 %1223
        %v1225 = vmul.f32 %v1221, %v734
        %v1226 = vmul.f32 %v1224, %v734
        %v1227 = vadd.f32 %v1225, 1e-06
        %v1228 = vadd.f32 %v1226, 1e-06
        %v1229 = vrsqrt.pop %v1227
        %v1230 = vrsqrt.pop %v1228
        %v1231 = vmul.f32 %v1215, %v1229
        %v1232 = vmul.f32 %v1216, %v1230
        %v1233 = vmul.f32 %v1231, %v1059
        %v1234 = vmul.f32 %v1232, %v1059
        %v1235 = vadd.f32 %v1233, %v1097
        %v1236 = vadd.f32 %v1234, %v1097
        %v1237 = vstv %s1167
        %v1238 = vmul.f32 %v1235, %v1237
        %v1239 = vmul.f32 %v1236, %v1237
        %v1240 = vpack.c.bf16 %v1239, %v1238
        %s1241 = scalar_lea.vmem [#allocation2], 136
        %1242 = vst.msk [vmem:[%s1241] sm:$0xff] %vm637, %v1240
        %v1243 = vlaneseq
        %v1244 = vshrl.u32 %v1243, 7
        %v1245 = vadd.s32 %v1244, 8
        %vm1246 = vcmp.gt.s32.totalorder %v1244, 0
        %vm1247 = vcmp.gt.s32.totalorder %v1245, 0
        %vm1248 = vcmp.lt.s32.totalorder %v1244, 15
        %vm1249 = vcmp.lt.s32.totalorder %v1245, 15
        %v1250 = vld [vmem:[%s7] sm:$0x1]
        %v1251 = vld [vmem:[%s8] sm:$0x1]
        %v1252 = vld [vmem:[%s6] sm:$0x1]
        %v1253 = vld [vmem:[%s10] sm:$0x3]
        %v1254 = vld [vmem:[%s12] sm:$0x1]
        %v1255 = vld [vmem:[#allocation2] sm:$0xff]
        %v1256 = vld [vmem:[#allocation2 + $0x8] sm:$0xff]
        %v1257 = vld [vmem:[#allocation2 + $0x10] sm:$0xff]
        %v1258 = vld [vmem:[#allocation2 + $0x18] sm:$0xff]
        %v1259 = vld [vmem:[#allocation2 + $0x20] sm:$0xff]
        %v1260 = vld [vmem:[#allocation2 + $0x28] sm:$0xff]
        %v1261 = vld [vmem:[#allocation2 + $0x30] sm:$0xff]
        %v1262 = vld [vmem:[#allocation2 + $0x38] sm:$0xff]
        %v1263 = vld [vmem:[#allocation2 + $0x40] sm:$0xff]
        %v1264 = vld [vmem:[#allocation2 + $0x48] sm:$0xff]
        %v1265 = vld [vmem:[#allocation2 + $0x50] sm:$0xff]
        %v1266 = vld [vmem:[#allocation2 + $0x58] sm:$0xff]
        %v1267 = vld [vmem:[#allocation2 + $0x60] sm:$0xff]
        %v1268 = vld [vmem:[#allocation2 + $0x68] sm:$0xff]
        %v1269 = vld [vmem:[#allocation2 + $0x70] sm:$0xff]
        %v1270 = vld [vmem:[#allocation2 + $0x78] sm:$0xff]
        %v1271 = vld [vmem:[#allocation2 + $0x80] sm:$0xff]
        %v1272 = vld [vmem:[#allocation2 + $0x88] sm:$0xff]
        %v1273 = vunpack.c.l.bf16 %v1255
        %v1274 = vunpack.c.h.bf16 %v1255
        %v1275 = vunpack.c.l.bf16 %v1256
        %v1276 = vunpack.c.h.bf16 %v1256
        %v1277 = vunpack.c.l.bf16 %v1257
        %v1278 = vunpack.c.h.bf16 %v1257
        %v1279 = vunpack.c.l.bf16 %v1258
        %v1280 = vunpack.c.h.bf16 %v1258
        %v1281 = vunpack.c.l.bf16 %v1259
        %v1282 = vunpack.c.h.bf16 %v1259
        %v1283 = vunpack.c.l.bf16 %v1260
        %v1284 = vunpack.c.h.bf16 %v1260
        %v1285 = vunpack.c.l.bf16 %v1261
        %v1286 = vunpack.c.h.bf16 %v1261
        %v1287 = vunpack.c.l.bf16 %v1262
        %v1288 = vunpack.c.h.bf16 %v1262
        %v1289 = vunpack.c.l.bf16 %v1263
        %v1290 = vunpack.c.h.bf16 %v1263
        %v1291 = vunpack.c.l.bf16 %v1264
        %v1292 = vunpack.c.h.bf16 %v1264
        %v1293 = vunpack.c.l.bf16 %v1265
        %v1294 = vunpack.c.h.bf16 %v1265
        %v1295 = vunpack.c.l.bf16 %v1266
        %v1296 = vunpack.c.h.bf16 %v1266
        %v1297 = vunpack.c.l.bf16 %v1267
        %v1298 = vunpack.c.h.bf16 %v1267
        %v1299 = vunpack.c.l.bf16 %v1268
        %v1300 = vunpack.c.h.bf16 %v1268
        %v1301 = vunpack.c.l.bf16 %v1269
        %v1302 = vunpack.c.h.bf16 %v1269
        %v1303 = vunpack.c.l.bf16 %v1270
        %v1304 = vunpack.c.h.bf16 %v1270
        %v1305 = vunpack.c.l.bf16 %v1271
        %v1306 = vunpack.c.h.bf16 %v1271
        %v1307 = vunpack.c.l.bf16 %v1272
        %v1308 = vunpack.c.h.bf16 %v1272
        %v1309 = vrot.slane %v1273, 7
        %v1310 = vrot.slane %v1275, 7
        %v1311 = vrot.slane %v1277, 7
        %v1312 = vrot.slane %v1279, 7
        %v1313 = vrot.slane %v1281, 7
        %v1314 = vrot.slane %v1283, 7
        %v1315 = vrot.slane %v1285, 7
        %v1316 = vrot.slane %v1287, 7
        %v1317 = vrot.slane %v1289, 7
        %v1318 = vrot.slane %v1291, 7
        %v1319 = vrot.slane %v1293, 7
        %v1320 = vrot.slane %v1295, 7
        %v1321 = vrot.slane %v1297, 7
        %v1322 = vrot.slane %v1299, 7
        %v1323 = vrot.slane %v1301, 7
        %v1324 = vrot.slane %v1303, 7
        %v1325 = vrot.slane %v1305, 7
        %v1326 = vrot.slane %v1307, 7
        %v1327 = vrot.slane %v1274, 7
        %v1328 = vrot.slane %v1276, 7
        %v1329 = vrot.slane %v1278, 7
        %v1330 = vrot.slane %v1280, 7
        %v1331 = vrot.slane %v1282, 7
        %v1332 = vrot.slane %v1284, 7
        %v1333 = vrot.slane %v1286, 7
        %v1334 = vrot.slane %v1288, 7
        %v1335 = vrot.slane %v1290, 7
        %v1336 = vrot.slane %v1292, 7
        %v1337 = vrot.slane %v1294, 7
        %v1338 = vrot.slane %v1296, 7
        %v1339 = vrot.slane %v1298, 7
        %v1340 = vrot.slane %v1300, 7
        %v1341 = vrot.slane %v1302, 7
        %v1342 = vrot.slane %v1304, 7
        %v1343 = vrot.slane %v1306, 7
        %v1344 = vrot.slane %v1308, 7
        %vm1345 = vcmp.lt.s32.totalorder %v1244, 1
        %v1346 = vsel %vm1345, %v1309, %v1327
        %v1347 = vsel %vm1345, %v1310, %v1328
        %v1348 = vsel %vm1345, %v1311, %v1329
        %v1349 = vsel %vm1345, %v1312, %v1330
        %v1350 = vsel %vm1345, %v1313, %v1331
        %v1351 = vsel %vm1345, %v1314, %v1332
        %v1352 = vsel %vm1345, %v1315, %v1333
        %v1353 = vsel %vm1345, %v1316, %v1334
        %v1354 = vsel %vm1345, %v1317, %v1335
        %v1355 = vsel %vm1345, %v1318, %v1336
        %v1356 = vsel %vm1345, %v1319, %v1337
        %v1357 = vsel %vm1345, %v1320, %v1338
        %v1358 = vsel %vm1345, %v1321, %v1339
        %v1359 = vsel %vm1345, %v1322, %v1340
        %v1360 = vsel %vm1345, %v1323, %v1341
        %v1361 = vsel %vm1345, %v1324, %v1342
        %v1362 = vsel %vm1345, %v1325, %v1343
        %v1363 = vsel %vm1345, %v1326, %v1344
        %v1364 = vsel %vm1345, %v1327, %v1309
        %v1365 = vsel %vm1345, %v1328, %v1310
        %v1366 = vsel %vm1345, %v1329, %v1311
        %v1367 = vsel %vm1345, %v1330, %v1312
        %v1368 = vsel %vm1345, %v1331, %v1313
        %v1369 = vsel %vm1345, %v1332, %v1314
        %v1370 = vsel %vm1345, %v1333, %v1315
        %v1371 = vsel %vm1345, %v1334, %v1316
        %v1372 = vsel %vm1345, %v1335, %v1317
        %v1373 = vsel %vm1345, %v1336, %v1318
        %v1374 = vsel %vm1345, %v1337, %v1319
        %v1375 = vsel %vm1345, %v1338, %v1320
        %v1376 = vsel %vm1345, %v1339, %v1321
        %v1377 = vsel %vm1345, %v1340, %v1322
        %v1378 = vsel %vm1345, %v1341, %v1323
        %v1379 = vsel %vm1345, %v1342, %v1324
        %v1380 = vsel %vm1345, %v1343, %v1325
        %v1381 = vsel %vm1345, %v1344, %v1326
        %v1382 = vsel %vm1246, %v1364, 0.0
        %v1383 = vsel %vm1247, %v1346, 0.0
        %v1384 = vsel %vm1246, %v1365, 0.0
        %v1385 = vsel %vm1247, %v1347, 0.0
        %v1386 = vsel %vm1246, %v1366, 0.0
        %v1387 = vsel %vm1247, %v1348, 0.0
        %v1388 = vsel %vm1246, %v1367, 0.0
        %v1389 = vsel %vm1247, %v1349, 0.0
        %v1390 = vsel %vm1246, %v1368, 0.0
        %v1391 = vsel %vm1247, %v1350, 0.0
        %v1392 = vsel %vm1246, %v1369, 0.0
        %v1393 = vsel %vm1247, %v1351, 0.0
        %v1394 = vsel %vm1246, %v1370, 0.0
        %v1395 = vsel %vm1247, %v1352, 0.0
        %v1396 = vsel %vm1246, %v1371, 0.0
        %v1397 = vsel %vm1247, %v1353, 0.0
        %v1398 = vsel %vm1246, %v1372, 0.0
        %v1399 = vsel %vm1247, %v1354, 0.0
        %v1400 = vsel %vm1246, %v1373, 0.0
        %v1401 = vsel %vm1247, %v1355, 0.0
        %v1402 = vsel %vm1246, %v1374, 0.0
        %v1403 = vsel %vm1247, %v1356, 0.0
        %v1404 = vsel %vm1246, %v1375, 0.0
        %v1405 = vsel %vm1247, %v1357, 0.0
        %v1406 = vsel %vm1246, %v1376, 0.0
        %v1407 = vsel %vm1247, %v1358, 0.0
        %v1408 = vsel %vm1246, %v1377, 0.0
        %v1409 = vsel %vm1247, %v1359, 0.0
        %v1410 = vsel %vm1246, %v1378, 0.0
        %v1411 = vsel %vm1247, %v1360, 0.0
        %v1412 = vsel %vm1246, %v1379, 0.0
        %v1413 = vsel %vm1247, %v1361, 0.0
        %v1414 = vsel %vm1246, %v1380, 0.0
        %v1415 = vsel %vm1247, %v1362, 0.0
        %v1416 = vsel %vm1246, %v1381, 0.0
        %v1417 = vsel %vm1247, %v1363, 0.0
        %v1418 = vrot.slane %v1273, 1
        %v1419 = vrot.slane %v1275, 1
        %v1420 = vrot.slane %v1277, 1
        %v1421 = vrot.slane %v1279, 1
        %v1422 = vrot.slane %v1281, 1
        %v1423 = vrot.slane %v1283, 1
        %v1424 = vrot.slane %v1285, 1
        %v1425 = vrot.slane %v1287, 1
        %v1426 = vrot.slane %v1289, 1
        %v1427 = vrot.slane %v1291, 1
        %v1428 = vrot.slane %v1293, 1
        %v1429 = vrot.slane %v1295, 1
        %v1430 = vrot.slane %v1297, 1
        %v1431 = vrot.slane %v1299, 1
        %v1432 = vrot.slane %v1301, 1
        %v1433 = vrot.slane %v1303, 1
        %v1434 = vrot.slane %v1305, 1
        %v1435 = vrot.slane %v1307, 1
        %v1436 = vrot.slane %v1274, 1
        %v1437 = vrot.slane %v1276, 1
        %v1438 = vrot.slane %v1278, 1
        %v1439 = vrot.slane %v1280, 1
        %v1440 = vrot.slane %v1282, 1
        %v1441 = vrot.slane %v1284, 1
        %v1442 = vrot.slane %v1286, 1
        %v1443 = vrot.slane %v1288, 1
        %v1444 = vrot.slane %v1290, 1
        %v1445 = vrot.slane %v1292, 1
        %v1446 = vrot.slane %v1294, 1
        %v1447 = vrot.slane %v1296, 1
        %v1448 = vrot.slane %v1298, 1
        %v1449 = vrot.slane %v1300, 1
        %v1450 = vrot.slane %v1302, 1
        %v1451 = vrot.slane %v1304, 1
        %v1452 = vrot.slane %v1306, 1
        %v1453 = vrot.slane %v1308, 1
        %vm1454 = vcmp.lt.s32.totalorder %v1244, 7
        %v1455 = vsel %vm1454, %v1418, %v1436
        %v1456 = vsel %vm1454, %v1419, %v1437
        %v1457 = vsel %vm1454, %v1420, %v1438
        %v1458 = vsel %vm1454, %v1421, %v1439
        %v1459 = vsel %vm1454, %v1422, %v1440
        %v1460 = vsel %vm1454, %v1423, %v1441
        %v1461 = vsel %vm1454, %v1424, %v1442
        %v1462 = vsel %vm1454, %v1425, %v1443
        %v1463 = vsel %vm1454, %v1426, %v1444
        %v1464 = vsel %vm1454, %v1427, %v1445
        %v1465 = vsel %vm1454, %v1428, %v1446
        %v1466 = vsel %vm1454, %v1429, %v1447
        %v1467 = vsel %vm1454, %v1430, %v1448
        %v1468 = vsel %vm1454, %v1431, %v1449
        %v1469 = vsel %vm1454, %v1432, %v1450
        %v1470 = vsel %vm1454, %v1433, %v1451
        %v1471 = vsel %vm1454, %v1434, %v1452
        %v1472 = vsel %vm1454, %v1435, %v1453
        %v1473 = vsel %vm1454, %v1436, %v1418
        %v1474 = vsel %vm1454, %v1437, %v1419
        %v1475 = vsel %vm1454, %v1438, %v1420
        %v1476 = vsel %vm1454, %v1439, %v1421
        %v1477 = vsel %vm1454, %v1440, %v1422
        %v1478 = vsel %vm1454, %v1441, %v1423
        %v1479 = vsel %vm1454, %v1442, %v1424
        %v1480 = vsel %vm1454, %v1443, %v1425
        %v1481 = vsel %vm1454, %v1444, %v1426
        %v1482 = vsel %vm1454, %v1445, %v1427
        %v1483 = vsel %vm1454, %v1446, %v1428
        %v1484 = vsel %vm1454, %v1447, %v1429
        %v1485 = vsel %vm1454, %v1448, %v1430
        %v1486 = vsel %vm1454, %v1449, %v1431
        %v1487 = vsel %vm1454, %v1450, %v1432
        %v1488 = vsel %vm1454, %v1451, %v1433
        %v1489 = vsel %vm1454, %v1452, %v1434
        %v1490 = vsel %vm1454, %v1453, %v1435
        %v1491 = vsel %vm1248, %v1455, 0.0
        %v1492 = vsel %vm1249, %v1473, 0.0
        %v1493 = vsel %vm1248, %v1456, 0.0
        %v1494 = vsel %vm1249, %v1474, 0.0
        %v1495 = vsel %vm1248, %v1457, 0.0
        %v1496 = vsel %vm1249, %v1475, 0.0
        %v1497 = vsel %vm1248, %v1458, 0.0
        %v1498 = vsel %vm1249, %v1476, 0.0
        %v1499 = vsel %vm1248, %v1459, 0.0
        %v1500 = vsel %vm1249, %v1477, 0.0
        %v1501 = vsel %vm1248, %v1460, 0.0
        %v1502 = vsel %vm1249, %v1478, 0.0
        %v1503 = vsel %vm1248, %v1461, 0.0
        %v1504 = vsel %vm1249, %v1479, 0.0
        %v1505 = vsel %vm1248, %v1462, 0.0
        %v1506 = vsel %vm1249, %v1480, 0.0
        %v1507 = vsel %vm1248, %v1463, 0.0
        %v1508 = vsel %vm1249, %v1481, 0.0
        %v1509 = vsel %vm1248, %v1464, 0.0
        %v1510 = vsel %vm1249, %v1482, 0.0
        %v1511 = vsel %vm1248, %v1465, 0.0
        %v1512 = vsel %vm1249, %v1483, 0.0
        %v1513 = vsel %vm1248, %v1466, 0.0
        %v1514 = vsel %vm1249, %v1484, 0.0
        %v1515 = vsel %vm1248, %v1467, 0.0
        %v1516 = vsel %vm1249, %v1485, 0.0
        %v1517 = vsel %vm1248, %v1468, 0.0
        %v1518 = vsel %vm1249, %v1486, 0.0
        %v1519 = vsel %vm1248, %v1469, 0.0
        %v1520 = vsel %vm1249, %v1487, 0.0
        %v1521 = vsel %vm1248, %v1470, 0.0
        %v1522 = vsel %vm1249, %v1488, 0.0
        %v1523 = vsel %vm1248, %v1471, 0.0
        %v1524 = vsel %vm1249, %v1489, 0.0
        %v1525 = vsel %vm1248, %v1472, 0.0
        %v1526 = vsel %vm1249, %v1490, 0.0
        %v1527 = vpack.c.bf16 %v1383, %v1382
        %v1528 = vpack.c.bf16 %v1385, %v1384
        %v1529 = vpack.c.bf16 %v1387, %v1386
        %v1530 = vpack.c.bf16 %v1389, %v1388
        %v1531 = vpack.c.bf16 %v1391, %v1390
        %v1532 = vpack.c.bf16 %v1393, %v1392
        %v1533 = vpack.c.bf16 %v1395, %v1394
        %v1534 = vpack.c.bf16 %v1397, %v1396
        %v1535 = vpack.c.bf16 %v1399, %v1398
        %v1536 = vpack.c.bf16 %v1401, %v1400
        %v1537 = vpack.c.bf16 %v1403, %v1402
        %v1538 = vpack.c.bf16 %v1405, %v1404
        %v1539 = vpack.c.bf16 %v1407, %v1406
        %v1540 = vpack.c.bf16 %v1409, %v1408
        %v1541 = vpack.c.bf16 %v1411, %v1410
        %v1542 = vpack.c.bf16 %v1413, %v1412
        %v1543 = vpack.c.bf16 %v1415, %v1414
        %v1544 = vpack.c.bf16 %v1417, %v1416
        %v1545 = vpack.c.bf16 %v1492, %v1491
        %v1546 = vpack.c.bf16 %v1494, %v1493
        %v1547 = vpack.c.bf16 %v1496, %v1495
        %v1548 = vpack.c.bf16 %v1498, %v1497
        %v1549 = vpack.c.bf16 %v1500, %v1499
        %v1550 = vpack.c.bf16 %v1502, %v1501
        %v1551 = vpack.c.bf16 %v1504, %v1503
        %v1552 = vpack.c.bf16 %v1506, %v1505
        %v1553 = vpack.c.bf16 %v1508, %v1507
        %v1554 = vpack.c.bf16 %v1510, %v1509
        %v1555 = vpack.c.bf16 %v1512, %v1511
        %v1556 = vpack.c.bf16 %v1514, %v1513
        %v1557 = vpack.c.bf16 %v1516, %v1515
        %v1558 = vpack.c.bf16 %v1518, %v1517
        %v1559 = vpack.c.bf16 %v1520, %v1519
        %v1560 = vpack.c.bf16 %v1522, %v1521
        %v1561 = vpack.c.bf16 %v1524, %v1523
        %v1562 = vpack.c.bf16 %v1526, %v1525
        %1581 = vrot.lane.b32.xlu0 %v1255, 64
        %v1582 = vpop.permute.xlu0 %1581
        %1583 = vrot.lane.b32.xlu0 %v1256, 64
        %v1584 = vpop.permute.xlu0 %1583
        %1585 = vrot.lane.b32.xlu0 %v1257, 64
        %v1586 = vpop.permute.xlu0 %1585
        %1587 = vrot.lane.b32.xlu0 %v1258, 64
        %v1588 = vpop.permute.xlu0 %1587
        %1589 = vrot.lane.b32.xlu0 %v1259, 64
        %v1590 = vpop.permute.xlu0 %1589
        %1591 = vrot.lane.b32.xlu0 %v1260, 64
        %v1592 = vpop.permute.xlu0 %1591
        %1593 = vrot.lane.b32.xlu0 %v1261, 64
        %v1594 = vpop.permute.xlu0 %1593
        %1595 = vrot.lane.b32.xlu0 %v1262, 64
        %v1596 = vpop.permute.xlu0 %1595
        %1597 = vrot.lane.b32.xlu0 %v1263, 64
        %v1598 = vpop.permute.xlu0 %1597
        %1599 = vrot.lane.b32.xlu0 %v1264, 64
        %v1600 = vpop.permute.xlu0 %1599
        %1601 = vrot.lane.b32.xlu0 %v1265, 64
        %v1602 = vpop.permute.xlu0 %1601
        %1603 = vrot.lane.b32.xlu0 %v1266, 64
        %v1604 = vpop.permute.xlu0 %1603
        %1605 = vrot.lane.b32.xlu0 %v1267, 64
        %v1606 = vpop.permute.xlu0 %1605
        %1607 = vrot.lane.b32.xlu0 %v1268, 64
        %v1608 = vpop.permute.xlu0 %1607
        %1609 = vrot.lane.b32.xlu0 %v1269, 64
        %v1610 = vpop.permute.xlu0 %1609
        %1611 = vrot.lane.b32.xlu0 %v1270, 64
        %v1612 = vpop.permute.xlu0 %1611
        %1613 = vrot.lane.b32.xlu0 %v1271, 64
        %v1614 = vpop.permute.xlu0 %1613
        %1615 = vrot.lane.b32.xlu0 %v1272, 64
        %v1616 = vpop.permute.xlu0 %1615
        %v1619 = vsel %vm637, %v1527, %v1582
        %v1623 = vsel %vm637, %v1528, %v1584
        %v1627 = vsel %vm637, %v1529, %v1586
        %v1631 = vsel %vm637, %v1530, %v1588
        %v1635 = vsel %vm637, %v1531, %v1590
        %v1639 = vsel %vm637, %v1532, %v1592
        %v1643 = vsel %vm637, %v1533, %v1594
        %v1647 = vsel %vm637, %v1534, %v1596
        %v1651 = vsel %vm637, %v1535, %v1598
        %v1655 = vsel %vm637, %v1536, %v1600
        %v1659 = vsel %vm637, %v1537, %v1602
        %v1663 = vsel %vm637, %v1538, %v1604
        %v1667 = vsel %vm637, %v1539, %v1606
        %v1671 = vsel %vm637, %v1540, %v1608
        %v1675 = vsel %vm637, %v1541, %v1610
        %v1679 = vsel %vm637, %v1542, %v1612
        %v1683 = vsel %vm637, %v1543, %v1614
        %v1687 = vsel %vm637, %v1544, %v1616
        %v1690 = vlaneseq
        %v1691 = vshrl.u32 %v1690, 7
        %v1692 = vsub.s32 0, %v1691
        %v1693 = vrot.slane %v1252, %v1692
        %v1695 = vadd.f32 %v1693, 0.0
        %v1696 = vld [vmem:[%s5] sm:$0xf]
        %v1697 = vld [vmem:[%s5 + $0x4] sm:$0xf]
        %v1698 = vld [vmem:[%s5 + $0x8] sm:$0xf]
        %v1699 = vld [vmem:[%s5 + $0xc] sm:$0xf]
        %v1700 = vld [vmem:[%s5 + $0x10] sm:$0xf]
        %v1701 = vld [vmem:[%s5 + $0x14] sm:$0xf]
        %v1702 = vld [vmem:[%s5 + $0x18] sm:$0xf]
        %v1703 = vld [vmem:[%s5 + $0x1c] sm:$0xf]
        %v1704 = vld [vmem:[%s5 + $0x20] sm:$0xf]
        %v1705 = vld [vmem:[%s5 + $0x24] sm:$0xf]
        %v1706 = vld [vmem:[%s5 + $0x28] sm:$0xf]
        %v1707 = vld [vmem:[%s5 + $0x2c] sm:$0xf]
        %v1708 = vld [vmem:[%s5 + $0x30] sm:$0xf]
        %v1709 = vld [vmem:[%s5 + $0x34] sm:$0xf]
        %v1710 = vld [vmem:[%s5 + $0x38] sm:$0xf]
        %v1711 = vld [vmem:[%s5 + $0x3c] sm:$0xf]
        %v1712 = vld [vmem:[%s5 + $0x40] sm:$0xf]
        %v1713 = vld [vmem:[%s5 + $0x44] sm:$0xf]
        %v1714 = vld [vmem:[%s5 + $0x48] sm:$0xf]
        %v1715 = vld [vmem:[%s5 + $0x4c] sm:$0xf]
        %v1716 = vld [vmem:[%s5 + $0x50] sm:$0xf]
        %v1717 = vld [vmem:[%s5 + $0x54] sm:$0xf]
        %v1718 = vld [vmem:[%s5 + $0x58] sm:$0xf]
        %v1719 = vld [vmem:[%s5 + $0x5c] sm:$0xf]
        %v1744 = vunpack.c.l.b16 %v1696
        %v1745 = vunpack.c.l.b16 %v1697
        %v1746 = vunpack.c.l.b16 %v1698
        %v1747 = vunpack.c.l.b16 %v1699
        %v1748 = vunpack.c.l.b16 %v1700
        %v1749 = vunpack.c.l.b16 %v1701
        %v1750 = vunpack.c.l.b16 %v1702
        %v1751 = vunpack.c.l.b16 %v1703
        %v1752 = vunpack.c.l.b16 %v1704
        %v1753 = vunpack.c.l.b16 %v1705
        %v1754 = vunpack.c.l.b16 %v1706
        %v1755 = vunpack.c.l.b16 %v1707
        %v1756 = vunpack.c.l.b16 %v1708
        %v1757 = vunpack.c.l.b16 %v1709
        %v1758 = vunpack.c.l.b16 %v1710
        %v1759 = vunpack.c.l.b16 %v1711
        %v1760 = vunpack.c.l.b16 %v1712
        %v1761 = vunpack.c.l.b16 %v1713
        %v1762 = vunpack.c.l.b16 %v1714
        %v1763 = vunpack.c.l.b16 %v1715
        %v1764 = vunpack.c.l.b16 %v1716
        %v1765 = vunpack.c.l.b16 %v1717
        %v1766 = vunpack.c.l.b16 %v1718
        %v1767 = vunpack.c.l.b16 %v1719
        %v1768 = vpack.c.b16 %v1745, %v1744
        %v1769 = vpack.c.b16 %v1747, %v1746
        %v1770 = vpack.c.b16 %v1749, %v1748
        %v1771 = vpack.c.b16 %v1751, %v1750
        %v1772 = vpack.c.b16 %v1753, %v1752
        %v1773 = vpack.c.b16 %v1755, %v1754
        %v1774 = vpack.c.b16 %v1757, %v1756
        %v1775 = vpack.c.b16 %v1759, %v1758
        %v1776 = vpack.c.b16 %v1761, %v1760
        %v1777 = vpack.c.b16 %v1763, %v1762
        %v1778 = vpack.c.b16 %v1765, %v1764
        %v1779 = vpack.c.b16 %v1767, %v1766
        %v1793 = vsel %vm637, %v1545, 0
        %v1796 = vsel %vm637, %v1546, 0
        %v1799 = vsel %vm637, %v1547, 0
        %v1802 = vsel %vm637, %v1548, 0
        %v1805 = vsel %vm637, %v1549, 0
        %v1808 = vsel %vm637, %v1550, 0
        %v1811 = vsel %vm637, %v1551, 0
        %v1814 = vsel %vm637, %v1552, 0
        %v1817 = vsel %vm637, %v1553, 0
        %v1820 = vsel %vm637, %v1554, 0
        %v1823 = vsel %vm637, %v1555, 0
        %v1826 = vsel %vm637, %v1556, 0
        %v1829 = vsel %vm637, %v1557, 0
        %v1832 = vsel %vm637, %v1558, 0
        %v1835 = vsel %vm637, %v1559, 0
        %v1838 = vsel %vm637, %v1560, 0
        %1840 = vmatprep.subr.bf16.mxu0 0
        %1841 = vmatpush1.bf16.msra.mxu0 %v1768
        %1842 = vmatprep.subr.bf16.mxu0 0
        %1843 = vmatpush1.bf16.msra.mxu0 %v1769
        %1844 = vmatprep.subr.bf16.mxu0 0
        %1845 = vmatpush1.bf16.msra.mxu0 %v1770
        %1846 = vmatprep.subr.bf16.mxu0 0
        %1847 = vmatpush1.bf16.msra.mxu0 %v1771
        %1848 = vmatprep.subr.bf16.mxu0 0
        %1849 = vmatpush1.bf16.msra.mxu0 %v1772
        %1850 = vmatprep.subr.bf16.mxu0 0
        %1851 = vmatpush1.bf16.msra.mxu0 %v1773
        %1852 = vmatprep.subr.bf16.mxu0 0
        %1853 = vmatpush1.bf16.msra.mxu0 %v1774
        %1854 = vmatprep.subr.bf16.mxu0 0
        %1855 = vmatpush1.bf16.msra.mxu0 %v1775
        %1856 = vmatprep.subr.bf16.mxu0 0
        %1857 = vmatpush1.bf16.msra.mxu0 %v1776
        %1858 = vmatprep.subr.bf16.mxu0 0
        %1859 = vmatpush1.bf16.msra.mxu0 %v1777
        %1860 = vmatprep.subr.bf16.mxu0 0
        %1861 = vmatpush1.bf16.msra.mxu0 %v1778
        %1862 = vmatprep.subr.bf16.mxu0 0
        %1863 = vmatpush1.bf16.msra.mxu0 %v1779
        %1864 = vmatprep.subr.bf16.mxu0 0
        %1865 = vmatpush1.bf16.msra.mxu0 0
        %1866 = vmatprep.subr.bf16.mxu0 0
        %1867 = vmatpush1.bf16.msra.mxu0 0
        %1868 = vmatprep.subr.bf16.mxu0 0
        %1869 = vmatpush1.bf16.msra.mxu0 0
        %1870 = vmatprep.subr.bf16.mxu0 0
        %1871 = vmatpush1.bf16.msra.mxu0 0
        %1872 = vmatprep.mubr.bf16.mxu0 %v1793
        %1873 = vmatmul.mubr.bf16.gmra.mrb[0].mxu0 %v1619
        %v1874 = vpop.f32.mrb[0].mxu0
        %v1875 = vadd.f32 0.0, %v1874
        %v1876 = vpop.f32.mrb[0].mxu0
        %v1877 = vpop.f32.mrb[0].mxu0
        %v1878 = vadd.f32 0.0, %v1877
        %v1879 = vpop.f32.mrb[0].mxu0
        %1880 = vmatprep.mubr.bf16.mxu0 %v1796
        %1881 = vmatmul.mubr.bf16.gmra.mrb[0].mxu0 %v1623
        %v1882 = vpop.f32.mrb[0].mxu0
        %v1883 = vadd.f32 0.0, %v1882
        %v1884 = vpop.f32.mrb[0].mxu0
        %v1885 = vpop.f32.mrb[0].mxu0
        %v1886 = vadd.f32 0.0, %v1885
        %v1887 = vpop.f32.mrb[0].mxu0
        %1888 = vmatprep.mubr.bf16.mxu0 %v1799
        %1889 = vmatmul.mubr.bf16.gmra.mrb[0].mxu0 %v1627
        %v1890 = vpop.f32.mrb[0].mxu0
        %v1891 = vadd.f32 0.0, %v1890
        %v1892 = vpop.f32.mrb[0].mxu0
        %v1893 = vpop.f32.mrb[0].mxu0
        %v1894 = vadd.f32 0.0, %v1893
        %v1895 = vpop.f32.mrb[0].mxu0
        %1896 = vmatprep.mubr.bf16.mxu0 %v1802
        %1897 = vmatmul.mubr.bf16.gmra.mrb[0].mxu0 %v1631
        %v1898 = vpop.f32.mrb[0].mxu0
        %v1899 = vadd.f32 0.0, %v1898
        %v1900 = vpop.f32.mrb[0].mxu0
        %v1901 = vpop.f32.mrb[0].mxu0
        %v1902 = vadd.f32 0.0, %v1901
        %v1903 = vpop.f32.mrb[0].mxu0
        %1904 = vmatprep.mubr.bf16.mxu0 %v1805
        %1905 = vmatmul.mubr.bf16.gmra.mrb[0].mxu0 %v1635
        %v1906 = vpop.f32.mrb[0].mxu0
        %v1907 = vadd.f32 0.0, %v1906
        %v1908 = vpop.f32.mrb[0].mxu0
        %v1909 = vpop.f32.mrb[0].mxu0
        %v1910 = vadd.f32 0.0, %v1909
        %v1911 = vpop.f32.mrb[0].mxu0
        %1912 = vmatprep.mubr.bf16.mxu0 %v1808
        %1913 = vmatmul.mubr.bf16.gmra.mrb[0].mxu0 %v1639
        %v1914 = vpop.f32.mrb[0].mxu0
        %v1915 = vadd.f32 0.0, %v1914
        %v1916 = vpop.f32.mrb[0].mxu0
        %v1917 = vpop.f32.mrb[0].mxu0
        %v1918 = vadd.f32 0.0, %v1917
        %v1919 = vpop.f32.mrb[0].mxu0
        %1920 = vmatprep.mubr.bf16.mxu0 %v1811
        %1921 = vmatmul.mubr.bf16.gmra.mrb[0].mxu0 %v1643
        %v1922 = vpop.f32.mrb[0].mxu0
        %v1923 = vadd.f32 0.0, %v1922
        %v1924 = vpop.f32.mrb[0].mxu0
        %v1925 = vpop.f32.mrb[0].mxu0
        %v1926 = vadd.f32 0.0, %v1925
        %v1927 = vpop.f32.mrb[0].mxu0
        %1928 = vmatprep.mubr.bf16.mxu0 %v1814
        %1929 = vmatmul.mubr.bf16.gmra.mrb[0].mxu0 %v1647
        %v1930 = vpop.f32.mrb[0].mxu0
        %v1931 = vadd.f32 0.0, %v1930
        %v1932 = vpop.f32.mrb[0].mxu0
        %v1933 = vpop.f32.mrb[0].mxu0
        %v1934 = vadd.f32 0.0, %v1933
        %v1935 = vpop.f32.mrb[0].mxu0
        %1936 = vmatprep.mubr.bf16.mxu0 %v1817
        %1937 = vmatmul.mubr.bf16.gmra.mrb[0].mxu0 %v1651
        %v1938 = vpop.f32.mrb[0].mxu0
        %v1939 = vadd.f32 0.0, %v1938
        %v1940 = vpop.f32.mrb[0].mxu0
        %v1941 = vpop.f32.mrb[0].mxu0
        %v1942 = vadd.f32 0.0, %v1941
        %v1943 = vpop.f32.mrb[0].mxu0
        %1944 = vmatprep.mubr.bf16.mxu0 %v1820
        %1945 = vmatmul.mubr.bf16.gmra.mrb[0].mxu0 %v1655
        %v1946 = vpop.f32.mrb[0].mxu0
        %v1947 = vadd.f32 0.0, %v1946
        %v1948 = vpop.f32.mrb[0].mxu0
        %v1949 = vpop.f32.mrb[0].mxu0
        %v1950 = vadd.f32 0.0, %v1949
        %v1951 = vpop.f32.mrb[0].mxu0
        %1952 = vmatprep.mubr.bf16.mxu0 %v1823
        %1953 = vmatmul.mubr.bf16.gmra.mrb[0].mxu0 %v1659
        %v1954 = vpop.f32.mrb[0].mxu0
        %v1955 = vadd.f32 0.0, %v1954
        %v1956 = vpop.f32.mrb[0].mxu0
        %v1957 = vpop.f32.mrb[0].mxu0
        %v1958 = vadd.f32 0.0, %v1957
        %v1959 = vpop.f32.mrb[0].mxu0
        %1960 = vmatprep.mubr.bf16.mxu0 %v1826
        %1961 = vmatmul.mubr.bf16.gmra.mrb[0].mxu0 %v1663
        %v1962 = vpop.f32.mrb[0].mxu0
        %v1963 = vadd.f32 0.0, %v1962
        %v1964 = vpop.f32.mrb[0].mxu0
        %v1965 = vpop.f32.mrb[0].mxu0
        %v1966 = vadd.f32 0.0, %v1965
        %v1967 = vpop.f32.mrb[0].mxu0
        %1968 = vmatprep.mubr.bf16.mxu0 %v1829
        %1969 = vmatmul.mubr.bf16.gmra.mrb[0].mxu0 %v1667
        %v1970 = vpop.f32.mrb[0].mxu0
        %v1971 = vadd.f32 0.0, %v1970
        %v1972 = vpop.f32.mrb[0].mxu0
        %v1973 = vpop.f32.mrb[0].mxu0
        %v1974 = vadd.f32 0.0, %v1973
        %v1975 = vpop.f32.mrb[0].mxu0
        %1976 = vmatprep.mubr.bf16.mxu0 %v1832
        %1977 = vmatmul.mubr.bf16.gmra.mrb[0].mxu0 %v1671
        %v1978 = vpop.f32.mrb[0].mxu0
        %v1979 = vadd.f32 0.0, %v1978
        %v1980 = vpop.f32.mrb[0].mxu0
        %v1981 = vpop.f32.mrb[0].mxu0
        %v1982 = vadd.f32 0.0, %v1981
        %v1983 = vpop.f32.mrb[0].mxu0
        %1984 = vmatprep.mubr.bf16.mxu0 %v1835
        %1985 = vmatmul.mubr.bf16.gmra.mrb[0].mxu0 %v1675
        %v1986 = vpop.f32.mrb[0].mxu0
        %v1987 = vadd.f32 0.0, %v1986
        %v1988 = vpop.f32.mrb[0].mxu0
        %v1989 = vpop.f32.mrb[0].mxu0
        %v1990 = vadd.f32 0.0, %v1989
        %v1991 = vpop.f32.mrb[0].mxu0
        %1992 = vmatprep.mubr.bf16.mxu0 %v1838
        %1993 = vmatmul.mubr.bf16.gmra.mrb[0].mxu0 %v1679
        %v1994 = vpop.f32.mrb[0].mxu0
        %v1995 = vadd.f32 0.0, %v1994
        %v1996 = vpop.f32.mrb[0].mxu0
        %v1997 = vpop.f32.mrb[0].mxu0
        %v1998 = vadd.f32 0.0, %v1997
        %v1999 = vpop.f32.mrb[0].mxu0
        %2000 = vdwg.mxu0
        %v2001 = vadd.f32 %v1695, %v1875
        %v2002 = vadd.f32 %v1695, %v1878
        %v2003 = vadd.f32 %v1695, %v1883
        %v2004 = vadd.f32 %v1695, %v1886
        %v2005 = vadd.f32 %v1695, %v1891
        %v2006 = vadd.f32 %v1695, %v1894
        %v2007 = vadd.f32 %v1695, %v1899
        %v2008 = vadd.f32 %v1695, %v1902
        %v2009 = vadd.f32 %v1695, %v1907
        %v2010 = vadd.f32 %v1695, %v1910
        %v2011 = vadd.f32 %v1695, %v1915
        %v2012 = vadd.f32 %v1695, %v1918
        %v2013 = vadd.f32 %v1695, %v1923
        %v2014 = vadd.f32 %v1695, %v1926
        %v2015 = vadd.f32 %v1695, %v1931
        %v2016 = vadd.f32 %v1695, %v1934
        %v2017 = vadd.f32 %v1695, %v1939
        %v2018 = vadd.f32 %v1695, %v1942
        %v2019 = vadd.f32 %v1695, %v1947
        %v2020 = vadd.f32 %v1695, %v1950
        %v2021 = vadd.f32 %v1695, %v1955
        %v2022 = vadd.f32 %v1695, %v1958
        %v2023 = vadd.f32 %v1695, %v1963
        %v2024 = vadd.f32 %v1695, %v1966
        %v2025 = vadd.f32 %v1695, %v1971
        %v2026 = vadd.f32 %v1695, %v1974
        %v2027 = vadd.f32 %v1695, %v1979
        %v2028 = vadd.f32 %v1695, %v1982
        %v2029 = vadd.f32 %v1695, %v1987
        %v2030 = vadd.f32 %v1695, %v1990
        %v2031 = vadd.f32 %v1695, %v1995
        %v2032 = vadd.f32 %v1695, %v1998
        %s2033 = scalar_lea.vmem %s5, 96
        %v2034 = vld [vmem:[%s2033] sm:$0xf]
        %v2035 = vld [vmem:[%s2033 + $0x4] sm:$0xf]
        %v2036 = vld [vmem:[%s2033 + $0x8] sm:$0xf]
        %v2037 = vld [vmem:[%s2033 + $0xc] sm:$0xf]
        %v2038 = vld [vmem:[%s2033 + $0x10] sm:$0xf]
        %v2039 = vld [vmem:[%s2033 + $0x14] sm:$0xf]
        %v2040 = vld [vmem:[%s2033 + $0x18] sm:$0xf]
        %v2041 = vld [vmem:[%s2033 + $0x1c] sm:$0xf]
        %v2042 = vld [vmem:[%s2033 + $0x20] sm:$0xf]
        %v2043 = vld [vmem:[%s2033 + $0x24] sm:$0xf]
        %v2044 = vld [vmem:[%s2033 + $0x28] sm:$0xf]
        %v2045 = vld [vmem:[%s2033 + $0x2c] sm:$0xf]
        %v2046 = vld [vmem:[%s2033 + $0x30] sm:$0xf]
        %v2047 = vld [vmem:[%s2033 + $0x34] sm:$0xf]
        %v2048 = vld [vmem:[%s2033 + $0x38] sm:$0xf]
        %v2049 = vld [vmem:[%s2033 + $0x3c] sm:$0xf]
        %v2050 = vld [vmem:[%s2033 + $0x40] sm:$0xf]
        %v2051 = vld [vmem:[%s2033 + $0x44] sm:$0xf]
        %v2052 = vld [vmem:[%s2033 + $0x48] sm:$0xf]
        %v2053 = vld [vmem:[%s2033 + $0x4c] sm:$0xf]
        %v2054 = vld [vmem:[%s2033 + $0x50] sm:$0xf]
        %v2055 = vld [vmem:[%s2033 + $0x54] sm:$0xf]
        %v2056 = vld [vmem:[%s2033 + $0x58] sm:$0xf]
        %v2057 = vld [vmem:[%s2033 + $0x5c] sm:$0xf]
        %v2082 = vunpack.c.l.b16 %v2034
        %v2083 = vunpack.c.l.b16 %v2035
        %v2084 = vunpack.c.l.b16 %v2036
        %v2085 = vunpack.c.l.b16 %v2037
        %v2086 = vunpack.c.l.b16 %v2038
        %v2087 = vunpack.c.l.b16 %v2039
        %v2088 = vunpack.c.l.b16 %v2040
        %v2089 = vunpack.c.l.b16 %v2041
        %v2090 = vunpack.c.l.b16 %v2042
        %v2091 = vunpack.c.l.b16 %v2043
        %v2092 = vunpack.c.l.b16 %v2044
        %v2093 = vunpack.c.l.b16 %v2045
        %v2094 = vunpack.c.l.b16 %v2046
        %v2095 = vunpack.c.l.b16 %v2047
        %v2096 = vunpack.c.l.b16 %v2048
        %v2097 = vunpack.c.l.b16 %v2049
        %v2098 = vunpack.c.l.b16 %v2050
        %v2099 = vunpack.c.l.b16 %v2051
        %v2100 = vunpack.c.l.b16 %v2052
        %v2101 = vunpack.c.l.b16 %v2053
        %v2102 = vunpack.c.l.b16 %v2054
        %v2103 = vunpack.c.l.b16 %v2055
        %v2104 = vunpack.c.l.b16 %v2056
        %v2105 = vunpack.c.l.b16 %v2057
        %v2106 = vpack.c.b16 %v2083, %v2082
        %v2107 = vpack.c.b16 %v2085, %v2084
        %v2108 = vpack.c.b16 %v2087, %v2086
        %v2109 = vpack.c.b16 %v2089, %v2088
        %v2110 = vpack.c.b16 %v2091, %v2090
        %v2111 = vpack.c.b16 %v2093, %v2092
        %v2112 = vpack.c.b16 %v2095, %v2094
        %v2113 = vpack.c.b16 %v2097, %v2096
        %v2114 = vpack.c.b16 %v2099, %v2098
        %v2115 = vpack.c.b16 %v2101, %v2100
        %v2116 = vpack.c.b16 %v2103, %v2102
        %v2117 = vpack.c.b16 %v2105, %v2104
        %v2131 = vsel %vm637, %v1561, 0
        %2133 = vmatprep.subr.bf16.mxu0 0
        %2134 = vmatpush1.bf16.msra.mxu0 %v2106
        %2135 = vmatprep.subr.bf16.mxu0 0
        %2136 = vmatpush1.bf16.msra.mxu0 %v2107
        %2137 = vmatprep.subr.bf16.mxu0 0
        %2138 = vmatpush1.bf16.msra.mxu0 %v2108
        %2139 = vmatprep.subr.bf16.mxu0 0
        %2140 = vmatpush1.bf16.msra.mxu0 %v2109
        %2141 = vmatprep.subr.bf16.mxu0 0
        %2142 = vmatpush1.bf16.msra.mxu0 %v2110
        %2143 = vmatprep.subr.bf16.mxu0 0
        %2144 = vmatpush1.bf16.msra.mxu0 %v2111
        %2145 = vmatprep.subr.bf16.mxu0 0
        %2146 = vmatpush1.bf16.msra.mxu0 %v2112
        %2147 = vmatprep.subr.bf16.mxu0 0
        %2148 = vmatpush1.bf16.msra.mxu0 %v2113
        %2149 = vmatprep.subr.bf16.mxu0 0
        %2150 = vmatpush1.bf16.msra.mxu0 %v2114
        %2151 = vmatprep.subr.bf16.mxu0 0
        %2152 = vmatpush1.bf16.msra.mxu0 %v2115
        %2153 = vmatprep.subr.bf16.mxu0 0
        %2154 = vmatpush1.bf16.msra.mxu0 %v2116
        %2155 = vmatprep.subr.bf16.mxu0 0
        %2156 = vmatpush1.bf16.msra.mxu0 %v2117
        %2157 = vmatprep.subr.bf16.mxu0 0
        %2158 = vmatpush1.bf16.msra.mxu0 0
        %2159 = vmatprep.subr.bf16.mxu0 0
        %2160 = vmatpush1.bf16.msra.mxu0 0
        %2161 = vmatprep.subr.bf16.mxu0 0
        %2162 = vmatpush1.bf16.msra.mxu0 0
        %2163 = vmatprep.subr.bf16.mxu0 0
        %2164 = vmatpush1.bf16.msra.mxu0 0
        %2165 = vmatprep.mubr.bf16.mxu0 %v1796
        %2166 = vmatmul.mubr.bf16.gmra.mrb[0].mxu0 %v1623
        %v2167 = vpop.f32.mrb[0].mxu0
        %v2168 = vadd.f32 0.0, %v2167
        %v2169 = vpop.f32.mrb[0].mxu0
        %v2170 = vpop.f32.mrb[0].mxu0
        %v2171 = vadd.f32 0.0, %v2170
        %v2172 = vpop.f32.mrb[0].mxu0
        %2173 = vmatprep.mubr.bf16.mxu0 %v1799
        %2174 = vmatmul.mubr.bf16.gmra.mrb[0].mxu0 %v1627
        %v2175 = vpop.f32.mrb[0].mxu0
        %v2176 = vadd.f32 0.0, %v2175
        %v2177 = vpop.f32.mrb[0].mxu0
        %v2178 = vpop.f32.mrb[0].mxu0
        %v2179 = vadd.f32 0.0, %v2178
        %v2180 = vpop.f32.mrb[0].mxu0
        %2181 = vmatprep.mubr.bf16.mxu0 %v1802
        %2182 = vmatmul.mubr.bf16.gmra.mrb[0].mxu0 %v1631
        %v2183 = vpop.f32.mrb[0].mxu0
        %v2184 = vadd.f32 0.0, %v2183
        %v2185 = vpop.f32.mrb[0].mxu0
        %v2186 = vpop.f32.mrb[0].mxu0
        %v2187 = vadd.f32 0.0, %v2186
        %v2188 = vpop.f32.mrb[0].mxu0
        %2189 = vmatprep.mubr.bf16.mxu0 %v1805
        %2190 = vmatmul.mubr.bf16.gmra.mrb[0].mxu0 %v1635
        %v2191 = vpop.f32.mrb[0].mxu0
        %v2192 = vadd.f32 0.0, %v2191
        %v2193 = vpop.f32.mrb[0].mxu0
        %v2194 = vpop.f32.mrb[0].mxu0
        %v2195 = vadd.f32 0.0, %v2194
        %v2196 = vpop.f32.mrb[0].mxu0
        %2197 = vmatprep.mubr.bf16.mxu0 %v1808
        %2198 = vmatmul.mubr.bf16.gmra.mrb[0].mxu0 %v1639
        %v2199 = vpop.f32.mrb[0].mxu0
        %v2200 = vadd.f32 0.0, %v2199
        %v2201 = vpop.f32.mrb[0].mxu0
        %v2202 = vpop.f32.mrb[0].mxu0
        %v2203 = vadd.f32 0.0, %v2202
        %v2204 = vpop.f32.mrb[0].mxu0
        %2205 = vmatprep.mubr.bf16.mxu0 %v1811
        %2206 = vmatmul.mubr.bf16.gmra.mrb[0].mxu0 %v1643
        %v2207 = vpop.f32.mrb[0].mxu0
        %v2208 = vadd.f32 0.0, %v2207
        %v2209 = vpop.f32.mrb[0].mxu0
        %v2210 = vpop.f32.mrb[0].mxu0
        %v2211 = vadd.f32 0.0, %v2210
        %v2212 = vpop.f32.mrb[0].mxu0
        %2213 = vmatprep.mubr.bf16.mxu0 %v1814
        %2214 = vmatmul.mubr.bf16.gmra.mrb[0].mxu0 %v1647
        %v2215 = vpop.f32.mrb[0].mxu0
        %v2216 = vadd.f32 0.0, %v2215
        %v2217 = vpop.f32.mrb[0].mxu0
        %v2218 = vpop.f32.mrb[0].mxu0
        %v2219 = vadd.f32 0.0, %v2218
        %v2220 = vpop.f32.mrb[0].mxu0
        %2221 = vmatprep.mubr.bf16.mxu0 %v1817
        %2222 = vmatmul.mubr.bf16.gmra.mrb[0].mxu0 %v1651
        %v2223 = vpop.f32.mrb[0].mxu0
        %v2224 = vadd.f32 0.0, %v2223
        %v2225 = vpop.f32.mrb[0].mxu0
        %v2226 = vpop.f32.mrb[0].mxu0
        %v2227 = vadd.f32 0.0, %v2226
        %v2228 = vpop.f32.mrb[0].mxu0
        %2229 = vmatprep.mubr.bf16.mxu0 %v1820
        %2230 = vmatmul.mubr.bf16.gmra.mrb[0].mxu0 %v1655
        %v2231 = vpop.f32.mrb[0].mxu0
        %v2232 = vadd.f32 0.0, %v2231
        %v2233 = vpop.f32.mrb[0].mxu0
        %v2234 = vpop.f32.mrb[0].mxu0
        %v2235 = vadd.f32 0.0, %v2234
        %v2236 = vpop.f32.mrb[0].mxu0
        %2237 = vmatprep.mubr.bf16.mxu0 %v1823
        %2238 = vmatmul.mubr.bf16.gmra.mrb[0].mxu0 %v1659
        %v2239 = vpop.f32.mrb[0].mxu0
        %v2240 = vadd.f32 0.0, %v2239
        %v2241 = vpop.f32.mrb[0].mxu0
        %v2242 = vpop.f32.mrb[0].mxu0
        %v2243 = vadd.f32 0.0, %v2242
        %v2244 = vpop.f32.mrb[0].mxu0
        %2245 = vmatprep.mubr.bf16.mxu0 %v1826
        %2246 = vmatmul.mubr.bf16.gmra.mrb[0].mxu0 %v1663
        %v2247 = vpop.f32.mrb[0].mxu0
        %v2248 = vadd.f32 0.0, %v2247
        %v2249 = vpop.f32.mrb[0].mxu0
        %v2250 = vpop.f32.mrb[0].mxu0
        %v2251 = vadd.f32 0.0, %v2250
        %v2252 = vpop.f32.mrb[0].mxu0
        %2253 = vmatprep.mubr.bf16.mxu0 %v1829
        %2254 = vmatmul.mubr.bf16.gmra.mrb[0].mxu0 %v1667
        %v2255 = vpop.f32.mrb[0].mxu0
        %v2256 = vadd.f32 0.0, %v2255
        %v2257 = vpop.f32.mrb[0].mxu0
        %v2258 = vpop.f32.mrb[0].mxu0
        %v2259 = vadd.f32 0.0, %v2258
        %v2260 = vpop.f32.mrb[0].mxu0
        %2261 = vmatprep.mubr.bf16.mxu0 %v1832
        %2262 = vmatmul.mubr.bf16.gmra.mrb[0].mxu0 %v1671
        %v2263 = vpop.f32.mrb[0].mxu0
        %v2264 = vadd.f32 0.0, %v2263
        %v2265 = vpop.f32.mrb[0].mxu0
        %v2266 = vpop.f32.mrb[0].mxu0
        %v2267 = vadd.f32 0.0, %v2266
        %v2268 = vpop.f32.mrb[0].mxu0
        %2269 = vmatprep.mubr.bf16.mxu0 %v1835
        %2270 = vmatmul.mubr.bf16.gmra.mrb[0].mxu0 %v1675
        %v2271 = vpop.f32.mrb[0].mxu0
        %v2272 = vadd.f32 0.0, %v2271
        %v2273 = vpop.f32.mrb[0].mxu0
        %v2274 = vpop.f32.mrb[0].mxu0
        %v2275 = vadd.f32 0.0, %v2274
        %v2276 = vpop.f32.mrb[0].mxu0
        %2277 = vmatprep.mubr.bf16.mxu0 %v1838
        %2278 = vmatmul.mubr.bf16.gmra.mrb[0].mxu0 %v1679
        %v2279 = vpop.f32.mrb[0].mxu0
        %v2280 = vadd.f32 0.0, %v2279
        %v2281 = vpop.f32.mrb[0].mxu0
        %v2282 = vpop.f32.mrb[0].mxu0
        %v2283 = vadd.f32 0.0, %v2282
        %v2284 = vpop.f32.mrb[0].mxu0
        %2285 = vmatprep.mubr.bf16.mxu0 %v2131
        %2286 = vmatmul.mubr.bf16.gmra.mrb[0].mxu0 %v1683
        %v2287 = vpop.f32.mrb[0].mxu0
        %v2288 = vadd.f32 0.0, %v2287
        %v2289 = vpop.f32.mrb[0].mxu0
        %v2290 = vpop.f32.mrb[0].mxu0
        %v2291 = vadd.f32 0.0, %v2290
        %v2292 = vpop.f32.mrb[0].mxu0
        %2293 = vdwg.mxu0
        %v2294 = vadd.f32 %v2001, %v2168
        %v2295 = vadd.f32 %v2002, %v2171
        %v2296 = vadd.f32 %v2003, %v2176
        %v2297 = vadd.f32 %v2004, %v2179
        %v2298 = vadd.f32 %v2005, %v2184
        %v2299 = vadd.f32 %v2006, %v2187
        %v2300 = vadd.f32 %v2007, %v2192
        %v2301 = vadd.f32 %v2008, %v2195
        %v2302 = vadd.f32 %v2009, %v2200
        %v2303 = vadd.f32 %v2010, %v2203
        %v2304 = vadd.f32 %v2011, %v2208
        %v2305 = vadd.f32 %v2012, %v2211
        %v2306 = vadd.f32 %v2013, %v2216
        %v2307 = vadd.f32 %v2014, %v2219
        %v2308 = vadd.f32 %v2015, %v2224
        %v2309 = vadd.f32 %v2016, %v2227
        %v2310 = vadd.f32 %v2017, %v2232
        %v2311 = vadd.f32 %v2018, %v2235
        %v2312 = vadd.f32 %v2019, %v2240
        %v2313 = vadd.f32 %v2020, %v2243
        %v2314 = vadd.f32 %v2021, %v2248
        %v2315 = vadd.f32 %v2022, %v2251
        %v2316 = vadd.f32 %v2023, %v2256
        %v2317 = vadd.f32 %v2024, %v2259
        %v2318 = vadd.f32 %v2025, %v2264
        %v2319 = vadd.f32 %v2026, %v2267
        %v2320 = vadd.f32 %v2027, %v2272
        %v2321 = vadd.f32 %v2028, %v2275
        %v2322 = vadd.f32 %v2029, %v2280
        %v2323 = vadd.f32 %v2030, %v2283
        %v2324 = vadd.f32 %v2031, %v2288
        %v2325 = vadd.f32 %v2032, %v2291
        %s2326 = scalar_lea.vmem %s5, 192
        %v2327 = vld [vmem:[%s2326] sm:$0xf]
        %v2328 = vld [vmem:[%s2326 + $0x4] sm:$0xf]
        %v2329 = vld [vmem:[%s2326 + $0x8] sm:$0xf]
        %v2330 = vld [vmem:[%s2326 + $0xc] sm:$0xf]
        %v2331 = vld [vmem:[%s2326 + $0x10] sm:$0xf]
        %v2332 = vld [vmem:[%s2326 + $0x14] sm:$0xf]
        %v2333 = vld [vmem:[%s2326 + $0x18] sm:$0xf]
        %v2334 = vld [vmem:[%s2326 + $0x1c] sm:$0xf]
        %v2335 = vld [vmem:[%s2326 + $0x20] sm:$0xf]
        %v2336 = vld [vmem:[%s2326 + $0x24] sm:$0xf]
        %v2337 = vld [vmem:[%s2326 + $0x28] sm:$0xf]
        %v2338 = vld [vmem:[%s2326 + $0x2c] sm:$0xf]
        %v2339 = vld [vmem:[%s2326 + $0x30] sm:$0xf]
        %v2340 = vld [vmem:[%s2326 + $0x34] sm:$0xf]
        %v2341 = vld [vmem:[%s2326 + $0x38] sm:$0xf]
        %v2342 = vld [vmem:[%s2326 + $0x3c] sm:$0xf]
        %v2343 = vld [vmem:[%s2326 + $0x40] sm:$0xf]
        %v2344 = vld [vmem:[%s2326 + $0x44] sm:$0xf]
        %v2345 = vld [vmem:[%s2326 + $0x48] sm:$0xf]
        %v2346 = vld [vmem:[%s2326 + $0x4c] sm:$0xf]
        %v2347 = vld [vmem:[%s2326 + $0x50] sm:$0xf]
        %v2348 = vld [vmem:[%s2326 + $0x54] sm:$0xf]
        %v2349 = vld [vmem:[%s2326 + $0x58] sm:$0xf]
        %v2350 = vld [vmem:[%s2326 + $0x5c] sm:$0xf]
        %v2375 = vunpack.c.l.b16 %v2327
        %v2376 = vunpack.c.l.b16 %v2328
        %v2377 = vunpack.c.l.b16 %v2329
        %v2378 = vunpack.c.l.b16 %v2330
        %v2379 = vunpack.c.l.b16 %v2331
        %v2380 = vunpack.c.l.b16 %v2332
        %v2381 = vunpack.c.l.b16 %v2333
        %v2382 = vunpack.c.l.b16 %v2334
        %v2383 = vunpack.c.l.b16 %v2335
        %v2384 = vunpack.c.l.b16 %v2336
        %v2385 = vunpack.c.l.b16 %v2337
        %v2386 = vunpack.c.l.b16 %v2338
        %v2387 = vunpack.c.l.b16 %v2339
        %v2388 = vunpack.c.l.b16 %v2340
        %v2389 = vunpack.c.l.b16 %v2341
        %v2390 = vunpack.c.l.b16 %v2342
        %v2391 = vunpack.c.l.b16 %v2343
        %v2392 = vunpack.c.l.b16 %v2344
        %v2393 = vunpack.c.l.b16 %v2345
        %v2394 = vunpack.c.l.b16 %v2346
        %v2395 = vunpack.c.l.b16 %v2347
        %v2396 = vunpack.c.l.b16 %v2348
        %v2397 = vunpack.c.l.b16 %v2349
        %v2398 = vunpack.c.l.b16 %v2350
        %v2399 = vpack.c.b16 %v2376, %v2375
        %v2400 = vpack.c.b16 %v2378, %v2377
        %v2401 = vpack.c.b16 %v2380, %v2379
        %v2402 = vpack.c.b16 %v2382, %v2381
        %v2403 = vpack.c.b16 %v2384, %v2383
        %v2404 = vpack.c.b16 %v2386, %v2385
        %v2405 = vpack.c.b16 %v2388, %v2387
        %v2406 = vpack.c.b16 %v2390, %v2389
        %v2407 = vpack.c.b16 %v2392, %v2391
        %v2408 = vpack.c.b16 %v2394, %v2393
        %v2409 = vpack.c.b16 %v2396, %v2395
        %v2410 = vpack.c.b16 %v2398, %v2397
        %v2424 = vsel %vm637, %v1562, 0
        %2426 = vmatprep.subr.bf16.mxu0 0
        %2427 = vmatpush1.bf16.msra.mxu0 %v2399
        %2428 = vmatprep.subr.bf16.mxu0 0
        %2429 = vmatpush1.bf16.msra.mxu0 %v2400
        %2430 = vmatprep.subr.bf16.mxu0 0
        %2431 = vmatpush1.bf16.msra.mxu0 %v2401
        %2432 = vmatprep.subr.bf16.mxu0 0
        %2433 = vmatpush1.bf16.msra.mxu0 %v2402
        %2434 = vmatprep.subr.bf16.mxu0 0
        %2435 = vmatpush1.bf16.msra.mxu0 %v2403
        %2436 = vmatprep.subr.bf16.mxu0 0
        %2437 = vmatpush1.bf16.msra.mxu0 %v2404
        %2438 = vmatprep.subr.bf16.mxu0 0
        %2439 = vmatpush1.bf16.msra.mxu0 %v2405
        %2440 = vmatprep.subr.bf16.mxu0 0
        %2441 = vmatpush1.bf16.msra.mxu0 %v2406
        %2442 = vmatprep.subr.bf16.mxu0 0
        %2443 = vmatpush1.bf16.msra.mxu0 %v2407
        %2444 = vmatprep.subr.bf16.mxu0 0
        %2445 = vmatpush1.bf16.msra.mxu0 %v2408
        %2446 = vmatprep.subr.bf16.mxu0 0
        %2447 = vmatpush1.bf16.msra.mxu0 %v2409
        %2448 = vmatprep.subr.bf16.mxu0 0
        %2449 = vmatpush1.bf16.msra.mxu0 %v2410
        %2450 = vmatprep.subr.bf16.mxu0 0
        %2451 = vmatpush1.bf16.msra.mxu0 0
        %2452 = vmatprep.subr.bf16.mxu0 0
        %2453 = vmatpush1.bf16.msra.mxu0 0
        %2454 = vmatprep.subr.bf16.mxu0 0
        %2455 = vmatpush1.bf16.msra.mxu0 0
        %2456 = vmatprep.subr.bf16.mxu0 0
        %2457 = vmatpush1.bf16.msra.mxu0 0
        %2458 = vmatprep.mubr.bf16.mxu0 %v1799
        %2459 = vmatmul.mubr.bf16.gmra.mrb[0].mxu0 %v1627
        %v2460 = vpop.f32.mrb[0].mxu0
        %v2461 = vadd.f32 0.0, %v2460
        %v2462 = vpop.f32.mrb[0].mxu0
        %v2463 = vpop.f32.mrb[0].mxu0
        %v2464 = vadd.f32 0.0, %v2463
        %v2465 = vpop.f32.mrb[0].mxu0
        %2466 = vmatprep.mubr.bf16.mxu0 %v1802
        %2467 = vmatmul.mubr.bf16.gmra.mrb[0].mxu0 %v1631
        %v2468 = vpop.f32.mrb[0].mxu0
        %v2469 = vadd.f32 0.0, %v2468
        %v2470 = vpop.f32.mrb[0].mxu0
        %v2471 = vpop.f32.mrb[0].mxu0
        %v2472 = vadd.f32 0.0, %v2471
        %v2473 = vpop.f32.mrb[0].mxu0
        %2474 = vmatprep.mubr.bf16.mxu0 %v1805
        %2475 = vmatmul.mubr.bf16.gmra.mrb[0].mxu0 %v1635
        %v2476 = vpop.f32.mrb[0].mxu0
        %v2477 = vadd.f32 0.0, %v2476
        %v2478 = vpop.f32.mrb[0].mxu0
        %v2479 = vpop.f32.mrb[0].mxu0
        %v2480 = vadd.f32 0.0, %v2479
        %v2481 = vpop.f32.mrb[0].mxu0
        %2482 = vmatprep.mubr.bf16.mxu0 %v1808
        %2483 = vmatmul.mubr.bf16.gmra.mrb[0].mxu0 %v1639
        %v2484 = vpop.f32.mrb[0].mxu0
        %v2485 = vadd.f32 0.0, %v2484
        %v2486 = vpop.f32.mrb[0].mxu0
        %v2487 = vpop.f32.mrb[0].mxu0
        %v2488 = vadd.f32 0.0, %v2487
        %v2489 = vpop.f32.mrb[0].mxu0
        %2490 = vmatprep.mubr.bf16.mxu0 %v1811
        %2491 = vmatmul.mubr.bf16.gmra.mrb[0].mxu0 %v1643
        %v2492 = vpop.f32.mrb[0].mxu0
        %v2493 = vadd.f32 0.0, %v2492
        %v2494 = vpop.f32.mrb[0].mxu0
        %v2495 = vpop.f32.mrb[0].mxu0
        %v2496 = vadd.f32 0.0, %v2495
        %v2497 = vpop.f32.mrb[0].mxu0
        %2498 = vmatprep.mubr.bf16.mxu0 %v1814
        %2499 = vmatmul.mubr.bf16.gmra.mrb[0].mxu0 %v1647
        %v2500 = vpop.f32.mrb[0].mxu0
        %v2501 = vadd.f32 0.0, %v2500
        %v2502 = vpop.f32.mrb[0].mxu0
        %v2503 = vpop.f32.mrb[0].mxu0
        %v2504 = vadd.f32 0.0, %v2503
        %v2505 = vpop.f32.mrb[0].mxu0
        %2506 = vmatprep.mubr.bf16.mxu0 %v1817
        %2507 = vmatmul.mubr.bf16.gmra.mrb[0].mxu0 %v1651
        %v2508 = vpop.f32.mrb[0].mxu0
        %v2509 = vadd.f32 0.0, %v2508
        %v2510 = vpop.f32.mrb[0].mxu0
        %v2511 = vpop.f32.mrb[0].mxu0
        %v2512 = vadd.f32 0.0, %v2511
        %v2513 = vpop.f32.mrb[0].mxu0
        %2514 = vmatprep.mubr.bf16.mxu0 %v1820
        %2515 = vmatmul.mubr.bf16.gmra.mrb[0].mxu0 %v1655
        %v2516 = vpop.f32.mrb[0].mxu0
        %v2517 = vadd.f32 0.0, %v2516
        %v2518 = vpop.f32.mrb[0].mxu0
        %v2519 = vpop.f32.mrb[0].mxu0
        %v2520 = vadd.f32 0.0, %v2519
        %v2521 = vpop.f32.mrb[0].mxu0
        %2522 = vmatprep.mubr.bf16.mxu0 %v1823
        %2523 = vmatmul.mubr.bf16.gmra.mrb[0].mxu0 %v1659
        %v2524 = vpop.f32.mrb[0].mxu0
        %v2525 = vadd.f32 0.0, %v2524
        %v2526 = vpop.f32.mrb[0].mxu0
        %v2527 = vpop.f32.mrb[0].mxu0
        %v2528 = vadd.f32 0.0, %v2527
        %v2529 = vpop.f32.mrb[0].mxu0
        %2530 = vmatprep.mubr.bf16.mxu0 %v1826
        %2531 = vmatmul.mubr.bf16.gmra.mrb[0].mxu0 %v1663
        %v2532 = vpop.f32.mrb[0].mxu0
        %v2533 = vadd.f32 0.0, %v2532
        %v2534 = vpop.f32.mrb[0].mxu0
        %v2535 = vpop.f32.mrb[0].mxu0
        %v2536 = vadd.f32 0.0, %v2535
        %v2537 = vpop.f32.mrb[0].mxu0
        %2538 = vmatprep.mubr.bf16.mxu0 %v1829
        %2539 = vmatmul.mubr.bf16.gmra.mrb[0].mxu0 %v1667
        %v2540 = vpop.f32.mrb[0].mxu0
        %v2541 = vadd.f32 0.0, %v2540
        %v2542 = vpop.f32.mrb[0].mxu0
        %v2543 = vpop.f32.mrb[0].mxu0
        %v2544 = vadd.f32 0.0, %v2543
        %v2545 = vpop.f32.mrb[0].mxu0
        %2546 = vmatprep.mubr.bf16.mxu0 %v1832
        %2547 = vmatmul.mubr.bf16.gmra.mrb[0].mxu0 %v1671
        %v2548 = vpop.f32.mrb[0].mxu0
        %v2549 = vadd.f32 0.0, %v2548
        %v2550 = vpop.f32.mrb[0].mxu0
        %v2551 = vpop.f32.mrb[0].mxu0
        %v2552 = vadd.f32 0.0, %v2551
        %v2553 = vpop.f32.mrb[0].mxu0
        %2554 = vmatprep.mubr.bf16.mxu0 %v1835
        %2555 = vmatmul.mubr.bf16.gmra.mrb[0].mxu0 %v1675
        %v2556 = vpop.f32.mrb[0].mxu0
        %v2557 = vadd.f32 0.0, %v2556
        %v2558 = vpop.f32.mrb[0].mxu0
        %v2559 = vpop.f32.mrb[0].mxu0
        %v2560 = vadd.f32 0.0, %v2559
        %v2561 = vpop.f32.mrb[0].mxu0
        %2562 = vmatprep.mubr.bf16.mxu0 %v1838
        %2563 = vmatmul.mubr.bf16.gmra.mrb[0].mxu0 %v1679
        %v2564 = vpop.f32.mrb[0].mxu0
        %v2565 = vadd.f32 0.0, %v2564
        %v2566 = vpop.f32.mrb[0].mxu0
        %v2567 = vpop.f32.mrb[0].mxu0
        %v2568 = vadd.f32 0.0, %v2567
        %v2569 = vpop.f32.mrb[0].mxu0
        %2570 = vmatprep.mubr.bf16.mxu0 %v2131
        %2571 = vmatmul.mubr.bf16.gmra.mrb[0].mxu0 %v1683
        %v2572 = vpop.f32.mrb[0].mxu0
        %v2573 = vadd.f32 0.0, %v2572
        %v2574 = vpop.f32.mrb[0].mxu0
        %v2575 = vpop.f32.mrb[0].mxu0
        %v2576 = vadd.f32 0.0, %v2575
        %v2577 = vpop.f32.mrb[0].mxu0
        %2578 = vmatprep.mubr.bf16.mxu0 %v2424
        %2579 = vmatmul.mubr.bf16.gmra.mrb[0].mxu0 %v1687
        %v2580 = vpop.f32.mrb[0].mxu0
        %v2581 = vadd.f32 0.0, %v2580
        %v2582 = vpop.f32.mrb[0].mxu0
        %v2583 = vpop.f32.mrb[0].mxu0
        %v2584 = vadd.f32 0.0, %v2583
        %v2585 = vpop.f32.mrb[0].mxu0
        %2586 = vdwg.mxu0
        %v2587 = vadd.f32 %v2294, %v2461
        %v2588 = vadd.f32 %v2295, %v2464
        %v2589 = vadd.f32 %v2296, %v2469
        %v2590 = vadd.f32 %v2297, %v2472
        %v2591 = vadd.f32 %v2298, %v2477
        %v2592 = vadd.f32 %v2299, %v2480
        %v2593 = vadd.f32 %v2300, %v2485
        %v2594 = vadd.f32 %v2301, %v2488
        %v2595 = vadd.f32 %v2302, %v2493
        %v2596 = vadd.f32 %v2303, %v2496
        %v2597 = vadd.f32 %v2304, %v2501
        %v2598 = vadd.f32 %v2305, %v2504
        %v2599 = vadd.f32 %v2306, %v2509
        %v2600 = vadd.f32 %v2307, %v2512
        %v2601 = vadd.f32 %v2308, %v2517
        %v2602 = vadd.f32 %v2309, %v2520
        %v2603 = vadd.f32 %v2310, %v2525
        %v2604 = vadd.f32 %v2311, %v2528
        %v2605 = vadd.f32 %v2312, %v2533
        %v2606 = vadd.f32 %v2313, %v2536
        %v2607 = vadd.f32 %v2314, %v2541
        %v2608 = vadd.f32 %v2315, %v2544
        %v2609 = vadd.f32 %v2316, %v2549
        %v2610 = vadd.f32 %v2317, %v2552
        %v2611 = vadd.f32 %v2318, %v2557
        %v2612 = vadd.f32 %v2319, %v2560
        %v2613 = vadd.f32 %v2320, %v2565
        %v2614 = vadd.f32 %v2321, %v2568
        %v2615 = vadd.f32 %v2322, %v2573
        %v2616 = vadd.f32 %v2323, %v2576
        %v2617 = vadd.f32 %v2324, %v2581
        %v2618 = vadd.f32 %v2325, %v2584
        %v2619 = vld [vmem:[%s509] sm:$0xff]
        %v2620 = vld [vmem:[%s509 + $0x8] sm:$0xff]
        %v2621 = vld [vmem:[%s509 + $0x10] sm:$0xff]
        %v2622 = vld [vmem:[%s509 + $0x18] sm:$0xff]
        %v2623 = vld [vmem:[%s509 + $0x20] sm:$0xff]
        %v2624 = vld [vmem:[%s509 + $0x28] sm:$0xff]
        %v2625 = vld [vmem:[%s509 + $0x30] sm:$0xff]
        %v2626 = vld [vmem:[%s509 + $0x38] sm:$0xff]
        %v2627 = vld [vmem:[%s509 + $0x40] sm:$0xff]
        %v2628 = vld [vmem:[%s509 + $0x48] sm:$0xff]
        %v2629 = vld [vmem:[%s509 + $0x50] sm:$0xff]
        %v2630 = vld [vmem:[%s509 + $0x58] sm:$0xff]
        %v2631 = vld [vmem:[%s509 + $0x60] sm:$0xff]
        %v2632 = vld [vmem:[%s509 + $0x68] sm:$0xff]
        %v2633 = vld [vmem:[%s509 + $0x70] sm:$0xff]
        %v2634 = vld [vmem:[%s509 + $0x78] sm:$0xff]
        %v2635 = vld [vmem:[%s509 + $0x80] sm:$0xff]
        %v2636 = vld [vmem:[%s509 + $0x88] sm:$0xff]
        %v2637 = vld [vmem:[%s509 + $0x90] sm:$0xff]
        %v2638 = vld [vmem:[%s509 + $0x98] sm:$0xff]
        %v2639 = vld [vmem:[%s509 + $0xa0] sm:$0xff]
        %v2640 = vld [vmem:[%s509 + $0xa8] sm:$0xff]
        %v2641 = vld [vmem:[%s509 + $0xb0] sm:$0xff]
        %v2642 = vld [vmem:[%s509 + $0xb8] sm:$0xff]
        %v2643 = vld [vmem:[%s509 + $0xc0] sm:$0xff]
        %v2644 = vld [vmem:[%s509 + $0xc8] sm:$0xff]
        %v2645 = vld [vmem:[%s509 + $0xd0] sm:$0xff]
        %v2646 = vld [vmem:[%s509 + $0xd8] sm:$0xff]
        %v2647 = vld [vmem:[%s509 + $0xe0] sm:$0xff]
        %v2648 = vld [vmem:[%s509 + $0xe8] sm:$0xff]
        %v2649 = vld [vmem:[%s509 + $0xf0] sm:$0xff]
        %v2650 = vld [vmem:[%s509 + $0xf8] sm:$0xff]
        %v2651 = vadd.f32 %v2619, %v2587
        %v2652 = vadd.f32 %v2620, %v2588
        %v2653 = vadd.f32 %v2621, %v2589
        %v2654 = vadd.f32 %v2622, %v2590
        %v2655 = vadd.f32 %v2623, %v2591
        %v2656 = vadd.f32 %v2624, %v2592
        %v2657 = vadd.f32 %v2625, %v2593
        %v2658 = vadd.f32 %v2626, %v2594
        %v2659 = vadd.f32 %v2627, %v2595
        %v2660 = vadd.f32 %v2628, %v2596
        %v2661 = vadd.f32 %v2629, %v2597
        %v2662 = vadd.f32 %v2630, %v2598
        %v2663 = vadd.f32 %v2631, %v2599
        %v2664 = vadd.f32 %v2632, %v2600
        %v2665 = vadd.f32 %v2633, %v2601
        %v2666 = vadd.f32 %v2634, %v2602
        %v2667 = vadd.f32 %v2635, %v2603
        %v2668 = vadd.f32 %v2636, %v2604
        %v2669 = vadd.f32 %v2637, %v2605
        %v2670 = vadd.f32 %v2638, %v2606
        %v2671 = vadd.f32 %v2639, %v2607
        %v2672 = vadd.f32 %v2640, %v2608
        %v2673 = vadd.f32 %v2641, %v2609
        %v2674 = vadd.f32 %v2642, %v2610
        %v2675 = vadd.f32 %v2643, %v2611
        %v2676 = vadd.f32 %v2644, %v2612
        %v2677 = vadd.f32 %v2645, %v2613
        %v2678 = vadd.f32 %v2646, %v2614
        %v2679 = vadd.f32 %v2647, %v2615
        %v2680 = vadd.f32 %v2648, %v2616
        %v2681 = vadd.f32 %v2649, %v2617
        %v2682 = vadd.f32 %v2650, %v2618
        %v2683 = vsel %vm637, %v2651, 0.0
        %2684 = vadd.xlane.f32.xlu0 %v2683
        %v2685 = vpop.xlane.xlu0 %2684
        %v2686 = vsel %vm637, %v2652, 0.0
        %2687 = vadd.xlane.f32.xlu0 %v2686
        %v2688 = vpop.xlane.xlu0 %2687
        %v2689 = vsel %vm637, %v2653, 0.0
        %2690 = vadd.xlane.f32.xlu0 %v2689
        %v2691 = vpop.xlane.xlu0 %2690
        %v2692 = vsel %vm637, %v2654, 0.0
        %2693 = vadd.xlane.f32.xlu0 %v2692
        %v2694 = vpop.xlane.xlu0 %2693
        %v2695 = vsel %vm637, %v2655, 0.0
        %2696 = vadd.xlane.f32.xlu0 %v2695
        %v2697 = vpop.xlane.xlu0 %2696
        %v2698 = vsel %vm637, %v2656, 0.0
        %2699 = vadd.xlane.f32.xlu0 %v2698
        %v2700 = vpop.xlane.xlu0 %2699
        %v2701 = vsel %vm637, %v2657, 0.0
        %2702 = vadd.xlane.f32.xlu0 %v2701
        %v2703 = vpop.xlane.xlu0 %2702
        %v2704 = vsel %vm637, %v2658, 0.0
        %2705 = vadd.xlane.f32.xlu0 %v2704
        %v2706 = vpop.xlane.xlu0 %2705
        %v2707 = vsel %vm637, %v2659, 0.0
        %2708 = vadd.xlane.f32.xlu0 %v2707
        %v2709 = vpop.xlane.xlu0 %2708
        %v2710 = vsel %vm637, %v2660, 0.0
        %2711 = vadd.xlane.f32.xlu0 %v2710
        %v2712 = vpop.xlane.xlu0 %2711
        %v2713 = vsel %vm637, %v2661, 0.0
        %2714 = vadd.xlane.f32.xlu0 %v2713
        %v2715 = vpop.xlane.xlu0 %2714
        %v2716 = vsel %vm637, %v2662, 0.0
        %2717 = vadd.xlane.f32.xlu0 %v2716
        %v2718 = vpop.xlane.xlu0 %2717
        %v2719 = vsel %vm637, %v2663, 0.0
        %2720 = vadd.xlane.f32.xlu0 %v2719
        %v2721 = vpop.xlane.xlu0 %2720
        %v2722 = vsel %vm637, %v2664, 0.0
        %2723 = vadd.xlane.f32.xlu0 %v2722
        %v2724 = vpop.xlane.xlu0 %2723
        %v2725 = vsel %vm637, %v2665, 0.0
        %2726 = vadd.xlane.f32.xlu0 %v2725
        %v2727 = vpop.xlane.xlu0 %2726
        %v2728 = vsel %vm637, %v2666, 0.0
        %2729 = vadd.xlane.f32.xlu0 %v2728
        %v2730 = vpop.xlane.xlu0 %2729
        %v2731 = vsel %vm637, %v2667, 0.0
        %2732 = vadd.xlane.f32.xlu0 %v2731
        %v2733 = vpop.xlane.xlu0 %2732
        %v2734 = vsel %vm637, %v2668, 0.0
        %2735 = vadd.xlane.f32.xlu0 %v2734
        %v2736 = vpop.xlane.xlu0 %2735
        %v2737 = vsel %vm637, %v2669, 0.0
        %2738 = vadd.xlane.f32.xlu0 %v2737
        %v2739 = vpop.xlane.xlu0 %2738
        %v2740 = vsel %vm637, %v2670, 0.0
        %2741 = vadd.xlane.f32.xlu0 %v2740
        %v2742 = vpop.xlane.xlu0 %2741
        %v2743 = vsel %vm637, %v2671, 0.0
        %2744 = vadd.xlane.f32.xlu0 %v2743
        %v2745 = vpop.xlane.xlu0 %2744
        %v2746 = vsel %vm637, %v2672, 0.0
        %2747 = vadd.xlane.f32.xlu0 %v2746
        %v2748 = vpop.xlane.xlu0 %2747
        %v2749 = vsel %vm637, %v2673, 0.0
        %2750 = vadd.xlane.f32.xlu0 %v2749
        %v2751 = vpop.xlane.xlu0 %2750
        %v2752 = vsel %vm637, %v2674, 0.0
        %2753 = vadd.xlane.f32.xlu0 %v2752
        %v2754 = vpop.xlane.xlu0 %2753
        %v2755 = vsel %vm637, %v2675, 0.0
        %2756 = vadd.xlane.f32.xlu0 %v2755
        %v2757 = vpop.xlane.xlu0 %2756
        %v2758 = vsel %vm637, %v2676, 0.0
        %2759 = vadd.xlane.f32.xlu0 %v2758
        %v2760 = vpop.xlane.xlu0 %2759
        %v2761 = vsel %vm637, %v2677, 0.0
        %2762 = vadd.xlane.f32.xlu0 %v2761
        %v2763 = vpop.xlane.xlu0 %2762
        %v2764 = vsel %vm637, %v2678, 0.0
        %2765 = vadd.xlane.f32.xlu0 %v2764
        %v2766 = vpop.xlane.xlu0 %2765
        %v2767 = vsel %vm637, %v2679, 0.0
        %2768 = vadd.xlane.f32.xlu0 %v2767
        %v2769 = vpop.xlane.xlu0 %2768
        %v2770 = vsel %vm637, %v2680, 0.0
        %2771 = vadd.xlane.f32.xlu0 %v2770
        %v2772 = vpop.xlane.xlu0 %2771
        %v2773 = vsel %vm637, %v2681, 0.0
        %2774 = vadd.xlane.f32.xlu0 %v2773
        %v2775 = vpop.xlane.xlu0 %2774
        %v2776 = vsel %vm637, %v2682, 0.0
        %2777 = vadd.xlane.f32.xlu0 %v2776
        %v2778 = vpop.xlane.xlu0 %2777
        %v2779 = vmul.f32 %v2685, %v734
        %v2780 = vmul.f32 %v2688, %v734
        %v2781 = vmul.f32 %v2691, %v734
        %v2782 = vmul.f32 %v2694, %v734
        %v2783 = vmul.f32 %v2697, %v734
        %v2784 = vmul.f32 %v2700, %v734
        %v2785 = vmul.f32 %v2703, %v734
        %v2786 = vmul.f32 %v2706, %v734
        %v2787 = vmul.f32 %v2709, %v734
        %v2788 = vmul.f32 %v2712, %v734
        %v2789 = vmul.f32 %v2715, %v734
        %v2790 = vmul.f32 %v2718, %v734
        %v2791 = vmul.f32 %v2721, %v734
        %v2792 = vmul.f32 %v2724, %v734
        %v2793 = vmul.f32 %v2727, %v734
        %v2794 = vmul.f32 %v2730, %v734
        %v2795 = vmul.f32 %v2733, %v734
        %v2796 = vmul.f32 %v2736, %v734
        %v2797 = vmul.f32 %v2739, %v734
        %v2798 = vmul.f32 %v2742, %v734
        %v2799 = vmul.f32 %v2745, %v734
        %v2800 = vmul.f32 %v2748, %v734
        %v2801 = vmul.f32 %v2751, %v734
        %v2802 = vmul.f32 %v2754, %v734
        %v2803 = vmul.f32 %v2757, %v734
        %v2804 = vmul.f32 %v2760, %v734
        %v2805 = vmul.f32 %v2763, %v734
        %v2806 = vmul.f32 %v2766, %v734
        %v2807 = vmul.f32 %v2769, %v734
        %v2808 = vmul.f32 %v2772, %v734
        %v2809 = vmul.f32 %v2775, %v734
        %v2810 = vmul.f32 %v2778, %v734
        %v2811 = vsub.f32 %v2651, %v2779
        %v2812 = vsub.f32 %v2652, %v2780
        %v2813 = vsub.f32 %v2653, %v2781
        %v2814 = vsub.f32 %v2654, %v2782
        %v2815 = vsub.f32 %v2655, %v2783
        %v2816 = vsub.f32 %v2656, %v2784
        %v2817 = vsub.f32 %v2657, %v2785
        %v2818 = vsub.f32 %v2658, %v2786
        %v2819 = vsub.f32 %v2659, %v2787
        %v2820 = vsub.f32 %v2660, %v2788
        %v2821 = vsub.f32 %v2661, %v2789
        %v2822 = vsub.f32 %v2662, %v2790
        %v2823 = vsub.f32 %v2663, %v2791
        %v2824 = vsub.f32 %v2664, %v2792
        %v2825 = vsub.f32 %v2665, %v2793
        %v2826 = vsub.f32 %v2666, %v2794
        %v2827 = vsub.f32 %v2667, %v2795
        %v2828 = vsub.f32 %v2668, %v2796
        %v2829 = vsub.f32 %v2669, %v2797
        %v2830 = vsub.f32 %v2670, %v2798
        %v2831 = vsub.f32 %v2671, %v2799
        %v2832 = vsub.f32 %v2672, %v2800
        %v2833 = vsub.f32 %v2673, %v2801
        %v2834 = vsub.f32 %v2674, %v2802
        %v2835 = vsub.f32 %v2675, %v2803
        %v2836 = vsub.f32 %v2676, %v2804
        %v2837 = vsub.f32 %v2677, %v2805
        %v2838 = vsub.f32 %v2678, %v2806
        %v2839 = vsub.f32 %v2679, %v2807
        %v2840 = vsub.f32 %v2680, %v2808
        %v2841 = vsub.f32 %v2681, %v2809
        %v2842 = vsub.f32 %v2682, %v2810
        %v2843 = vmul.f32 %v2811, %v2811
        %v2844 = vmul.f32 %v2812, %v2812
        %v2845 = vmul.f32 %v2813, %v2813
        %v2846 = vmul.f32 %v2814, %v2814
        %v2847 = vmul.f32 %v2815, %v2815
        %v2848 = vmul.f32 %v2816, %v2816
        %v2849 = vmul.f32 %v2817, %v2817
        %v2850 = vmul.f32 %v2818, %v2818
        %v2851 = vmul.f32 %v2819, %v2819
        %v2852 = vmul.f32 %v2820, %v2820
        %v2853 = vmul.f32 %v2821, %v2821
        %v2854 = vmul.f32 %v2822, %v2822
        %v2855 = vmul.f32 %v2823, %v2823
        %v2856 = vmul.f32 %v2824, %v2824
        %v2857 = vmul.f32 %v2825, %v2825
        %v2858 = vmul.f32 %v2826, %v2826
        %v2859 = vmul.f32 %v2827, %v2827
        %v2860 = vmul.f32 %v2828, %v2828
        %v2861 = vmul.f32 %v2829, %v2829
        %v2862 = vmul.f32 %v2830, %v2830
        %v2863 = vmul.f32 %v2831, %v2831
        %v2864 = vmul.f32 %v2832, %v2832
        %v2865 = vmul.f32 %v2833, %v2833
        %v2866 = vmul.f32 %v2834, %v2834
        %v2867 = vmul.f32 %v2835, %v2835
        %v2868 = vmul.f32 %v2836, %v2836
        %v2869 = vmul.f32 %v2837, %v2837
        %v2870 = vmul.f32 %v2838, %v2838
        %v2871 = vmul.f32 %v2839, %v2839
        %v2872 = vmul.f32 %v2840, %v2840
        %v2873 = vmul.f32 %v2841, %v2841
        %v2874 = vmul.f32 %v2842, %v2842
        %v2875 = vsel %vm637, %v2843, 0.0
        %2876 = vadd.xlane.f32.xlu0 %v2875
        %v2877 = vpop.xlane.xlu0 %2876
        %v2878 = vsel %vm637, %v2844, 0.0
        %2879 = vadd.xlane.f32.xlu0 %v2878
        %v2880 = vpop.xlane.xlu0 %2879
        %v2881 = vsel %vm637, %v2845, 0.0
        %2882 = vadd.xlane.f32.xlu0 %v2881
        %v2883 = vpop.xlane.xlu0 %2882
        %v2884 = vsel %vm637, %v2846, 0.0
        %2885 = vadd.xlane.f32.xlu0 %v2884
        %v2886 = vpop.xlane.xlu0 %2885
        %v2887 = vsel %vm637, %v2847, 0.0
        %2888 = vadd.xlane.f32.xlu0 %v2887
        %v2889 = vpop.xlane.xlu0 %2888
        %v2890 = vsel %vm637, %v2848, 0.0
        %2891 = vadd.xlane.f32.xlu0 %v2890
        %v2892 = vpop.xlane.xlu0 %2891
        %v2893 = vsel %vm637, %v2849, 0.0
        %2894 = vadd.xlane.f32.xlu0 %v2893
        %v2895 = vpop.xlane.xlu0 %2894
        %v2896 = vsel %vm637, %v2850, 0.0
        %2897 = vadd.xlane.f32.xlu0 %v2896
        %v2898 = vpop.xlane.xlu0 %2897
        %v2899 = vsel %vm637, %v2851, 0.0
        %2900 = vadd.xlane.f32.xlu0 %v2899
        %v2901 = vpop.xlane.xlu0 %2900
        %v2902 = vsel %vm637, %v2852, 0.0
        %2903 = vadd.xlane.f32.xlu0 %v2902
        %v2904 = vpop.xlane.xlu0 %2903
        %v2905 = vsel %vm637, %v2853, 0.0
        %2906 = vadd.xlane.f32.xlu0 %v2905
        %v2907 = vpop.xlane.xlu0 %2906
        %v2908 = vsel %vm637, %v2854, 0.0
        %2909 = vadd.xlane.f32.xlu0 %v2908
        %v2910 = vpop.xlane.xlu0 %2909
        %v2911 = vsel %vm637, %v2855, 0.0
        %2912 = vadd.xlane.f32.xlu0 %v2911
        %v2913 = vpop.xlane.xlu0 %2912
        %v2914 = vsel %vm637, %v2856, 0.0
        %2915 = vadd.xlane.f32.xlu0 %v2914
        %v2916 = vpop.xlane.xlu0 %2915
        %v2917 = vsel %vm637, %v2857, 0.0
        %2918 = vadd.xlane.f32.xlu0 %v2917
        %v2919 = vpop.xlane.xlu0 %2918
        %v2920 = vsel %vm637, %v2858, 0.0
        %2921 = vadd.xlane.f32.xlu0 %v2920
        %v2922 = vpop.xlane.xlu0 %2921
        %v2923 = vsel %vm637, %v2859, 0.0
        %2924 = vadd.xlane.f32.xlu0 %v2923
        %v2925 = vpop.xlane.xlu0 %2924
        %v2926 = vsel %vm637, %v2860, 0.0
        %2927 = vadd.xlane.f32.xlu0 %v2926
        %v2928 = vpop.xlane.xlu0 %2927
        %v2929 = vsel %vm637, %v2861, 0.0
        %2930 = vadd.xlane.f32.xlu0 %v2929
        %v2931 = vpop.xlane.xlu0 %2930
        %v2932 = vsel %vm637, %v2862, 0.0
        %2933 = vadd.xlane.f32.xlu0 %v2932
        %v2934 = vpop.xlane.xlu0 %2933
        %v2935 = vsel %vm637, %v2863, 0.0
        %2936 = vadd.xlane.f32.xlu0 %v2935
        %v2937 = vpop.xlane.xlu0 %2936
        %v2938 = vsel %vm637, %v2864, 0.0
        %2939 = vadd.xlane.f32.xlu0 %v2938
        %v2940 = vpop.xlane.xlu0 %2939
        %v2941 = vsel %vm637, %v2865, 0.0
        %2942 = vadd.xlane.f32.xlu0 %v2941
        %v2943 = vpop.xlane.xlu0 %2942
        %v2944 = vsel %vm637, %v2866, 0.0
        %2945 = vadd.xlane.f32.xlu0 %v2944
        %v2946 = vpop.xlane.xlu0 %2945
        %v2947 = vsel %vm637, %v2867, 0.0
        %2948 = vadd.xlane.f32.xlu0 %v2947
        %v2949 = vpop.xlane.xlu0 %2948
        %v2950 = vsel %vm637, %v2868, 0.0
        %2951 = vadd.xlane.f32.xlu0 %v2950
        %v2952 = vpop.xlane.xlu0 %2951
        %v2953 = vsel %vm637, %v2869, 0.0
        %2954 = vadd.xlane.f32.xlu0 %v2953
        %v2955 = vpop.xlane.xlu0 %2954
        %v2956 = vsel %vm637, %v2870, 0.0
        %2957 = vadd.xlane.f32.xlu0 %v2956
        %v2958 = vpop.xlane.xlu0 %2957
        %v2959 = vsel %vm637, %v2871, 0.0
        %2960 = vadd.xlane.f32.xlu0 %v2959
        %v2961 = vpop.xlane.xlu0 %2960
        %v2962 = vsel %vm637, %v2872, 0.0
        %2963 = vadd.xlane.f32.xlu0 %v2962
        %v2964 = vpop.xlane.xlu0 %2963
        %v2965 = vsel %vm637, %v2873, 0.0
        %2966 = vadd.xlane.f32.xlu0 %v2965
        %v2967 = vpop.xlane.xlu0 %2966
        %v2968 = vsel %vm637, %v2874, 0.0
        %2969 = vadd.xlane.f32.xlu0 %v2968
        %v2970 = vpop.xlane.xlu0 %2969
        %v2971 = vmul.f32 %v2877, %v734
        %v2972 = vmul.f32 %v2880, %v734
        %v2973 = vmul.f32 %v2883, %v734
        %v2974 = vmul.f32 %v2886, %v734
        %v2975 = vmul.f32 %v2889, %v734
        %v2976 = vmul.f32 %v2892, %v734
        %v2977 = vmul.f32 %v2895, %v734
        %v2978 = vmul.f32 %v2898, %v734
        %v2979 = vmul.f32 %v2901, %v734
        %v2980 = vmul.f32 %v2904, %v734
        %v2981 = vmul.f32 %v2907, %v734
        %v2982 = vmul.f32 %v2910, %v734
        %v2983 = vmul.f32 %v2913, %v734
        %v2984 = vmul.f32 %v2916, %v734
        %v2985 = vmul.f32 %v2919, %v734
        %v2986 = vmul.f32 %v2922, %v734
        %v2987 = vmul.f32 %v2925, %v734
        %v2988 = vmul.f32 %v2928, %v734
        %v2989 = vmul.f32 %v2931, %v734
        %v2990 = vmul.f32 %v2934, %v734
        %v2991 = vmul.f32 %v2937, %v734
        %v2992 = vmul.f32 %v2940, %v734
        %v2993 = vmul.f32 %v2943, %v734
        %v2994 = vmul.f32 %v2946, %v734
        %v2995 = vmul.f32 %v2949, %v734
        %v2996 = vmul.f32 %v2952, %v734
        %v2997 = vmul.f32 %v2955, %v734
        %v2998 = vmul.f32 %v2958, %v734
        %v2999 = vmul.f32 %v2961, %v734
        %v3000 = vmul.f32 %v2964, %v734
        %v3001 = vmul.f32 %v2967, %v734
        %v3002 = vmul.f32 %v2970, %v734
        %v3003 = vadd.f32 %v2971, 1e-06
        %v3004 = vadd.f32 %v2972, 1e-06
        %v3005 = vadd.f32 %v2973, 1e-06
        %v3006 = vadd.f32 %v2974, 1e-06
        %v3007 = vadd.f32 %v2975, 1e-06
        %v3008 = vadd.f32 %v2976, 1e-06
        %v3009 = vadd.f32 %v2977, 1e-06
        %v3010 = vadd.f32 %v2978, 1e-06
        %v3011 = vadd.f32 %v2979, 1e-06
        %v3012 = vadd.f32 %v2980, 1e-06
        %v3013 = vadd.f32 %v2981, 1e-06
        %v3014 = vadd.f32 %v2982, 1e-06
        %v3015 = vadd.f32 %v2983, 1e-06
        %v3016 = vadd.f32 %v2984, 1e-06
        %v3017 = vadd.f32 %v2985, 1e-06
        %v3018 = vadd.f32 %v2986, 1e-06
        %v3019 = vadd.f32 %v2987, 1e-06
        %v3020 = vadd.f32 %v2988, 1e-06
        %v3021 = vadd.f32 %v2989, 1e-06
        %v3022 = vadd.f32 %v2990, 1e-06
        %v3023 = vadd.f32 %v2991, 1e-06
        %v3024 = vadd.f32 %v2992, 1e-06
        %v3025 = vadd.f32 %v2993, 1e-06
        %v3026 = vadd.f32 %v2994, 1e-06
        %v3027 = vadd.f32 %v2995, 1e-06
        %v3028 = vadd.f32 %v2996, 1e-06
        %v3029 = vadd.f32 %v2997, 1e-06
        %v3030 = vadd.f32 %v2998, 1e-06
        %v3031 = vadd.f32 %v2999, 1e-06
        %v3032 = vadd.f32 %v3000, 1e-06
        %v3033 = vadd.f32 %v3001, 1e-06
        %v3034 = vadd.f32 %v3002, 1e-06
        %v3035 = vrsqrt.pop %v3003
        %v3036 = vrsqrt.pop %v3004
        %v3037 = vrsqrt.pop %v3005
        %v3038 = vrsqrt.pop %v3006
        %v3039 = vrsqrt.pop %v3007
        %v3040 = vrsqrt.pop %v3008
        %v3041 = vrsqrt.pop %v3009
        %v3042 = vrsqrt.pop %v3010
        %v3043 = vrsqrt.pop %v3011
        %v3044 = vrsqrt.pop %v3012
        %v3045 = vrsqrt.pop %v3013
        %v3046 = vrsqrt.pop %v3014
        %v3047 = vrsqrt.pop %v3015
        %v3048 = vrsqrt.pop %v3016
        %v3049 = vrsqrt.pop %v3017
        %v3050 = vrsqrt.pop %v3018
        %v3051 = vrsqrt.pop %v3019
        %v3052 = vrsqrt.pop %v3020
        %v3053 = vrsqrt.pop %v3021
        %v3054 = vrsqrt.pop %v3022
        %v3055 = vrsqrt.pop %v3023
        %v3056 = vrsqrt.pop %v3024
        %v3057 = vrsqrt.pop %v3025
        %v3058 = vrsqrt.pop %v3026
        %v3059 = vrsqrt.pop %v3027
        %v3060 = vrsqrt.pop %v3028
        %v3061 = vrsqrt.pop %v3029
        %v3062 = vrsqrt.pop %v3030
        %v3063 = vrsqrt.pop %v3031
        %v3064 = vrsqrt.pop %v3032
        %v3065 = vrsqrt.pop %v3033
        %v3066 = vrsqrt.pop %v3034
        %v3067 = vmul.f32 %v2811, %v3035
        %v3068 = vmul.f32 %v2812, %v3036
        %v3069 = vmul.f32 %v2813, %v3037
        %v3070 = vmul.f32 %v2814, %v3038
        %v3071 = vmul.f32 %v2815, %v3039
        %v3072 = vmul.f32 %v2816, %v3040
        %v3073 = vmul.f32 %v2817, %v3041
        %v3074 = vmul.f32 %v2818, %v3042
        %v3075 = vmul.f32 %v2819, %v3043
        %v3076 = vmul.f32 %v2820, %v3044
        %v3077 = vmul.f32 %v2821, %v3045
        %v3078 = vmul.f32 %v2822, %v3046
        %v3079 = vmul.f32 %v2823, %v3047
        %v3080 = vmul.f32 %v2824, %v3048
        %v3081 = vmul.f32 %v2825, %v3049
        %v3082 = vmul.f32 %v2826, %v3050
        %v3083 = vmul.f32 %v2827, %v3051
        %v3084 = vmul.f32 %v2828, %v3052
        %v3085 = vmul.f32 %v2829, %v3053
        %v3086 = vmul.f32 %v2830, %v3054
        %v3087 = vmul.f32 %v2831, %v3055
        %v3088 = vmul.f32 %v2832, %v3056
        %v3089 = vmul.f32 %v2833, %v3057
        %v3090 = vmul.f32 %v2834, %v3058
        %v3091 = vmul.f32 %v2835, %v3059
        %v3092 = vmul.f32 %v2836, %v3060
        %v3093 = vmul.f32 %v2837, %v3061
        %v3094 = vmul.f32 %v2838, %v3062
        %v3095 = vmul.f32 %v2839, %v3063
        %v3096 = vmul.f32 %v2840, %v3064
        %v3097 = vmul.f32 %v2841, %v3065
        %v3098 = vmul.f32 %v2842, %v3066
        %v3100 = vlaneseq
        %v3101 = vshrl.u32 %v3100, 7
        %v3102 = vsub.s32 0, %v3101
        %v3103 = vrot.slane %v1250, %v3102
        %v3105 = vmul.f32 %v3067, %v3103
        %v3106 = vmul.f32 %v3068, %v3103
        %v3107 = vmul.f32 %v3069, %v3103
        %v3108 = vmul.f32 %v3070, %v3103
        %v3109 = vmul.f32 %v3071, %v3103
        %v3110 = vmul.f32 %v3072, %v3103
        %v3111 = vmul.f32 %v3073, %v3103
        %v3112 = vmul.f32 %v3074, %v3103
        %v3113 = vmul.f32 %v3075, %v3103
        %v3114 = vmul.f32 %v3076, %v3103
        %v3115 = vmul.f32 %v3077, %v3103
        %v3116 = vmul.f32 %v3078, %v3103
        %v3117 = vmul.f32 %v3079, %v3103
        %v3118 = vmul.f32 %v3080, %v3103
        %v3119 = vmul.f32 %v3081, %v3103
        %v3120 = vmul.f32 %v3082, %v3103
        %v3121 = vmul.f32 %v3083, %v3103
        %v3122 = vmul.f32 %v3084, %v3103
        %v3123 = vmul.f32 %v3085, %v3103
        %v3124 = vmul.f32 %v3086, %v3103
        %v3125 = vmul.f32 %v3087, %v3103
        %v3126 = vmul.f32 %v3088, %v3103
        %v3127 = vmul.f32 %v3089, %v3103
        %v3128 = vmul.f32 %v3090, %v3103
        %v3129 = vmul.f32 %v3091, %v3103
        %v3130 = vmul.f32 %v3092, %v3103
        %v3131 = vmul.f32 %v3093, %v3103
        %v3132 = vmul.f32 %v3094, %v3103
        %v3133 = vmul.f32 %v3095, %v3103
        %v3134 = vmul.f32 %v3096, %v3103
        %v3135 = vmul.f32 %v3097, %v3103
        %v3136 = vmul.f32 %v3098, %v3103
        %v3138 = vlaneseq
        %v3139 = vshrl.u32 %v3138, 7
        %v3140 = vsub.s32 0, %v3139
        %v3141 = vrot.slane %v1251, %v3140
        %v3143 = vadd.f32 %v3105, %v3141
        %v3144 = vadd.f32 %v3106, %v3141
        %v3145 = vadd.f32 %v3107, %v3141
        %v3146 = vadd.f32 %v3108, %v3141
        %v3147 = vadd.f32 %v3109, %v3141
        %v3148 = vadd.f32 %v3110, %v3141
        %v3149 = vadd.f32 %v3111, %v3141
        %v3150 = vadd.f32 %v3112, %v3141
        %v3151 = vadd.f32 %v3113, %v3141
        %v3152 = vadd.f32 %v3114, %v3141
        %v3153 = vadd.f32 %v3115, %v3141
        %v3154 = vadd.f32 %v3116, %v3141
        %v3155 = vadd.f32 %v3117, %v3141
        %v3156 = vadd.f32 %v3118, %v3141
        %v3157 = vadd.f32 %v3119, %v3141
        %v3158 = vadd.f32 %v3120, %v3141
        %v3159 = vadd.f32 %v3121, %v3141
        %v3160 = vadd.f32 %v3122, %v3141
        %v3161 = vadd.f32 %v3123, %v3141
        %v3162 = vadd.f32 %v3124, %v3141
        %v3163 = vadd.f32 %v3125, %v3141
        %v3164 = vadd.f32 %v3126, %v3141
        %v3165 = vadd.f32 %v3127, %v3141
        %v3166 = vadd.f32 %v3128, %v3141
        %v3167 = vadd.f32 %v3129, %v3141
        %v3168 = vadd.f32 %v3130, %v3141
        %v3169 = vadd.f32 %v3131, %v3141
        %v3170 = vadd.f32 %v3132, %v3141
        %v3171 = vadd.f32 %v3133, %v3141
        %v3172 = vadd.f32 %v3134, %v3141
        %v3173 = vadd.f32 %v3135, %v3141
        %v3174 = vadd.f32 %v3136, %v3141
        %v3175 = vpack.c.bf16 %v3144, %v3143
        %v3176 = vpack.c.bf16 %v3146, %v3145
        %v3177 = vpack.c.bf16 %v3148, %v3147
        %v3178 = vpack.c.bf16 %v3150, %v3149
        %v3179 = vpack.c.bf16 %v3152, %v3151
        %v3180 = vpack.c.bf16 %v3154, %v3153
        %v3181 = vpack.c.bf16 %v3156, %v3155
        %v3182 = vpack.c.bf16 %v3158, %v3157
        %v3183 = vpack.c.bf16 %v3160, %v3159
        %v3184 = vpack.c.bf16 %v3162, %v3161
        %v3185 = vpack.c.bf16 %v3164, %v3163
        %v3186 = vpack.c.bf16 %v3166, %v3165
        %v3187 = vpack.c.bf16 %v3168, %v3167
        %v3188 = vpack.c.bf16 %v3170, %v3169
        %v3189 = vpack.c.bf16 %v3172, %v3171
        %v3190 = vpack.c.bf16 %v3174, %v3173
        %v3191 = vld [vmem:[%s9] sm:$0xff]
        %v3192 = vld [vmem:[%s9 + $0x8] sm:$0xff]
        %v3193 = vld [vmem:[%s9 + $0x10] sm:$0xff]
        %v3194 = vld [vmem:[%s9 + $0x18] sm:$0xff]
        %v3195 = vld [vmem:[%s9 + $0x20] sm:$0xff]
        %v3196 = vld [vmem:[%s9 + $0x28] sm:$0xff]
        %v3197 = vld [vmem:[%s9 + $0x30] sm:$0xff]
        %v3198 = vld [vmem:[%s9 + $0x38] sm:$0xff]
        %v3200 = vlaneseq
        %v3201 = vshrl.u32 %v3200, 7
        %v3202 = vsub.s32 0, %v3201
        %v3203 = vrot.slane %v1253, %v3202
        %v3204 = vlaneseq
        %v3205 = vshrl.u32 %v3204, 7
        %v3206 = vsub.s32 1, %v3205
        %v3207 = vrot.slane %v1253, %v3206
        %v3218 = vunpack.c.l.b16 %v3191
        %v3219 = vunpack.c.h.b16 %v3191
        %v3220 = vunpack.c.l.b16 %v3192
        %v3221 = vunpack.c.h.b16 %v3192
        %v3222 = vunpack.c.l.b16 %v3193
        %v3223 = vunpack.c.h.b16 %v3193
        %v3224 = vunpack.c.l.b16 %v3194
        %v3225 = vunpack.c.h.b16 %v3194
        %v3226 = vunpack.c.l.b16 %v3195
        %v3227 = vunpack.c.h.b16 %v3195
        %v3228 = vunpack.c.l.b16 %v3196
        %v3229 = vunpack.c.h.b16 %v3196
        %v3230 = vunpack.c.l.b16 %v3197
        %v3231 = vunpack.c.h.b16 %v3197
        %v3232 = vunpack.c.l.b16 %v3198
        %v3233 = vunpack.c.h.b16 %v3198
        %v3234 = vpack.c.b16 %v3220, %v3218
        %v3235 = vpack.c.b16 %v3221, %v3219
        %v3236 = vpack.c.b16 %v3224, %v3222
        %v3237 = vpack.c.b16 %v3225, %v3223
        %v3238 = vpack.c.b16 %v3228, %v3226
        %v3239 = vpack.c.b16 %v3229, %v3227
        %v3240 = vpack.c.b16 %v3232, %v3230
        %v3241 = vpack.c.b16 %v3233, %v3231
        %v3251 = vsel %vm637, %v3175, 0
        %v3254 = vsel %vm637, %v3176, 0
        %v3257 = vsel %vm637, %v3177, 0
        %v3260 = vsel %vm637, %v3178, 0
        %v3263 = vsel %vm637, %v3179, 0
        %v3266 = vsel %vm637, %v3180, 0
        %v3269 = vsel %vm637, %v3181, 0
        %v3272 = vsel %vm637, %v3182, 0
        %v3275 = vsel %vm637, %v3183, 0
        %v3278 = vsel %vm637, %v3184, 0
        %v3281 = vsel %vm637, %v3185, 0
        %v3284 = vsel %vm637, %v3186, 0
        %v3287 = vsel %vm637, %v3187, 0
        %v3290 = vsel %vm637, %v3188, 0
        %v3293 = vsel %vm637, %v3189, 0
        %v3296 = vsel %vm637, %v3190, 0
        %3298 = vmatprep.subr.bf16.mxu0 %v3235
        %3299 = vmatpush1.bf16.msra.mxu0 %v3234
        %3300 = vmatprep.subr.bf16.mxu0 %v3237
        %3301 = vmatpush1.bf16.msra.mxu0 %v3236
        %3302 = vmatprep.subr.bf16.mxu0 %v3239
        %3303 = vmatpush1.bf16.msra.mxu0 %v3238
        %3304 = vmatprep.subr.bf16.mxu0 %v3241
        %3305 = vmatpush1.bf16.msra.mxu0 %v3240
        %3306 = vmatprep.subr.bf16.mxu0 0
        %3307 = vmatpush1.bf16.msra.mxu0 0
        %3308 = vmatprep.subr.bf16.mxu0 0
        %3309 = vmatpush1.bf16.msra.mxu0 0
        %3310 = vmatprep.subr.bf16.mxu0 0
        %3311 = vmatpush1.bf16.msra.mxu0 0
        %3312 = vmatprep.subr.bf16.mxu0 0
        %3313 = vmatpush1.bf16.msra.mxu0 0
        %3314 = vmatprep.subr.bf16.mxu0 0
        %3315 = vmatpush1.bf16.msra.mxu0 0
        %3316 = vmatprep.subr.bf16.mxu0 0
        %3317 = vmatpush1.bf16.msra.mxu0 0
        %3318 = vmatprep.subr.bf16.mxu0 0
        %3319 = vmatpush1.bf16.msra.mxu0 0
        %3320 = vmatprep.subr.bf16.mxu0 0
        %3321 = vmatpush1.bf16.msra.mxu0 0
        %3322 = vmatprep.subr.bf16.mxu0 0
        %3323 = vmatpush1.bf16.msra.mxu0 0
        %3324 = vmatprep.subr.bf16.mxu0 0
        %3325 = vmatpush1.bf16.msra.mxu0 0
        %3326 = vmatprep.subr.bf16.mxu0 0
        %3327 = vmatpush1.bf16.msra.mxu0 0
        %3328 = vmatprep.subr.bf16.mxu0 0
        %3329 = vmatpush1.bf16.msra.mxu0 0
        %3330 = vmatprep.mubr.bf16.mxu0 0
        %3331 = vmatmul.mubr.bf16.gmra.mrb[0].mxu0 %v3251
        %v3332 = vpop.f32.mrb[0].mxu0
        %v3333 = vadd.f32 %v3203, %v3332
        %v3334 = vpop.f32.mrb[0].mxu0
        %v3335 = vadd.f32 %v3207, %v3334
        %v3336 = vpop.f32.mrb[0].mxu0
        %v3337 = vadd.f32 %v3203, %v3336
        %v3338 = vpop.f32.mrb[0].mxu0
        %v3339 = vadd.f32 %v3207, %v3338
        %3340 = vmatprep.mubr.bf16.mxu0 0
        %3341 = vmatmul.mubr.bf16.gmra.mrb[0].mxu0 %v3254
        %v3342 = vpop.f32.mrb[0].mxu0
        %v3343 = vadd.f32 %v3203, %v3342
        %v3344 = vpop.f32.mrb[0].mxu0
        %v3345 = vadd.f32 %v3207, %v3344
        %v3346 = vpop.f32.mrb[0].mxu0
        %v3347 = vadd.f32 %v3203, %v3346
        %v3348 = vpop.f32.mrb[0].mxu0
        %v3349 = vadd.f32 %v3207, %v3348
        %3350 = vmatprep.mubr.bf16.mxu0 0
        %3351 = vmatmul.mubr.bf16.gmra.mrb[0].mxu0 %v3257
        %v3352 = vpop.f32.mrb[0].mxu0
        %v3353 = vadd.f32 %v3203, %v3352
        %v3354 = vpop.f32.mrb[0].mxu0
        %v3355 = vadd.f32 %v3207, %v3354
        %v3356 = vpop.f32.mrb[0].mxu0
        %v3357 = vadd.f32 %v3203, %v3356
        %v3358 = vpop.f32.mrb[0].mxu0
        %v3359 = vadd.f32 %v3207, %v3358
        %3360 = vmatprep.mubr.bf16.mxu0 0
        %3361 = vmatmul.mubr.bf16.gmra.mrb[0].mxu0 %v3260
        %v3362 = vpop.f32.mrb[0].mxu0
        %v3363 = vadd.f32 %v3203, %v3362
        %v3364 = vpop.f32.mrb[0].mxu0
        %v3365 = vadd.f32 %v3207, %v3364
        %v3366 = vpop.f32.mrb[0].mxu0
        %v3367 = vadd.f32 %v3203, %v3366
        %v3368 = vpop.f32.mrb[0].mxu0
        %v3369 = vadd.f32 %v3207, %v3368
        %3370 = vmatprep.mubr.bf16.mxu0 0
        %3371 = vmatmul.mubr.bf16.gmra.mrb[0].mxu0 %v3263
        %v3372 = vpop.f32.mrb[0].mxu0
        %v3373 = vadd.f32 %v3203, %v3372
        %v3374 = vpop.f32.mrb[0].mxu0
        %v3375 = vadd.f32 %v3207, %v3374
        %v3376 = vpop.f32.mrb[0].mxu0
        %v3377 = vadd.f32 %v3203, %v3376
        %v3378 = vpop.f32.mrb[0].mxu0
        %v3379 = vadd.f32 %v3207, %v3378
        %3380 = vmatprep.mubr.bf16.mxu0 0
        %3381 = vmatmul.mubr.bf16.gmra.mrb[0].mxu0 %v3266
        %v3382 = vpop.f32.mrb[0].mxu0
        %v3383 = vadd.f32 %v3203, %v3382
        %v3384 = vpop.f32.mrb[0].mxu0
        %v3385 = vadd.f32 %v3207, %v3384
        %v3386 = vpop.f32.mrb[0].mxu0
        %v3387 = vadd.f32 %v3203, %v3386
        %v3388 = vpop.f32.mrb[0].mxu0
        %v3389 = vadd.f32 %v3207, %v3388
        %3390 = vmatprep.mubr.bf16.mxu0 0
        %3391 = vmatmul.mubr.bf16.gmra.mrb[0].mxu0 %v3269
        %v3392 = vpop.f32.mrb[0].mxu0
        %v3393 = vadd.f32 %v3203, %v3392
        %v3394 = vpop.f32.mrb[0].mxu0
        %v3395 = vadd.f32 %v3207, %v3394
        %v3396 = vpop.f32.mrb[0].mxu0
        %v3397 = vadd.f32 %v3203, %v3396
        %v3398 = vpop.f32.mrb[0].mxu0
        %v3399 = vadd.f32 %v3207, %v3398
        %3400 = vmatprep.mubr.bf16.mxu0 0
        %3401 = vmatmul.mubr.bf16.gmra.mrb[0].mxu0 %v3272
        %v3402 = vpop.f32.mrb[0].mxu0
        %v3403 = vadd.f32 %v3203, %v3402
        %v3404 = vpop.f32.mrb[0].mxu0
        %v3405 = vadd.f32 %v3207, %v3404
        %v3406 = vpop.f32.mrb[0].mxu0
        %v3407 = vadd.f32 %v3203, %v3406
        %v3408 = vpop.f32.mrb[0].mxu0
        %v3409 = vadd.f32 %v3207, %v3408
        %3410 = vmatprep.mubr.bf16.mxu0 0
        %3411 = vmatmul.mubr.bf16.gmra.mrb[0].mxu0 %v3275
        %v3412 = vpop.f32.mrb[0].mxu0
        %v3413 = vadd.f32 %v3203, %v3412
        %v3414 = vpop.f32.mrb[0].mxu0
        %v3415 = vadd.f32 %v3207, %v3414
        %v3416 = vpop.f32.mrb[0].mxu0
        %v3417 = vadd.f32 %v3203, %v3416
        %v3418 = vpop.f32.mrb[0].mxu0
        %v3419 = vadd.f32 %v3207, %v3418
        %3420 = vmatprep.mubr.bf16.mxu0 0
        %3421 = vmatmul.mubr.bf16.gmra.mrb[0].mxu0 %v3278
        %v3422 = vpop.f32.mrb[0].mxu0
        %v3423 = vadd.f32 %v3203, %v3422
        %v3424 = vpop.f32.mrb[0].mxu0
        %v3425 = vadd.f32 %v3207, %v3424
        %v3426 = vpop.f32.mrb[0].mxu0
        %v3427 = vadd.f32 %v3203, %v3426
        %v3428 = vpop.f32.mrb[0].mxu0
        %v3429 = vadd.f32 %v3207, %v3428
        %3430 = vmatprep.mubr.bf16.mxu0 0
        %3431 = vmatmul.mubr.bf16.gmra.mrb[0].mxu0 %v3281
        %v3432 = vpop.f32.mrb[0].mxu0
        %v3433 = vadd.f32 %v3203, %v3432
        %v3434 = vpop.f32.mrb[0].mxu0
        %v3435 = vadd.f32 %v3207, %v3434
        %v3436 = vpop.f32.mrb[0].mxu0
        %v3437 = vadd.f32 %v3203, %v3436
        %v3438 = vpop.f32.mrb[0].mxu0
        %v3439 = vadd.f32 %v3207, %v3438
        %3440 = vmatprep.mubr.bf16.mxu0 0
        %3441 = vmatmul.mubr.bf16.gmra.mrb[0].mxu0 %v3284
        %v3442 = vpop.f32.mrb[0].mxu0
        %v3443 = vadd.f32 %v3203, %v3442
        %v3444 = vpop.f32.mrb[0].mxu0
        %v3445 = vadd.f32 %v3207, %v3444
        %v3446 = vpop.f32.mrb[0].mxu0
        %v3447 = vadd.f32 %v3203, %v3446
        %v3448 = vpop.f32.mrb[0].mxu0
        %v3449 = vadd.f32 %v3207, %v3448
        %3450 = vmatprep.mubr.bf16.mxu0 0
        %3451 = vmatmul.mubr.bf16.gmra.mrb[0].mxu0 %v3287
        %v3452 = vpop.f32.mrb[0].mxu0
        %v3453 = vadd.f32 %v3203, %v3452
        %v3454 = vpop.f32.mrb[0].mxu0
        %v3455 = vadd.f32 %v3207, %v3454
        %v3456 = vpop.f32.mrb[0].mxu0
        %v3457 = vadd.f32 %v3203, %v3456
        %v3458 = vpop.f32.mrb[0].mxu0
        %v3459 = vadd.f32 %v3207, %v3458
        %3460 = vmatprep.mubr.bf16.mxu0 0
        %3461 = vmatmul.mubr.bf16.gmra.mrb[0].mxu0 %v3290
        %v3462 = vpop.f32.mrb[0].mxu0
        %v3463 = vadd.f32 %v3203, %v3462
        %v3464 = vpop.f32.mrb[0].mxu0
        %v3465 = vadd.f32 %v3207, %v3464
        %v3466 = vpop.f32.mrb[0].mxu0
        %v3467 = vadd.f32 %v3203, %v3466
        %v3468 = vpop.f32.mrb[0].mxu0
        %v3469 = vadd.f32 %v3207, %v3468
        %3470 = vmatprep.mubr.bf16.mxu0 0
        %3471 = vmatmul.mubr.bf16.gmra.mrb[0].mxu0 %v3293
        %v3472 = vpop.f32.mrb[0].mxu0
        %v3473 = vadd.f32 %v3203, %v3472
        %v3474 = vpop.f32.mrb[0].mxu0
        %v3475 = vadd.f32 %v3207, %v3474
        %v3476 = vpop.f32.mrb[0].mxu0
        %v3477 = vadd.f32 %v3203, %v3476
        %v3478 = vpop.f32.mrb[0].mxu0
        %v3479 = vadd.f32 %v3207, %v3478
        %3480 = vmatprep.mubr.bf16.mxu0 0
        %3481 = vmatmul.mubr.bf16.gmra.mrb[0].mxu0 %v3296
        %v3482 = vpop.f32.mrb[0].mxu0
        %v3483 = vadd.f32 %v3203, %v3482
        %v3484 = vpop.f32.mrb[0].mxu0
        %v3485 = vadd.f32 %v3207, %v3484
        %v3486 = vpop.f32.mrb[0].mxu0
        %v3487 = vadd.f32 %v3203, %v3486
        %v3488 = vpop.f32.mrb[0].mxu0
        %v3489 = vadd.f32 %v3207, %v3488
        %3490 = vdwg.mxu0
        %v3491 = vmul.f32 %v3333, 0.5
        %v3492 = vmul.f32 %v3335, 0.5
        %v3493 = vmul.f32 %v3337, 0.5
        %v3494 = vmul.f32 %v3339, 0.5
        %v3495 = vmul.f32 %v3343, 0.5
        %v3496 = vmul.f32 %v3345, 0.5
        %v3497 = vmul.f32 %v3347, 0.5
        %v3498 = vmul.f32 %v3349, 0.5
        %v3499 = vmul.f32 %v3353, 0.5
        %v3500 = vmul.f32 %v3355, 0.5
        %v3501 = vmul.f32 %v3357, 0.5
        %v3502 = vmul.f32 %v3359, 0.5
        %v3503 = vmul.f32 %v3363, 0.5
        %v3504 = vmul.f32 %v3365, 0.5
        %v3505 = vmul.f32 %v3367, 0.5
        %v3506 = vmul.f32 %v3369, 0.5
        %v3507 = vmul.f32 %v3373, 0.5
        %v3508 = vmul.f32 %v3375, 0.5
        %v3509 = vmul.f32 %v3377, 0.5
        %v3510 = vmul.f32 %v3379, 0.5
        %v3511 = vmul.f32 %v3383, 0.5
        %v3512 = vmul.f32 %v3385, 0.5
        %v3513 = vmul.f32 %v3387, 0.5
        %v3514 = vmul.f32 %v3389, 0.5
        %v3515 = vmul.f32 %v3393, 0.5
        %v3516 = vmul.f32 %v3395, 0.5
        %v3517 = vmul.f32 %v3397, 0.5
        %v3518 = vmul.f32 %v3399, 0.5
        %v3519 = vmul.f32 %v3403, 0.5
        %v3520 = vmul.f32 %v3405, 0.5
        %v3521 = vmul.f32 %v3407, 0.5
        %v3522 = vmul.f32 %v3409, 0.5
        %v3523 = vmul.f32 %v3413, 0.5
        %v3524 = vmul.f32 %v3415, 0.5
        %v3525 = vmul.f32 %v3417, 0.5
        %v3526 = vmul.f32 %v3419, 0.5
        %v3527 = vmul.f32 %v3423, 0.5
        %v3528 = vmul.f32 %v3425, 0.5
        %v3529 = vmul.f32 %v3427, 0.5
        %v3530 = vmul.f32 %v3429, 0.5
        %v3531 = vmul.f32 %v3433, 0.5
        %v3532 = vmul.f32 %v3435, 0.5
        %v3533 = vmul.f32 %v3437, 0.5
        %v3534 = vmul.f32 %v3439, 0.5
        %v3535 = vmul.f32 %v3443, 0.5
        %v3536 = vmul.f32 %v3445, 0.5
        %v3537 = vmul.f32 %v3447, 0.5
        %v3538 = vmul.f32 %v3449, 0.5
        %v3539 = vmul.f32 %v3453, 0.5
        %v3540 = vmul.f32 %v3455, 0.5
        %v3541 = vmul.f32 %v3457, 0.5
        %v3542 = vmul.f32 %v3459, 0.5
        %v3543 = vmul.f32 %v3463, 0.5
        %v3544 = vmul.f32 %v3465, 0.5
        %v3545 = vmul.f32 %v3467, 0.5
        %v3546 = vmul.f32 %v3469, 0.5
        %v3547 = vmul.f32 %v3473, 0.5
        %v3548 = vmul.f32 %v3475, 0.5
        %v3549 = vmul.f32 %v3477, 0.5
        %v3550 = vmul.f32 %v3479, 0.5
        %v3551 = vmul.f32 %v3483, 0.5
        %v3552 = vmul.f32 %v3485, 0.5
        %v3553 = vmul.f32 %v3487, 0.5
        %v3554 = vmul.f32 %v3489, 0.5
        %v3555 = vmul.f32 %v3333, 0.044715
        %v3556 = vmul.f32 %v3335, 0.044715
        %v3557 = vmul.f32 %v3337, 0.044715
        %v3558 = vmul.f32 %v3339, 0.044715
        %v3559 = vmul.f32 %v3343, 0.044715
        %v3560 = vmul.f32 %v3345, 0.044715
        %v3561 = vmul.f32 %v3347, 0.044715
        %v3562 = vmul.f32 %v3349, 0.044715
        %v3563 = vmul.f32 %v3353, 0.044715
        %v3564 = vmul.f32 %v3355, 0.044715
        %v3565 = vmul.f32 %v3357, 0.044715
        %v3566 = vmul.f32 %v3359, 0.044715
        %v3567 = vmul.f32 %v3363, 0.044715
        %v3568 = vmul.f32 %v3365, 0.044715
        %v3569 = vmul.f32 %v3367, 0.044715
        %v3570 = vmul.f32 %v3369, 0.044715
        %v3571 = vmul.f32 %v3373, 0.044715
        %v3572 = vmul.f32 %v3375, 0.044715
        %v3573 = vmul.f32 %v3377, 0.044715
        %v3574 = vmul.f32 %v3379, 0.044715
        %v3575 = vmul.f32 %v3383, 0.044715
        %v3576 = vmul.f32 %v3385, 0.044715
        %v3577 = vmul.f32 %v3387, 0.044715
        %v3578 = vmul.f32 %v3389, 0.044715
        %v3579 = vmul.f32 %v3393, 0.044715
        %v3580 = vmul.f32 %v3395, 0.044715
        %v3581 = vmul.f32 %v3397, 0.044715
        %v3582 = vmul.f32 %v3399, 0.044715
        %v3583 = vmul.f32 %v3403, 0.044715
        %v3584 = vmul.f32 %v3405, 0.044715
        %v3585 = vmul.f32 %v3407, 0.044715
        %v3586 = vmul.f32 %v3409, 0.044715
        %v3587 = vmul.f32 %v3413, 0.044715
        %v3588 = vmul.f32 %v3415, 0.044715
        %v3589 = vmul.f32 %v3417, 0.044715
        %v3590 = vmul.f32 %v3419, 0.044715
        %v3591 = vmul.f32 %v3423, 0.044715
        %v3592 = vmul.f32 %v3425, 0.044715
        %v3593 = vmul.f32 %v3427, 0.044715
        %v3594 = vmul.f32 %v3429, 0.044715
        %v3595 = vmul.f32 %v3433, 0.044715
        %v3596 = vmul.f32 %v3435, 0.044715
        %v3597 = vmul.f32 %v3437, 0.044715
        %v3598 = vmul.f32 %v3439, 0.044715
        %v3599 = vmul.f32 %v3443, 0.044715
        %v3600 = vmul.f32 %v3445, 0.044715
        %v3601 = vmul.f32 %v3447, 0.044715
        %v3602 = vmul.f32 %v3449, 0.044715
        %v3603 = vmul.f32 %v3453, 0.044715
        %v3604 = vmul.f32 %v3455, 0.044715
        %v3605 = vmul.f32 %v3457, 0.044715
        %v3606 = vmul.f32 %v3459, 0.044715
        %v3607 = vmul.f32 %v3463, 0.044715
        %v3608 = vmul.f32 %v3465, 0.044715
        %v3609 = vmul.f32 %v3467, 0.044715
        %v3610 = vmul.f32 %v3469, 0.044715
        %v3611 = vmul.f32 %v3473, 0.044715
        %v3612 = vmul.f32 %v3475, 0.044715
        %v3613 = vmul.f32 %v3477, 0.044715
        %v3614 = vmul.f32 %v3479, 0.044715
        %v3615 = vmul.f32 %v3483, 0.044715
        %v3616 = vmul.f32 %v3485, 0.044715
        %v3617 = vmul.f32 %v3487, 0.044715
        %v3618 = vmul.f32 %v3489, 0.044715
        %v3619 = vmul.f32 %v3555, %v3333
        %v3620 = vmul.f32 %v3556, %v3335
        %v3621 = vmul.f32 %v3557, %v3337
        %v3622 = vmul.f32 %v3558, %v3339
        %v3623 = vmul.f32 %v3559, %v3343
        %v3624 = vmul.f32 %v3560, %v3345
        %v3625 = vmul.f32 %v3561, %v3347
        %v3626 = vmul.f32 %v3562, %v3349
        %v3627 = vmul.f32 %v3563, %v3353
        %v3628 = vmul.f32 %v3564, %v3355
        %v3629 = vmul.f32 %v3565, %v3357
        %v3630 = vmul.f32 %v3566, %v3359
        %v3631 = vmul.f32 %v3567, %v3363
        %v3632 = vmul.f32 %v3568, %v3365
        %v3633 = vmul.f32 %v3569, %v3367
        %v3634 = vmul.f32 %v3570, %v3369
        %v3635 = vmul.f32 %v3571, %v3373
        %v3636 = vmul.f32 %v3572, %v3375
        %v3637 = vmul.f32 %v3573, %v3377
        %v3638 = vmul.f32 %v3574, %v3379
        %v3639 = vmul.f32 %v3575, %v3383
        %v3640 = vmul.f32 %v3576, %v3385
        %v3641 = vmul.f32 %v3577, %v3387
        %v3642 = vmul.f32 %v3578, %v3389
        %v3643 = vmul.f32 %v3579, %v3393
        %v3644 = vmul.f32 %v3580, %v3395
        %v3645 = vmul.f32 %v3581, %v3397
        %v3646 = vmul.f32 %v3582, %v3399
        %v3647 = vmul.f32 %v3583, %v3403
        %v3648 = vmul.f32 %v3584, %v3405
        %v3649 = vmul.f32 %v3585, %v3407
        %v3650 = vmul.f32 %v3586, %v3409
        %v3651 = vmul.f32 %v3587, %v3413
        %v3652 = vmul.f32 %v3588, %v3415
        %v3653 = vmul.f32 %v3589, %v3417
        %v3654 = vmul.f32 %v3590, %v3419
        %v3655 = vmul.f32 %v3591, %v3423
        %v3656 = vmul.f32 %v3592, %v3425
        %v3657 = vmul.f32 %v3593, %v3427
        %v3658 = vmul.f32 %v3594, %v3429
        %v3659 = vmul.f32 %v3595, %v3433
        %v3660 = vmul.f32 %v3596, %v3435
        %v3661 = vmul.f32 %v3597, %v3437
        %v3662 = vmul.f32 %v3598, %v3439
        %v3663 = vmul.f32 %v3599, %v3443
        %v3664 = vmul.f32 %v3600, %v3445
        %v3665 = vmul.f32 %v3601, %v3447
        %v3666 = vmul.f32 %v3602, %v3449
        %v3667 = vmul.f32 %v3603, %v3453
        %v3668 = vmul.f32 %v3604, %v3455
        %v3669 = vmul.f32 %v3605, %v3457
        %v3670 = vmul.f32 %v3606, %v3459
        %v3671 = vmul.f32 %v3607, %v3463
        %v3672 = vmul.f32 %v3608, %v3465
        %v3673 = vmul.f32 %v3609, %v3467
        %v3674 = vmul.f32 %v3610, %v3469
        %v3675 = vmul.f32 %v3611, %v3473
        %v3676 = vmul.f32 %v3612, %v3475
        %v3677 = vmul.f32 %v3613, %v3477
        %v3678 = vmul.f32 %v3614, %v3479
        %v3679 = vmul.f32 %v3615, %v3483
        %v3680 = vmul.f32 %v3616, %v3485
        %v3681 = vmul.f32 %v3617, %v3487
        %v3682 = vmul.f32 %v3618, %v3489
        %v3683 = vmul.f32 %v3619, %v3333
        %v3684 = vmul.f32 %v3620, %v3335
        %v3685 = vmul.f32 %v3621, %v3337
        %v3686 = vmul.f32 %v3622, %v3339
        %v3687 = vmul.f32 %v3623, %v3343
        %v3688 = vmul.f32 %v3624, %v3345
        %v3689 = vmul.f32 %v3625, %v3347
        %v3690 = vmul.f32 %v3626, %v3349
        %v3691 = vmul.f32 %v3627, %v3353
        %v3692 = vmul.f32 %v3628, %v3355
        %v3693 = vmul.f32 %v3629, %v3357
        %v3694 = vmul.f32 %v3630, %v3359
        %v3695 = vmul.f32 %v3631, %v3363
        %v3696 = vmul.f32 %v3632, %v3365
        %v3697 = vmul.f32 %v3633, %v3367
        %v3698 = vmul.f32 %v3634, %v3369
        %v3699 = vmul.f32 %v3635, %v3373
        %v3700 = vmul.f32 %v3636, %v3375
        %v3701 = vmul.f32 %v3637, %v3377
        %v3702 = vmul.f32 %v3638, %v3379
        %v3703 = vmul.f32 %v3639, %v3383
        %v3704 = vmul.f32 %v3640, %v3385
        %v3705 = vmul.f32 %v3641, %v3387
        %v3706 = vmul.f32 %v3642, %v3389
        %v3707 = vmul.f32 %v3643, %v3393
        %v3708 = vmul.f32 %v3644, %v3395
        %v3709 = vmul.f32 %v3645, %v3397
        %v3710 = vmul.f32 %v3646, %v3399
        %v3711 = vmul.f32 %v3647, %v3403
        %v3712 = vmul.f32 %v3648, %v3405
        %v3713 = vmul.f32 %v3649, %v3407
        %v3714 = vmul.f32 %v3650, %v3409
        %v3715 = vmul.f32 %v3651, %v3413
        %v3716 = vmul.f32 %v3652, %v3415
        %v3717 = vmul.f32 %v3653, %v3417
        %v3718 = vmul.f32 %v3654, %v3419
        %v3719 = vmul.f32 %v3655, %v3423
        %v3720 = vmul.f32 %v3656, %v3425
        %v3721 = vmul.f32 %v3657, %v3427
        %v3722 = vmul.f32 %v3658, %v3429
        %v3723 = vmul.f32 %v3659, %v3433
        %v3724 = vmul.f32 %v3660, %v3435
        %v3725 = vmul.f32 %v3661, %v3437
        %v3726 = vmul.f32 %v3662, %v3439
        %v3727 = vmul.f32 %v3663, %v3443
        %v3728 = vmul.f32 %v3664, %v3445
        %v3729 = vmul.f32 %v3665, %v3447
        %v3730 = vmul.f32 %v3666, %v3449
        %v3731 = vmul.f32 %v3667, %v3453
        %v3732 = vmul.f32 %v3668, %v3455
        %v3733 = vmul.f32 %v3669, %v3457
        %v3734 = vmul.f32 %v3670, %v3459
        %v3735 = vmul.f32 %v3671, %v3463
        %v3736 = vmul.f32 %v3672, %v3465
        %v3737 = vmul.f32 %v3673, %v3467
        %v3738 = vmul.f32 %v3674, %v3469
        %v3739 = vmul.f32 %v3675, %v3473
        %v3740 = vmul.f32 %v3676, %v3475
        %v3741 = vmul.f32 %v3677, %v3477
        %v3742 = vmul.f32 %v3678, %v3479
        %v3743 = vmul.f32 %v3679, %v3483
        %v3744 = vmul.f32 %v3680, %v3485
        %v3745 = vmul.f32 %v3681, %v3487
        %v3746 = vmul.f32 %v3682, %v3489
        %v3747 = vadd.f32 %v3333, %v3683
        %v3748 = vadd.f32 %v3335, %v3684
        %v3749 = vadd.f32 %v3337, %v3685
        %v3750 = vadd.f32 %v3339, %v3686
        %v3751 = vadd.f32 %v3343, %v3687
        %v3752 = vadd.f32 %v3345, %v3688
        %v3753 = vadd.f32 %v3347, %v3689
        %v3754 = vadd.f32 %v3349, %v3690
        %v3755 = vadd.f32 %v3353, %v3691
        %v3756 = vadd.f32 %v3355, %v3692
        %v3757 = vadd.f32 %v3357, %v3693
        %v3758 = vadd.f32 %v3359, %v3694
        %v3759 = vadd.f32 %v3363, %v3695
        %v3760 = vadd.f32 %v3365, %v3696
        %v3761 = vadd.f32 %v3367, %v3697
        %v3762 = vadd.f32 %v3369, %v3698
        %v3763 = vadd.f32 %v3373, %v3699
        %v3764 = vadd.f32 %v3375, %v3700
        %v3765 = vadd.f32 %v3377, %v3701
        %v3766 = vadd.f32 %v3379, %v3702
        %v3767 = vadd.f32 %v3383, %v3703
        %v3768 = vadd.f32 %v3385, %v3704
        %v3769 = vadd.f32 %v3387, %v3705
        %v3770 = vadd.f32 %v3389, %v3706
        %v3771 = vadd.f32 %v3393, %v3707
        %v3772 = vadd.f32 %v3395, %v3708
        %v3773 = vadd.f32 %v3397, %v3709
        %v3774 = vadd.f32 %v3399, %v3710
        %v3775 = vadd.f32 %v3403, %v3711
        %v3776 = vadd.f32 %v3405, %v3712
        %v3777 = vadd.f32 %v3407, %v3713
        %v3778 = vadd.f32 %v3409, %v3714
        %v3779 = vadd.f32 %v3413, %v3715
        %v3780 = vadd.f32 %v3415, %v3716
        %v3781 = vadd.f32 %v3417, %v3717
        %v3782 = vadd.f32 %v3419, %v3718
        %v3783 = vadd.f32 %v3423, %v3719
        %v3784 = vadd.f32 %v3425, %v3720
        %v3785 = vadd.f32 %v3427, %v3721
        %v3786 = vadd.f32 %v3429, %v3722
        %v3787 = vadd.f32 %v3433, %v3723
        %v3788 = vadd.f32 %v3435, %v3724
        %v3789 = vadd.f32 %v3437, %v3725
        %v3790 = vadd.f32 %v3439, %v3726
        %v3791 = vadd.f32 %v3443, %v3727
        %v3792 = vadd.f32 %v3445, %v3728
        %v3793 = vadd.f32 %v3447, %v3729
        %v3794 = vadd.f32 %v3449, %v3730
        %v3795 = vadd.f32 %v3453, %v3731
        %v3796 = vadd.f32 %v3455, %v3732
        %v3797 = vadd.f32 %v3457, %v3733
        %v3798 = vadd.f32 %v3459, %v3734
        %v3799 = vadd.f32 %v3463, %v3735
        %v3800 = vadd.f32 %v3465, %v3736
        %v3801 = vadd.f32 %v3467, %v3737
        %v3802 = vadd.f32 %v3469, %v3738
        %v3803 = vadd.f32 %v3473, %v3739
        %v3804 = vadd.f32 %v3475, %v3740
        %v3805 = vadd.f32 %v3477, %v3741
        %v3806 = vadd.f32 %v3479, %v3742
        %v3807 = vadd.f32 %v3483, %v3743
        %v3808 = vadd.f32 %v3485, %v3744
        %v3809 = vadd.f32 %v3487, %v3745
        %v3810 = vadd.f32 %v3489, %v3746
        %v3811 = vmul.f32 %v3747, 0.7978846
        %v3812 = vmul.f32 %v3748, 0.7978846
        %v3813 = vmul.f32 %v3749, 0.7978846
        %v3814 = vmul.f32 %v3750, 0.7978846
        %v3815 = vmul.f32 %v3751, 0.7978846
        %v3816 = vmul.f32 %v3752, 0.7978846
        %v3817 = vmul.f32 %v3753, 0.7978846
        %v3818 = vmul.f32 %v3754, 0.7978846
        %v3819 = vmul.f32 %v3755, 0.7978846
        %v3820 = vmul.f32 %v3756, 0.7978846
        %v3821 = vmul.f32 %v3757, 0.7978846
        %v3822 = vmul.f32 %v3758, 0.7978846
        %v3823 = vmul.f32 %v3759, 0.7978846
        %v3824 = vmul.f32 %v3760, 0.7978846
        %v3825 = vmul.f32 %v3761, 0.7978846
        %v3826 = vmul.f32 %v3762, 0.7978846
        %v3827 = vmul.f32 %v3763, 0.7978846
        %v3828 = vmul.f32 %v3764, 0.7978846
        %v3829 = vmul.f32 %v3765, 0.7978846
        %v3830 = vmul.f32 %v3766, 0.7978846
        %v3831 = vmul.f32 %v3767, 0.7978846
        %v3832 = vmul.f32 %v3768, 0.7978846
        %v3833 = vmul.f32 %v3769, 0.7978846
        %v3834 = vmul.f32 %v3770, 0.7978846
        %v3835 = vmul.f32 %v3771, 0.7978846
        %v3836 = vmul.f32 %v3772, 0.7978846
        %v3837 = vmul.f32 %v3773, 0.7978846
        %v3838 = vmul.f32 %v3774, 0.7978846
        %v3839 = vmul.f32 %v3775, 0.7978846
        %v3840 = vmul.f32 %v3776, 0.7978846
        %v3841 = vmul.f32 %v3777, 0.7978846
        %v3842 = vmul.f32 %v3778, 0.7978846
        %v3843 = vmul.f32 %v3779, 0.7978846
        %v3844 = vmul.f32 %v3780, 0.7978846
        %v3845 = vmul.f32 %v3781, 0.7978846
        %v3846 = vmul.f32 %v3782, 0.7978846
        %v3847 = vmul.f32 %v3783, 0.7978846
        %v3848 = vmul.f32 %v3784, 0.7978846
        %v3849 = vmul.f32 %v3785, 0.7978846
        %v3850 = vmul.f32 %v3786, 0.7978846
        %v3851 = vmul.f32 %v3787, 0.7978846
        %v3852 = vmul.f32 %v3788, 0.7978846
        %v3853 = vmul.f32 %v3789, 0.7978846
        %v3854 = vmul.f32 %v3790, 0.7978846
        %v3855 = vmul.f32 %v3791, 0.7978846
        %v3856 = vmul.f32 %v3792, 0.7978846
        %v3857 = vmul.f32 %v3793, 0.7978846
        %v3858 = vmul.f32 %v3794, 0.7978846
        %v3859 = vmul.f32 %v3795, 0.7978846
        %v3860 = vmul.f32 %v3796, 0.7978846
        %v3861 = vmul.f32 %v3797, 0.7978846
        %v3862 = vmul.f32 %v3798, 0.7978846
        %v3863 = vmul.f32 %v3799, 0.7978846
        %v3864 = vmul.f32 %v3800, 0.7978846
        %v3865 = vmul.f32 %v3801, 0.7978846
        %v3866 = vmul.f32 %v3802, 0.7978846
        %v3867 = vmul.f32 %v3803, 0.7978846
        %v3868 = vmul.f32 %v3804, 0.7978846
        %v3869 = vmul.f32 %v3805, 0.7978846
        %v3870 = vmul.f32 %v3806, 0.7978846
        %v3871 = vmul.f32 %v3807, 0.7978846
        %v3872 = vmul.f32 %v3808, 0.7978846
        %v3873 = vmul.f32 %v3809, 0.7978846
        %v3874 = vmul.f32 %v3810, 0.7978846
        %v3875 = vtanh.pop %v3811
        %v3876 = vtanh.pop %v3812
        %v3877 = vtanh.pop %v3813
        %v3878 = vtanh.pop %v3814
        %v3879 = vtanh.pop %v3815
        %v3880 = vtanh.pop %v3816
        %v3881 = vtanh.pop %v3817
        %v3882 = vtanh.pop %v3818
        %v3883 = vtanh.pop %v3819
        %v3884 = vtanh.pop %v3820
        %v3885 = vtanh.pop %v3821
        %v3886 = vtanh.pop %v3822
        %v3887 = vtanh.pop %v3823
        %v3888 = vtanh.pop %v3824
        %v3889 = vtanh.pop %v3825
        %v3890 = vtanh.pop %v3826
        %v3891 = vtanh.pop %v3827
        %v3892 = vtanh.pop %v3828
        %v3893 = vtanh.pop %v3829
        %v3894 = vtanh.pop %v3830
        %v3895 = vtanh.pop %v3831
        %v3896 = vtanh.pop %v3832
        %v3897 = vtanh.pop %v3833
        %v3898 = vtanh.pop %v3834
        %v3899 = vtanh.pop %v3835
        %v3900 = vtanh.pop %v3836
        %v3901 = vtanh.pop %v3837
        %v3902 = vtanh.pop %v3838
        %v3903 = vtanh.pop %v3839
        %v3904 = vtanh.pop %v3840
        %v3905 = vtanh.pop %v3841
        %v3906 = vtanh.pop %v3842
        %v3907 = vtanh.pop %v3843
        %v3908 = vtanh.pop %v3844
        %v3909 = vtanh.pop %v3845
        %v3910 = vtanh.pop %v3846
        %v3911 = vtanh.pop %v3847
        %v3912 = vtanh.pop %v3848
        %v3913 = vtanh.pop %v3849
        %v3914 = vtanh.pop %v3850
        %v3915 = vtanh.pop %v3851
        %v3916 = vtanh.pop %v3852
        %v3917 = vtanh.pop %v3853
        %v3918 = vtanh.pop %v3854
        %v3919 = vtanh.pop %v3855
        %v3920 = vtanh.pop %v3856
        %v3921 = vtanh.pop %v3857
        %v3922 = vtanh.pop %v3858
        %v3923 = vtanh.pop %v3859
        %v3924 = vtanh.pop %v3860
        %v3925 = vtanh.pop %v3861
        %v3926 = vtanh.pop %v3862
        %v3927 = vtanh.pop %v3863
        %v3928 = vtanh.pop %v3864
        %v3929 = vtanh.pop %v3865
        %v3930 = vtanh.pop %v3866
        %v3931 = vtanh.pop %v3867
        %v3932 = vtanh.pop %v3868
        %v3933 = vtanh.pop %v3869
        %v3934 = vtanh.pop %v3870
        %v3935 = vtanh.pop %v3871
        %v3936 = vtanh.pop %v3872
        %v3937 = vtanh.pop %v3873
        %v3938 = vtanh.pop %v3874
        %v3939 = vadd.f32 %v3875, 1.0
        %v3940 = vadd.f32 %v3876, 1.0
        %v3941 = vadd.f32 %v3877, 1.0
        %v3942 = vadd.f32 %v3878, 1.0
        %v3943 = vadd.f32 %v3879, 1.0
        %v3944 = vadd.f32 %v3880, 1.0
        %v3945 = vadd.f32 %v3881, 1.0
        %v3946 = vadd.f32 %v3882, 1.0
        %v3947 = vadd.f32 %v3883, 1.0
        %v3948 = vadd.f32 %v3884, 1.0
        %v3949 = vadd.f32 %v3885, 1.0
        %v3950 = vadd.f32 %v3886, 1.0
        %v3951 = vadd.f32 %v3887, 1.0
        %v3952 = vadd.f32 %v3888, 1.0
        %v3953 = vadd.f32 %v3889, 1.0
        %v3954 = vadd.f32 %v3890, 1.0
        %v3955 = vadd.f32 %v3891, 1.0
        %v3956 = vadd.f32 %v3892, 1.0
        %v3957 = vadd.f32 %v3893, 1.0
        %v3958 = vadd.f32 %v3894, 1.0
        %v3959 = vadd.f32 %v3895, 1.0
        %v3960 = vadd.f32 %v3896, 1.0
        %v3961 = vadd.f32 %v3897, 1.0
        %v3962 = vadd.f32 %v3898, 1.0
        %v3963 = vadd.f32 %v3899, 1.0
        %v3964 = vadd.f32 %v3900, 1.0
        %v3965 = vadd.f32 %v3901, 1.0
        %v3966 = vadd.f32 %v3902, 1.0
        %v3967 = vadd.f32 %v3903, 1.0
        %v3968 = vadd.f32 %v3904, 1.0
        %v3969 = vadd.f32 %v3905, 1.0
        %v3970 = vadd.f32 %v3906, 1.0
        %v3971 = vadd.f32 %v3907, 1.0
        %v3972 = vadd.f32 %v3908, 1.0
        %v3973 = vadd.f32 %v3909, 1.0
        %v3974 = vadd.f32 %v3910, 1.0
        %v3975 = vadd.f32 %v3911, 1.0
        %v3976 = vadd.f32 %v3912, 1.0
        %v3977 = vadd.f32 %v3913, 1.0
        %v3978 = vadd.f32 %v3914, 1.0
        %v3979 = vadd.f32 %v3915, 1.0
        %v3980 = vadd.f32 %v3916, 1.0
        %v3981 = vadd.f32 %v3917, 1.0
        %v3982 = vadd.f32 %v3918, 1.0
        %v3983 = vadd.f32 %v3919, 1.0
        %v3984 = vadd.f32 %v3920, 1.0
        %v3985 = vadd.f32 %v3921, 1.0
        %v3986 = vadd.f32 %v3922, 1.0
        %v3987 = vadd.f32 %v3923, 1.0
        %v3988 = vadd.f32 %v3924, 1.0
        %v3989 = vadd.f32 %v3925, 1.0
        %v3990 = vadd.f32 %v3926, 1.0
        %v3991 = vadd.f32 %v3927, 1.0
        %v3992 = vadd.f32 %v3928, 1.0
        %v3993 = vadd.f32 %v3929, 1.0
        %v3994 = vadd.f32 %v3930, 1.0
        %v3995 = vadd.f32 %v3931, 1.0
        %v3996 = vadd.f32 %v3932, 1.0
        %v3997 = vadd.f32 %v3933, 1.0
        %v3998 = vadd.f32 %v3934, 1.0
        %v3999 = vadd.f32 %v3935, 1.0
        %v4000 = vadd.f32 %v3936, 1.0
        %v4001 = vadd.f32 %v3937, 1.0
        %v4002 = vadd.f32 %v3938, 1.0
        %v4003 = vmul.f32 %v3491, %v3939
        %v4004 = vmul.f32 %v3492, %v3940
        %v4005 = vmul.f32 %v3493, %v3941
        %v4006 = vmul.f32 %v3494, %v3942
        %v4007 = vmul.f32 %v3495, %v3943
        %v4008 = vmul.f32 %v3496, %v3944
        %v4009 = vmul.f32 %v3497, %v3945
        %v4010 = vmul.f32 %v3498, %v3946
        %v4011 = vmul.f32 %v3499, %v3947
        %v4012 = vmul.f32 %v3500, %v3948
        %v4013 = vmul.f32 %v3501, %v3949
        %v4014 = vmul.f32 %v3502, %v3950
        %v4015 = vmul.f32 %v3503, %v3951
        %v4016 = vmul.f32 %v3504, %v3952
        %v4017 = vmul.f32 %v3505, %v3953
        %v4018 = vmul.f32 %v3506, %v3954
        %v4019 = vmul.f32 %v3507, %v3955
        %v4020 = vmul.f32 %v3508, %v3956
        %v4021 = vmul.f32 %v3509, %v3957
        %v4022 = vmul.f32 %v3510, %v3958
        %v4023 = vmul.f32 %v3511, %v3959
        %v4024 = vmul.f32 %v3512, %v3960
        %v4025 = vmul.f32 %v3513, %v3961
        %v4026 = vmul.f32 %v3514, %v3962
        %v4027 = vmul.f32 %v3515, %v3963
        %v4028 = vmul.f32 %v3516, %v3964
        %v4029 = vmul.f32 %v3517, %v3965
        %v4030 = vmul.f32 %v3518, %v3966
        %v4031 = vmul.f32 %v3519, %v3967
        %v4032 = vmul.f32 %v3520, %v3968
        %v4033 = vmul.f32 %v3521, %v3969
        %v4034 = vmul.f32 %v3522, %v3970
        %v4035 = vmul.f32 %v3523, %v3971
        %v4036 = vmul.f32 %v3524, %v3972
        %v4037 = vmul.f32 %v3525, %v3973
        %v4038 = vmul.f32 %v3526, %v3974
        %v4039 = vmul.f32 %v3527, %v3975
        %v4040 = vmul.f32 %v3528, %v3976
        %v4041 = vmul.f32 %v3529, %v3977
        %v4042 = vmul.f32 %v3530, %v3978
        %v4043 = vmul.f32 %v3531, %v3979
        %v4044 = vmul.f32 %v3532, %v3980
        %v4045 = vmul.f32 %v3533, %v3981
        %v4046 = vmul.f32 %v3534, %v3982
        %v4047 = vmul.f32 %v3535, %v3983
        %v4048 = vmul.f32 %v3536, %v3984
        %v4049 = vmul.f32 %v3537, %v3985
        %v4050 = vmul.f32 %v3538, %v3986
        %v4051 = vmul.f32 %v3539, %v3987
        %v4052 = vmul.f32 %v3540, %v3988
        %v4053 = vmul.f32 %v3541, %v3989
        %v4054 = vmul.f32 %v3542, %v3990
        %v4055 = vmul.f32 %v3543, %v3991
        %v4056 = vmul.f32 %v3544, %v3992
        %v4057 = vmul.f32 %v3545, %v3993
        %v4058 = vmul.f32 %v3546, %v3994
        %v4059 = vmul.f32 %v3547, %v3995
        %v4060 = vmul.f32 %v3548, %v3996
        %v4061 = vmul.f32 %v3549, %v3997
        %v4062 = vmul.f32 %v3550, %v3998
        %v4063 = vmul.f32 %v3551, %v3999
        %v4064 = vmul.f32 %v3552, %v4000
        %v4065 = vmul.f32 %v3553, %v4001
        %v4066 = vmul.f32 %v3554, %v4002
        %v4067 = vpack.c.bf16 %v4005, %v4003
        %v4068 = vpack.c.bf16 %v4006, %v4004
        %v4069 = vpack.c.bf16 %v4009, %v4007
        %v4070 = vpack.c.bf16 %v4010, %v4008
        %v4071 = vpack.c.bf16 %v4013, %v4011
        %v4072 = vpack.c.bf16 %v4014, %v4012
        %v4073 = vpack.c.bf16 %v4017, %v4015
        %v4074 = vpack.c.bf16 %v4018, %v4016
        %v4075 = vpack.c.bf16 %v4021, %v4019
        %v4076 = vpack.c.bf16 %v4022, %v4020
        %v4077 = vpack.c.bf16 %v4025, %v4023
        %v4078 = vpack.c.bf16 %v4026, %v4024
        %v4079 = vpack.c.bf16 %v4029, %v4027
        %v4080 = vpack.c.bf16 %v4030, %v4028
        %v4081 = vpack.c.bf16 %v4033, %v4031
        %v4082 = vpack.c.bf16 %v4034, %v4032
        %v4083 = vpack.c.bf16 %v4037, %v4035
        %v4084 = vpack.c.bf16 %v4038, %v4036
        %v4085 = vpack.c.bf16 %v4041, %v4039
        %v4086 = vpack.c.bf16 %v4042, %v4040
        %v4087 = vpack.c.bf16 %v4045, %v4043
        %v4088 = vpack.c.bf16 %v4046, %v4044
        %v4089 = vpack.c.bf16 %v4049, %v4047
        %v4090 = vpack.c.bf16 %v4050, %v4048
        %v4091 = vpack.c.bf16 %v4053, %v4051
        %v4092 = vpack.c.bf16 %v4054, %v4052
        %v4093 = vpack.c.bf16 %v4057, %v4055
        %v4094 = vpack.c.bf16 %v4058, %v4056
        %v4095 = vpack.c.bf16 %v4061, %v4059
        %v4096 = vpack.c.bf16 %v4062, %v4060
        %v4097 = vpack.c.bf16 %v4065, %v4063
        %v4098 = vpack.c.bf16 %v4066, %v4064
        %v4099 = vld [vmem:[%s11] sm:$0xf]
        %v4100 = vld [vmem:[%s11 + $0x4] sm:$0xf]
        %v4101 = vld [vmem:[%s11 + $0x8] sm:$0xf]
        %v4102 = vld [vmem:[%s11 + $0xc] sm:$0xf]
        %v4103 = vld [vmem:[%s11 + $0x10] sm:$0xf]
        %v4104 = vld [vmem:[%s11 + $0x14] sm:$0xf]
        %v4105 = vld [vmem:[%s11 + $0x18] sm:$0xf]
        %v4106 = vld [vmem:[%s11 + $0x1c] sm:$0xf]
        %v4107 = vld [vmem:[%s11 + $0x20] sm:$0xf]
        %v4108 = vld [vmem:[%s11 + $0x24] sm:$0xf]
        %v4109 = vld [vmem:[%s11 + $0x28] sm:$0xf]
        %v4110 = vld [vmem:[%s11 + $0x2c] sm:$0xf]
        %v4111 = vld [vmem:[%s11 + $0x30] sm:$0xf]
        %v4112 = vld [vmem:[%s11 + $0x34] sm:$0xf]
        %v4113 = vld [vmem:[%s11 + $0x38] sm:$0xf]
        %v4114 = vld [vmem:[%s11 + $0x3c] sm:$0xf]
        %v4115 = vld [vmem:[%s11 + $0x40] sm:$0xf]
        %v4116 = vld [vmem:[%s11 + $0x44] sm:$0xf]
        %v4117 = vld [vmem:[%s11 + $0x48] sm:$0xf]
        %v4118 = vld [vmem:[%s11 + $0x4c] sm:$0xf]
        %v4119 = vld [vmem:[%s11 + $0x50] sm:$0xf]
        %v4120 = vld [vmem:[%s11 + $0x54] sm:$0xf]
        %v4121 = vld [vmem:[%s11 + $0x58] sm:$0xf]
        %v4122 = vld [vmem:[%s11 + $0x5c] sm:$0xf]
        %v4123 = vld [vmem:[%s11 + $0x60] sm:$0xf]
        %v4124 = vld [vmem:[%s11 + $0x64] sm:$0xf]
        %v4125 = vld [vmem:[%s11 + $0x68] sm:$0xf]
        %v4126 = vld [vmem:[%s11 + $0x6c] sm:$0xf]
        %v4127 = vld [vmem:[%s11 + $0x70] sm:$0xf]
        %v4128 = vld [vmem:[%s11 + $0x74] sm:$0xf]
        %v4129 = vld [vmem:[%s11 + $0x78] sm:$0xf]
        %v4130 = vld [vmem:[%s11 + $0x7c] sm:$0xf]
        %v4132 = vlaneseq
        %v4133 = vshrl.u32 %v4132, 7
        %v4134 = vsub.s32 0, %v4133
        %v4135 = vrot.slane %v1254, %v4134
        %v4169 = vunpack.c.l.b16 %v4099
        %v4170 = vunpack.c.l.b16 %v4100
        %v4171 = vunpack.c.l.b16 %v4101
        %v4172 = vunpack.c.l.b16 %v4102
        %v4173 = vunpack.c.l.b16 %v4103
        %v4174 = vunpack.c.l.b16 %v4104
        %v4175 = vunpack.c.l.b16 %v4105
        %v4176 = vunpack.c.l.b16 %v4106
        %v4177 = vunpack.c.l.b16 %v4107
        %v4178 = vunpack.c.l.b16 %v4108
        %v4179 = vunpack.c.l.b16 %v4109
        %v4180 = vunpack.c.l.b16 %v4110
        %v4181 = vunpack.c.l.b16 %v4111
        %v4182 = vunpack.c.l.b16 %v4112
        %v4183 = vunpack.c.l.b16 %v4113
        %v4184 = vunpack.c.l.b16 %v4114
        %v4185 = vunpack.c.l.b16 %v4115
        %v4186 = vunpack.c.l.b16 %v4116
        %v4187 = vunpack.c.l.b16 %v4117
        %v4188 = vunpack.c.l.b16 %v4118
        %v4189 = vunpack.c.l.b16 %v4119
        %v4190 = vunpack.c.l.b16 %v4120
        %v4191 = vunpack.c.l.b16 %v4121
        %v4192 = vunpack.c.l.b16 %v4122
        %v4193 = vunpack.c.l.b16 %v4123
        %v4194 = vunpack.c.l.b16 %v4124
        %v4195 = vunpack.c.l.b16 %v4125
        %v4196 = vunpack.c.l.b16 %v4126
        %v4197 = vunpack.c.l.b16 %v4127
        %v4198 = vunpack.c.l.b16 %v4128
        %v4199 = vunpack.c.l.b16 %v4129
        %v4200 = vunpack.c.l.b16 %v4130
        %v4201 = vpack.c.b16 %v4170, %v4169
        %v4202 = vpack.c.b16 %v4172, %v4171
        %v4203 = vpack.c.b16 %v4174, %v4173
        %v4204 = vpack.c.b16 %v4176, %v4175
        %v4205 = vpack.c.b16 %v4178, %v4177
        %v4206 = vpack.c.b16 %v4180, %v4179
        %v4207 = vpack.c.b16 %v4182, %v4181
        %v4208 = vpack.c.b16 %v4184, %v4183
        %v4209 = vpack.c.b16 %v4186, %v4185
        %v4210 = vpack.c.b16 %v4188, %v4187
        %v4211 = vpack.c.b16 %v4190, %v4189
        %v4212 = vpack.c.b16 %v4192, %v4191
        %v4213 = vpack.c.b16 %v4194, %v4193
        %v4214 = vpack.c.b16 %v4196, %v4195
        %v4215 = vpack.c.b16 %v4198, %v4197
        %v4216 = vpack.c.b16 %v4200, %v4199
        %4233 = vmatprep.subr.bf16.mxu0 0
        %4234 = vmatpush1.bf16.msra.mxu0 %v4201
        %4235 = vmatprep.subr.bf16.mxu0 0
        %4236 = vmatpush1.bf16.msra.mxu0 %v4202
        %4237 = vmatprep.subr.bf16.mxu0 0
        %4238 = vmatpush1.bf16.msra.mxu0 %v4203
        %4239 = vmatprep.subr.bf16.mxu0 0
        %4240 = vmatpush1.bf16.msra.mxu0 %v4204
        %4241 = vmatprep.subr.bf16.mxu0 0
        %4242 = vmatpush1.bf16.msra.mxu0 %v4205
        %4243 = vmatprep.subr.bf16.mxu0 0
        %4244 = vmatpush1.bf16.msra.mxu0 %v4206
        %4245 = vmatprep.subr.bf16.mxu0 0
        %4246 = vmatpush1.bf16.msra.mxu0 %v4207
        %4247 = vmatprep.subr.bf16.mxu0 0
        %4248 = vmatpush1.bf16.msra.mxu0 %v4208
        %4249 = vmatprep.subr.bf16.mxu0 0
        %4250 = vmatpush1.bf16.msra.mxu0 %v4209
        %4251 = vmatprep.subr.bf16.mxu0 0
        %4252 = vmatpush1.bf16.msra.mxu0 %v4210
        %4253 = vmatprep.subr.bf16.mxu0 0
        %4254 = vmatpush1.bf16.msra.mxu0 %v4211
        %4255 = vmatprep.subr.bf16.mxu0 0
        %4256 = vmatpush1.bf16.msra.mxu0 %v4212
        %4257 = vmatprep.subr.bf16.mxu0 0
        %4258 = vmatpush1.bf16.msra.mxu0 %v4213
        %4259 = vmatprep.subr.bf16.mxu0 0
        %4260 = vmatpush1.bf16.msra.mxu0 %v4214
        %4261 = vmatprep.subr.bf16.mxu0 0
        %4262 = vmatpush1.bf16.msra.mxu0 %v4215
        %4263 = vmatprep.subr.bf16.mxu0 0
        %4264 = vmatpush1.bf16.msra.mxu0 %v4216
        %4265 = vmatprep.mubr.bf16.mxu0 %v4068
        %4266 = vmatmul.mubr.bf16.gmra.mrb[0].mxu0 %v4067
        %v4267 = vpop.f32.mrb[0].mxu0
        %v4268 = vadd.f32 %v4135, %v4267
        %v4269 = vpop.f32.mrb[0].mxu0
        %v4270 = vpop.f32.mrb[0].mxu0
        %v4271 = vadd.f32 %v4135, %v4270
        %v4272 = vpop.f32.mrb[0].mxu0
        %4273 = vmatprep.mubr.bf16.mxu0 %v4070
        %4274 = vmatmul.mubr.bf16.gmra.mrb[0].mxu0 %v4069
        %v4275 = vpop.f32.mrb[0].mxu0
        %v4276 = vadd.f32 %v4135, %v4275
        %v4277 = vpop.f32.mrb[0].mxu0
        %v4278 = vpop.f32.mrb[0].mxu0
        %v4279 = vadd.f32 %v4135, %v4278
        %v4280 = vpop.f32.mrb[0].mxu0
        %4281 = vmatprep.mubr.bf16.mxu0 %v4072
        %4282 = vmatmul.mubr.bf16.gmra.mrb[0].mxu0 %v4071
        %v4283 = vpop.f32.mrb[0].mxu0
        %v4284 = vadd.f32 %v4135, %v4283
        %v4285 = vpop.f32.mrb[0].mxu0
        %v4286 = vpop.f32.mrb[0].mxu0
        %v4287 = vadd.f32 %v4135, %v4286
        %v4288 = vpop.f32.mrb[0].mxu0
        %4289 = vmatprep.mubr.bf16.mxu0 %v4074
        %4290 = vmatmul.mubr.bf16.gmra.mrb[0].mxu0 %v4073
        %v4291 = vpop.f32.mrb[0].mxu0
        %v4292 = vadd.f32 %v4135, %v4291
        %v4293 = vpop.f32.mrb[0].mxu0
        %v4294 = vpop.f32.mrb[0].mxu0
        %v4295 = vadd.f32 %v4135, %v4294
        %v4296 = vpop.f32.mrb[0].mxu0
        %4297 = vmatprep.mubr.bf16.mxu0 %v4076
        %4298 = vmatmul.mubr.bf16.gmra.mrb[0].mxu0 %v4075
        %v4299 = vpop.f32.mrb[0].mxu0
        %v4300 = vadd.f32 %v4135, %v4299
        %v4301 = vpop.f32.mrb[0].mxu0
        %v4302 = vpop.f32.mrb[0].mxu0
        %v4303 = vadd.f32 %v4135, %v4302
        %v4304 = vpop.f32.mrb[0].mxu0
        %4305 = vmatprep.mubr.bf16.mxu0 %v4078
        %4306 = vmatmul.mubr.bf16.gmra.mrb[0].mxu0 %v4077
        %v4307 = vpop.f32.mrb[0].mxu0
        %v4308 = vadd.f32 %v4135, %v4307
        %v4309 = vpop.f32.mrb[0].mxu0
        %v4310 = vpop.f32.mrb[0].mxu0
        %v4311 = vadd.f32 %v4135, %v4310
        %v4312 = vpop.f32.mrb[0].mxu0
        %4313 = vmatprep.mubr.bf16.mxu0 %v4080
        %4314 = vmatmul.mubr.bf16.gmra.mrb[0].mxu0 %v4079
        %v4315 = vpop.f32.mrb[0].mxu0
        %v4316 = vadd.f32 %v4135, %v4315
        %v4317 = vpop.f32.mrb[0].mxu0
        %v4318 = vpop.f32.mrb[0].mxu0
        %v4319 = vadd.f32 %v4135, %v4318
        %v4320 = vpop.f32.mrb[0].mxu0
        %4321 = vmatprep.mubr.bf16.mxu0 %v4082
        %4322 = vmatmul.mubr.bf16.gmra.mrb[0].mxu0 %v4081
        %v4323 = vpop.f32.mrb[0].mxu0
        %v4324 = vadd.f32 %v4135, %v4323
        %v4325 = vpop.f32.mrb[0].mxu0
        %v4326 = vpop.f32.mrb[0].mxu0
        %v4327 = vadd.f32 %v4135, %v4326
        %v4328 = vpop.f32.mrb[0].mxu0
        %4329 = vmatprep.mubr.bf16.mxu0 %v4084
        %4330 = vmatmul.mubr.bf16.gmra.mrb[0].mxu0 %v4083
        %v4331 = vpop.f32.mrb[0].mxu0
        %v4332 = vadd.f32 %v4135, %v4331
        %v4333 = vpop.f32.mrb[0].mxu0
        %v4334 = vpop.f32.mrb[0].mxu0
        %v4335 = vadd.f32 %v4135, %v4334
        %v4336 = vpop.f32.mrb[0].mxu0
        %4337 = vmatprep.mubr.bf16.mxu0 %v4086
        %4338 = vmatmul.mubr.bf16.gmra.mrb[0].mxu0 %v4085
        %v4339 = vpop.f32.mrb[0].mxu0
        %v4340 = vadd.f32 %v4135, %v4339
        %v4341 = vpop.f32.mrb[0].mxu0
        %v4342 = vpop.f32.mrb[0].mxu0
        %v4343 = vadd.f32 %v4135, %v4342
        %v4344 = vpop.f32.mrb[0].mxu0
        %4345 = vmatprep.mubr.bf16.mxu0 %v4088
        %4346 = vmatmul.mubr.bf16.gmra.mrb[0].mxu0 %v4087
        %v4347 = vpop.f32.mrb[0].mxu0
        %v4348 = vadd.f32 %v4135, %v4347
        %v4349 = vpop.f32.mrb[0].mxu0
        %v4350 = vpop.f32.mrb[0].mxu0
        %v4351 = vadd.f32 %v4135, %v4350
        %v4352 = vpop.f32.mrb[0].mxu0
        %4353 = vmatprep.mubr.bf16.mxu0 %v4090
        %4354 = vmatmul.mubr.bf16.gmra.mrb[0].mxu0 %v4089
        %v4355 = vpop.f32.mrb[0].mxu0
        %v4356 = vadd.f32 %v4135, %v4355
        %v4357 = vpop.f32.mrb[0].mxu0
        %v4358 = vpop.f32.mrb[0].mxu0
        %v4359 = vadd.f32 %v4135, %v4358
        %v4360 = vpop.f32.mrb[0].mxu0
        %4361 = vmatprep.mubr.bf16.mxu0 %v4092
        %4362 = vmatmul.mubr.bf16.gmra.mrb[0].mxu0 %v4091
        %v4363 = vpop.f32.mrb[0].mxu0
        %v4364 = vadd.f32 %v4135, %v4363
        %v4365 = vpop.f32.mrb[0].mxu0
        %v4366 = vpop.f32.mrb[0].mxu0
        %v4367 = vadd.f32 %v4135, %v4366
        %v4368 = vpop.f32.mrb[0].mxu0
        %4369 = vmatprep.mubr.bf16.mxu0 %v4094
        %4370 = vmatmul.mubr.bf16.gmra.mrb[0].mxu0 %v4093
        %v4371 = vpop.f32.mrb[0].mxu0
        %v4372 = vadd.f32 %v4135, %v4371
        %v4373 = vpop.f32.mrb[0].mxu0
        %v4374 = vpop.f32.mrb[0].mxu0
        %v4375 = vadd.f32 %v4135, %v4374
        %v4376 = vpop.f32.mrb[0].mxu0
        %4377 = vmatprep.mubr.bf16.mxu0 %v4096
        %4378 = vmatmul.mubr.bf16.gmra.mrb[0].mxu0 %v4095
        %v4379 = vpop.f32.mrb[0].mxu0
        %v4380 = vadd.f32 %v4135, %v4379
        %v4381 = vpop.f32.mrb[0].mxu0
        %v4382 = vpop.f32.mrb[0].mxu0
        %v4383 = vadd.f32 %v4135, %v4382
        %v4384 = vpop.f32.mrb[0].mxu0
        %4385 = vmatprep.mubr.bf16.mxu0 %v4098
        %4386 = vmatmul.mubr.bf16.gmra.mrb[0].mxu0 %v4097
        %v4387 = vpop.f32.mrb[0].mxu0
        %v4388 = vadd.f32 %v4135, %v4387
        %v4389 = vpop.f32.mrb[0].mxu0
        %v4390 = vpop.f32.mrb[0].mxu0
        %v4391 = vadd.f32 %v4135, %v4390
        %v4392 = vpop.f32.mrb[0].mxu0
        %4393 = vdwg.mxu0
        %v4394 = vadd.f32 %v2651, %v4268
        %v4395 = vadd.f32 %v2652, %v4271
        %v4396 = vadd.f32 %v2653, %v4276
        %v4397 = vadd.f32 %v2654, %v4279
        %v4398 = vadd.f32 %v2655, %v4284
        %v4399 = vadd.f32 %v2656, %v4287
        %v4400 = vadd.f32 %v2657, %v4292
        %v4401 = vadd.f32 %v2658, %v4295
        %v4402 = vadd.f32 %v2659, %v4300
        %v4403 = vadd.f32 %v2660, %v4303
        %v4404 = vadd.f32 %v2661, %v4308
        %v4405 = vadd.f32 %v2662, %v4311
        %v4406 = vadd.f32 %v2663, %v4316
        %v4407 = vadd.f32 %v2664, %v4319
        %v4408 = vadd.f32 %v2665, %v4324
        %v4409 = vadd.f32 %v2666, %v4327
        %v4410 = vadd.f32 %v2667, %v4332
        %v4411 = vadd.f32 %v2668, %v4335
        %v4412 = vadd.f32 %v2669, %v4340
        %v4413 = vadd.f32 %v2670, %v4343
        %v4414 = vadd.f32 %v2671, %v4348
        %v4415 = vadd.f32 %v2672, %v4351
        %v4416 = vadd.f32 %v2673, %v4356
        %v4417 = vadd.f32 %v2674, %v4359
        %v4418 = vadd.f32 %v2675, %v4364
        %v4419 = vadd.f32 %v2676, %v4367
        %v4420 = vadd.f32 %v2677, %v4372
        %v4421 = vadd.f32 %v2678, %v4375
        %v4422 = vadd.f32 %v2679, %v4380
        %v4423 = vadd.f32 %v2680, %v4383
        %v4424 = vadd.f32 %v2681, %v4388
        %v4425 = vadd.f32 %v2682, %v4391
        %4426 = vst.msk [vmem:[%s578] sm:$0xff] %vm637, %v4394
        %4427 = vst.msk [vmem:[%s578 + $0x8] sm:$0xff] %vm637, %v4395
        %4428 = vst.msk [vmem:[%s578 + $0x10] sm:$0xff] %vm637, %v4396
        %4429 = vst.msk [vmem:[%s578 + $0x18] sm:$0xff] %vm637, %v4397
        %4430 = vst.msk [vmem:[%s578 + $0x20] sm:$0xff] %vm637, %v4398
        %4431 = vst.msk [vmem:[%s578 + $0x28] sm:$0xff] %vm637, %v4399
        %4432 = vst.msk [vmem:[%s578 + $0x30] sm:$0xff] %vm637, %v4400
        %4433 = vst.msk [vmem:[%s578 + $0x38] sm:$0xff] %vm637, %v4401
        %4434 = vst.msk [vmem:[%s578 + $0x40] sm:$0xff] %vm637, %v4402
        %4435 = vst.msk [vmem:[%s578 + $0x48] sm:$0xff] %vm637, %v4403
        %4436 = vst.msk [vmem:[%s578 + $0x50] sm:$0xff] %vm637, %v4404
        %4437 = vst.msk [vmem:[%s578 + $0x58] sm:$0xff] %vm637, %v4405
        %4438 = vst.msk [vmem:[%s578 + $0x60] sm:$0xff] %vm637, %v4406
        %4439 = vst.msk [vmem:[%s578 + $0x68] sm:$0xff] %vm637, %v4407
        %4440 = vst.msk [vmem:[%s578 + $0x70] sm:$0xff] %vm637, %v4408
        %4441 = vst.msk [vmem:[%s578 + $0x78] sm:$0xff] %vm637, %v4409
        %4442 = vst.msk [vmem:[%s578 + $0x80] sm:$0xff] %vm637, %v4410
        %4443 = vst.msk [vmem:[%s578 + $0x88] sm:$0xff] %vm637, %v4411
        %4444 = vst.msk [vmem:[%s578 + $0x90] sm:$0xff] %vm637, %v4412
        %4445 = vst.msk [vmem:[%s578 + $0x98] sm:$0xff] %vm637, %v4413
        %4446 = vst.msk [vmem:[%s578 + $0xa0] sm:$0xff] %vm637, %v4414
        %4447 = vst.msk [vmem:[%s578 + $0xa8] sm:$0xff] %vm637, %v4415
        %4448 = vst.msk [vmem:[%s578 + $0xb0] sm:$0xff] %vm637, %v4416
        %4449 = vst.msk [vmem:[%s578 + $0xb8] sm:$0xff] %vm637, %v4417
        %4450 = vst.msk [vmem:[%s578 + $0xc0] sm:$0xff] %vm637, %v4418
        %4451 = vst.msk [vmem:[%s578 + $0xc8] sm:$0xff] %vm637, %v4419
        %4452 = vst.msk [vmem:[%s578 + $0xd0] sm:$0xff] %vm637, %v4420
        %4453 = vst.msk [vmem:[%s578 + $0xd8] sm:$0xff] %vm637, %v4421
        %4454 = vst.msk [vmem:[%s578 + $0xe0] sm:$0xff] %vm637, %v4422
        %4455 = vst.msk [vmem:[%s578 + $0xe8] sm:$0xff] %vm637, %v4423
        %4456 = vst.msk [vmem:[%s578 + $0xf0] sm:$0xff] %vm637, %v4424
        %4457 = vst.msk [vmem:[%s578 + $0xf8] sm:$0xff] %vm637, %v4425
        %s4458 = sand.u32 %s365, 1
        %s4459 = scalar_lea.sflag [#allocation5], %s4458
        %s4460 = sand.u32 %s365, 1
        %s4461 = smul.addr %s4460, 256
        %s4462 = scalar_lea.vmem [#allocation8], %s4461
        // Predicated region
        $region81: #{tpu_custom_call.1} parent=71 // pred_check
          %p4463 = pneg %p375
        $region82: #{tpu_custom_call.1} parent=71 // pred_check_branch
          %4465 = sbr.rel (%p4463) target = $region84
        $region83: #{tpu_custom_call.1} parent=71 // pred_region
          %s4466 = smul.u32 16, %s38
          %s4468 = ssub.s32 4096, 4096
          %4469 = vsyncadd %s4459, %s4468
          %s4470 = smul.addr %s4466, 2
          %s4471 = smul.addr %s37, 32
          %s4472 = sadd.s32 %s4470, %s4471
          %s4473 = smul.addr %s4472, 128
          %s4474 = scalar_lea.hbm %s13, %s4473
          %s4475 = sshll.u32 %s4462, 4
          %s4476 = int_to_ptr.vmem [resolvable:$true] %s4475
          %4481 = dma.vmem_to_hbm [thread:$0]  %s4476, 4096, %s4474, %s4459, 128, 128, 8
        $region84: #{tpu_custom_call.1} parent=71 // pred_fallthru
          _
      $region72: #{tpu_custom_call.1} parent=5 // pred_fallthru
        _
      %p4482 = scmp.le.s32.totalorder 2, %s28
      // Predicated region
      $region85: #{tpu_custom_call.1} parent=5 // pred_check
        %p4483 = pneg %p4482
      $region86: #{tpu_custom_call.1} parent=5 // pred_check_branch
        %4485 = sbr.rel (%p4483) target = $region88
      $region87: #{tpu_custom_call.1} parent=5 // pred_region
        %s4486 = ssub.s32 %s28, 2
        // Predicated region
        $region89: #{tpu_custom_call.1} parent=87 // pred_check
          %p4487 = pneg %p381
        $region90: #{tpu_custom_call.1} parent=87 // pred_check_branch
          %4489 = sbr.rel (%p4487) target = $region92
        $region91: #{tpu_custom_call.1} parent=87 // pred_region
          %s4490 = sand.u32 %s366, 1
          %s4491 = scalar_lea.sflag [#allocation5], %s4490
          %s4492 = sand.u32 %s366, 1
          %s4493 = smul.addr %s4492, 256
          %s4494 = scalar_lea.vmem [#allocation8], %s4493
          %4495 = dma.done %s4491, 4096
        $region92: #{tpu_custom_call.1} parent=87 // pred_fallthru
          _
      $region88: #{tpu_custom_call.1} parent=5 // pred_fallthru
        _
    $region6: #{tpu_custom_call.1} parent=1 // loop_footer
      %s32 = sadd.s32 1, %s28
    $region7: #{tpu_custom_call.1} parent=1 // loop_footer_branch
      %27 = sbr.rel target = $region3
    $region8: #{tpu_custom_call.1} parent=1 // loop_exit
      _
    %4496 = vsyncpa [#allocation4], 1
    %s4497 = scalar_lea.sflag [#allocation4], 1
    %4498 = vsyncpa %s4497, 1
    %4499 = vsyncpa [#allocation7], 1
    %s4500 = scalar_lea.sflag [#allocation7], 1
    %4501 = vsyncpa %s4500, 1
    %4502 = vsyncpa [#allocation5], 1
    %s4503 = scalar_lea.sflag [#allocation5], 1
    %4504 = vsyncpa %s4503, 1

</llo_original>
